<compile_context>
chip_gen: v5e
topology: v5e:2x2
jax: 0.10.0
libtpu: 0.0.40
codegen_flags: <defaults>
</compile_context>

<pallas_src>
import functools
import math

import numpy as np
import jax
import jax.numpy as jnp
from jax.experimental import pallas as pl
from jax.experimental.pallas import tpu as pltpu

LN_EPS = 1e-5        # nn.LayerNorm default eps
NEG_SLOPE = 0.01     # nn.LeakyReLU default negative_slope


def _kernel_points(radius, num_points=3, dim=3):
    """Mirrors KPConv.getKernelPoints (grid of kernel points)."""
    xyz = np.linspace(-1.0, 1.0, num_points)
    if dim == 1:
        return xyz[:, None] * radius
    points = np.meshgrid(*dim * [xyz])
    points = [p.flatten() for p in points]
    points = np.vstack(points).T
    points /= dim ** 0.5
    return points * radius


def resnet_kpconv_kernel(geom_ref, nbx_ref, x_ref, g_all_ref, r_all_ref,
                         w_ref, ln_g_ref, ln_b_ref, tail_w_ref, tail_b_ref,
                         out_ref, *, kp_extent, num_h):
    """Everything is transposed: channels/rows on sublanes, points on lanes."""
    tn = out_ref.shape[1]
    kc = w_ref.shape[1]                       # K * C_in
    inv_ext = 1.0 / kp_extent

    geom = geom_ref[...]                      # (H*5, tn) f32  [p, |p|^2, 1] per h
    nbx = nbx_ref[...]                        # (H*C_in, tn) bf16

    # --- per-neighbor loop: distances + influence weights + weighted feats --
    # Selection of neighbor h is folded into the constant matrices, so each
    # step is two skinny MXU matmuls + a (KC, tn) VPU multiply-accumulate.
    wf = jnp.zeros((kc, tn), jnp.float32)
    for h in range(num_h):
        # squared distance to every kernel point (already replicated C_in
        # times along the kc row axis):  |p|^2 + |kp|^2 - 2 p.kp
        sq = jnp.dot(g_all_ref[h], geom, preferred_element_type=jnp.float32)
        sq = jnp.maximum(sq, 0.0)             # clamp f32 cancellation at 0
        allw = jnp.maximum(1.0 - jnp.sqrt(sq) * inv_ext, 0.0)      # (KC, tn)
        # neighbor-h features replicated K times along kc rows (0/1 matmul)
        nbx_e = jnp.dot(r_all_ref[h], nbx, preferred_element_type=jnp.float32)
        wf = wf + allw * nbx_e

    # --- KPConv contraction kc -> C_mid on the MXU --------------------------
    mid = jnp.dot(w_ref[...], wf, preferred_element_type=jnp.float32)  # (C_mid, tn)

    # --- LayerNorm over channels (sublane axis) + LeakyReLU ------------------
    mu = jnp.mean(mid, axis=0, keepdims=True)
    var = jnp.mean((mid - mu) ** 2, axis=0, keepdims=True)
    y = (mid - mu) * jax.lax.rsqrt(var + LN_EPS)
    y = y * ln_g_ref[...] + ln_b_ref[...]
    y = jnp.where(y >= 0.0, y, NEG_SLOPE * y)

    # --- fused tail: [lin_W | proj_W] @ [y ; x] + (lin_b + proj_b) -----------
    cat = jnp.concatenate([y, x_ref[...]], axis=0)          # (C_mid + C_in, tn)
    out = jnp.dot(tail_w_ref[...], cat,
                  preferred_element_type=jnp.float32) + tail_b_ref[...]
    out_ref[...] = out.astype(out_ref.dtype)


def resnet_kpconv_forward(q_pts, s_pts, neighb_inds, x, params, kp,
                          kp_extent, tile_n=128):
    n = q_pts.shape[0]
    h = neighb_inds.shape[1]
    c_in = x.shape[1]
    k = kp.shape[0]
    c_mid = params['kp_w'].shape[2]
    c_out = params['lin_w'].shape[1]
    kc = k * c_in
    n_pad = pl.cdiv(n, tile_n) * tile_n

    # NOTE: relu(ln1(x)) in the original forward is dead code (its result is
    # immediately overwritten by the kpconv output), so it is omitted.

    # --- gather glue (data-dependent indexing, plain JAX) -------------------
    # TODO(synk): move the neighbor gather in-kernel (scalar-prefetched
    # indices + one-hot MXU gather / DMA gather) to avoid materializing the
    # H-amplified gathered streams in HBM; XLA will not fuse dynamic gathers
    # into pallas_call inputs, so they are kept in the wrapper for now.
    s_pad = jnp.concatenate([s_pts, jnp.zeros_like(s_pts[:1]) + 1.0e6], axis=0)
    x_pad = jnp.concatenate([x, jnp.zeros_like(x[:1])], axis=0)
    nb_rel = s_pad[neighb_inds] - q_pts[:, None, :]          # (N, H, 3) f32
    nb_x = x_pad[neighb_inds]                                # (N, H, C_in)

    # --- lane-dense transposed layouts: points on the 128-lane axis ---------
    # nb_rel stays f32 (shadow point at +1e6; bf16 would lose the near-point
    # precision that sets the influence weights).
    pnorm = jnp.sum(nb_rel * nb_rel, axis=-1, keepdims=True)
    geom = jnp.concatenate([nb_rel, pnorm, jnp.ones_like(pnorm)], axis=-1)
    geom_t = geom.transpose(1, 2, 0).reshape(h * 5, n)       # rows = h*5 + j
    nbx_t = nb_x.transpose(1, 2, 0).reshape(h * c_in, n).astype(jnp.bfloat16)
    x_t = jnp.transpose(x)                                   # (C_in, N)

    if n_pad != n:   # pad point axis so the last tile is full (junk discarded)
        geom_t = jnp.pad(geom_t, ((0, 0), (0, n_pad - n)))
        nbx_t = jnp.pad(nbx_t, ((0, 0), (0, n_pad - n)))
        x_t = jnp.pad(x_t, ((0, 0), (0, n_pad - n)))

    # --- constants with the per-h selection folded in (MXU does the work) ---
    # gcol[j, k]: sq = [-2*kp | 1 | |kp|^2] . [p, |p|^2, 1]
    gcol = jnp.concatenate([-2.0 * jnp.transpose(kp),                 # (3, K)
                            jnp.ones((1, k), jnp.float32),
                            jnp.sum(kp * kp, axis=1)[None, :]], axis=0)
    gcol_e = jnp.repeat(gcol, c_in, axis=1)                           # (5, KC)
    eye_h = jnp.eye(h, dtype=jnp.float32)
    # g_all[h, kc, h'*5 + j] = (h == h') * gcol_e[j, kc]
    g_all = jnp.einsum('ab,jm->ambj', eye_h, gcol_e).reshape(h, kc, h * 5)
    # r_all[h, k*C_in + c, h'*C_in + c'] = (h == h') * (c == c')
    rep = jnp.tile(jnp.eye(c_in, dtype=jnp.float32), (k, 1))          # (KC, C_in)
    r_all = jnp.einsum('ab,mc->ambc', eye_h, rep).reshape(h, kc, h * c_in)
    r_all = r_all.astype(jnp.bfloat16)

    w_t = jnp.transpose(params['kp_w'].reshape(kc, c_mid))            # (C_mid, KC)
    ln_g = params['ln_g'].reshape(c_mid, 1)
    ln_b = params['ln_b'].reshape(c_mid, 1)
    tail_w = jnp.concatenate([jnp.transpose(params['lin_w']),
                              jnp.transpose(params['proj_w'])], axis=1)  # (C_out, C_mid+C_in)
    tail_b = (params['lin_b'] + params['proj_b']).reshape(c_out, 1)

    kernel = functools.partial(resnet_kpconv_kernel,
                               kp_extent=float(kp_extent), num_h=h)
    out_t = pl.pallas_call(
        kernel,
        out_shape=jax.ShapeDtypeStruct((c_out, n_pad), jnp.float32),
        grid_spec=pltpu.PrefetchScalarGridSpec(
            num_scalar_prefetch=0,
            grid=(n_pad // tile_n,),
            in_specs=[
                pl.BlockSpec((h * 5, tile_n), lambda i: (0, i)),       # geom_t
                pl.BlockSpec((h * c_in, tile_n), lambda i: (0, i)),    # nbx_t (bf16)
                pl.BlockSpec((c_in, tile_n), lambda i: (0, i)),        # x_t
                pl.BlockSpec((h, kc, h * 5), lambda i: (0, 0, 0)),     # dist const
                pl.BlockSpec((h, kc, h * c_in), lambda i: (0, 0, 0)),  # repl const
                pl.BlockSpec((c_mid, kc), lambda i: (0, 0)),           # KP weights^T
                pl.BlockSpec((c_mid, 1), lambda i: (0, 0)),            # ln2 gamma
                pl.BlockSpec((c_mid, 1), lambda i: (0, 0)),            # ln2 beta
                pl.BlockSpec((c_out, c_mid + c_in), lambda i: (0, 0)), # fused tail W
                pl.BlockSpec((c_out, 1), lambda i: (0, 0)),            # fused tail b
            ],
            out_specs=pl.BlockSpec((c_out, tile_n), lambda i: (0, i)),
        ),
        compiler_params=pltpu.CompilerParams(
            dimension_semantics=("parallel",),
            vmem_limit_bytes=32 * 1024 * 1024,
        ),
    )(geom_t, nbx_t, x_t, g_all, r_all, w_t, ln_g, ln_b, tail_w, tail_b)
    return jnp.transpose(out_t[:, :n])                        # (N, C_out)


def reference_forward(q_pts, s_pts, neighb_inds, x, params, kp, kp_extent):
    """Pure-JAX (full f32) mirror of ResnetKPConv.forward for verification."""
    s_pad = jnp.concatenate([s_pts, jnp.zeros_like(s_pts[:1]) + 1.0e6], axis=0)
    x_pad = jnp.concatenate([x, jnp.zeros_like(x[:1])], axis=0)
    neighbors = s_pad[neighb_inds] - q_pts[:, None, :]        # [N, H, 3]
    nb_x = x_pad[neighb_inds]                                 # [N, H, Cin]
    diff = neighbors[:, :, None, :] - kp[None, None, :, :]    # [N, H, K, 3]
    sq = jnp.sum(diff ** 2, -1)
    w = jnp.maximum(1.0 - jnp.sqrt(sq) / kp_extent, 0.0)      # [N, H, K]
    wt = jnp.swapaxes(w, -1, -2)                              # [N, K, H]
    wf = wt @ nb_x                                            # [N, K, Cin]
    mid = jnp.einsum('nkc,kcd->nd', wf, params['kp_w'])       # [N, Cmid]
    mu = mid.mean(-1, keepdims=True)
    var = ((mid - mu) ** 2).mean(-1, keepdims=True)
    y = (mid - mu) / jnp.sqrt(var + LN_EPS)
    y = y * params['ln_g'][0] + params['ln_b'][0]
    y = jnp.where(y >= 0.0, y, NEG_SLOPE * y)
    y = y @ params['lin_w'] + params['lin_b'][0]
    return x @ params['proj_w'] + params['proj_b'][0] + y


if __name__ == "__main__":
    # small shapes implied by the module's forward
    N = M = 512           # query / support point counts (equal so residual adds)
    H = 8                 # neighbors per query point
    C_IN, C_OUT, F_DSCALE = 8, 16, 2
    C_MID = C_OUT // F_DSCALE
    RADIUS = 1.0
    KERNEL_SIZE, P_DIM = 3, 3
    K = KERNEL_SIZE ** P_DIM                                   # 27 kernel points
    KP_EXTENT = RADIUS / (KERNEL_SIZE - 1) * P_DIM ** 0.5
    TILE_N = 128                                               # grid of 4 tiles

    key = jax.random.PRNGKey(0)
    k1, k2, k3, k4, k5, k6, k7, k8, k9 = jax.random.split(key, 9)
    q_pts = jax.random.normal(k1, (N, P_DIM), jnp.float32)
    s_pts = jax.random.normal(k2, (M, P_DIM), jnp.float32)
    x = jax.random.normal(k3, (M, C_IN), jnp.float32)
    # index M hits the padded "shadow" point (zero feature / far away)
    neighb_inds = jax.random.randint(k4, (N, H), 0, M + 1)

    kp = jnp.asarray(_kernel_points(RADIUS, KERNEL_SIZE, P_DIM).astype(np.float32))

    def unif(kk, shape, fan_in):
        b = 1.0 / math.sqrt(fan_in)
        return jax.random.uniform(kk, shape, jnp.float32, -b, b)

    params = dict(
        kp_w=unif(k5, (K, C_IN, C_MID), C_IN),       # KPConv.weights
        ln_g=jnp.ones((1, C_MID), jnp.float32),      # ln2 affine (fresh init)
        ln_b=jnp.zeros((1, C_MID), jnp.float32),
        lin_w=unif(k6, (C_MID, C_OUT), C_MID),       # self.lin
        lin_b=unif(k7, (1, C_OUT), C_MID),
        proj_w=unif(k8, (C_IN, C_OUT), C_IN),        # in_projection (C_IN != C_OUT)
        proj_b=unif(k9, (1, C_OUT), C_IN),
    )

    fwd = jax.jit(functools.partial(resnet_kpconv_forward,
                                    kp_extent=KP_EXTENT, tile_n=TILE_N))
    out = fwd(q_pts, s_pts, neighb_inds, x, params, kp)
    out = jax.block_until_ready(out)

    ref = reference_forward(q_pts, s_pts, neighb_inds, x, params, kp, KP_EXTENT)
    # tolerance accounts for the intentional bf16 transport of the gathered
    # neighbor features and the expanded-square distance (all accumulation /
    # normalization stays in f32).
    np.testing.assert_allclose(np.asarray(out), np.asarray(ref),
                               rtol=3e-2, atol=3e-2)
    print("KERNEL_OK")
</pallas_src>

<mosaic_0001>
module attributes {stable_mosaic.version = 11 : i64} {
  func.func @resnet_kpconv_kernel(%arg0: i32, %arg1: memref<40x128xf32, #tpu.memory_space<vmem>>, %arg2: memref<64x128xbf16, #tpu.memory_space<vmem>>, %arg3: memref<8x128xf32, #tpu.memory_space<vmem>>, %arg4: memref<8x216x40xf32, #tpu.memory_space<vmem>>, %arg5: memref<8x216x64xbf16, #tpu.memory_space<vmem>>, %arg6: memref<8x216xf32, #tpu.memory_space<vmem>>, %arg7: memref<8x1xf32, #tpu.memory_space<vmem>>, %arg8: memref<8x1xf32, #tpu.memory_space<vmem>>, %arg9: memref<16x16xf32, #tpu.memory_space<vmem>>, %arg10: memref<16x1xf32, #tpu.memory_space<vmem>>, %arg11: memref<16x128xf32, #tpu.memory_space<vmem>>) attributes {dimension_semantics = [#tpu.dimension_semantics<parallel>], iteration_bounds = array<i64: 4>, scalar_prefetch = 0 : i64, scratch_operands = 0 : i64, tpu.core_type = #tpu.core_type<tc>, window_params = [{transform_indices = @transform_0, window_bounds = array<i64: 40, 128>}, {transform_indices = @transform_1, window_bounds = array<i64: 64, 128>}, {transform_indices = @transform_2, window_bounds = array<i64: 8, 128>}, {pipeline_mode = #tpu.pipeline_mode<synchronous>, transform_indices = @transform_3, window_bounds = array<i64: 8, 216, 40>}, {pipeline_mode = #tpu.pipeline_mode<synchronous>, transform_indices = @transform_4, window_bounds = array<i64: 8, 216, 64>}, {pipeline_mode = #tpu.pipeline_mode<synchronous>, transform_indices = @transform_5, window_bounds = array<i64: 8, 216>}, {pipeline_mode = #tpu.pipeline_mode<synchronous>, transform_indices = @transform_6, window_bounds = array<i64: 8, 1>}, {pipeline_mode = #tpu.pipeline_mode<synchronous>, transform_indices = @transform_7, window_bounds = array<i64: 8, 1>}, {pipeline_mode = #tpu.pipeline_mode<synchronous>, transform_indices = @transform_8, window_bounds = array<i64: 16, 16>}, {pipeline_mode = #tpu.pipeline_mode<synchronous>, transform_indices = @transform_9, window_bounds = array<i64: 16, 1>}, {transform_indices = @transform_10, window_bounds = array<i64: 16, 128>}]} {
    %c0 = arith.constant 0 : index
    %c0_0 = arith.constant 0 : index
    %0 = vector.load %arg1[%c0, %c0_0] : memref<40x128xf32, #tpu.memory_space<vmem>>, vector<40x128xf32>
    %c0_1 = arith.constant 0 : index
    %c0_2 = arith.constant 0 : index
    %1 = vector.load %arg2[%c0_1, %c0_2] : memref<64x128xbf16, #tpu.memory_space<vmem>>, vector<64x128xbf16>
    %cst = arith.constant 0.000000e+00 : f32
    %2 = vector.broadcast %cst : f32 to vector<216x128xf32>
    %c0_3 = arith.constant 0 : index
    %c0_4 = arith.constant 0 : index
    %c0_5 = arith.constant 0 : index
    %3 = vector.load %arg4[%c0_3, %c0_4, %c0_5] : memref<8x216x40xf32, #tpu.memory_space<vmem>>, vector<1x216x40xf32>
    %4 = vector.shape_cast %3 : vector<1x216x40xf32> to vector<216x40xf32>
    %cst_6 = arith.constant dense<0.000000e+00> : vector<216x128xf32>
    %5 = tpu.matmul %4, %0, %cst_6 {dimension_numbers = #tpu.dot_dimension_numbers<[1], [0], [0], [1], [0, 0, 1, 1], [], []>} : vector<216x40xf32>, vector<40x128xf32>, vector<216x128xf32> -> vector<216x128xf32>
    %cst_7 = arith.constant 0.000000e+00 : f32
    %6 = vector.broadcast %cst_7 : f32 to vector<216x128xf32>
    %7 = arith.maximumf %5, %6 : vector<216x128xf32>
    %8 = math.sqrt %7 : vector<216x128xf32>
    %cst_8 = arith.constant 1.15470052 : f32
    %9 = vector.broadcast %cst_8 : f32 to vector<216x128xf32>
    %10 = arith.mulf %8, %9 : vector<216x128xf32>
    %cst_9 = arith.constant 1.000000e+00 : f32
    %11 = vector.broadcast %cst_9 : f32 to vector<216x128xf32>
    %12 = arith.subf %11, %10 : vector<216x128xf32>
    %cst_10 = arith.constant 0.000000e+00 : f32
    %13 = vector.broadcast %cst_10 : f32 to vector<216x128xf32>
    %14 = arith.maximumf %12, %13 : vector<216x128xf32>
    %c0_11 = arith.constant 0 : index
    %c0_12 = arith.constant 0 : index
    %c0_13 = arith.constant 0 : index
    %15 = vector.load %arg5[%c0_11, %c0_12, %c0_13] : memref<8x216x64xbf16, #tpu.memory_space<vmem>>, vector<1x216x64xbf16>
    %16 = vector.shape_cast %15 : vector<1x216x64xbf16> to vector<216x64xbf16>
    %cst_14 = arith.constant dense<0.000000e+00> : vector<216x128xf32>
    %17 = tpu.matmul %16, %1, %cst_14 {dimension_numbers = #tpu.dot_dimension_numbers<[1], [0], [0], [1], [0, 0, 1, 1], [], []>} : vector<216x64xbf16>, vector<64x128xbf16>, vector<216x128xf32> -> vector<216x128xf32>
    %18 = arith.mulf %14, %17 : vector<216x128xf32>
    %19 = arith.addf %2, %18 : vector<216x128xf32>
    %c1 = arith.constant 1 : index
    %c0_15 = arith.constant 0 : index
    %c0_16 = arith.constant 0 : index
    %20 = vector.load %arg4[%c1, %c0_15, %c0_16] : memref<8x216x40xf32, #tpu.memory_space<vmem>>, vector<1x216x40xf32>
    %21 = vector.shape_cast %20 : vector<1x216x40xf32> to vector<216x40xf32>
    %cst_17 = arith.constant dense<0.000000e+00> : vector<216x128xf32>
    %22 = tpu.matmul %21, %0, %cst_17 {dimension_numbers = #tpu.dot_dimension_numbers<[1], [0], [0], [1], [0, 0, 1, 1], [], []>} : vector<216x40xf32>, vector<40x128xf32>, vector<216x128xf32> -> vector<216x128xf32>
    %cst_18 = arith.constant 0.000000e+00 : f32
    %23 = vector.broadcast %cst_18 : f32 to vector<216x128xf32>
    %24 = arith.maximumf %22, %23 : vector<216x128xf32>
    %25 = math.sqrt %24 : vector<216x128xf32>
    %cst_19 = arith.constant 1.15470052 : f32
    %26 = vector.broadcast %cst_19 : f32 to vector<216x128xf32>
    %27 = arith.mulf %25, %26 : vector<216x128xf32>
    %cst_20 = arith.constant 1.000000e+00 : f32
    %28 = vector.broadcast %cst_20 : f32 to vector<216x128xf32>
    %29 = arith.subf %28, %27 : vector<216x128xf32>
    %cst_21 = arith.constant 0.000000e+00 : f32
    %30 = vector.broadcast %cst_21 : f32 to vector<216x128xf32>
    %31 = arith.maximumf %29, %30 : vector<216x128xf32>
    %c1_22 = arith.constant 1 : index
    %c0_23 = arith.constant 0 : index
    %c0_24 = arith.constant 0 : index
    %32 = vector.load %arg5[%c1_22, %c0_23, %c0_24] : memref<8x216x64xbf16, #tpu.memory_space<vmem>>, vector<1x216x64xbf16>
    %33 = vector.shape_cast %32 : vector<1x216x64xbf16> to vector<216x64xbf16>
    %cst_25 = arith.constant dense<0.000000e+00> : vector<216x128xf32>
    %34 = tpu.matmul %33, %1, %cst_25 {dimension_numbers = #tpu.dot_dimension_numbers<[1], [0], [0], [1], [0, 0, 1, 1], [], []>} : vector<216x64xbf16>, vector<64x128xbf16>, vector<216x128xf32> -> vector<216x128xf32>
    %35 = arith.mulf %31, %34 : vector<216x128xf32>
    %36 = arith.addf %19, %35 : vector<216x128xf32>
    %c2 = arith.constant 2 : index
    %c0_26 = arith.constant 0 : index
    %c0_27 = arith.constant 0 : index
    %37 = vector.load %arg4[%c2, %c0_26, %c0_27] : memref<8x216x40xf32, #tpu.memory_space<vmem>>, vector<1x216x40xf32>
    %38 = vector.shape_cast %37 : vector<1x216x40xf32> to vector<216x40xf32>
    %cst_28 = arith.constant dense<0.000000e+00> : vector<216x128xf32>
    %39 = tpu.matmul %38, %0, %cst_28 {dimension_numbers = #tpu.dot_dimension_numbers<[1], [0], [0], [1], [0, 0, 1, 1], [], []>} : vector<216x40xf32>, vector<40x128xf32>, vector<216x128xf32> -> vector<216x128xf32>
    %cst_29 = arith.constant 0.000000e+00 : f32
    %40 = vector.broadcast %cst_29 : f32 to vector<216x128xf32>
    %41 = arith.maximumf %39, %40 : vector<216x128xf32>
    %42 = math.sqrt %41 : vector<216x128xf32>
    %cst_30 = arith.constant 1.15470052 : f32
    %43 = vector.broadcast %cst_30 : f32 to vector<216x128xf32>
    %44 = arith.mulf %42, %43 : vector<216x128xf32>
    %cst_31 = arith.constant 1.000000e+00 : f32
    %45 = vector.broadcast %cst_31 : f32 to vector<216x128xf32>
    %46 = arith.subf %45, %44 : vector<216x128xf32>
    %cst_32 = arith.constant 0.000000e+00 : f32
    %47 = vector.broadcast %cst_32 : f32 to vector<216x128xf32>
    %48 = arith.maximumf %46, %47 : vector<216x128xf32>
    %c2_33 = arith.constant 2 : index
    %c0_34 = arith.constant 0 : index
    %c0_35 = arith.constant 0 : index
    %49 = vector.load %arg5[%c2_33, %c0_34, %c0_35] : memref<8x216x64xbf16, #tpu.memory_space<vmem>>, vector<1x216x64xbf16>
    %50 = vector.shape_cast %49 : vector<1x216x64xbf16> to vector<216x64xbf16>
    %cst_36 = arith.constant dense<0.000000e+00> : vector<216x128xf32>
    %51 = tpu.matmul %50, %1, %cst_36 {dimension_numbers = #tpu.dot_dimension_numbers<[1], [0], [0], [1], [0, 0, 1, 1], [], []>} : vector<216x64xbf16>, vector<64x128xbf16>, vector<216x128xf32> -> vector<216x128xf32>
    %52 = arith.mulf %48, %51 : vector<216x128xf32>
    %53 = arith.addf %36, %52 : vector<216x128xf32>
    %c3 = arith.constant 3 : index
    %c0_37 = arith.constant 0 : index
    %c0_38 = arith.constant 0 : index
    %54 = vector.load %arg4[%c3, %c0_37, %c0_38] : memref<8x216x40xf32, #tpu.memory_space<vmem>>, vector<1x216x40xf32>
    %55 = vector.shape_cast %54 : vector<1x216x40xf32> to vector<216x40xf32>
    %cst_39 = arith.constant dense<0.000000e+00> : vector<216x128xf32>
    %56 = tpu.matmul %55, %0, %cst_39 {dimension_numbers = #tpu.dot_dimension_numbers<[1], [0], [0], [1], [0, 0, 1, 1], [], []>} : vector<216x40xf32>, vector<40x128xf32>, vector<216x128xf32> -> vector<216x128xf32>
    %cst_40 = arith.constant 0.000000e+00 : f32
    %57 = vector.broadcast %cst_40 : f32 to vector<216x128xf32>
    %58 = arith.maximumf %56, %57 : vector<216x128xf32>
    %59 = math.sqrt %58 : vector<216x128xf32>
    %cst_41 = arith.constant 1.15470052 : f32
    %60 = vector.broadcast %cst_41 : f32 to vector<216x128xf32>
    %61 = arith.mulf %59, %60 : vector<216x128xf32>
    %cst_42 = arith.constant 1.000000e+00 : f32
    %62 = vector.broadcast %cst_42 : f32 to vector<216x128xf32>
    %63 = arith.subf %62, %61 : vector<216x128xf32>
    %cst_43 = arith.constant 0.000000e+00 : f32
    %64 = vector.broadcast %cst_43 : f32 to vector<216x128xf32>
    %65 = arith.maximumf %63, %64 : vector<216x128xf32>
    %c3_44 = arith.constant 3 : index
    %c0_45 = arith.constant 0 : index
    %c0_46 = arith.constant 0 : index
    %66 = vector.load %arg5[%c3_44, %c0_45, %c0_46] : memref<8x216x64xbf16, #tpu.memory_space<vmem>>, vector<1x216x64xbf16>
    %67 = vector.shape_cast %66 : vector<1x216x64xbf16> to vector<216x64xbf16>
    %cst_47 = arith.constant dense<0.000000e+00> : vector<216x128xf32>
    %68 = tpu.matmul %67, %1, %cst_47 {dimension_numbers = #tpu.dot_dimension_numbers<[1], [0], [0], [1], [0, 0, 1, 1], [], []>} : vector<216x64xbf16>, vector<64x128xbf16>, vector<216x128xf32> -> vector<216x128xf32>
    %69 = arith.mulf %65, %68 : vector<216x128xf32>
    %70 = arith.addf %53, %69 : vector<216x128xf32>
    %c4 = arith.constant 4 : index
    %c0_48 = arith.constant 0 : index
    %c0_49 = arith.constant 0 : index
    %71 = vector.load %arg4[%c4, %c0_48, %c0_49] : memref<8x216x40xf32, #tpu.memory_space<vmem>>, vector<1x216x40xf32>
    %72 = vector.shape_cast %71 : vector<1x216x40xf32> to vector<216x40xf32>
    %cst_50 = arith.constant dense<0.000000e+00> : vector<216x128xf32>
    %73 = tpu.matmul %72, %0, %cst_50 {dimension_numbers = #tpu.dot_dimension_numbers<[1], [0], [0], [1], [0, 0, 1, 1], [], []>} : vector<216x40xf32>, vector<40x128xf32>, vector<216x128xf32> -> vector<216x128xf32>
    %cst_51 = arith.constant 0.000000e+00 : f32
    %74 = vector.broadcast %cst_51 : f32 to vector<216x128xf32>
    %75 = arith.maximumf %73, %74 : vector<216x128xf32>
    %76 = math.sqrt %75 : vector<216x128xf32>
    %cst_52 = arith.constant 1.15470052 : f32
    %77 = vector.broadcast %cst_52 : f32 to vector<216x128xf32>
    %78 = arith.mulf %76, %77 : vector<216x128xf32>
    %cst_53 = arith.constant 1.000000e+00 : f32
    %79 = vector.broadcast %cst_53 : f32 to vector<216x128xf32>
    %80 = arith.subf %79, %78 : vector<216x128xf32>
    %cst_54 = arith.constant 0.000000e+00 : f32
    %81 = vector.broadcast %cst_54 : f32 to vector<216x128xf32>
    %82 = arith.maximumf %80, %81 : vector<216x128xf32>
    %c4_55 = arith.constant 4 : index
    %c0_56 = arith.constant 0 : index
    %c0_57 = arith.constant 0 : index
    %83 = vector.load %arg5[%c4_55, %c0_56, %c0_57] : memref<8x216x64xbf16, #tpu.memory_space<vmem>>, vector<1x216x64xbf16>
    %84 = vector.shape_cast %83 : vector<1x216x64xbf16> to vector<216x64xbf16>
    %cst_58 = arith.constant dense<0.000000e+00> : vector<216x128xf32>
    %85 = tpu.matmul %84, %1, %cst_58 {dimension_numbers = #tpu.dot_dimension_numbers<[1], [0], [0], [1], [0, 0, 1, 1], [], []>} : vector<216x64xbf16>, vector<64x128xbf16>, vector<216x128xf32> -> vector<216x128xf32>
    %86 = arith.mulf %82, %85 : vector<216x128xf32>
    %87 = arith.addf %70, %86 : vector<216x128xf32>
    %c5 = arith.constant 5 : index
    %c0_59 = arith.constant 0 : index
    %c0_60 = arith.constant 0 : index
    %88 = vector.load %arg4[%c5, %c0_59, %c0_60] : memref<8x216x40xf32, #tpu.memory_space<vmem>>, vector<1x216x40xf32>
    %89 = vector.shape_cast %88 : vector<1x216x40xf32> to vector<216x40xf32>
    %cst_61 = arith.constant dense<0.000000e+00> : vector<216x128xf32>
    %90 = tpu.matmul %89, %0, %cst_61 {dimension_numbers = #tpu.dot_dimension_numbers<[1], [0], [0], [1], [0, 0, 1, 1], [], []>} : vector<216x40xf32>, vector<40x128xf32>, vector<216x128xf32> -> vector<216x128xf32>
    %cst_62 = arith.constant 0.000000e+00 : f32
    %91 = vector.broadcast %cst_62 : f32 to vector<216x128xf32>
    %92 = arith.maximumf %90, %91 : vector<216x128xf32>
    %93 = math.sqrt %92 : vector<216x128xf32>
    %cst_63 = arith.constant 1.15470052 : f32
    %94 = vector.broadcast %cst_63 : f32 to vector<216x128xf32>
    %95 = arith.mulf %93, %94 : vector<216x128xf32>
    %cst_64 = arith.constant 1.000000e+00 : f32
    %96 = vector.broadcast %cst_64 : f32 to vector<216x128xf32>
    %97 = arith.subf %96, %95 : vector<216x128xf32>
    %cst_65 = arith.constant 0.000000e+00 : f32
    %98 = vector.broadcast %cst_65 : f32 to vector<216x128xf32>
    %99 = arith.maximumf %97, %98 : vector<216x128xf32>
    %c5_66 = arith.constant 5 : index
    %c0_67 = arith.constant 0 : index
    %c0_68 = arith.constant 0 : index
    %100 = vector.load %arg5[%c5_66, %c0_67, %c0_68] : memref<8x216x64xbf16, #tpu.memory_space<vmem>>, vector<1x216x64xbf16>
    %101 = vector.shape_cast %100 : vector<1x216x64xbf16> to vector<216x64xbf16>
    %cst_69 = arith.constant dense<0.000000e+00> : vector<216x128xf32>
    %102 = tpu.matmul %101, %1, %cst_69 {dimension_numbers = #tpu.dot_dimension_numbers<[1], [0], [0], [1], [0, 0, 1, 1], [], []>} : vector<216x64xbf16>, vector<64x128xbf16>, vector<216x128xf32> -> vector<216x128xf32>
    %103 = arith.mulf %99, %102 : vector<216x128xf32>
    %104 = arith.addf %87, %103 : vector<216x128xf32>
    %c6 = arith.constant 6 : index
    %c0_70 = arith.constant 0 : index
    %c0_71 = arith.constant 0 : index
    %105 = vector.load %arg4[%c6, %c0_70, %c0_71] : memref<8x216x40xf32, #tpu.memory_space<vmem>>, vector<1x216x40xf32>
    %106 = vector.shape_cast %105 : vector<1x216x40xf32> to vector<216x40xf32>
    %cst_72 = arith.constant dense<0.000000e+00> : vector<216x128xf32>
    %107 = tpu.matmul %106, %0, %cst_72 {dimension_numbers = #tpu.dot_dimension_numbers<[1], [0], [0], [1], [0, 0, 1, 1], [], []>} : vector<216x40xf32>, vector<40x128xf32>, vector<216x128xf32> -> vector<216x128xf32>
    %cst_73 = arith.constant 0.000000e+00 : f32
    %108 = vector.broadcast %cst_73 : f32 to vector<216x128xf32>
    %109 = arith.maximumf %107, %108 : vector<216x128xf32>
    %110 = math.sqrt %109 : vector<216x128xf32>
    %cst_74 = arith.constant 1.15470052 : f32
    %111 = vector.broadcast %cst_74 : f32 to vector<216x128xf32>
    %112 = arith.mulf %110, %111 : vector<216x128xf32>
    %cst_75 = arith.constant 1.000000e+00 : f32
    %113 = vector.broadcast %cst_75 : f32 to vector<216x128xf32>
    %114 = arith.subf %113, %112 : vector<216x128xf32>
    %cst_76 = arith.constant 0.000000e+00 : f32
    %115 = vector.broadcast %cst_76 : f32 to vector<216x128xf32>
    %116 = arith.maximumf %114, %115 : vector<216x128xf32>
    %c6_77 = arith.constant 6 : index
    %c0_78 = arith.constant 0 : index
    %c0_79 = arith.constant 0 : index
    %117 = vector.load %arg5[%c6_77, %c0_78, %c0_79] : memref<8x216x64xbf16, #tpu.memory_space<vmem>>, vector<1x216x64xbf16>
    %118 = vector.shape_cast %117 : vector<1x216x64xbf16> to vector<216x64xbf16>
    %cst_80 = arith.constant dense<0.000000e+00> : vector<216x128xf32>
    %119 = tpu.matmul %118, %1, %cst_80 {dimension_numbers = #tpu.dot_dimension_numbers<[1], [0], [0], [1], [0, 0, 1, 1], [], []>} : vector<216x64xbf16>, vector<64x128xbf16>, vector<216x128xf32> -> vector<216x128xf32>
    %120 = arith.mulf %116, %119 : vector<216x128xf32>
    %121 = arith.addf %104, %120 : vector<216x128xf32>
    %c7 = arith.constant 7 : index
    %c0_81 = arith.constant 0 : index
    %c0_82 = arith.constant 0 : index
    %122 = vector.load %arg4[%c7, %c0_81, %c0_82] : memref<8x216x40xf32, #tpu.memory_space<vmem>>, vector<1x216x40xf32>
    %123 = vector.shape_cast %122 : vector<1x216x40xf32> to vector<216x40xf32>
    %cst_83 = arith.constant dense<0.000000e+00> : vector<216x128xf32>
    %124 = tpu.matmul %123, %0, %cst_83 {dimension_numbers = #tpu.dot_dimension_numbers<[1], [0], [0], [1], [0, 0, 1, 1], [], []>} : vector<216x40xf32>, vector<40x128xf32>, vector<216x128xf32> -> vector<216x128xf32>
    %cst_84 = arith.constant 0.000000e+00 : f32
    %125 = vector.broadcast %cst_84 : f32 to vector<216x128xf32>
    %126 = arith.maximumf %124, %125 : vector<216x128xf32>
    %127 = math.sqrt %126 : vector<216x128xf32>
    %cst_85 = arith.constant 1.15470052 : f32
    %128 = vector.broadcast %cst_85 : f32 to vector<216x128xf32>
    %129 = arith.mulf %127, %128 : vector<216x128xf32>
    %cst_86 = arith.constant 1.000000e+00 : f32
    %130 = vector.broadcast %cst_86 : f32 to vector<216x128xf32>
    %131 = arith.subf %130, %129 : vector<216x128xf32>
    %cst_87 = arith.constant 0.000000e+00 : f32
    %132 = vector.broadcast %cst_87 : f32 to vector<216x128xf32>
    %133 = arith.maximumf %131, %132 : vector<216x128xf32>
    %c7_88 = arith.constant 7 : index
    %c0_89 = arith.constant 0 : index
    %c0_90 = arith.constant 0 : index
    %134 = vector.load %arg5[%c7_88, %c0_89, %c0_90] : memref<8x216x64xbf16, #tpu.memory_space<vmem>>, vector<1x216x64xbf16>
    %135 = vector.shape_cast %134 : vector<1x216x64xbf16> to vector<216x64xbf16>
    %cst_91 = arith.constant dense<0.000000e+00> : vector<216x128xf32>
    %136 = tpu.matmul %135, %1, %cst_91 {dimension_numbers = #tpu.dot_dimension_numbers<[1], [0], [0], [1], [0, 0, 1, 1], [], []>} : vector<216x64xbf16>, vector<64x128xbf16>, vector<216x128xf32> -> vector<216x128xf32>
    %137 = arith.mulf %133, %136 : vector<216x128xf32>
    %138 = arith.addf %121, %137 : vector<216x128xf32>
    %c0_92 = arith.constant 0 : index
    %c0_93 = arith.constant 0 : index
    %139 = vector.load %arg6[%c0_92, %c0_93] : memref<8x216xf32, #tpu.memory_space<vmem>>, vector<8x216xf32>
    %cst_94 = arith.constant dense<0.000000e+00> : vector<8x128xf32>
    %140 = tpu.matmul %139, %138, %cst_94 {dimension_numbers = #tpu.dot_dimension_numbers<[1], [0], [0], [1], [0, 0, 1, 1], [], []>} : vector<8x216xf32>, vector<216x128xf32>, vector<8x128xf32> -> vector<8x128xf32>
    %cst_95 = arith.constant dense<0.000000e+00> : vector<128xf32>
    %141 = vector.multi_reduction <add>, %140, %cst_95 [0] : vector<8x128xf32> to vector<128xf32>
    %142 = vector.shape_cast %141 : vector<128xf32> to vector<1x128xf32>
    %cst_96 = arith.constant 8.000000e+00 : f32
    %143 = vector.broadcast %cst_96 : f32 to vector<1x128xf32>
    %144 = arith.divf %142, %143 : vector<1x128xf32>
    %145 = vector.broadcast %144 : vector<1x128xf32> to vector<8x128xf32>
    %146 = arith.subf %140, %145 : vector<8x128xf32>
    %147 = arith.mulf %146, %146 : vector<8x128xf32>
    %cst_97 = arith.constant dense<0.000000e+00> : vector<128xf32>
    %148 = vector.multi_reduction <add>, %147, %cst_97 [0] : vector<8x128xf32> to vector<128xf32>
    %149 = vector.shape_cast %148 : vector<128xf32> to vector<1x128xf32>
    %cst_98 = arith.constant 8.000000e+00 : f32
    %150 = vector.broadcast %cst_98 : f32 to vector<1x128xf32>
    %151 = arith.divf %149, %150 : vector<1x128xf32>
    %152 = vector.broadcast %144 : vector<1x128xf32> to vector<8x128xf32>
    %153 = arith.subf %140, %152 : vector<8x128xf32>
    %cst_99 = arith.constant 9.99999974E-6 : f32
    %154 = vector.broadcast %cst_99 : f32 to vector<1x128xf32>
    %155 = arith.addf %151, %154 : vector<1x128xf32>
    %156 = math.rsqrt %155 : vector<1x128xf32>
    %157 = vector.broadcast %156 : vector<1x128xf32> to vector<8x128xf32>
    %158 = arith.mulf %153, %157 : vector<8x128xf32>
    %c0_100 = arith.constant 0 : index
    %c0_101 = arith.constant 0 : index
    %159 = vector.load %arg7[%c0_100, %c0_101] : memref<8x1xf32, #tpu.memory_space<vmem>>, vector<8x1xf32>
    %160 = vector.broadcast %159 : vector<8x1xf32> to vector<8x128xf32>
    %161 = arith.mulf %158, %160 : vector<8x128xf32>
    %c0_102 = arith.constant 0 : index
    %c0_103 = arith.constant 0 : index
    %162 = vector.load %arg8[%c0_102, %c0_103] : memref<8x1xf32, #tpu.memory_space<vmem>>, vector<8x1xf32>
    %163 = vector.broadcast %162 : vector<8x1xf32> to vector<8x128xf32>
    %164 = arith.addf %161, %163 : vector<8x128xf32>
    %cst_104 = arith.constant 0.000000e+00 : f32
    %165 = vector.broadcast %cst_104 : f32 to vector<8x128xf32>
    %166 = arith.cmpf oge, %164, %165 : vector<8x128xf32>
    %cst_105 = arith.constant 0.00999999977 : f32
    %167 = vector.broadcast %cst_105 : f32 to vector<8x128xf32>
    %168 = arith.mulf %167, %164 : vector<8x128xf32>
    %169 = arith.select %166, %164, %168 : vector<8x128xi1>, vector<8x128xf32>
    %c0_106 = arith.constant 0 : index
    %c0_107 = arith.constant 0 : index
    %170 = vector.load %arg3[%c0_106, %c0_107] : memref<8x128xf32, #tpu.memory_space<vmem>>, vector<8x128xf32>
    %171 = tpu.concatenate %169, %170 in 0 : vector<8x128xf32>, vector<8x128xf32> -> vector<16x128xf32>
    %c0_108 = arith.constant 0 : index
    %c0_109 = arith.constant 0 : index
    %172 = vector.load %arg9[%c0_108, %c0_109] : memref<16x16xf32, #tpu.memory_space<vmem>>, vector<16x16xf32>
    %cst_110 = arith.constant dense<0.000000e+00> : vector<16x128xf32>
    %173 = tpu.matmul %172, %171, %cst_110 {dimension_numbers = #tpu.dot_dimension_numbers<[1], [0], [0], [1], [0, 0, 1, 1], [], []>} : vector<16x16xf32>, vector<16x128xf32>, vector<16x128xf32> -> vector<16x128xf32>
    %c0_111 = arith.constant 0 : index
    %c0_112 = arith.constant 0 : index
    %174 = vector.load %arg10[%c0_111, %c0_112] : memref<16x1xf32, #tpu.memory_space<vmem>>, vector<16x1xf32>
    %175 = vector.broadcast %174 : vector<16x1xf32> to vector<16x128xf32>
    %176 = arith.addf %173, %175 : vector<16x128xf32>
    %c0_113 = arith.constant 0 : index
    %c0_114 = arith.constant 0 : index
    %177 = vector.load %arg11[%c0_113, %c0_114] : memref<16x128xf32, #tpu.memory_space<vmem>>, vector<16x128xf32>
    tpu.vector_store %arg11[%c0_113, %c0_114], %176 {strides = array<i32>} : memref<16x128xf32, #tpu.memory_space<vmem>>, vector<16x128xf32>,
    return
  }
  func.func @transform_0(%arg0: i32) -> (i32, i32) {
    %c0_i32 = arith.constant 0 : i32
    %c0_i32_0 = arith.constant 0 : i32
    return %c0_i32, %arg0 : i32, i32
  }
  func.func @transform_1(%arg0: i32) -> (i32, i32) {
    %c0_i32 = arith.constant 0 : i32
    %c0_i32_0 = arith.constant 0 : i32
    return %c0_i32, %arg0 : i32, i32
  }
  func.func @transform_2(%arg0: i32) -> (i32, i32) {
    %c0_i32 = arith.constant 0 : i32
    %c0_i32_0 = arith.constant 0 : i32
    return %c0_i32, %arg0 : i32, i32
  }
  func.func @transform_3(%arg0: i32) -> (i32, i32, i32) {
    %c0_i32 = arith.constant 0 : i32
    %c0_i32_0 = arith.constant 0 : i32
    %c0_i32_1 = arith.constant 0 : i32
    %c0_i32_2 = arith.constant 0 : i32
    return %c0_i32, %c0_i32_0, %c0_i32_1 : i32, i32, i32
  }
  func.func @transform_4(%arg0: i32) -> (i32, i32, i32) {
    %c0_i32 = arith.constant 0 : i32
    %c0_i32_0 = arith.constant 0 : i32
    %c0_i32_1 = arith.constant 0 : i32
    %c0_i32_2 = arith.constant 0 : i32
    return %c0_i32, %c0_i32_0, %c0_i32_1 : i32, i32, i32
  }
  func.func @transform_5(%arg0: i32) -> (i32, i32) {
    %c0_i32 = arith.constant 0 : i32
    %c0_i32_0 = arith.constant 0 : i32
    %c0_i32_1 = arith.constant 0 : i32
    return %c0_i32, %c0_i32_0 : i32, i32
  }
  func.func @transform_6(%arg0: i32) -> (i32, i32) {
    %c0_i32 = arith.constant 0 : i32
    %c0_i32_0 = arith.constant 0 : i32
    %c0_i32_1 = arith.constant 0 : i32
    return %c0_i32, %c0_i32_0 : i32, i32
  }
  func.func @transform_7(%arg0: i32) -> (i32, i32) {
    %c0_i32 = arith.constant 0 : i32
    %c0_i32_0 = arith.constant 0 : i32
    %c0_i32_1 = arith.constant 0 : i32
    return %c0_i32, %c0_i32_0 : i32, i32
  }
  func.func @transform_8(%arg0: i32) -> (i32, i32) {
    %c0_i32 = arith.constant 0 : i32
    %c0_i32_0 = arith.constant 0 : i32
    %c0_i32_1 = arith.constant 0 : i32
    return %c0_i32, %c0_i32_0 : i32, i32
  }
  func.func @transform_9(%arg0: i32) -> (i32, i32) {
    %c0_i32 = arith.constant 0 : i32
    %c0_i32_0 = arith.constant 0 : i32
    %c0_i32_1 = arith.constant 0 : i32
    return %c0_i32, %c0_i32_0 : i32, i32
  }
  func.func @transform_10(%arg0: i32) -> (i32, i32) {
    %c0_i32 = arith.constant 0 : i32
    %c0_i32_0 = arith.constant 0 : i32
    return %c0_i32, %arg0 : i32, i32
  }
}

</mosaic_0001>

<llo_original>
// kernel: tile.9
$region0: #{tile.9}
  %s0 = inlined_call_operand.vmem [shape: f32[27,8,8], index: 0, kind: input, shape index: {}]
  %s1 = inlined_call_operand.vmem [shape: f32[216,8], index: 1, kind: output, shape index: {}]
  %s2 = smov 3
  %v3 = vld [vmem:[%s0] ss:$16 sm:%s2]
  %s4 = smov 12
  %v5 = vld [vmem:[%s0] ss:$16 sm:%s4]
  %vm6 = vcmask 1043458
  %v7 = vsel %vm6, %v5, %v3
  %s8 = smov 48
  %v9 = vld [vmem:[%s0] ss:$16 sm:%s8]
  %vm10 = vcmask 1045508
  %v11 = vsel %vm10, %v9, %v7
  %s12 = smov 192
  %v13 = vld [vmem:[%s0] ss:$16 sm:%s12]
  %vm14 = vcmask 1047558
  %v15 = vsel %vm14, %v13, %v11
  %vm16 = vcmask 64512
  %17 = vst.msk [vmem:[%s1] ss:$8 sm:$0x3] %vm16, %v15
  %s18 = scalar_lea.vmem %s1, 4294967281
  %19 = vst.msk [vmem:[%s18] ss:$8 sm:$0xc] %vm16, %v15
  %s20 = scalar_lea.vmem %s1, 4294967266
  %21 = vst.msk [vmem:[%s20] ss:$8 sm:$0x30] %vm16, %v15
  %s22 = scalar_lea.vmem %s1, 4294967251
  %23 = vst.msk [vmem:[%s22] ss:$8 sm:$0xc0] %vm16, %v15
  %s24 = scalar_lea.vmem %s0, 128
  %s25 = smov 3
  %v26 = vld [vmem:[%s24] ss:$16 sm:%s25]
  %s27 = scalar_lea.vmem %s0, 128
  %s28 = smov 12
  %v29 = vld [vmem:[%s27] ss:$16 sm:%s28]
  %vm30 = vcmask 1043458
  %v31 = vsel %vm30, %v29, %v26
  %s32 = scalar_lea.vmem %s0, 128
  %s33 = smov 48
  %v34 = vld [vmem:[%s32] ss:$16 sm:%s33]
  %vm35 = vcmask 1045508
  %v36 = vsel %vm35, %v34, %v31
  %s37 = scalar_lea.vmem %s0, 128
  %s38 = smov 192
  %v39 = vld [vmem:[%s37] ss:$16 sm:%s38]
  %vm40 = vcmask 1047558
  %v41 = vsel %vm40, %v39, %v36
  %vm42 = vcmask 64512
  %s43 = scalar_lea.vmem %s1, 4
  %44 = vst.msk [vmem:[%s43] ss:$8 sm:$0x3] %vm42, %v41
  %s45 = scalar_lea.vmem %s1, 4294967285
  %46 = vst.msk [vmem:[%s45] ss:$8 sm:$0xc] %vm42, %v41
  %s47 = scalar_lea.vmem %s1, 4294967270
  %48 = vst.msk [vmem:[%s47] ss:$8 sm:$0x30] %vm42, %v41
  %s49 = scalar_lea.vmem %s1, 4294967255
  %50 = vst.msk [vmem:[%s49] ss:$8 sm:$0xc0] %vm42, %v41
  %s51 = scalar_lea.vmem %s0, 15
  %v52 = vld [vmem:[%s51] sm:$0x1]
  %s53 = scalar_lea.vmem %s0, 46
  %v54 = vld [vmem:[%s53] sm:$0x2]
  %vm55 = vcmask 1041409
  %v56 = vsel %vm55, %v54, %v52
  %s57 = scalar_lea.vmem %s0, 77
  %v58 = vld [vmem:[%s57] sm:$0x4]
  %vm59 = vcmask 1042434
  %v60 = vsel %vm59, %v58, %v56
  %s61 = scalar_lea.vmem %s0, 108
  %v62 = vld [vmem:[%s61] sm:$0x8]
  %vm63 = vcmask 1043459
  %v64 = vsel %vm63, %v62, %v60
  %s65 = scalar_lea.vmem %s0, 139
  %v66 = vld [vmem:[%s65] sm:$0x10]
  %vm67 = vcmask 1044484
  %v68 = vsel %vm67, %v66, %v64
  %s69 = scalar_lea.vmem %s0, 170
  %v70 = vld [vmem:[%s69] sm:$0x20]
  %vm71 = vcmask 1045509
  %v72 = vsel %vm71, %v70, %v68
  %s73 = scalar_lea.vmem %s0, 201
  %v74 = vld [vmem:[%s73] sm:$0x40]
  %vm75 = vcmask 1046534
  %v76 = vsel %vm75, %v74, %v72
  %s77 = scalar_lea.vmem %s0, 232
  %v78 = vld [vmem:[%s77] sm:$0x80]
  %vm79 = vcmask 1047559
  %v80 = vsel %vm79, %v78, %v76
  %81 = vrot.lane.b32.xlu0 %v80, 120
  %v82 = vpop.permute.xlu0 %81
  %vm83 = vcmask 1048512
  %84 = vst.msk [vmem:[%s1] sm:$0xff] %vm83, %v82
  %s85 = scalar_lea.vmem %s0, 14
  %v86 = vld [vmem:[%s85] sm:$0x1]
  %s87 = scalar_lea.vmem %s0, 45
  %v88 = vld [vmem:[%s87] sm:$0x2]
  %vm89 = vcmask 1041409
  %v90 = vsel %vm89, %v88, %v86
  %s91 = scalar_lea.vmem %s0, 76
  %v92 = vld [vmem:[%s91] sm:$0x4]
  %vm93 = vcmask 1042434
  %v94 = vsel %vm93, %v92, %v90
  %s95 = scalar_lea.vmem %s0, 107
  %v96 = vld [vmem:[%s95] sm:$0x8]
  %vm97 = vcmask 1043459
  %v98 = vsel %vm97, %v96, %v94
  %s99 = scalar_lea.vmem %s0, 138
  %v100 = vld [vmem:[%s99] sm:$0x10]
  %vm101 = vcmask 1044484
  %v102 = vsel %vm101, %v100, %v98
  %s103 = scalar_lea.vmem %s0, 169
  %v104 = vld [vmem:[%s103] sm:$0x20]
  %vm105 = vcmask 1045509
  %v106 = vsel %vm105, %v104, %v102
  %s107 = scalar_lea.vmem %s0, 200
  %v108 = vld [vmem:[%s107] sm:$0x40]
  %vm109 = vcmask 1046534
  %v110 = vsel %vm109, %v108, %v106
  %s111 = scalar_lea.vmem %s0, 231
  %v112 = vld [vmem:[%s111] sm:$0x80]
  %vm113 = vcmask 1047559
  %v114 = vsel %vm113, %v112, %v110
  %115 = vrot.lane.b32.xlu0 %v114, 112
  %v116 = vpop.permute.xlu0 %115
  %vm117 = vcmask 982912
  %118 = vst.msk [vmem:[%s1] sm:$0xff] %vm117, %v116
  %s119 = scalar_lea.vmem %s0, 13
  %v120 = vld [vmem:[%s119] sm:$0x1]
  %s121 = scalar_lea.vmem %s0, 44
  %v122 = vld [vmem:[%s121] sm:$0x2]
  %vm123 = vcmask 1041409
  %v124 = vsel %vm123, %v122, %v120
  %s125 = scalar_lea.vmem %s0, 75
  %v126 = vld [vmem:[%s125] sm:$0x4]
  %vm127 = vcmask 1042434
  %v128 = vsel %vm127, %v126, %v124
  %s129 = scalar_lea.vmem %s0, 106
  %v130 = vld [vmem:[%s129] sm:$0x8]
  %vm131 = vcmask 1043459
  %v132 = vsel %vm131, %v130, %v128
  %s133 = scalar_lea.vmem %s0, 137
  %v134 = vld [vmem:[%s133] sm:$0x10]
  %vm135 = vcmask 1044484
  %v136 = vsel %vm135, %v134, %v132
  %s137 = scalar_lea.vmem %s0, 168
  %v138 = vld [vmem:[%s137] sm:$0x20]
  %vm139 = vcmask 1045509
  %v140 = vsel %vm139, %v138, %v136
  %s141 = scalar_lea.vmem %s0, 199
  %v142 = vld [vmem:[%s141] sm:$0x40]
  %vm143 = vcmask 1046534
  %v144 = vsel %vm143, %v142, %v140
  %s145 = scalar_lea.vmem %s0, 230
  %v146 = vld [vmem:[%s145] sm:$0x80]
  %vm147 = vcmask 1047559
  %v148 = vsel %vm147, %v146, %v144
  %149 = vrot.lane.b32.xlu0 %v148, 104
  %v150 = vpop.permute.xlu0 %149
  %vm151 = vcmask 917312
  %152 = vst.msk [vmem:[%s1] sm:$0xff] %vm151, %v150
  %s153 = scalar_lea.vmem %s0, 12
  %v154 = vld [vmem:[%s153] sm:$0x1]
  %s155 = scalar_lea.vmem %s0, 43
  %v156 = vld [vmem:[%s155] sm:$0x2]
  %vm157 = vcmask 1041409
  %v158 = vsel %vm157, %v156, %v154
  %s159 = scalar_lea.vmem %s0, 74
  %v160 = vld [vmem:[%s159] sm:$0x4]
  %vm161 = vcmask 1042434
  %v162 = vsel %vm161, %v160, %v158
  %s163 = scalar_lea.vmem %s0, 105
  %v164 = vld [vmem:[%s163] sm:$0x8]
  %vm165 = vcmask 1043459
  %v166 = vsel %vm165, %v164, %v162
  %s167 = scalar_lea.vmem %s0, 136
  %v168 = vld [vmem:[%s167] sm:$0x10]
  %vm169 = vcmask 1044484
  %v170 = vsel %vm169, %v168, %v166
  %s171 = scalar_lea.vmem %s0, 167
  %v172 = vld [vmem:[%s171] sm:$0x20]
  %vm173 = vcmask 1045509
  %v174 = vsel %vm173, %v172, %v170
  %s175 = scalar_lea.vmem %s0, 198
  %v176 = vld [vmem:[%s175] sm:$0x40]
  %vm177 = vcmask 1046534
  %v178 = vsel %vm177, %v176, %v174
  %s179 = scalar_lea.vmem %s0, 229
  %v180 = vld [vmem:[%s179] sm:$0x80]
  %vm181 = vcmask 1047559
  %v182 = vsel %vm181, %v180, %v178
  %183 = vrot.lane.b32.xlu0 %v182, 96
  %v184 = vpop.permute.xlu0 %183
  %vm185 = vcmask 851712
  %186 = vst.msk [vmem:[%s1] sm:$0xff] %vm185, %v184
  %s187 = scalar_lea.vmem %s0, 11
  %v188 = vld [vmem:[%s187] sm:$0x1]
  %s189 = scalar_lea.vmem %s0, 42
  %v190 = vld [vmem:[%s189] sm:$0x2]
  %vm191 = vcmask 1041409
  %v192 = vsel %vm191, %v190, %v188
  %s193 = scalar_lea.vmem %s0, 73
  %v194 = vld [vmem:[%s193] sm:$0x4]
  %vm195 = vcmask 1042434
  %v196 = vsel %vm195, %v194, %v192
  %s197 = scalar_lea.vmem %s0, 104
  %v198 = vld [vmem:[%s197] sm:$0x8]
  %vm199 = vcmask 1043459
  %v200 = vsel %vm199, %v198, %v196
  %s201 = scalar_lea.vmem %s0, 135
  %v202 = vld [vmem:[%s201] sm:$0x10]
  %vm203 = vcmask 1044484
  %v204 = vsel %vm203, %v202, %v200
  %s205 = scalar_lea.vmem %s0, 166
  %v206 = vld [vmem:[%s205] sm:$0x20]
  %vm207 = vcmask 1045509
  %v208 = vsel %vm207, %v206, %v204
  %s209 = scalar_lea.vmem %s0, 197
  %v210 = vld [vmem:[%s209] sm:$0x40]
  %vm211 = vcmask 1046534
  %v212 = vsel %vm211, %v210, %v208
  %s213 = scalar_lea.vmem %s0, 228
  %v214 = vld [vmem:[%s213] sm:$0x80]
  %vm215 = vcmask 1047559
  %v216 = vsel %vm215, %v214, %v212
  %217 = vrot.lane.b32.xlu0 %v216, 88
  %v218 = vpop.permute.xlu0 %217
  %vm219 = vcmask 786112
  %220 = vst.msk [vmem:[%s1] sm:$0xff] %vm219, %v218
  %s221 = scalar_lea.vmem %s0, 10
  %v222 = vld [vmem:[%s221] sm:$0x1]
  %s223 = scalar_lea.vmem %s0, 41
  %v224 = vld [vmem:[%s223] sm:$0x2]
  %vm225 = vcmask 1041409
  %v226 = vsel %vm225, %v224, %v222
  %s227 = scalar_lea.vmem %s0, 72
  %v228 = vld [vmem:[%s227] sm:$0x4]
  %vm229 = vcmask 1042434
  %v230 = vsel %vm229, %v228, %v226
  %s231 = scalar_lea.vmem %s0, 103
  %v232 = vld [vmem:[%s231] sm:$0x8]
  %vm233 = vcmask 1043459
  %v234 = vsel %vm233, %v232, %v230
  %s235 = scalar_lea.vmem %s0, 134
  %v236 = vld [vmem:[%s235] sm:$0x10]
  %vm237 = vcmask 1044484
  %v238 = vsel %vm237, %v236, %v234
  %s239 = scalar_lea.vmem %s0, 165
  %v240 = vld [vmem:[%s239] sm:$0x20]
  %vm241 = vcmask 1045509
  %v242 = vsel %vm241, %v240, %v238
  %s243 = scalar_lea.vmem %s0, 196
  %v244 = vld [vmem:[%s243] sm:$0x40]
  %vm245 = vcmask 1046534
  %v246 = vsel %vm245, %v244, %v242
  %s247 = scalar_lea.vmem %s0, 227
  %v248 = vld [vmem:[%s247] sm:$0x80]
  %vm249 = vcmask 1047559
  %v250 = vsel %vm249, %v248, %v246
  %251 = vrot.lane.b32.xlu0 %v250, 80
  %v252 = vpop.permute.xlu0 %251
  %vm253 = vcmask 720512
  %254 = vst.msk [vmem:[%s1] sm:$0xff] %vm253, %v252
  %s255 = scalar_lea.vmem %s0, 26
  %v256 = vld [vmem:[%s255] sm:$0x1]
  %s257 = scalar_lea.vmem %s0, 57
  %v258 = vld [vmem:[%s257] sm:$0x2]
  %vm259 = vcmask 1041409
  %v260 = vsel %vm259, %v258, %v256
  %s261 = scalar_lea.vmem %s0, 88
  %v262 = vld [vmem:[%s261] sm:$0x4]
  %vm263 = vcmask 1042434
  %v264 = vsel %vm263, %v262, %v260
  %s265 = scalar_lea.vmem %s0, 119
  %v266 = vld [vmem:[%s265] sm:$0x8]
  %vm267 = vcmask 1043459
  %v268 = vsel %vm267, %v266, %v264
  %s269 = scalar_lea.vmem %s0, 150
  %v270 = vld [vmem:[%s269] sm:$0x10]
  %vm271 = vcmask 1044484
  %v272 = vsel %vm271, %v270, %v268
  %s273 = scalar_lea.vmem %s0, 181
  %v274 = vld [vmem:[%s273] sm:$0x20]
  %vm275 = vcmask 1045509
  %v276 = vsel %vm275, %v274, %v272
  %s277 = scalar_lea.vmem %s0, 212
  %v278 = vld [vmem:[%s277] sm:$0x40]
  %vm279 = vcmask 1046534
  %v280 = vsel %vm279, %v278, %v276
  %s281 = scalar_lea.vmem %s0, 243
  %v282 = vld [vmem:[%s281] sm:$0x80]
  %vm283 = vcmask 1047559
  %v284 = vsel %vm283, %v282, %v280
  %285 = vrot.lane.b32.xlu0 %v284, 80
  %v286 = vpop.permute.xlu0 %285
  %vm287 = vcmask 720512
  %s288 = scalar_lea.vmem %s1, 8
  %289 = vst.msk [vmem:[%s288] sm:$0xff] %vm287, %v286
  %s290 = scalar_lea.vmem %s0, 9
  %v291 = vld [vmem:[%s290] sm:$0x1]
  %s292 = scalar_lea.vmem %s0, 40
  %v293 = vld [vmem:[%s292] sm:$0x2]
  %vm294 = vcmask 1041409
  %v295 = vsel %vm294, %v293, %v291
  %s296 = scalar_lea.vmem %s0, 71
  %v297 = vld [vmem:[%s296] sm:$0x4]
  %vm298 = vcmask 1042434
  %v299 = vsel %vm298, %v297, %v295
  %s300 = scalar_lea.vmem %s0, 102
  %v301 = vld [vmem:[%s300] sm:$0x8]
  %vm302 = vcmask 1043459
  %v303 = vsel %vm302, %v301, %v299
  %s304 = scalar_lea.vmem %s0, 133
  %v305 = vld [vmem:[%s304] sm:$0x10]
  %vm306 = vcmask 1044484
  %v307 = vsel %vm306, %v305, %v303
  %s308 = scalar_lea.vmem %s0, 164
  %v309 = vld [vmem:[%s308] sm:$0x20]
  %vm310 = vcmask 1045509
  %v311 = vsel %vm310, %v309, %v307
  %s312 = scalar_lea.vmem %s0, 195
  %v313 = vld [vmem:[%s312] sm:$0x40]
  %vm314 = vcmask 1046534
  %v315 = vsel %vm314, %v313, %v311
  %s316 = scalar_lea.vmem %s0, 226
  %v317 = vld [vmem:[%s316] sm:$0x80]
  %vm318 = vcmask 1047559
  %v319 = vsel %vm318, %v317, %v315
  %320 = vrot.lane.b32.xlu0 %v319, 72
  %v321 = vpop.permute.xlu0 %320
  %vm322 = vcmask 654912
  %323 = vst.msk [vmem:[%s1] sm:$0xff] %vm322, %v321
  %s324 = scalar_lea.vmem %s0, 25
  %v325 = vld [vmem:[%s324] sm:$0x1]
  %s326 = scalar_lea.vmem %s0, 56
  %v327 = vld [vmem:[%s326] sm:$0x2]
  %vm328 = vcmask 1041409
  %v329 = vsel %vm328, %v327, %v325
  %s330 = scalar_lea.vmem %s0, 87
  %v331 = vld [vmem:[%s330] sm:$0x4]
  %vm332 = vcmask 1042434
  %v333 = vsel %vm332, %v331, %v329
  %s334 = scalar_lea.vmem %s0, 118
  %v335 = vld [vmem:[%s334] sm:$0x8]
  %vm336 = vcmask 1043459
  %v337 = vsel %vm336, %v335, %v333
  %s338 = scalar_lea.vmem %s0, 149
  %v339 = vld [vmem:[%s338] sm:$0x10]
  %vm340 = vcmask 1044484
  %v341 = vsel %vm340, %v339, %v337
  %s342 = scalar_lea.vmem %s0, 180
  %v343 = vld [vmem:[%s342] sm:$0x20]
  %vm344 = vcmask 1045509
  %v345 = vsel %vm344, %v343, %v341
  %s346 = scalar_lea.vmem %s0, 211
  %v347 = vld [vmem:[%s346] sm:$0x40]
  %vm348 = vcmask 1046534
  %v349 = vsel %vm348, %v347, %v345
  %s350 = scalar_lea.vmem %s0, 242
  %v351 = vld [vmem:[%s350] sm:$0x80]
  %vm352 = vcmask 1047559
  %v353 = vsel %vm352, %v351, %v349
  %354 = vrot.lane.b32.xlu0 %v353, 72
  %v355 = vpop.permute.xlu0 %354
  %vm356 = vcmask 654912
  %s357 = scalar_lea.vmem %s1, 8
  %358 = vst.msk [vmem:[%s357] sm:$0xff] %vm356, %v355
  %s359 = scalar_lea.vmem %s0, 8
  %v360 = vld [vmem:[%s359] sm:$0x1]
  %s361 = scalar_lea.vmem %s0, 39
  %v362 = vld [vmem:[%s361] sm:$0x2]
  %vm363 = vcmask 1041409
  %v364 = vsel %vm363, %v362, %v360
  %s365 = scalar_lea.vmem %s0, 70
  %v366 = vld [vmem:[%s365] sm:$0x4]
  %vm367 = vcmask 1042434
  %v368 = vsel %vm367, %v366, %v364
  %s369 = scalar_lea.vmem %s0, 101
  %v370 = vld [vmem:[%s369] sm:$0x8]
  %vm371 = vcmask 1043459
  %v372 = vsel %vm371, %v370, %v368
  %s373 = scalar_lea.vmem %s0, 132
  %v374 = vld [vmem:[%s373] sm:$0x10]
  %vm375 = vcmask 1044484
  %v376 = vsel %vm375, %v374, %v372
  %s377 = scalar_lea.vmem %s0, 163
  %v378 = vld [vmem:[%s377] sm:$0x20]
  %vm379 = vcmask 1045509
  %v380 = vsel %vm379, %v378, %v376
  %s381 = scalar_lea.vmem %s0, 194
  %v382 = vld [vmem:[%s381] sm:$0x40]
  %vm383 = vcmask 1046534
  %v384 = vsel %vm383, %v382, %v380
  %s385 = scalar_lea.vmem %s0, 225
  %v386 = vld [vmem:[%s385] sm:$0x80]
  %vm387 = vcmask 1047559
  %v388 = vsel %vm387, %v386, %v384
  %389 = vrot.lane.b32.xlu0 %v388, 64
  %v390 = vpop.permute.xlu0 %389
  %vm391 = vcmask 589312
  %392 = vst.msk [vmem:[%s1] sm:$0xff] %vm391, %v390
  %s393 = scalar_lea.vmem %s0, 24
  %v394 = vld [vmem:[%s393] sm:$0x1]
  %s395 = scalar_lea.vmem %s0, 55
  %v396 = vld [vmem:[%s395] sm:$0x2]
  %vm397 = vcmask 1041409
  %v398 = vsel %vm397, %v396, %v394
  %s399 = scalar_lea.vmem %s0, 86
  %v400 = vld [vmem:[%s399] sm:$0x4]
  %vm401 = vcmask 1042434
  %v402 = vsel %vm401, %v400, %v398
  %s403 = scalar_lea.vmem %s0, 117
  %v404 = vld [vmem:[%s403] sm:$0x8]
  %vm405 = vcmask 1043459
  %v406 = vsel %vm405, %v404, %v402
  %s407 = scalar_lea.vmem %s0, 148
  %v408 = vld [vmem:[%s407] sm:$0x10]
  %vm409 = vcmask 1044484
  %v410 = vsel %vm409, %v408, %v406
  %s411 = scalar_lea.vmem %s0, 179
  %v412 = vld [vmem:[%s411] sm:$0x20]
  %vm413 = vcmask 1045509
  %v414 = vsel %vm413, %v412, %v410
  %s415 = scalar_lea.vmem %s0, 210
  %v416 = vld [vmem:[%s415] sm:$0x40]
  %vm417 = vcmask 1046534
  %v418 = vsel %vm417, %v416, %v414
  %s419 = scalar_lea.vmem %s0, 241
  %v420 = vld [vmem:[%s419] sm:$0x80]
  %vm421 = vcmask 1047559
  %v422 = vsel %vm421, %v420, %v418
  %423 = vrot.lane.b32.xlu0 %v422, 64
  %v424 = vpop.permute.xlu0 %423
  %vm425 = vcmask 589312
  %s426 = scalar_lea.vmem %s1, 8
  %427 = vst.msk [vmem:[%s426] sm:$0xff] %vm425, %v424
  %s428 = scalar_lea.vmem %s0, 7
  %v429 = vld [vmem:[%s428] sm:$0x1]
  %s430 = scalar_lea.vmem %s0, 38
  %v431 = vld [vmem:[%s430] sm:$0x2]
  %vm432 = vcmask 1041409
  %v433 = vsel %vm432, %v431, %v429
  %s434 = scalar_lea.vmem %s0, 69
  %v435 = vld [vmem:[%s434] sm:$0x4]
  %vm436 = vcmask 1042434
  %v437 = vsel %vm436, %v435, %v433
  %s438 = scalar_lea.vmem %s0, 100
  %v439 = vld [vmem:[%s438] sm:$0x8]
  %vm440 = vcmask 1043459
  %v441 = vsel %vm440, %v439, %v437
  %s442 = scalar_lea.vmem %s0, 131
  %v443 = vld [vmem:[%s442] sm:$0x10]
  %vm444 = vcmask 1044484
  %v445 = vsel %vm444, %v443, %v441
  %s446 = scalar_lea.vmem %s0, 162
  %v447 = vld [vmem:[%s446] sm:$0x20]
  %vm448 = vcmask 1045509
  %v449 = vsel %vm448, %v447, %v445
  %s450 = scalar_lea.vmem %s0, 193
  %v451 = vld [vmem:[%s450] sm:$0x40]
  %vm452 = vcmask 1046534
  %v453 = vsel %vm452, %v451, %v449
  %s454 = scalar_lea.vmem %s0, 224
  %v455 = vld [vmem:[%s454] sm:$0x80]
  %vm456 = vcmask 1047559
  %v457 = vsel %vm456, %v455, %v453
  %458 = vrot.lane.b32.xlu0 %v457, 56
  %v459 = vpop.permute.xlu0 %458
  %vm460 = vcmask 523712
  %461 = vst.msk [vmem:[%s1] sm:$0xff] %vm460, %v459
  %s462 = scalar_lea.vmem %s0, 23
  %v463 = vld [vmem:[%s462] sm:$0x1]
  %s464 = scalar_lea.vmem %s0, 54
  %v465 = vld [vmem:[%s464] sm:$0x2]
  %vm466 = vcmask 1041409
  %v467 = vsel %vm466, %v465, %v463
  %s468 = scalar_lea.vmem %s0, 85
  %v469 = vld [vmem:[%s468] sm:$0x4]
  %vm470 = vcmask 1042434
  %v471 = vsel %vm470, %v469, %v467
  %s472 = scalar_lea.vmem %s0, 116
  %v473 = vld [vmem:[%s472] sm:$0x8]
  %vm474 = vcmask 1043459
  %v475 = vsel %vm474, %v473, %v471
  %s476 = scalar_lea.vmem %s0, 147
  %v477 = vld [vmem:[%s476] sm:$0x10]
  %vm478 = vcmask 1044484
  %v479 = vsel %vm478, %v477, %v475
  %s480 = scalar_lea.vmem %s0, 178
  %v481 = vld [vmem:[%s480] sm:$0x20]
  %vm482 = vcmask 1045509
  %v483 = vsel %vm482, %v481, %v479
  %s484 = scalar_lea.vmem %s0, 209
  %v485 = vld [vmem:[%s484] sm:$0x40]
  %vm486 = vcmask 1046534
  %v487 = vsel %vm486, %v485, %v483
  %s488 = scalar_lea.vmem %s0, 240
  %v489 = vld [vmem:[%s488] sm:$0x80]
  %vm490 = vcmask 1047559
  %v491 = vsel %vm490, %v489, %v487
  %492 = vrot.lane.b32.xlu0 %v491, 56
  %v493 = vpop.permute.xlu0 %492
  %vm494 = vcmask 523712
  %s495 = scalar_lea.vmem %s1, 8
  %496 = vst.msk [vmem:[%s495] sm:$0xff] %vm494, %v493
  %s497 = scalar_lea.vmem %s0, 6
  %v498 = vld [vmem:[%s497] sm:$0x1]
  %s499 = scalar_lea.vmem %s0, 37
  %v500 = vld [vmem:[%s499] sm:$0x2]
  %vm501 = vcmask 1041409
  %v502 = vsel %vm501, %v500, %v498
  %s503 = scalar_lea.vmem %s0, 68
  %v504 = vld [vmem:[%s503] sm:$0x4]
  %vm505 = vcmask 1042434
  %v506 = vsel %vm505, %v504, %v502
  %s507 = scalar_lea.vmem %s0, 99
  %v508 = vld [vmem:[%s507] sm:$0x8]
  %vm509 = vcmask 1043459
  %v510 = vsel %vm509, %v508, %v506
  %s511 = scalar_lea.vmem %s0, 130
  %v512 = vld [vmem:[%s511] sm:$0x10]
  %vm513 = vcmask 1044484
  %v514 = vsel %vm513, %v512, %v510
  %s515 = scalar_lea.vmem %s0, 161
  %v516 = vld [vmem:[%s515] sm:$0x20]
  %vm517 = vcmask 1045509
  %v518 = vsel %vm517, %v516, %v514
  %s519 = scalar_lea.vmem %s0, 192
  %v520 = vld [vmem:[%s519] sm:$0x40]
  %vm521 = vcmask 1046534
  %v522 = vsel %vm521, %v520, %v518
  %s523 = scalar_lea.vmem %s0, 223
  %v524 = vld [vmem:[%s523] sm:$0x80]
  %vm525 = vcmask 1047559
  %v526 = vsel %vm525, %v524, %v522
  %527 = vrot.lane.b32.xlu0 %v526, 48
  %v528 = vpop.permute.xlu0 %527
  %vm529 = vcmask 458112
  %530 = vst.msk [vmem:[%s1] sm:$0xff] %vm529, %v528
  %s531 = scalar_lea.vmem %s0, 22
  %v532 = vld [vmem:[%s531] sm:$0x1]
  %s533 = scalar_lea.vmem %s0, 53
  %v534 = vld [vmem:[%s533] sm:$0x2]
  %vm535 = vcmask 1041409
  %v536 = vsel %vm535, %v534, %v532
  %s537 = scalar_lea.vmem %s0, 84
  %v538 = vld [vmem:[%s537] sm:$0x4]
  %vm539 = vcmask 1042434
  %v540 = vsel %vm539, %v538, %v536
  %s541 = scalar_lea.vmem %s0, 115
  %v542 = vld [vmem:[%s541] sm:$0x8]
  %vm543 = vcmask 1043459
  %v544 = vsel %vm543, %v542, %v540
  %s545 = scalar_lea.vmem %s0, 146
  %v546 = vld [vmem:[%s545] sm:$0x10]
  %vm547 = vcmask 1044484
  %v548 = vsel %vm547, %v546, %v544
  %s549 = scalar_lea.vmem %s0, 177
  %v550 = vld [vmem:[%s549] sm:$0x20]
  %vm551 = vcmask 1045509
  %v552 = vsel %vm551, %v550, %v548
  %s553 = scalar_lea.vmem %s0, 208
  %v554 = vld [vmem:[%s553] sm:$0x40]
  %vm555 = vcmask 1046534
  %v556 = vsel %vm555, %v554, %v552
  %s557 = scalar_lea.vmem %s0, 239
  %v558 = vld [vmem:[%s557] sm:$0x80]
  %vm559 = vcmask 1047559
  %v560 = vsel %vm559, %v558, %v556
  %561 = vrot.lane.b32.xlu0 %v560, 48
  %v562 = vpop.permute.xlu0 %561
  %vm563 = vcmask 458112
  %s564 = scalar_lea.vmem %s1, 8
  %565 = vst.msk [vmem:[%s564] sm:$0xff] %vm563, %v562
  %s566 = scalar_lea.vmem %s0, 5
  %v567 = vld [vmem:[%s566] sm:$0x1]
  %s568 = scalar_lea.vmem %s0, 36
  %v569 = vld [vmem:[%s568] sm:$0x2]
  %vm570 = vcmask 1041409
  %v571 = vsel %vm570, %v569, %v567
  %s572 = scalar_lea.vmem %s0, 67
  %v573 = vld [vmem:[%s572] sm:$0x4]
  %vm574 = vcmask 1042434
  %v575 = vsel %vm574, %v573, %v571
  %s576 = scalar_lea.vmem %s0, 98
  %v577 = vld [vmem:[%s576] sm:$0x8]
  %vm578 = vcmask 1043459
  %v579 = vsel %vm578, %v577, %v575
  %s580 = scalar_lea.vmem %s0, 129
  %v581 = vld [vmem:[%s580] sm:$0x10]
  %vm582 = vcmask 1044484
  %v583 = vsel %vm582, %v581, %v579
  %s584 = scalar_lea.vmem %s0, 160
  %v585 = vld [vmem:[%s584] sm:$0x20]
  %vm586 = vcmask 1045509
  %v587 = vsel %vm586, %v585, %v583
  %s588 = scalar_lea.vmem %s0, 191
  %v589 = vld [vmem:[%s588] sm:$0x40]
  %vm590 = vcmask 1046534
  %v591 = vsel %vm590, %v589, %v587
  %s592 = scalar_lea.vmem %s0, 222
  %v593 = vld [vmem:[%s592] sm:$0x80]
  %vm594 = vcmask 1047559
  %v595 = vsel %vm594, %v593, %v591
  %596 = vrot.lane.b32.xlu0 %v595, 40
  %v597 = vpop.permute.xlu0 %596
  %vm598 = vcmask 392512
  %599 = vst.msk [vmem:[%s1] sm:$0xff] %vm598, %v597
  %s600 = scalar_lea.vmem %s0, 21
  %v601 = vld [vmem:[%s600] sm:$0x1]
  %s602 = scalar_lea.vmem %s0, 52
  %v603 = vld [vmem:[%s602] sm:$0x2]
  %vm604 = vcmask 1041409
  %v605 = vsel %vm604, %v603, %v601
  %s606 = scalar_lea.vmem %s0, 83
  %v607 = vld [vmem:[%s606] sm:$0x4]
  %vm608 = vcmask 1042434
  %v609 = vsel %vm608, %v607, %v605
  %s610 = scalar_lea.vmem %s0, 114
  %v611 = vld [vmem:[%s610] sm:$0x8]
  %vm612 = vcmask 1043459
  %v613 = vsel %vm612, %v611, %v609
  %s614 = scalar_lea.vmem %s0, 145
  %v615 = vld [vmem:[%s614] sm:$0x10]
  %vm616 = vcmask 1044484
  %v617 = vsel %vm616, %v615, %v613
  %s618 = scalar_lea.vmem %s0, 176
  %v619 = vld [vmem:[%s618] sm:$0x20]
  %vm620 = vcmask 1045509
  %v621 = vsel %vm620, %v619, %v617
  %s622 = scalar_lea.vmem %s0, 207
  %v623 = vld [vmem:[%s622] sm:$0x40]
  %vm624 = vcmask 1046534
  %v625 = vsel %vm624, %v623, %v621
  %s626 = scalar_lea.vmem %s0, 238
  %v627 = vld [vmem:[%s626] sm:$0x80]
  %vm628 = vcmask 1047559
  %v629 = vsel %vm628, %v627, %v625
  %630 = vrot.lane.b32.xlu0 %v629, 40
  %v631 = vpop.permute.xlu0 %630
  %vm632 = vcmask 392512
  %s633 = scalar_lea.vmem %s1, 8
  %634 = vst.msk [vmem:[%s633] sm:$0xff] %vm632, %v631
  %s635 = scalar_lea.vmem %s0, 4
  %v636 = vld [vmem:[%s635] sm:$0x1]
  %s637 = scalar_lea.vmem %s0, 35
  %v638 = vld [vmem:[%s637] sm:$0x2]
  %vm639 = vcmask 1041409
  %v640 = vsel %vm639, %v638, %v636
  %s641 = scalar_lea.vmem %s0, 66
  %v642 = vld [vmem:[%s641] sm:$0x4]
  %vm643 = vcmask 1042434
  %v644 = vsel %vm643, %v642, %v640
  %s645 = scalar_lea.vmem %s0, 97
  %v646 = vld [vmem:[%s645] sm:$0x8]
  %vm647 = vcmask 1043459
  %v648 = vsel %vm647, %v646, %v644
  %s649 = scalar_lea.vmem %s0, 128
  %v650 = vld [vmem:[%s649] sm:$0x10]
  %vm651 = vcmask 1044484
  %v652 = vsel %vm651, %v650, %v648
  %s653 = scalar_lea.vmem %s0, 159
  %v654 = vld [vmem:[%s653] sm:$0x20]
  %vm655 = vcmask 1045509
  %v656 = vsel %vm655, %v654, %v652
  %s657 = scalar_lea.vmem %s0, 190
  %v658 = vld [vmem:[%s657] sm:$0x40]
  %vm659 = vcmask 1046534
  %v660 = vsel %vm659, %v658, %v656
  %s661 = scalar_lea.vmem %s0, 221
  %v662 = vld [vmem:[%s661] sm:$0x80]
  %vm663 = vcmask 1047559
  %v664 = vsel %vm663, %v662, %v660
  %665 = vrot.lane.b32.xlu0 %v664, 32
  %v666 = vpop.permute.xlu0 %665
  %vm667 = vcmask 326912
  %668 = vst.msk [vmem:[%s1] sm:$0xff] %vm667, %v666
  %s669 = scalar_lea.vmem %s0, 20
  %v670 = vld [vmem:[%s669] sm:$0x1]
  %s671 = scalar_lea.vmem %s0, 51
  %v672 = vld [vmem:[%s671] sm:$0x2]
  %vm673 = vcmask 1041409
  %v674 = vsel %vm673, %v672, %v670
  %s675 = scalar_lea.vmem %s0, 82
  %v676 = vld [vmem:[%s675] sm:$0x4]
  %vm677 = vcmask 1042434
  %v678 = vsel %vm677, %v676, %v674
  %s679 = scalar_lea.vmem %s0, 113
  %v680 = vld [vmem:[%s679] sm:$0x8]
  %vm681 = vcmask 1043459
  %v682 = vsel %vm681, %v680, %v678
  %s683 = scalar_lea.vmem %s0, 144
  %v684 = vld [vmem:[%s683] sm:$0x10]
  %vm685 = vcmask 1044484
  %v686 = vsel %vm685, %v684, %v682
  %s687 = scalar_lea.vmem %s0, 175
  %v688 = vld [vmem:[%s687] sm:$0x20]
  %vm689 = vcmask 1045509
  %v690 = vsel %vm689, %v688, %v686
  %s691 = scalar_lea.vmem %s0, 206
  %v692 = vld [vmem:[%s691] sm:$0x40]
  %vm693 = vcmask 1046534
  %v694 = vsel %vm693, %v692, %v690
  %s695 = scalar_lea.vmem %s0, 237
  %v696 = vld [vmem:[%s695] sm:$0x80]
  %vm697 = vcmask 1047559
  %v698 = vsel %vm697, %v696, %v694
  %699 = vrot.lane.b32.xlu0 %v698, 32
  %v700 = vpop.permute.xlu0 %699
  %vm701 = vcmask 326912
  %s702 = scalar_lea.vmem %s1, 8
  %703 = vst.msk [vmem:[%s702] sm:$0xff] %vm701, %v700
  %s704 = scalar_lea.vmem %s0, 3
  %v705 = vld [vmem:[%s704] sm:$0x1]
  %s706 = scalar_lea.vmem %s0, 34
  %v707 = vld [vmem:[%s706] sm:$0x2]
  %vm708 = vcmask 1041409
  %v709 = vsel %vm708, %v707, %v705
  %s710 = scalar_lea.vmem %s0, 65
  %v711 = vld [vmem:[%s710] sm:$0x4]
  %vm712 = vcmask 1042434
  %v713 = vsel %vm712, %v711, %v709
  %s714 = scalar_lea.vmem %s0, 96
  %v715 = vld [vmem:[%s714] sm:$0x8]
  %vm716 = vcmask 1043459
  %v717 = vsel %vm716, %v715, %v713
  %s718 = scalar_lea.vmem %s0, 127
  %v719 = vld [vmem:[%s718] sm:$0x10]
  %vm720 = vcmask 1044484
  %v721 = vsel %vm720, %v719, %v717
  %s722 = scalar_lea.vmem %s0, 158
  %v723 = vld [vmem:[%s722] sm:$0x20]
  %vm724 = vcmask 1045509
  %v725 = vsel %vm724, %v723, %v721
  %s726 = scalar_lea.vmem %s0, 189
  %v727 = vld [vmem:[%s726] sm:$0x40]
  %vm728 = vcmask 1046534
  %v729 = vsel %vm728, %v727, %v725
  %s730 = scalar_lea.vmem %s0, 220
  %v731 = vld [vmem:[%s730] sm:$0x80]
  %vm732 = vcmask 1047559
  %v733 = vsel %vm732, %v731, %v729
  %734 = vrot.lane.b32.xlu0 %v733, 24
  %v735 = vpop.permute.xlu0 %734
  %vm736 = vcmask 261312
  %737 = vst.msk [vmem:[%s1] sm:$0xff] %vm736, %v735
  %s738 = scalar_lea.vmem %s0, 19
  %v739 = vld [vmem:[%s738] sm:$0x1]
  %s740 = scalar_lea.vmem %s0, 50
  %v741 = vld [vmem:[%s740] sm:$0x2]
  %vm742 = vcmask 1041409
  %v743 = vsel %vm742, %v741, %v739
  %s744 = scalar_lea.vmem %s0, 81
  %v745 = vld [vmem:[%s744] sm:$0x4]
  %vm746 = vcmask 1042434
  %v747 = vsel %vm746, %v745, %v743
  %s748 = scalar_lea.vmem %s0, 112
  %v749 = vld [vmem:[%s748] sm:$0x8]
  %vm750 = vcmask 1043459
  %v751 = vsel %vm750, %v749, %v747
  %s752 = scalar_lea.vmem %s0, 143
  %v753 = vld [vmem:[%s752] sm:$0x10]
  %vm754 = vcmask 1044484
  %v755 = vsel %vm754, %v753, %v751
  %s756 = scalar_lea.vmem %s0, 174
  %v757 = vld [vmem:[%s756] sm:$0x20]
  %vm758 = vcmask 1045509
  %v759 = vsel %vm758, %v757, %v755
  %s760 = scalar_lea.vmem %s0, 205
  %v761 = vld [vmem:[%s760] sm:$0x40]
  %vm762 = vcmask 1046534
  %v763 = vsel %vm762, %v761, %v759
  %s764 = scalar_lea.vmem %s0, 236
  %v765 = vld [vmem:[%s764] sm:$0x80]
  %vm766 = vcmask 1047559
  %v767 = vsel %vm766, %v765, %v763
  %768 = vrot.lane.b32.xlu0 %v767, 24
  %v769 = vpop.permute.xlu0 %768
  %vm770 = vcmask 261312
  %s771 = scalar_lea.vmem %s1, 8
  %772 = vst.msk [vmem:[%s771] sm:$0xff] %vm770, %v769
  %s773 = scalar_lea.vmem %s0, 2
  %v774 = vld [vmem:[%s773] sm:$0x1]
  %s775 = scalar_lea.vmem %s0, 33
  %v776 = vld [vmem:[%s775] sm:$0x2]
  %vm777 = vcmask 1041409
  %v778 = vsel %vm777, %v776, %v774
  %s779 = scalar_lea.vmem %s0, 64
  %v780 = vld [vmem:[%s779] sm:$0x4]
  %vm781 = vcmask 1042434
  %v782 = vsel %vm781, %v780, %v778
  %s783 = scalar_lea.vmem %s0, 95
  %v784 = vld [vmem:[%s783] sm:$0x8]
  %vm785 = vcmask 1043459
  %v786 = vsel %vm785, %v784, %v782
  %s787 = scalar_lea.vmem %s0, 126
  %v788 = vld [vmem:[%s787] sm:$0x10]
  %vm789 = vcmask 1044484
  %v790 = vsel %vm789, %v788, %v786
  %s791 = scalar_lea.vmem %s0, 157
  %v792 = vld [vmem:[%s791] sm:$0x20]
  %vm793 = vcmask 1045509
  %v794 = vsel %vm793, %v792, %v790
  %s795 = scalar_lea.vmem %s0, 188
  %v796 = vld [vmem:[%s795] sm:$0x40]
  %vm797 = vcmask 1046534
  %v798 = vsel %vm797, %v796, %v794
  %s799 = scalar_lea.vmem %s0, 219
  %v800 = vld [vmem:[%s799] sm:$0x80]
  %vm801 = vcmask 1047559
  %v802 = vsel %vm801, %v800, %v798
  %803 = vrot.lane.b32.xlu0 %v802, 16
  %v804 = vpop.permute.xlu0 %803
  %vm805 = vcmask 195712
  %806 = vst.msk [vmem:[%s1] sm:$0xff] %vm805, %v804
  %s807 = scalar_lea.vmem %s0, 18
  %v808 = vld [vmem:[%s807] sm:$0x1]
  %s809 = scalar_lea.vmem %s0, 49
  %v810 = vld [vmem:[%s809] sm:$0x2]
  %vm811 = vcmask 1041409
  %v812 = vsel %vm811, %v810, %v808
  %s813 = scalar_lea.vmem %s0, 80
  %v814 = vld [vmem:[%s813] sm:$0x4]
  %vm815 = vcmask 1042434
  %v816 = vsel %vm815, %v814, %v812
  %s817 = scalar_lea.vmem %s0, 111
  %v818 = vld [vmem:[%s817] sm:$0x8]
  %vm819 = vcmask 1043459
  %v820 = vsel %vm819, %v818, %v816
  %s821 = scalar_lea.vmem %s0, 142
  %v822 = vld [vmem:[%s821] sm:$0x10]
  %vm823 = vcmask 1044484
  %v824 = vsel %vm823, %v822, %v820
  %s825 = scalar_lea.vmem %s0, 173
  %v826 = vld [vmem:[%s825] sm:$0x20]
  %vm827 = vcmask 1045509
  %v828 = vsel %vm827, %v826, %v824
  %s829 = scalar_lea.vmem %s0, 204
  %v830 = vld [vmem:[%s829] sm:$0x40]
  %vm831 = vcmask 1046534
  %v832 = vsel %vm831, %v830, %v828
  %s833 = scalar_lea.vmem %s0, 235
  %v834 = vld [vmem:[%s833] sm:$0x80]
  %vm835 = vcmask 1047559
  %v836 = vsel %vm835, %v834, %v832
  %837 = vrot.lane.b32.xlu0 %v836, 16
  %v838 = vpop.permute.xlu0 %837
  %vm839 = vcmask 195712
  %s840 = scalar_lea.vmem %s1, 8
  %841 = vst.msk [vmem:[%s840] sm:$0xff] %vm839, %v838
  %s842 = scalar_lea.vmem %s0, 1
  %v843 = vld [vmem:[%s842] sm:$0x1]
  %s844 = scalar_lea.vmem %s0, 32
  %v845 = vld [vmem:[%s844] sm:$0x2]
  %vm846 = vcmask 1041409
  %v847 = vsel %vm846, %v845, %v843
  %s848 = scalar_lea.vmem %s0, 63
  %v849 = vld [vmem:[%s848] sm:$0x4]
  %vm850 = vcmask 1042434
  %v851 = vsel %vm850, %v849, %v847
  %s852 = scalar_lea.vmem %s0, 94
  %v853 = vld [vmem:[%s852] sm:$0x8]
  %vm854 = vcmask 1043459
  %v855 = vsel %vm854, %v853, %v851
  %s856 = scalar_lea.vmem %s0, 125
  %v857 = vld [vmem:[%s856] sm:$0x10]
  %vm858 = vcmask 1044484
  %v859 = vsel %vm858, %v857, %v855
  %s860 = scalar_lea.vmem %s0, 156
  %v861 = vld [vmem:[%s860] sm:$0x20]
  %vm862 = vcmask 1045509
  %v863 = vsel %vm862, %v861, %v859
  %s864 = scalar_lea.vmem %s0, 187
  %v865 = vld [vmem:[%s864] sm:$0x40]
  %vm866 = vcmask 1046534
  %v867 = vsel %vm866, %v865, %v863
  %s868 = scalar_lea.vmem %s0, 218
  %v869 = vld [vmem:[%s868] sm:$0x80]
  %vm870 = vcmask 1047559
  %v871 = vsel %vm870, %v869, %v867
  %872 = vrot.lane.b32.xlu0 %v871, 8
  %v873 = vpop.permute.xlu0 %872
  %vm874 = vcmask 130112
  %875 = vst.msk [vmem:[%s1] sm:$0xff] %vm874, %v873
  %s876 = scalar_lea.vmem %s0, 17
  %v877 = vld [vmem:[%s876] sm:$0x1]
  %s878 = scalar_lea.vmem %s0, 48
  %v879 = vld [vmem:[%s878] sm:$0x2]
  %vm880 = vcmask 1041409
  %v881 = vsel %vm880, %v879, %v877
  %s882 = scalar_lea.vmem %s0, 79
  %v883 = vld [vmem:[%s882] sm:$0x4]
  %vm884 = vcmask 1042434
  %v885 = vsel %vm884, %v883, %v881
  %s886 = scalar_lea.vmem %s0, 110
  %v887 = vld [vmem:[%s886] sm:$0x8]
  %vm888 = vcmask 1043459
  %v889 = vsel %vm888, %v887, %v885
  %s890 = scalar_lea.vmem %s0, 141
  %v891 = vld [vmem:[%s890] sm:$0x10]
  %vm892 = vcmask 1044484
  %v893 = vsel %vm892, %v891, %v889
  %s894 = scalar_lea.vmem %s0, 172
  %v895 = vld [vmem:[%s894] sm:$0x20]
  %vm896 = vcmask 1045509
  %v897 = vsel %vm896, %v895, %v893
  %s898 = scalar_lea.vmem %s0, 203
  %v899 = vld [vmem:[%s898] sm:$0x40]
  %vm900 = vcmask 1046534
  %v901 = vsel %vm900, %v899, %v897
  %s902 = scalar_lea.vmem %s0, 234
  %v903 = vld [vmem:[%s902] sm:$0x80]
  %vm904 = vcmask 1047559
  %v905 = vsel %vm904, %v903, %v901
  %906 = vrot.lane.b32.xlu0 %v905, 8
  %v907 = vpop.permute.xlu0 %906
  %vm908 = vcmask 130112
  %s909 = scalar_lea.vmem %s1, 8
  %910 = vst.msk [vmem:[%s909] sm:$0xff] %vm908, %v907

// kernel: resnet_kpconv_forward.1
$region0: #{resnet_kpconv_forward.1}
  #allocation0 [shape = 'u32[]', space=smem, size = 0x4, offset = 0x4, fixed_abs, tag = 'smem constant byte address 0x4 - core index']
  #allocation1 [shape = 'u32[72,128]{1,0:T(1,128)}', space=vmem, size = 0x9000, scoped, tag = 'internal scratch']
  %s0 = inlined_call_operand.vmem [shape: f32[40,512], index: 0, kind: input, shape index: {}]
  %s1 = inlined_call_operand.vmem [shape: bf16[64,512], index: 1, kind: input, shape index: {}]
  %s2 = inlined_call_operand.vmem [shape: f32[8,512], index: 2, kind: input, shape index: {}]
  %s3 = inlined_call_operand.vmem [shape: f32[8,216,40], index: 3, kind: input, shape index: {}]
  %s4 = inlined_call_operand.vmem [shape: bf16[8,216,64], index: 4, kind: input, shape index: {}]
  %s5 = inlined_call_operand.vmem [shape: f32[8,216], index: 5, kind: input, shape index: {}]
  %s6 = inlined_call_operand.vmem [shape: f32[8,1], index: 6, kind: input, shape index: {}]
  %s7 = inlined_call_operand.vmem [shape: f32[8,1], index: 7, kind: input, shape index: {}]
  %s8 = inlined_call_operand.vmem [shape: f32[16,16], index: 8, kind: input, shape index: {}]
  %s9 = inlined_call_operand.vmem [shape: f32[16,1], index: 9, kind: input, shape index: {}]
  %s10 = inlined_call_operand.hbm [shape: f32[16,512], index: 10, kind: output, shape index: {}]
  %s11 = sld [smem:[#allocation0]]
  $region152: #{resnet_kpconv_forward.1} parent=0
    _
  %s13 = ssub.s32 1, %s11
  %s14 = scalar_select 0, %s13, %s11
  $region1: #{resnet_kpconv_forward.1} parent=0
    #allocation2 [shape = 'u8[40960]{0}', space=vmem, size = 0xa000, scoped, tag = 'input window, operand 0']
    #allocation3 [shape = 'u8[32768]{0}', space=vmem, size = 0x8000, scoped, tag = 'input window, operand 1']
    #allocation4 [shape = 'u8[16384]{0}', space=vmem, size = 0x4000, scoped, tag = 'output window, operand 0']
    #allocation5 [shape = 's32[2]{0}', space=sflag, size = 0x8, scoped, tag = 'scoped memory for resnet_kpconv_forward.1']
    %15 = vsyncpa [#allocation5], 0
    %s16 = scalar_lea.sflag [#allocation5], 1
    %17 = vsyncpa %s16, 0
    loop: start=0, step=1, limit=6
    $region2: #{resnet_kpconv_forward.1} parent=1 // loop_pre_header
      _
    $region3: #{resnet_kpconv_forward.1} parent=1 // loop_header
      %s19 = sphi 0, %s23
      %p20 = scmp.ge.s32.totalorder %s19, 6
      %s29 = sphi 0, %s31
      %s32 = sphi 0, %s29
      %s33 = sphi 0, %s32
      %s49 = sphi 0, %s33
      %s55 = sphi 0, %s57
      %s58 = sphi 0, %s55
      %s59 = sphi 0, %s58
      %s75 = sphi 0, %s59
      %s81 = sphi 0, %s83
      %s84 = sphi 0, %s81
      %s85 = sphi 0, %s84
      %s101 = sphi 0, %s85
      %s105 = sphi 0, %s105
      %s107 = sphi 0, %s105
      %s108 = sphi 0, %s107
      %s122 = sphi 0, %s108
      %s126 = sphi 0, %s126
      %s128 = sphi 0, %s126
      %s129 = sphi 0, %s128
      %s143 = sphi 0, %s129
      %s147 = sphi 0, %s147
      %s149 = sphi 0, %s147
      %s150 = sphi 0, %s149
      %s164 = sphi 0, %s150
      %s168 = sphi 0, %s168
      %s170 = sphi 0, %s168
      %s171 = sphi 0, %s170
      %s185 = sphi 0, %s171
      %s189 = sphi 0, %s189
      %s191 = sphi 0, %s189
      %s192 = sphi 0, %s191
      %s206 = sphi 0, %s192
      %s210 = sphi 0, %s210
      %s212 = sphi 0, %s210
      %s213 = sphi 0, %s212
      %s227 = sphi 0, %s213
      %s231 = sphi 0, %s231
      %s233 = sphi 0, %s231
      %s234 = sphi 0, %s233
      %s248 = sphi 0, %s234
      %s254 = sphi 0, %s256
      %s257 = sphi 0, %s254
      %s258 = sphi 0, %s257
      %s274 = sphi 0, %s258
    $region4: #{resnet_kpconv_forward.1} parent=1 // loop_header_branch
      %22 = sbr.rel (%p20) target = $region8
    $region5: #{resnet_kpconv_forward.1} parent=1 // loop_body
      %s24 = ssub.s32 %s19, 1
      %s25 = ssub.s32 %s19, 2
      %s26 = sadd.s32 %s19, 1
      %s27 = ssub.s32 %s19, %s26
      %p28 = scmp.eq.s32.totalorder %s27, 0
      %s30 = sadd.s32 %s29, 1
      %s31 = scalar_select %p28, %s29, %s30
      %p34 = pneg %p28
      %p35 = scmp.eq.s32.totalorder %s19, 3
      %p36 = por %p34, %p35
      %p37 = scmp.ne.s32.totalorder %s29, %s32
      %p38 = scmp.eq.s32.totalorder %s19, 0
      %p39 = por %p37, %p38
      %p40 = scmp.ne.s32.totalorder %s29, %s32
      %p41 = scmp.eq.s32.totalorder %s24, 3
      %p42 = por %p40, %p41
      %p43 = scmp.ne.s32.totalorder %s32, %s33
      %p44 = scmp.eq.s32.totalorder %s24, 0
      %p45 = por %p43, %p44
      %p46 = scmp.ne.s32.totalorder %s32, %s33
      %p47 = scmp.eq.s32.totalorder %s25, 3
      %p48 = por %p46, %p47
      %p50 = scmp.ne.s32.totalorder %s33, %s49
      %p51 = scmp.eq.s32.totalorder %s25, 0
      %p52 = por %p50, %p51
      %s53 = ssub.s32 %s19, %s26
      %p54 = scmp.eq.s32.totalorder %s53, 0
      %s56 = sadd.s32 %s55, 1
      %s57 = scalar_select %p54, %s55, %s56
      %p60 = pneg %p54
      %p61 = scmp.eq.s32.totalorder %s19, 3
      %p62 = por %p60, %p61
      %p63 = scmp.ne.s32.totalorder %s55, %s58
      %p64 = scmp.eq.s32.totalorder %s19, 0
      %p65 = por %p63, %p64
      %p66 = scmp.ne.s32.totalorder %s55, %s58
      %p67 = scmp.eq.s32.totalorder %s24, 3
      %p68 = por %p66, %p67
      %p69 = scmp.ne.s32.totalorder %s58, %s59
      %p70 = scmp.eq.s32.totalorder %s24, 0
      %p71 = por %p69, %p70
      %p72 = scmp.ne.s32.totalorder %s58, %s59
      %p73 = scmp.eq.s32.totalorder %s25, 3
      %p74 = por %p72, %p73
      %p76 = scmp.ne.s32.totalorder %s59, %s75
      %p77 = scmp.eq.s32.totalorder %s25, 0
      %p78 = por %p76, %p77
      %s79 = ssub.s32 %s19, %s26
      %p80 = scmp.eq.s32.totalorder %s79, 0
      %s82 = sadd.s32 %s81, 1
      %s83 = scalar_select %p80, %s81, %s82
      %p86 = pneg %p80
      %p87 = scmp.eq.s32.totalorder %s19, 3
      %p88 = por %p86, %p87
      %p89 = scmp.ne.s32.totalorder %s81, %s84
      %p90 = scmp.eq.s32.totalorder %s19, 0
      %p91 = por %p89, %p90
      %p92 = scmp.ne.s32.totalorder %s81, %s84
      %p93 = scmp.eq.s32.totalorder %s24, 3
      %p94 = por %p92, %p93
      %p95 = scmp.ne.s32.totalorder %s84, %s85
      %p96 = scmp.eq.s32.totalorder %s24, 0
      %p97 = por %p95, %p96
      %p98 = scmp.ne.s32.totalorder %s84, %s85
      %p99 = scmp.eq.s32.totalorder %s25, 3
      %p100 = por %p98, %p99
      %p102 = scmp.ne.s32.totalorder %s85, %s101
      %p103 = scmp.eq.s32.totalorder %s25, 0
      %p104 = por %p102, %p103
      %s106 = sadd.s32 %s105, 1
      %p109 = scmp.eq.s32.totalorder %s19, 3
      %p110 = scmp.ne.s32.totalorder %s105, %s107
      %p111 = scmp.eq.s32.totalorder %s19, 0
      %p112 = por %p110, %p111
      %p113 = scmp.ne.s32.totalorder %s105, %s107
      %p114 = scmp.eq.s32.totalorder %s24, 3
      %p115 = por %p113, %p114
      %p116 = scmp.ne.s32.totalorder %s107, %s108
      %p117 = scmp.eq.s32.totalorder %s24, 0
      %p118 = por %p116, %p117
      %p119 = scmp.ne.s32.totalorder %s107, %s108
      %p120 = scmp.eq.s32.totalorder %s25, 3
      %p121 = por %p119, %p120
      %p123 = scmp.ne.s32.totalorder %s108, %s122
      %p124 = scmp.eq.s32.totalorder %s25, 0
      %p125 = por %p123, %p124
      %s127 = sadd.s32 %s126, 1
      %p130 = scmp.eq.s32.totalorder %s19, 3
      %p131 = scmp.ne.s32.totalorder %s126, %s128
      %p132 = scmp.eq.s32.totalorder %s19, 0
      %p133 = por %p131, %p132
      %p134 = scmp.ne.s32.totalorder %s126, %s128
      %p135 = scmp.eq.s32.totalorder %s24, 3
      %p136 = por %p134, %p135
      %p137 = scmp.ne.s32.totalorder %s128, %s129
      %p138 = scmp.eq.s32.totalorder %s24, 0
      %p139 = por %p137, %p138
      %p140 = scmp.ne.s32.totalorder %s128, %s129
      %p141 = scmp.eq.s32.totalorder %s25, 3
      %p142 = por %p140, %p141
      %p144 = scmp.ne.s32.totalorder %s129, %s143
      %p145 = scmp.eq.s32.totalorder %s25, 0
      %p146 = por %p144, %p145
      %s148 = sadd.s32 %s147, 1
      %p151 = scmp.eq.s32.totalorder %s19, 3
      %p152 = scmp.ne.s32.totalorder %s147, %s149
      %p153 = scmp.eq.s32.totalorder %s19, 0
      %p154 = por %p152, %p153
      %p155 = scmp.ne.s32.totalorder %s147, %s149
      %p156 = scmp.eq.s32.totalorder %s24, 3
      %p157 = por %p155, %p156
      %p158 = scmp.ne.s32.totalorder %s149, %s150
      %p159 = scmp.eq.s32.totalorder %s24, 0
      %p160 = por %p158, %p159
      %p161 = scmp.ne.s32.totalorder %s149, %s150
      %p162 = scmp.eq.s32.totalorder %s25, 3
      %p163 = por %p161, %p162
      %p165 = scmp.ne.s32.totalorder %s150, %s164
      %p166 = scmp.eq.s32.totalorder %s25, 0
      %p167 = por %p165, %p166
      %s169 = sadd.s32 %s168, 1
      %p172 = scmp.eq.s32.totalorder %s19, 3
      %p173 = scmp.ne.s32.totalorder %s168, %s170
      %p174 = scmp.eq.s32.totalorder %s19, 0
      %p175 = por %p173, %p174
      %p176 = scmp.ne.s32.totalorder %s168, %s170
      %p177 = scmp.eq.s32.totalorder %s24, 3
      %p178 = por %p176, %p177
      %p179 = scmp.ne.s32.totalorder %s170, %s171
      %p180 = scmp.eq.s32.totalorder %s24, 0
      %p181 = por %p179, %p180
      %p182 = scmp.ne.s32.totalorder %s170, %s171
      %p183 = scmp.eq.s32.totalorder %s25, 3
      %p184 = por %p182, %p183
      %p186 = scmp.ne.s32.totalorder %s171, %s185
      %p187 = scmp.eq.s32.totalorder %s25, 0
      %p188 = por %p186, %p187
      %s190 = sadd.s32 %s189, 1
      %p193 = scmp.eq.s32.totalorder %s19, 3
      %p194 = scmp.ne.s32.totalorder %s189, %s191
      %p195 = scmp.eq.s32.totalorder %s19, 0
      %p196 = por %p194, %p195
      %p197 = scmp.ne.s32.totalorder %s189, %s191
      %p198 = scmp.eq.s32.totalorder %s24, 3
      %p199 = por %p197, %p198
      %p200 = scmp.ne.s32.totalorder %s191, %s192
      %p201 = scmp.eq.s32.totalorder %s24, 0
      %p202 = por %p200, %p201
      %p203 = scmp.ne.s32.totalorder %s191, %s192
      %p204 = scmp.eq.s32.totalorder %s25, 3
      %p205 = por %p203, %p204
      %p207 = scmp.ne.s32.totalorder %s192, %s206
      %p208 = scmp.eq.s32.totalorder %s25, 0
      %p209 = por %p207, %p208
      %s211 = sadd.s32 %s210, 1
      %p214 = scmp.eq.s32.totalorder %s19, 3
      %p215 = scmp.ne.s32.totalorder %s210, %s212
      %p216 = scmp.eq.s32.totalorder %s19, 0
      %p217 = por %p215, %p216
      %p218 = scmp.ne.s32.totalorder %s210, %s212
      %p219 = scmp.eq.s32.totalorder %s24, 3
      %p220 = por %p218, %p219
      %p221 = scmp.ne.s32.totalorder %s212, %s213
      %p222 = scmp.eq.s32.totalorder %s24, 0
      %p223 = por %p221, %p222
      %p224 = scmp.ne.s32.totalorder %s212, %s213
      %p225 = scmp.eq.s32.totalorder %s25, 3
      %p226 = por %p224, %p225
      %p228 = scmp.ne.s32.totalorder %s213, %s227
      %p229 = scmp.eq.s32.totalorder %s25, 0
      %p230 = por %p228, %p229
      %s232 = sadd.s32 %s231, 1
      %p235 = scmp.eq.s32.totalorder %s19, 3
      %p236 = scmp.ne.s32.totalorder %s231, %s233
      %p237 = scmp.eq.s32.totalorder %s19, 0
      %p238 = por %p236, %p237
      %p239 = scmp.ne.s32.totalorder %s231, %s233
      %p240 = scmp.eq.s32.totalorder %s24, 3
      %p241 = por %p239, %p240
      %p242 = scmp.ne.s32.totalorder %s233, %s234
      %p243 = scmp.eq.s32.totalorder %s24, 0
      %p244 = por %p242, %p243
      %p245 = scmp.ne.s32.totalorder %s233, %s234
      %p246 = scmp.eq.s32.totalorder %s25, 3
      %p247 = por %p245, %p246
      %p249 = scmp.ne.s32.totalorder %s234, %s248
      %p250 = scmp.eq.s32.totalorder %s25, 0
      %p251 = por %p249, %p250
      %s252 = ssub.s32 %s19, %s26
      %p253 = scmp.eq.s32.totalorder %s252, 0
      %s255 = sadd.s32 %s254, 1
      %s256 = scalar_select %p253, %s254, %s255
      %p259 = pneg %p253
      %p260 = scmp.eq.s32.totalorder %s19, 3
      %p261 = por %p259, %p260
      %p262 = scmp.ne.s32.totalorder %s254, %s257
      %p263 = scmp.eq.s32.totalorder %s19, 0
      %p264 = por %p262, %p263
      %p265 = scmp.ne.s32.totalorder %s254, %s257
      %p266 = scmp.eq.s32.totalorder %s24, 3
      %p267 = por %p265, %p266
      %p268 = scmp.ne.s32.totalorder %s257, %s258
      %p269 = scmp.eq.s32.totalorder %s24, 0
      %p270 = por %p268, %p269
      %p271 = scmp.ne.s32.totalorder %s257, %s258
      %p272 = scmp.eq.s32.totalorder %s25, 3
      %p273 = por %p271, %p272
      %p275 = scmp.ne.s32.totalorder %s258, %s274
      %p276 = scmp.eq.s32.totalorder %s25, 0
      %p277 = por %p275, %p276
      %p278 = scmp.le.s32.totalorder 1, %s19
      %p279 = scmp.lt.s32.totalorder %s19, 5
      %p280 = pnand %p278, %p279
      %p281 = pneg %p280
      // Predicated region
      $region9: #{resnet_kpconv_forward.1} parent=5 // pred_check
        _
      $region10: #{resnet_kpconv_forward.1} parent=5 // pred_check_branch
        %283 = sbr.rel (%p280) target = $region12
      $region11: #{resnet_kpconv_forward.1} parent=5 // pred_region
        %s284 = ssub.s32 %s19, 1
        // Predicated region
        $region13: #{resnet_kpconv_forward.1} parent=11 // pred_check
          %p285 = pneg %p118
        $region14: #{resnet_kpconv_forward.1} parent=11 // pred_check_branch
          %287 = sbr.rel (%p285) target = $region16
        $region15: #{resnet_kpconv_forward.1} parent=11 // pred_region
          _
        $region16: #{resnet_kpconv_forward.1} parent=11 // pred_fallthru
          _
        // Predicated region
        $region17: #{resnet_kpconv_forward.1} parent=11 // pred_check
          %p288 = pneg %p139
        $region18: #{resnet_kpconv_forward.1} parent=11 // pred_check_branch
          %290 = sbr.rel (%p288) target = $region20
        $region19: #{resnet_kpconv_forward.1} parent=11 // pred_region
          _
        $region20: #{resnet_kpconv_forward.1} parent=11 // pred_fallthru
          _
        // Predicated region
        $region21: #{resnet_kpconv_forward.1} parent=11 // pred_check
          %p291 = pneg %p160
        $region22: #{resnet_kpconv_forward.1} parent=11 // pred_check_branch
          %293 = sbr.rel (%p291) target = $region24
        $region23: #{resnet_kpconv_forward.1} parent=11 // pred_region
          _
        $region24: #{resnet_kpconv_forward.1} parent=11 // pred_fallthru
          _
        // Predicated region
        $region25: #{resnet_kpconv_forward.1} parent=11 // pred_check
          %p294 = pneg %p181
        $region26: #{resnet_kpconv_forward.1} parent=11 // pred_check_branch
          %296 = sbr.rel (%p294) target = $region28
        $region27: #{resnet_kpconv_forward.1} parent=11 // pred_region
          _
        $region28: #{resnet_kpconv_forward.1} parent=11 // pred_fallthru
          _
        // Predicated region
        $region29: #{resnet_kpconv_forward.1} parent=11 // pred_check
          %p297 = pneg %p202
        $region30: #{resnet_kpconv_forward.1} parent=11 // pred_check_branch
          %299 = sbr.rel (%p297) target = $region32
        $region31: #{resnet_kpconv_forward.1} parent=11 // pred_region
          _
        $region32: #{resnet_kpconv_forward.1} parent=11 // pred_fallthru
          _
        // Predicated region
        $region33: #{resnet_kpconv_forward.1} parent=11 // pred_check
          %p300 = pneg %p223
        $region34: #{resnet_kpconv_forward.1} parent=11 // pred_check_branch
          %302 = sbr.rel (%p300) target = $region36
        $region35: #{resnet_kpconv_forward.1} parent=11 // pred_region
          _
        $region36: #{resnet_kpconv_forward.1} parent=11 // pred_fallthru
          _
        // Predicated region
        $region37: #{resnet_kpconv_forward.1} parent=11 // pred_check
          %p303 = pneg %p244
        $region38: #{resnet_kpconv_forward.1} parent=11 // pred_check_branch
          %305 = sbr.rel (%p303) target = $region40
        $region39: #{resnet_kpconv_forward.1} parent=11 // pred_region
          _
        $region40: #{resnet_kpconv_forward.1} parent=11 // pred_fallthru
          _
      $region12: #{resnet_kpconv_forward.1} parent=5 // pred_fallthru
        _
      %p306 = scmp.lt.s32.totalorder %s19, 4
      // Predicated region
      $region41: #{resnet_kpconv_forward.1} parent=5 // pred_check
        %p307 = pneg %p306
      $region42: #{resnet_kpconv_forward.1} parent=5 // pred_check_branch
        %309 = sbr.rel (%p307) target = $region44
      $region43: #{resnet_kpconv_forward.1} parent=5 // pred_region
        // Predicated region
        $region45: #{resnet_kpconv_forward.1} parent=43 // pred_check
          %p310 = pneg %p39
        $region46: #{resnet_kpconv_forward.1} parent=43 // pred_check_branch
          %312 = sbr.rel (%p310) target = $region48
        $region47: #{resnet_kpconv_forward.1} parent=43 // pred_region
          %s313 = sand.u32 %s29, 1
          %s314 = sand.u32 %s29, 1
          %s315 = smul.addr %s314, 40
          %s316 = scalar_lea.vmem [#allocation2], %s315
          %s317 = smul.addr %s19, 8
          %s318 = scalar_lea.vmem %s0, %s317
          // Predicated region
          $region49: #{resnet_kpconv_forward.1} parent=47 // pred_check
            _
          $region50: #{resnet_kpconv_forward.1} parent=47 // pred_check_branch
            %320 = sbr.rel (0) target = $region52
          $region51: #{resnet_kpconv_forward.1} parent=47 // pred_region
            // Predicated region
            $region53: #{resnet_kpconv_forward.1} parent=51 // pred_check
              _
            $region54: #{resnet_kpconv_forward.1} parent=51 // pred_check_branch
              %322 = sbr.rel (0) target = $region56
            $region55: #{resnet_kpconv_forward.1} parent=51 // pred_region
              // Predicated region
              $region68: #{resnet_kpconv_forward.1} parent=55 // pred_check
                _
              $region69: #{resnet_kpconv_forward.1} parent=55 // pred_check_branch
                %346 = sbr.rel (0) target = $region71
              $region70: #{resnet_kpconv_forward.1} parent=55 // pred_region
                loop: start=0, step=1, limit=1
                $region72: #{resnet_kpconv_forward.1} parent=70 // loop_pre_header
                  _
                $region73: #{resnet_kpconv_forward.1} parent=70 // loop_header
                  %s348 = sphi 0, %s352
                  %p349 = scmp.ge.s32.totalorder %s348, 1
                  %s353 = sphi %s318, %s318
                  %s354 = sphi %s316, %s316
                $region74: #{resnet_kpconv_forward.1} parent=70 // loop_header_branch
                  %351 = sbr.rel (%p349) target = $region78
                $region75: #{resnet_kpconv_forward.1} parent=70 // loop_body
                  %v355 = vld [vmem:[%s353] sm:$0xff]
                  %356 = vst [vmem:[%s354] sm:$0xff] %v355
                  %v357 = vld [vmem:[%s353 + $0x20] sm:$0xff]
                  %358 = vst [vmem:[%s354 + $0x8] sm:$0xff] %v357
                  %v359 = vld [vmem:[%s353 + $0x40] sm:$0xff]
                  %360 = vst [vmem:[%s354 + $0x10] sm:$0xff] %v359
                  %v361 = vld [vmem:[%s353 + $0x60] sm:$0xff]
                  %362 = vst [vmem:[%s354 + $0x18] sm:$0xff] %v361
                  %v363 = vld [vmem:[%s353 + $0x80] sm:$0xff]
                  %364 = vst [vmem:[%s354 + $0x20] sm:$0xff] %v363
                $region76: #{resnet_kpconv_forward.1} parent=70 // loop_footer
                  %s352 = sadd.s32 1, %s348
                $region77: #{resnet_kpconv_forward.1} parent=70 // loop_footer_branch
                  %347 = sbr.rel target = $region73
                $region78: #{resnet_kpconv_forward.1} parent=70 // loop_exit
                  _
              $region71: #{resnet_kpconv_forward.1} parent=55 // pred_fallthru
                _
              // Predicated region
              $region79: #{resnet_kpconv_forward.1} parent=55 // pred_check
                _
              $region80: #{resnet_kpconv_forward.1} parent=55 // pred_check_branch
                %366 = sbr.rel target = $region82
              $region81: #{resnet_kpconv_forward.1} parent=55 // pred_region
                _
              $region82: #{resnet_kpconv_forward.1} parent=55 // pred_fallthru
                _
            $region56: #{resnet_kpconv_forward.1} parent=51 // pred_fallthru
              _
            // Predicated region
            $region57: #{resnet_kpconv_forward.1} parent=51 // pred_check
              _
            $region58: #{resnet_kpconv_forward.1} parent=51 // pred_check_branch
              %324 = sbr.rel target = $region60
            $region59: #{resnet_kpconv_forward.1} parent=51 // pred_region
              %s326 = ssub.s32 256, 1
              loop: start=0, step=1, limit=1
              $region61: #{resnet_kpconv_forward.1} parent=59 // loop_pre_header
                _
              $region62: #{resnet_kpconv_forward.1} parent=59 // loop_header
                %s328 = sphi 0, %s332
                %p329 = scmp.ge.s32.totalorder %s328, 1
                %s333 = sphi %s318, %s318
                %s334 = sphi %s316, %s316
              $region63: #{resnet_kpconv_forward.1} parent=59 // loop_header_branch
                %331 = sbr.rel (%p329) target = $region67
              $region64: #{resnet_kpconv_forward.1} parent=59 // loop_body
                %v335 = vld [vmem:[%s333] sm:%s326]
                %336 = vst [vmem:[%s334] sm:%s326] %v335
                %v337 = vld [vmem:[%s333 + $0x20] sm:%s326]
                %338 = vst [vmem:[%s334 + $0x8] sm:%s326] %v337
                %v339 = vld [vmem:[%s333 + $0x40] sm:%s326]
                %340 = vst [vmem:[%s334 + $0x10] sm:%s326] %v339
                %v341 = vld [vmem:[%s333 + $0x60] sm:%s326]
                %342 = vst [vmem:[%s334 + $0x18] sm:%s326] %v341
                %v343 = vld [vmem:[%s333 + $0x80] sm:%s326]
                %344 = vst [vmem:[%s334 + $0x20] sm:%s326] %v343
              $region65: #{resnet_kpconv_forward.1} parent=59 // loop_footer
                %s332 = sadd.s32 1, %s328
              $region66: #{resnet_kpconv_forward.1} parent=59 // loop_footer_branch
                %327 = sbr.rel target = $region62
              $region67: #{resnet_kpconv_forward.1} parent=59 // loop_exit
                _
            $region60: #{resnet_kpconv_forward.1} parent=51 // pred_fallthru
              _
          $region52: #{resnet_kpconv_forward.1} parent=47 // pred_fallthru
            _
          %367 = vnop
        $region48: #{resnet_kpconv_forward.1} parent=43 // pred_fallthru
          _
        // Predicated region
        $region83: #{resnet_kpconv_forward.1} parent=43 // pred_check
          %p368 = pneg %p65
        $region84: #{resnet_kpconv_forward.1} parent=43 // pred_check_branch
          %370 = sbr.rel (%p368) target = $region86
        $region85: #{resnet_kpconv_forward.1} parent=43 // pred_region
          %s371 = sand.u32 %s55, 1
          %s372 = sand.u32 %s55, 1
          %s373 = smul.addr %s372, 32
          %s374 = scalar_lea.vmem [#allocation3], %s373
          %s375 = smul.addr %s19, 4
          %s376 = scalar_lea.vmem %s1, %s375
          // Predicated region
          $region87: #{resnet_kpconv_forward.1} parent=85 // pred_check
            _
          $region88: #{resnet_kpconv_forward.1} parent=85 // pred_check_branch
            %378 = sbr.rel (0) target = $region90
          $region89: #{resnet_kpconv_forward.1} parent=85 // pred_region
            // Predicated region
            $region91: #{resnet_kpconv_forward.1} parent=89 // pred_check
              _
            $region92: #{resnet_kpconv_forward.1} parent=89 // pred_check_branch
              %380 = sbr.rel target = $region94
            $region93: #{resnet_kpconv_forward.1} parent=89 // pred_region
              // Predicated region
              $region106: #{resnet_kpconv_forward.1} parent=93 // pred_check
                _
              $region107: #{resnet_kpconv_forward.1} parent=93 // pred_check_branch
                %410 = sbr.rel (0) target = $region109
              $region108: #{resnet_kpconv_forward.1} parent=93 // pred_region
                loop: start=0, step=1, limit=1
                $region110: #{resnet_kpconv_forward.1} parent=108 // loop_pre_header
                  _
                $region111: #{resnet_kpconv_forward.1} parent=108 // loop_header
                  %s412 = sphi 0, %s416
                  %p413 = scmp.ge.s32.totalorder %s412, 1
                  %s417 = sphi %s376, %s376
                  %s418 = sphi %s374, %s374
                $region112: #{resnet_kpconv_forward.1} parent=108 // loop_header_branch
                  %415 = sbr.rel (%p413) target = $region116
                $region113: #{resnet_kpconv_forward.1} parent=108 // loop_body
                  _
                $region114: #{resnet_kpconv_forward.1} parent=108 // loop_footer
                  %s416 = sadd.s32 1, %s412
                $region115: #{resnet_kpconv_forward.1} parent=108 // loop_footer_branch
                  %411 = sbr.rel target = $region111
                $region116: #{resnet_kpconv_forward.1} parent=108 // loop_exit
                  _
                %s420 = ssub.s32 16, 1
                loop: start=0, step=1, limit=1
                $region117: #{resnet_kpconv_forward.1} parent=108 // loop_pre_header
                  _
                $region118: #{resnet_kpconv_forward.1} parent=108 // loop_header
                  %s422 = sphi 0, %s426
                  %p423 = scmp.ge.s32.totalorder %s422, 1
                  %s427 = sphi %s376, %s376
                  %s428 = sphi %s374, %s374
                $region119: #{resnet_kpconv_forward.1} parent=108 // loop_header_branch
                  %425 = sbr.rel (%p423) target = $region123
                $region120: #{resnet_kpconv_forward.1} parent=108 // loop_body
                  %v429 = vld [vmem:[%s427] sm:%s420]
                  %430 = vst [vmem:[%s428] sm:%s420] %v429
                  %v431 = vld [vmem:[%s427 + $0x10] sm:%s420]
                  %432 = vst [vmem:[%s428 + $0x4] sm:%s420] %v431
                  %v433 = vld [vmem:[%s427 + $0x20] sm:%s420]
                  %434 = vst [vmem:[%s428 + $0x8] sm:%s420] %v433
                  %v435 = vld [vmem:[%s427 + $0x30] sm:%s420]
                  %436 = vst [vmem:[%s428 + $0xc] sm:%s420] %v435
                  %v437 = vld [vmem:[%s427 + $0x40] sm:%s420]
                  %438 = vst [vmem:[%s428 + $0x10] sm:%s420] %v437
                  %v439 = vld [vmem:[%s427 + $0x50] sm:%s420]
                  %440 = vst [vmem:[%s428 + $0x14] sm:%s420] %v439
                  %v441 = vld [vmem:[%s427 + $0x60] sm:%s420]
                  %442 = vst [vmem:[%s428 + $0x18] sm:%s420] %v441
                  %v443 = vld [vmem:[%s427 + $0x70] sm:%s420]
                  %444 = vst [vmem:[%s428 + $0x1c] sm:%s420] %v443
                $region121: #{resnet_kpconv_forward.1} parent=108 // loop_footer
                  %s426 = sadd.s32 1, %s422
                $region122: #{resnet_kpconv_forward.1} parent=108 // loop_footer_branch
                  %421 = sbr.rel target = $region118
                $region123: #{resnet_kpconv_forward.1} parent=108 // loop_exit
                  _
              $region109: #{resnet_kpconv_forward.1} parent=93 // pred_fallthru
                _
            $region94: #{resnet_kpconv_forward.1} parent=89 // pred_fallthru
              _
            // Predicated region
            $region95: #{resnet_kpconv_forward.1} parent=89 // pred_check
              _
            $region96: #{resnet_kpconv_forward.1} parent=89 // pred_check_branch
              %382 = sbr.rel (0) target = $region98
            $region97: #{resnet_kpconv_forward.1} parent=89 // pred_region
              %s384 = ssub.s32 16, 1
              loop: start=0, step=1, limit=1
              $region99: #{resnet_kpconv_forward.1} parent=97 // loop_pre_header
                _
              $region100: #{resnet_kpconv_forward.1} parent=97 // loop_header
                %s386 = sphi 0, %s390
                %p387 = scmp.ge.s32.totalorder %s386, 1
                %s391 = sphi %s376, %s376
                %s392 = sphi %s374, %s374
              $region101: #{resnet_kpconv_forward.1} parent=97 // loop_header_branch
                %389 = sbr.rel (%p387) target = $region105
              $region102: #{resnet_kpconv_forward.1} parent=97 // loop_body
                %v393 = vld [vmem:[%s391] sm:%s384]
                %394 = vst [vmem:[%s392] sm:%s384] %v393
                %v395 = vld [vmem:[%s391 + $0x10] sm:%s384]
                %396 = vst [vmem:[%s392 + $0x4] sm:%s384] %v395
                %v397 = vld [vmem:[%s391 + $0x20] sm:%s384]
                %398 = vst [vmem:[%s392 + $0x8] sm:%s384] %v397
                %v399 = vld [vmem:[%s391 + $0x30] sm:%s384]
                %400 = vst [vmem:[%s392 + $0xc] sm:%s384] %v399
                %v401 = vld [vmem:[%s391 + $0x40] sm:%s384]
                %402 = vst [vmem:[%s392 + $0x10] sm:%s384] %v401
                %v403 = vld [vmem:[%s391 + $0x50] sm:%s384]
                %404 = vst [vmem:[%s392 + $0x14] sm:%s384] %v403
                %v405 = vld [vmem:[%s391 + $0x60] sm:%s384]
                %406 = vst [vmem:[%s392 + $0x18] sm:%s384] %v405
                %v407 = vld [vmem:[%s391 + $0x70] sm:%s384]
                %408 = vst [vmem:[%s392 + $0x1c] sm:%s384] %v407
              $region103: #{resnet_kpconv_forward.1} parent=97 // loop_footer
                %s390 = sadd.s32 1, %s386
              $region104: #{resnet_kpconv_forward.1} parent=97 // loop_footer_branch
                %385 = sbr.rel target = $region100
              $region105: #{resnet_kpconv_forward.1} parent=97 // loop_exit
                _
            $region98: #{resnet_kpconv_forward.1} parent=89 // pred_fallthru
              _
          $region90: #{resnet_kpconv_forward.1} parent=85 // pred_fallthru
            _
          %445 = vnop
        $region86: #{resnet_kpconv_forward.1} parent=43 // pred_fallthru
          _
        // Predicated region
        $region124: #{resnet_kpconv_forward.1} parent=43 // pred_check
          %p446 = pneg %p91
        $region125: #{resnet_kpconv_forward.1} parent=43 // pred_check_branch
          %448 = sbr.rel (%p446) target = $region127
        $region126: #{resnet_kpconv_forward.1} parent=43 // pred_region
          %p449 = scmp.lt.s32.totalorder %s19, 3
          %s450 = scalar_select %p449, %s19, 3
          %s451 = smul.addr %s450, 8
          %s452 = scalar_lea.vmem %s2, %s451
        $region127: #{resnet_kpconv_forward.1} parent=43 // pred_fallthru
          _
      $region44: #{resnet_kpconv_forward.1} parent=5 // pred_fallthru
        _
      %p453 = scmp.le.s32.totalorder 1, %s19
      %p454 = scmp.lt.s32.totalorder %s19, 5
      %p455 = pnand %p453, %p454
      %p456 = pneg %p455
      // Predicated region
      $region128: #{resnet_kpconv_forward.1} parent=5 // pred_check
        _
      $region129: #{resnet_kpconv_forward.1} parent=5 // pred_check_branch
        %458 = sbr.rel (%p455) target = $region131
      $region130: #{resnet_kpconv_forward.1} parent=5 // pred_region
        %s459 = ssub.s32 %s19, 1
        %s460 = sand.u32 %s32, 1
        %s461 = sand.u32 %s32, 1
        %s462 = smul.addr %s461, 40
        %s463 = scalar_lea.vmem [#allocation2], %s462
        // Predicated region
        $region132: #{resnet_kpconv_forward.1} parent=130 // pred_check
          %p464 = pneg %p45
        $region133: #{resnet_kpconv_forward.1} parent=130 // pred_check_branch
          %466 = sbr.rel (%p464) target = $region135
        $region134: #{resnet_kpconv_forward.1} parent=130 // pred_region
          _
        $region135: #{resnet_kpconv_forward.1} parent=130 // pred_fallthru
          _
        %s467 = sand.u32 %s58, 1
        %s468 = sand.u32 %s58, 1
        %s469 = smul.addr %s468, 32
        %s470 = scalar_lea.vmem [#allocation3], %s469
        // Predicated region
        $region136: #{resnet_kpconv_forward.1} parent=130 // pred_check
          %p471 = pneg %p71
        $region137: #{resnet_kpconv_forward.1} parent=130 // pred_check_branch
          %473 = sbr.rel (%p471) target = $region139
        $region138: #{resnet_kpconv_forward.1} parent=130 // pred_region
          _
        $region139: #{resnet_kpconv_forward.1} parent=130 // pred_fallthru
          _
        %s474 = sand.u32 %s32, 1
        %s475 = sand.u32 %s32, 1
        %s476 = smul.addr %s475, 40
        %s477 = scalar_lea.vmem [#allocation2], %s476
        %p478 = pneg %p45
        %p479 = pneg %p42
        %s480 = sand.u32 %s58, 1
        %s481 = sand.u32 %s58, 1
        %s482 = smul.addr %s481, 32
        %s483 = scalar_lea.vmem [#allocation3], %s482
        %p484 = pneg %p71
        %p485 = pneg %p68
        %p486 = scmp.lt.s32.totalorder %s24, 3
        %s487 = scalar_select %p486, %s24, 3
        %s488 = smul.addr %s487, 8
        %s489 = scalar_lea.vmem %s2, %s488
        %p490 = pneg %p97
        %p491 = pneg %p94
        %p492 = pneg %p118
        %p493 = pneg %p115
        %p494 = pneg %p139
        %p495 = pneg %p136
        %p496 = pneg %p160
        %p497 = pneg %p157
        %p498 = pneg %p181
        %p499 = pneg %p178
        %p500 = pneg %p202
        %p501 = pneg %p199
        %p502 = pneg %p223
        %p503 = pneg %p220
        %p504 = pneg %p244
        %p505 = pneg %p241
        %p506 = pneg %p270
        %p507 = pneg %p267
        %s508 = sand.u32 %s257, 1
        %s509 = scalar_lea.sflag [#allocation5], %s508
        %s510 = sand.u32 %s257, 1
        %s511 = smul.addr %s510, 16
        %s512 = scalar_lea.vmem [#allocation4], %s511
        %p513 = scmp.lt.s32.totalorder %s24, 3
        %s514 = scalar_select %p513, %s24, 3
        %s515 = smul.addr %s514, 8
        %s516 = scalar_lea.vmem %s2, %s515
        %v518 = vld [vmem:[%s463] sm:$0xff]
        %v519 = vld [vmem:[%s463 + $0x8] sm:$0xff]
        %v520 = vld [vmem:[%s463 + $0x10] sm:$0xff]
        %v521 = vld [vmem:[%s463 + $0x18] sm:$0xff]
        %v522 = vld [vmem:[%s463 + $0x20] sm:$0xff]
        %v523 = vld [vmem:[%s470] sm:$0xf]
        %v524 = vld [vmem:[%s470 + $0x4] sm:$0xf]
        %v525 = vld [vmem:[%s470 + $0x8] sm:$0xf]
        %v526 = vld [vmem:[%s470 + $0xc] sm:$0xf]
        %v527 = vld [vmem:[%s470 + $0x10] sm:$0xf]
        %v528 = vld [vmem:[%s470 + $0x14] sm:$0xf]
        %v529 = vld [vmem:[%s470 + $0x18] sm:$0xf]
        %v530 = vld [vmem:[%s470 + $0x1c] sm:$0xf]
        %v531 = vld [vmem:[%s3] sm:$0xff]
        %v532 = vld [vmem:[%s3 + $0x8] sm:$0xff]
        %v533 = vld [vmem:[%s3 + $0x10] sm:$0xff]
        %v534 = vld [vmem:[%s3 + $0x18] sm:$0xff]
        %v535 = vld [vmem:[%s3 + $0x20] sm:$0xff]
        %v536 = vld [vmem:[%s3 + $0x28] sm:$0xff]
        %v537 = vld [vmem:[%s3 + $0x30] sm:$0xff]
        %v538 = vld [vmem:[%s3 + $0x38] sm:$0xff]
        %v539 = vld [vmem:[%s3 + $0x40] sm:$0xff]
        %v540 = vld [vmem:[%s3 + $0x48] sm:$0xff]
        %v541 = vld [vmem:[%s3 + $0x50] sm:$0xff]
        %v542 = vld [vmem:[%s3 + $0x58] sm:$0xff]
        %v543 = vld [vmem:[%s3 + $0x60] sm:$0xff]
        %v544 = vld [vmem:[%s3 + $0x68] sm:$0xff]
        %v545 = vld [vmem:[%s3 + $0x70] sm:$0xff]
        %v546 = vld [vmem:[%s3 + $0x78] sm:$0xff]
        %v547 = vld [vmem:[%s3 + $0x80] sm:$0xff]
        %v548 = vld [vmem:[%s3 + $0x88] sm:$0xff]
        %v549 = vld [vmem:[%s3 + $0x90] sm:$0xff]
        %v550 = vld [vmem:[%s3 + $0x98] sm:$0xff]
        %v551 = vld [vmem:[%s3 + $0xa0] sm:$0xff]
        %v552 = vld [vmem:[%s3 + $0xa8] sm:$0xff]
        %v553 = vld [vmem:[%s3 + $0xb0] sm:$0xff]
        %v554 = vld [vmem:[%s3 + $0xb8] sm:$0xff]
        %v555 = vld [vmem:[%s3 + $0xc0] sm:$0xff]
        %v556 = vld [vmem:[%s3 + $0xc8] sm:$0xff]
        %v557 = vld [vmem:[%s3 + $0xd0] sm:$0xff]
        %vm558 = vcmask 326656
        %v560 = vsel %vm558, %v531, 0
        %v563 = vsel %vm558, %v532, 0
        %v566 = vsel %vm558, %v533, 0
        %v569 = vsel %vm558, %v534, 0
        %v572 = vsel %vm558, %v535, 0
        %v575 = vsel %vm558, %v536, 0
        %v578 = vsel %vm558, %v537, 0
        %v581 = vsel %vm558, %v538, 0
        %v584 = vsel %vm558, %v539, 0
        %v587 = vsel %vm558, %v540, 0
        %v590 = vsel %vm558, %v541, 0
        %v593 = vsel %vm558, %v542, 0
        %v596 = vsel %vm558, %v543, 0
        %v599 = vsel %vm558, %v544, 0
        %v602 = vsel %vm558, %v545, 0
        %v605 = vsel %vm558, %v546, 0
        %v608 = vsel %vm558, %v547, 0
        %v611 = vsel %vm558, %v548, 0
        %v614 = vsel %vm558, %v549, 0
        %v617 = vsel %vm558, %v550, 0
        %v620 = vsel %vm558, %v551, 0
        %v623 = vsel %vm558, %v552, 0
        %v626 = vsel %vm558, %v553, 0
        %v629 = vsel %vm558, %v554, 0
        %v632 = vsel %vm558, %v555, 0
        %v635 = vsel %vm558, %v556, 0
        %v638 = vsel %vm558, %v557, 0
        %640 = vmatpush.msra.mxu0 0.0
        %641 = vmatpush.msra.mxu0 0.0
        %642 = vmatpush.msra.mxu0 0.0
        %643 = vmatpush.msra.mxu0 0.0
        %644 = vmatpush.msra.mxu0 0.0
        %645 = vmatpush.msra.mxu0 0.0
        %646 = vmatpush.msra.mxu0 0.0
        %647 = vmatpush.msra.mxu0 0.0
        %648 = vmatpush.msra.mxu0 0.0
        %649 = vmatpush.msra.mxu0 0.0
        %650 = vmatpush.msra.mxu0 0.0
        %651 = vmatpush.msra.mxu0 %v522
        %652 = vmatpush.msra.mxu0 %v521
        %653 = vmatpush.msra.mxu0 %v520
        %654 = vmatpush.msra.mxu0 %v519
        %655 = vmatpush.msra.mxu0 %v518
        %656 = vmatmul.f32.gmra.mxu0 %v560
        %v657 = vpop.f32.mrf.mxu0
        %v658 = vadd.f32 0.0, %v657
        %659 = vmatmul.f32.gmra.mxu0 %v563
        %v660 = vpop.f32.mrf.mxu0
        %v661 = vadd.f32 0.0, %v660
        %662 = vmatmul.f32.gmra.mxu0 %v566
        %v663 = vpop.f32.mrf.mxu0
        %v664 = vadd.f32 0.0, %v663
        %665 = vmatmul.f32.gmra.mxu0 %v569
        %v666 = vpop.f32.mrf.mxu0
        %v667 = vadd.f32 0.0, %v666
        %668 = vmatmul.f32.gmra.mxu0 %v572
        %v669 = vpop.f32.mrf.mxu0
        %v670 = vadd.f32 0.0, %v669
        %671 = vmatmul.f32.gmra.mxu0 %v575
        %v672 = vpop.f32.mrf.mxu0
        %v673 = vadd.f32 0.0, %v672
        %674 = vmatmul.f32.gmra.mxu0 %v578
        %v675 = vpop.f32.mrf.mxu0
        %v676 = vadd.f32 0.0, %v675
        %677 = vmatmul.f32.gmra.mxu0 %v581
        %v678 = vpop.f32.mrf.mxu0
        %v679 = vadd.f32 0.0, %v678
        %680 = vmatmul.f32.gmra.mxu0 %v584
        %v681 = vpop.f32.mrf.mxu0
        %v682 = vadd.f32 0.0, %v681
        %683 = vmatmul.f32.gmra.mxu0 %v587
        %v684 = vpop.f32.mrf.mxu0
        %v685 = vadd.f32 0.0, %v684
        %686 = vmatmul.f32.gmra.mxu0 %v590
        %v687 = vpop.f32.mrf.mxu0
        %v688 = vadd.f32 0.0, %v687
        %689 = vmatmul.f32.gmra.mxu0 %v593
        %v690 = vpop.f32.mrf.mxu0
        %v691 = vadd.f32 0.0, %v690
        %692 = vmatmul.f32.gmra.mxu0 %v596
        %v693 = vpop.f32.mrf.mxu0
        %v694 = vadd.f32 0.0, %v693
        %695 = vmatmul.f32.gmra.mxu0 %v599
        %v696 = vpop.f32.mrf.mxu0
        %v697 = vadd.f32 0.0, %v696
        %698 = vmatmul.f32.gmra.mxu0 %v602
        %v699 = vpop.f32.mrf.mxu0
        %v700 = vadd.f32 0.0, %v699
        %701 = vmatmul.f32.gmra.mxu0 %v605
        %v702 = vpop.f32.mrf.mxu0
        %v703 = vadd.f32 0.0, %v702
        %704 = vmatmul.f32.gmra.mxu0 %v608
        %v705 = vpop.f32.mrf.mxu0
        %v706 = vadd.f32 0.0, %v705
        %707 = vmatmul.f32.gmra.mxu0 %v611
        %v708 = vpop.f32.mrf.mxu0
        %v709 = vadd.f32 0.0, %v708
        %710 = vmatmul.f32.gmra.mxu0 %v614
        %v711 = vpop.f32.mrf.mxu0
        %v712 = vadd.f32 0.0, %v711
        %713 = vmatmul.f32.gmra.mxu0 %v617
        %v714 = vpop.f32.mrf.mxu0
        %v715 = vadd.f32 0.0, %v714
        %716 = vmatmul.f32.gmra.mxu0 %v620
        %v717 = vpop.f32.mrf.mxu0
        %v718 = vadd.f32 0.0, %v717
        %719 = vmatmul.f32.gmra.mxu0 %v623
        %v720 = vpop.f32.mrf.mxu0
        %v721 = vadd.f32 0.0, %v720
        %722 = vmatmul.f32.gmra.mxu0 %v626
        %v723 = vpop.f32.mrf.mxu0
        %v724 = vadd.f32 0.0, %v723
        %725 = vmatmul.f32.gmra.mxu0 %v629
        %v726 = vpop.f32.mrf.mxu0
        %v727 = vadd.f32 0.0, %v726
        %728 = vmatmul.f32.gmra.mxu0 %v632
        %v729 = vpop.f32.mrf.mxu0
        %v730 = vadd.f32 0.0, %v729
        %731 = vmatmul.f32.gmra.mxu0 %v635
        %v732 = vpop.f32.mrf.mxu0
        %v733 = vadd.f32 0.0, %v732
        %734 = vmatmul.f32.gmra.mxu0 %v638
        %v735 = vpop.f32.mrf.mxu0
        %v736 = vadd.f32 0.0, %v735
        %737 = vdwg.mxu0
        %v738 = vmax.f32 %v658, 0.0
        %v739 = vmax.f32 %v661, 0.0
        %v740 = vmax.f32 %v664, 0.0
        %v741 = vmax.f32 %v667, 0.0
        %v742 = vmax.f32 %v670, 0.0
        %v743 = vmax.f32 %v673, 0.0
        %v744 = vmax.f32 %v676, 0.0
        %v745 = vmax.f32 %v679, 0.0
        %v746 = vmax.f32 %v682, 0.0
        %v747 = vmax.f32 %v685, 0.0
        %v748 = vmax.f32 %v688, 0.0
        %v749 = vmax.f32 %v691, 0.0
        %v750 = vmax.f32 %v694, 0.0
        %v751 = vmax.f32 %v697, 0.0
        %v752 = vmax.f32 %v700, 0.0
        %v753 = vmax.f32 %v703, 0.0
        %v754 = vmax.f32 %v706, 0.0
        %v755 = vmax.f32 %v709, 0.0
        %v756 = vmax.f32 %v712, 0.0
        %v757 = vmax.f32 %v715, 0.0
        %v758 = vmax.f32 %v718, 0.0
        %v759 = vmax.f32 %v721, 0.0
        %v760 = vmax.f32 %v724, 0.0
        %v761 = vmax.f32 %v727, 0.0
        %v762 = vmax.f32 %v730, 0.0
        %v763 = vmax.f32 %v733, 0.0
        %v764 = vmax.f32 %v736, 0.0
        %v765 = vrsqrt.pop %v738
        %v766 = vmul.f32 %v765, %v738
        %v767 = vmul.f32 %v766, %v765
        %v768 = vmul.f32 0.5, %v767
        %v769 = vsub.f32 1.5, %v768
        %v770 = vmul.f32 %v765, %v769
        %v771 = vmul.f32 %v738, %v770
        %vm772 = vcmp.eq.f32.partialorder %v738, inf
        %v773 = vsel %vm772, %v738, %v771
        %vm774 = vcmp.eq.f32.partialorder %v738, 0.0
        %v775 = vand.u32 %v738, 2147483648
        %v776 = vsel %vm774, %v775, %v773
        %v777 = vrsqrt.pop %v739
        %v778 = vmul.f32 %v777, %v739
        %v779 = vmul.f32 %v778, %v777
        %v780 = vmul.f32 0.5, %v779
        %v781 = vsub.f32 1.5, %v780
        %v782 = vmul.f32 %v777, %v781
        %v783 = vmul.f32 %v739, %v782
        %vm784 = vcmp.eq.f32.partialorder %v739, inf
        %v785 = vsel %vm784, %v739, %v783
        %vm786 = vcmp.eq.f32.partialorder %v739, 0.0
        %v787 = vand.u32 %v739, 2147483648
        %v788 = vsel %vm786, %v787, %v785
        %v789 = vrsqrt.pop %v740
        %v790 = vmul.f32 %v789, %v740
        %v791 = vmul.f32 %v790, %v789
        %v792 = vmul.f32 0.5, %v791
        %v793 = vsub.f32 1.5, %v792
        %v794 = vmul.f32 %v789, %v793
        %v795 = vmul.f32 %v740, %v794
        %vm796 = vcmp.eq.f32.partialorder %v740, inf
        %v797 = vsel %vm796, %v740, %v795
        %vm798 = vcmp.eq.f32.partialorder %v740, 0.0
        %v799 = vand.u32 %v740, 2147483648
        %v800 = vsel %vm798, %v799, %v797
        %v801 = vrsqrt.pop %v741
        %v802 = vmul.f32 %v801, %v741
        %v803 = vmul.f32 %v802, %v801
        %v804 = vmul.f32 0.5, %v803
        %v805 = vsub.f32 1.5, %v804
        %v806 = vmul.f32 %v801, %v805
        %v807 = vmul.f32 %v741, %v806
        %vm808 = vcmp.eq.f32.partialorder %v741, inf
        %v809 = vsel %vm808, %v741, %v807
        %vm810 = vcmp.eq.f32.partialorder %v741, 0.0
        %v811 = vand.u32 %v741, 2147483648
        %v812 = vsel %vm810, %v811, %v809
        %v813 = vrsqrt.pop %v742
        %v814 = vmul.f32 %v813, %v742
        %v815 = vmul.f32 %v814, %v813
        %v816 = vmul.f32 0.5, %v815
        %v817 = vsub.f32 1.5, %v816
        %v818 = vmul.f32 %v813, %v817
        %v819 = vmul.f32 %v742, %v818
        %vm820 = vcmp.eq.f32.partialorder %v742, inf
        %v821 = vsel %vm820, %v742, %v819
        %vm822 = vcmp.eq.f32.partialorder %v742, 0.0
        %v823 = vand.u32 %v742, 2147483648
        %v824 = vsel %vm822, %v823, %v821
        %v825 = vrsqrt.pop %v743
        %v826 = vmul.f32 %v825, %v743
        %v827 = vmul.f32 %v826, %v825
        %v828 = vmul.f32 0.5, %v827
        %v829 = vsub.f32 1.5, %v828
        %v830 = vmul.f32 %v825, %v829
        %v831 = vmul.f32 %v743, %v830
        %vm832 = vcmp.eq.f32.partialorder %v743, inf
        %v833 = vsel %vm832, %v743, %v831
        %vm834 = vcmp.eq.f32.partialorder %v743, 0.0
        %v835 = vand.u32 %v743, 2147483648
        %v836 = vsel %vm834, %v835, %v833
        %v837 = vrsqrt.pop %v744
        %v838 = vmul.f32 %v837, %v744
        %v839 = vmul.f32 %v838, %v837
        %v840 = vmul.f32 0.5, %v839
        %v841 = vsub.f32 1.5, %v840
        %v842 = vmul.f32 %v837, %v841
        %v843 = vmul.f32 %v744, %v842
        %vm844 = vcmp.eq.f32.partialorder %v744, inf
        %v845 = vsel %vm844, %v744, %v843
        %vm846 = vcmp.eq.f32.partialorder %v744, 0.0
        %v847 = vand.u32 %v744, 2147483648
        %v848 = vsel %vm846, %v847, %v845
        %v849 = vrsqrt.pop %v745
        %v850 = vmul.f32 %v849, %v745
        %v851 = vmul.f32 %v850, %v849
        %v852 = vmul.f32 0.5, %v851
        %v853 = vsub.f32 1.5, %v852
        %v854 = vmul.f32 %v849, %v853
        %v855 = vmul.f32 %v745, %v854
        %vm856 = vcmp.eq.f32.partialorder %v745, inf
        %v857 = vsel %vm856, %v745, %v855
        %vm858 = vcmp.eq.f32.partialorder %v745, 0.0
        %v859 = vand.u32 %v745, 2147483648
        %v860 = vsel %vm858, %v859, %v857
        %v861 = vrsqrt.pop %v746
        %v862 = vmul.f32 %v861, %v746
        %v863 = vmul.f32 %v862, %v861
        %v864 = vmul.f32 0.5, %v863
        %v865 = vsub.f32 1.5, %v864
        %v866 = vmul.f32 %v861, %v865
        %v867 = vmul.f32 %v746, %v866
        %vm868 = vcmp.eq.f32.partialorder %v746, inf
        %v869 = vsel %vm868, %v746, %v867
        %vm870 = vcmp.eq.f32.partialorder %v746, 0.0
        %v871 = vand.u32 %v746, 2147483648
        %v872 = vsel %vm870, %v871, %v869
        %v873 = vrsqrt.pop %v747
        %v874 = vmul.f32 %v873, %v747
        %v875 = vmul.f32 %v874, %v873
        %v876 = vmul.f32 0.5, %v875
        %v877 = vsub.f32 1.5, %v876
        %v878 = vmul.f32 %v873, %v877
        %v879 = vmul.f32 %v747, %v878
        %vm880 = vcmp.eq.f32.partialorder %v747, inf
        %v881 = vsel %vm880, %v747, %v879
        %vm882 = vcmp.eq.f32.partialorder %v747, 0.0
        %v883 = vand.u32 %v747, 2147483648
        %v884 = vsel %vm882, %v883, %v881
        %v885 = vrsqrt.pop %v748
        %v886 = vmul.f32 %v885, %v748
        %v887 = vmul.f32 %v886, %v885
        %v888 = vmul.f32 0.5, %v887
        %v889 = vsub.f32 1.5, %v888
        %v890 = vmul.f32 %v885, %v889
        %v891 = vmul.f32 %v748, %v890
        %vm892 = vcmp.eq.f32.partialorder %v748, inf
        %v893 = vsel %vm892, %v748, %v891
        %vm894 = vcmp.eq.f32.partialorder %v748, 0.0
        %v895 = vand.u32 %v748, 2147483648
        %v896 = vsel %vm894, %v895, %v893
        %v897 = vrsqrt.pop %v749
        %v898 = vmul.f32 %v897, %v749
        %v899 = vmul.f32 %v898, %v897
        %v900 = vmul.f32 0.5, %v899
        %v901 = vsub.f32 1.5, %v900
        %v902 = vmul.f32 %v897, %v901
        %v903 = vmul.f32 %v749, %v902
        %vm904 = vcmp.eq.f32.partialorder %v749, inf
        %v905 = vsel %vm904, %v749, %v903
        %vm906 = vcmp.eq.f32.partialorder %v749, 0.0
        %v907 = vand.u32 %v749, 2147483648
        %v908 = vsel %vm906, %v907, %v905
        %v909 = vrsqrt.pop %v750
        %v910 = vmul.f32 %v909, %v750
        %v911 = vmul.f32 %v910, %v909
        %v912 = vmul.f32 0.5, %v911
        %v913 = vsub.f32 1.5, %v912
        %v914 = vmul.f32 %v909, %v913
        %v915 = vmul.f32 %v750, %v914
        %vm916 = vcmp.eq.f32.partialorder %v750, inf
        %v917 = vsel %vm916, %v750, %v915
        %vm918 = vcmp.eq.f32.partialorder %v750, 0.0
        %v919 = vand.u32 %v750, 2147483648
        %v920 = vsel %vm918, %v919, %v917
        %v921 = vrsqrt.pop %v751
        %v922 = vmul.f32 %v921, %v751
        %v923 = vmul.f32 %v922, %v921
        %v924 = vmul.f32 0.5, %v923
        %v925 = vsub.f32 1.5, %v924
        %v926 = vmul.f32 %v921, %v925
        %v927 = vmul.f32 %v751, %v926
        %vm928 = vcmp.eq.f32.partialorder %v751, inf
        %v929 = vsel %vm928, %v751, %v927
        %vm930 = vcmp.eq.f32.partialorder %v751, 0.0
        %v931 = vand.u32 %v751, 2147483648
        %v932 = vsel %vm930, %v931, %v929
        %v933 = vrsqrt.pop %v752
        %v934 = vmul.f32 %v933, %v752
        %v935 = vmul.f32 %v934, %v933
        %v936 = vmul.f32 0.5, %v935
        %v937 = vsub.f32 1.5, %v936
        %v938 = vmul.f32 %v933, %v937
        %v939 = vmul.f32 %v752, %v938
        %vm940 = vcmp.eq.f32.partialorder %v752, inf
        %v941 = vsel %vm940, %v752, %v939
        %vm942 = vcmp.eq.f32.partialorder %v752, 0.0
        %v943 = vand.u32 %v752, 2147483648
        %v944 = vsel %vm942, %v943, %v941
        %v945 = vrsqrt.pop %v753
        %v946 = vmul.f32 %v945, %v753
        %v947 = vmul.f32 %v946, %v945
        %v948 = vmul.f32 0.5, %v947
        %v949 = vsub.f32 1.5, %v948
        %v950 = vmul.f32 %v945, %v949
        %v951 = vmul.f32 %v753, %v950
        %vm952 = vcmp.eq.f32.partialorder %v753, inf
        %v953 = vsel %vm952, %v753, %v951
        %vm954 = vcmp.eq.f32.partialorder %v753, 0.0
        %v955 = vand.u32 %v753, 2147483648
        %v956 = vsel %vm954, %v955, %v953
        %v957 = vrsqrt.pop %v754
        %v958 = vmul.f32 %v957, %v754
        %v959 = vmul.f32 %v958, %v957
        %v960 = vmul.f32 0.5, %v959
        %v961 = vsub.f32 1.5, %v960
        %v962 = vmul.f32 %v957, %v961
        %v963 = vmul.f32 %v754, %v962
        %vm964 = vcmp.eq.f32.partialorder %v754, inf
        %v965 = vsel %vm964, %v754, %v963
        %vm966 = vcmp.eq.f32.partialorder %v754, 0.0
        %v967 = vand.u32 %v754, 2147483648
        %v968 = vsel %vm966, %v967, %v965
        %v969 = vrsqrt.pop %v755
        %v970 = vmul.f32 %v969, %v755
        %v971 = vmul.f32 %v970, %v969
        %v972 = vmul.f32 0.5, %v971
        %v973 = vsub.f32 1.5, %v972
        %v974 = vmul.f32 %v969, %v973
        %v975 = vmul.f32 %v755, %v974
        %vm976 = vcmp.eq.f32.partialorder %v755, inf
        %v977 = vsel %vm976, %v755, %v975
        %vm978 = vcmp.eq.f32.partialorder %v755, 0.0
        %v979 = vand.u32 %v755, 2147483648
        %v980 = vsel %vm978, %v979, %v977
        %v981 = vrsqrt.pop %v756
        %v982 = vmul.f32 %v981, %v756
        %v983 = vmul.f32 %v982, %v981
        %v984 = vmul.f32 0.5, %v983
        %v985 = vsub.f32 1.5, %v984
        %v986 = vmul.f32 %v981, %v985
        %v987 = vmul.f32 %v756, %v986
        %vm988 = vcmp.eq.f32.partialorder %v756, inf
        %v989 = vsel %vm988, %v756, %v987
        %vm990 = vcmp.eq.f32.partialorder %v756, 0.0
        %v991 = vand.u32 %v756, 2147483648
        %v992 = vsel %vm990, %v991, %v989
        %v993 = vrsqrt.pop %v757
        %v994 = vmul.f32 %v993, %v757
        %v995 = vmul.f32 %v994, %v993
        %v996 = vmul.f32 0.5, %v995
        %v997 = vsub.f32 1.5, %v996
        %v998 = vmul.f32 %v993, %v997
        %v999 = vmul.f32 %v757, %v998
        %vm1000 = vcmp.eq.f32.partialorder %v757, inf
        %v1001 = vsel %vm1000, %v757, %v999
        %vm1002 = vcmp.eq.f32.partialorder %v757, 0.0
        %v1003 = vand.u32 %v757, 2147483648
        %v1004 = vsel %vm1002, %v1003, %v1001
        %v1005 = vrsqrt.pop %v758
        %v1006 = vmul.f32 %v1005, %v758
        %v1007 = vmul.f32 %v1006, %v1005
        %v1008 = vmul.f32 0.5, %v1007
        %v1009 = vsub.f32 1.5, %v1008
        %v1010 = vmul.f32 %v1005, %v1009
        %v1011 = vmul.f32 %v758, %v1010
        %vm1012 = vcmp.eq.f32.partialorder %v758, inf
        %v1013 = vsel %vm1012, %v758, %v1011
        %vm1014 = vcmp.eq.f32.partialorder %v758, 0.0
        %v1015 = vand.u32 %v758, 2147483648
        %v1016 = vsel %vm1014, %v1015, %v1013
        %v1017 = vrsqrt.pop %v759
        %v1018 = vmul.f32 %v1017, %v759
        %v1019 = vmul.f32 %v1018, %v1017
        %v1020 = vmul.f32 0.5, %v1019
        %v1021 = vsub.f32 1.5, %v1020
        %v1022 = vmul.f32 %v1017, %v1021
        %v1023 = vmul.f32 %v759, %v1022
        %vm1024 = vcmp.eq.f32.partialorder %v759, inf
        %v1025 = vsel %vm1024, %v759, %v1023
        %vm1026 = vcmp.eq.f32.partialorder %v759, 0.0
        %v1027 = vand.u32 %v759, 2147483648
        %v1028 = vsel %vm1026, %v1027, %v1025
        %v1029 = vrsqrt.pop %v760
        %v1030 = vmul.f32 %v1029, %v760
        %v1031 = vmul.f32 %v1030, %v1029
        %v1032 = vmul.f32 0.5, %v1031
        %v1033 = vsub.f32 1.5, %v1032
        %v1034 = vmul.f32 %v1029, %v1033
        %v1035 = vmul.f32 %v760, %v1034
        %vm1036 = vcmp.eq.f32.partialorder %v760, inf
        %v1037 = vsel %vm1036, %v760, %v1035
        %vm1038 = vcmp.eq.f32.partialorder %v760, 0.0
        %v1039 = vand.u32 %v760, 2147483648
        %v1040 = vsel %vm1038, %v1039, %v1037
        %v1041 = vrsqrt.pop %v761
        %v1042 = vmul.f32 %v1041, %v761
        %v1043 = vmul.f32 %v1042, %v1041
        %v1044 = vmul.f32 0.5, %v1043
        %v1045 = vsub.f32 1.5, %v1044
        %v1046 = vmul.f32 %v1041, %v1045
        %v1047 = vmul.f32 %v761, %v1046
        %vm1048 = vcmp.eq.f32.partialorder %v761, inf
        %v1049 = vsel %vm1048, %v761, %v1047
        %vm1050 = vcmp.eq.f32.partialorder %v761, 0.0
        %v1051 = vand.u32 %v761, 2147483648
        %v1052 = vsel %vm1050, %v1051, %v1049
        %v1053 = vrsqrt.pop %v762
        %v1054 = vmul.f32 %v1053, %v762
        %v1055 = vmul.f32 %v1054, %v1053
        %v1056 = vmul.f32 0.5, %v1055
        %v1057 = vsub.f32 1.5, %v1056
        %v1058 = vmul.f32 %v1053, %v1057
        %v1059 = vmul.f32 %v762, %v1058
        %vm1060 = vcmp.eq.f32.partialorder %v762, inf
        %v1061 = vsel %vm1060, %v762, %v1059
        %vm1062 = vcmp.eq.f32.partialorder %v762, 0.0
        %v1063 = vand.u32 %v762, 2147483648
        %v1064 = vsel %vm1062, %v1063, %v1061
        %v1065 = vrsqrt.pop %v763
        %v1066 = vmul.f32 %v1065, %v763
        %v1067 = vmul.f32 %v1066, %v1065
        %v1068 = vmul.f32 0.5, %v1067
        %v1069 = vsub.f32 1.5, %v1068
        %v1070 = vmul.f32 %v1065, %v1069
        %v1071 = vmul.f32 %v763, %v1070
        %vm1072 = vcmp.eq.f32.partialorder %v763, inf
        %v1073 = vsel %vm1072, %v763, %v1071
        %vm1074 = vcmp.eq.f32.partialorder %v763, 0.0
        %v1075 = vand.u32 %v763, 2147483648
        %v1076 = vsel %vm1074, %v1075, %v1073
        %v1077 = vrsqrt.pop %v764
        %v1078 = vmul.f32 %v1077, %v764
        %v1079 = vmul.f32 %v1078, %v1077
        %v1080 = vmul.f32 0.5, %v1079
        %v1081 = vsub.f32 1.5, %v1080
        %v1082 = vmul.f32 %v1077, %v1081
        %v1083 = vmul.f32 %v764, %v1082
        %vm1084 = vcmp.eq.f32.partialorder %v764, inf
        %v1085 = vsel %vm1084, %v764, %v1083
        %vm1086 = vcmp.eq.f32.partialorder %v764, 0.0
        %v1087 = vand.u32 %v764, 2147483648
        %v1088 = vsel %vm1086, %v1087, %v1085
        %v1089 = vmul.f32 %v776, 1.1547005
        %v1090 = vmul.f32 %v788, 1.1547005
        %v1091 = vmul.f32 %v800, 1.1547005
        %v1092 = vmul.f32 %v812, 1.1547005
        %v1093 = vmul.f32 %v824, 1.1547005
        %v1094 = vmul.f32 %v836, 1.1547005
        %v1095 = vmul.f32 %v848, 1.1547005
        %v1096 = vmul.f32 %v860, 1.1547005
        %v1097 = vmul.f32 %v872, 1.1547005
        %v1098 = vmul.f32 %v884, 1.1547005
        %v1099 = vmul.f32 %v896, 1.1547005
        %v1100 = vmul.f32 %v908, 1.1547005
        %v1101 = vmul.f32 %v920, 1.1547005
        %v1102 = vmul.f32 %v932, 1.1547005
        %v1103 = vmul.f32 %v944, 1.1547005
        %v1104 = vmul.f32 %v956, 1.1547005
        %v1105 = vmul.f32 %v968, 1.1547005
        %v1106 = vmul.f32 %v980, 1.1547005
        %v1107 = vmul.f32 %v992, 1.1547005
        %v1108 = vmul.f32 %v1004, 1.1547005
        %v1109 = vmul.f32 %v1016, 1.1547005
        %v1110 = vmul.f32 %v1028, 1.1547005
        %v1111 = vmul.f32 %v1040, 1.1547005
        %v1112 = vmul.f32 %v1052, 1.1547005
        %v1113 = vmul.f32 %v1064, 1.1547005
        %v1114 = vmul.f32 %v1076, 1.1547005
        %v1115 = vmul.f32 %v1088, 1.1547005
        %v1116 = vsub.f32 1.0, %v1089
        %v1117 = vsub.f32 1.0, %v1090
        %v1118 = vsub.f32 1.0, %v1091
        %v1119 = vsub.f32 1.0, %v1092
        %v1120 = vsub.f32 1.0, %v1093
        %v1121 = vsub.f32 1.0, %v1094
        %v1122 = vsub.f32 1.0, %v1095
        %v1123 = vsub.f32 1.0, %v1096
        %v1124 = vsub.f32 1.0, %v1097
        %v1125 = vsub.f32 1.0, %v1098
        %v1126 = vsub.f32 1.0, %v1099
        %v1127 = vsub.f32 1.0, %v1100
        %v1128 = vsub.f32 1.0, %v1101
        %v1129 = vsub.f32 1.0, %v1102
        %v1130 = vsub.f32 1.0, %v1103
        %v1131 = vsub.f32 1.0, %v1104
        %v1132 = vsub.f32 1.0, %v1105
        %v1133 = vsub.f32 1.0, %v1106
        %v1134 = vsub.f32 1.0, %v1107
        %v1135 = vsub.f32 1.0, %v1108
        %v1136 = vsub.f32 1.0, %v1109
        %v1137 = vsub.f32 1.0, %v1110
        %v1138 = vsub.f32 1.0, %v1111
        %v1139 = vsub.f32 1.0, %v1112
        %v1140 = vsub.f32 1.0, %v1113
        %v1141 = vsub.f32 1.0, %v1114
        %v1142 = vsub.f32 1.0, %v1115
        %v1143 = vmax.f32 %v1116, 0.0
        %v1144 = vmax.f32 %v1117, 0.0
        %v1145 = vmax.f32 %v1118, 0.0
        %v1146 = vmax.f32 %v1119, 0.0
        %v1147 = vmax.f32 %v1120, 0.0
        %v1148 = vmax.f32 %v1121, 0.0
        %v1149 = vmax.f32 %v1122, 0.0
        %v1150 = vmax.f32 %v1123, 0.0
        %v1151 = vmax.f32 %v1124, 0.0
        %v1152 = vmax.f32 %v1125, 0.0
        %v1153 = vmax.f32 %v1126, 0.0
        %v1154 = vmax.f32 %v1127, 0.0
        %v1155 = vmax.f32 %v1128, 0.0
        %v1156 = vmax.f32 %v1129, 0.0
        %v1157 = vmax.f32 %v1130, 0.0
        %v1158 = vmax.f32 %v1131, 0.0
        %v1159 = vmax.f32 %v1132, 0.0
        %v1160 = vmax.f32 %v1133, 0.0
        %v1161 = vmax.f32 %v1134, 0.0
        %v1162 = vmax.f32 %v1135, 0.0
        %v1163 = vmax.f32 %v1136, 0.0
        %v1164 = vmax.f32 %v1137, 0.0
        %v1165 = vmax.f32 %v1138, 0.0
        %v1166 = vmax.f32 %v1139, 0.0
        %v1167 = vmax.f32 %v1140, 0.0
        %v1168 = vmax.f32 %v1141, 0.0
        %v1169 = vmax.f32 %v1142, 0.0
        %v1170 = vld [vmem:[%s4] sm:$0xf]
        %v1171 = vld [vmem:[%s4 + $0x4] sm:$0xf]
        %v1172 = vld [vmem:[%s4 + $0x8] sm:$0xf]
        %v1173 = vld [vmem:[%s4 + $0xc] sm:$0xf]
        %v1174 = vld [vmem:[%s4 + $0x10] sm:$0xf]
        %v1175 = vld [vmem:[%s4 + $0x14] sm:$0xf]
        %v1176 = vld [vmem:[%s4 + $0x18] sm:$0xf]
        %v1177 = vld [vmem:[%s4 + $0x1c] sm:$0xf]
        %v1178 = vld [vmem:[%s4 + $0x20] sm:$0xf]
        %v1179 = vld [vmem:[%s4 + $0x24] sm:$0xf]
        %v1180 = vld [vmem:[%s4 + $0x28] sm:$0xf]
        %v1181 = vld [vmem:[%s4 + $0x2c] sm:$0xf]
        %v1182 = vld [vmem:[%s4 + $0x30] sm:$0xf]
        %v1183 = vld [vmem:[%s4 + $0x34] sm:$0xf]
        %v1184 = vld [vmem:[%s4 + $0x38] sm:$0xf]
        %v1185 = vld [vmem:[%s4 + $0x3c] sm:$0xf]
        %v1186 = vld [vmem:[%s4 + $0x40] sm:$0xf]
        %v1187 = vld [vmem:[%s4 + $0x44] sm:$0xf]
        %v1188 = vld [vmem:[%s4 + $0x48] sm:$0xf]
        %v1189 = vld [vmem:[%s4 + $0x4c] sm:$0xf]
        %v1190 = vld [vmem:[%s4 + $0x50] sm:$0xf]
        %v1191 = vld [vmem:[%s4 + $0x54] sm:$0xf]
        %v1192 = vld [vmem:[%s4 + $0x58] sm:$0xf]
        %v1193 = vld [vmem:[%s4 + $0x5c] sm:$0xf]
        %v1194 = vld [vmem:[%s4 + $0x60] sm:$0xf]
        %v1195 = vld [vmem:[%s4 + $0x64] sm:$0xf]
        %v1196 = vld [vmem:[%s4 + $0x68] sm:$0xf]
        %v1224 = vunpack.c.l.b16 %v1170
        %v1225 = vunpack.c.l.b16 %v1171
        %v1226 = vunpack.c.l.b16 %v1172
        %v1227 = vunpack.c.l.b16 %v1173
        %v1228 = vunpack.c.l.b16 %v1174
        %v1229 = vunpack.c.l.b16 %v1175
        %v1230 = vunpack.c.l.b16 %v1176
        %v1231 = vunpack.c.l.b16 %v1177
        %v1232 = vunpack.c.l.b16 %v1178
        %v1233 = vunpack.c.l.b16 %v1179
        %v1234 = vunpack.c.l.b16 %v1180
        %v1235 = vunpack.c.l.b16 %v1181
        %v1236 = vunpack.c.l.b16 %v1182
        %v1237 = vunpack.c.l.b16 %v1183
        %v1238 = vunpack.c.l.b16 %v1184
        %v1239 = vunpack.c.l.b16 %v1185
        %v1240 = vunpack.c.l.b16 %v1186
        %v1241 = vunpack.c.l.b16 %v1187
        %v1242 = vunpack.c.l.b16 %v1188
        %v1243 = vunpack.c.l.b16 %v1189
        %v1244 = vunpack.c.l.b16 %v1190
        %v1245 = vunpack.c.l.b16 %v1191
        %v1246 = vunpack.c.l.b16 %v1192
        %v1247 = vunpack.c.l.b16 %v1193
        %v1248 = vunpack.c.l.b16 %v1194
        %v1249 = vunpack.c.l.b16 %v1195
        %v1250 = vunpack.c.l.b16 %v1196
        %v1251 = vpack.c.b16 %v1225, %v1224
        %v1252 = vpack.c.b16 %v1227, %v1226
        %v1253 = vpack.c.b16 %v1229, %v1228
        %v1254 = vpack.c.b16 %v1231, %v1230
        %v1255 = vpack.c.b16 %v1233, %v1232
        %v1256 = vpack.c.b16 %v1235, %v1234
        %v1257 = vpack.c.b16 %v1237, %v1236
        %v1258 = vpack.c.b16 %v1239, %v1238
        %v1259 = vpack.c.b16 %v1241, %v1240
        %v1260 = vpack.c.b16 %v1243, %v1242
        %v1261 = vpack.c.b16 %v1245, %v1244
        %v1262 = vpack.c.b16 %v1247, %v1246
        %v1263 = vpack.c.b16 %v1249, %v1248
        %v1264 = vpack.c.b16 %v1250, %v1250
        %v1273 = vunpack.c.l.b16 %v523
        %v1274 = vunpack.c.l.b16 %v524
        %v1275 = vunpack.c.l.b16 %v525
        %v1276 = vunpack.c.l.b16 %v526
        %v1277 = vunpack.c.l.b16 %v527
        %v1278 = vunpack.c.l.b16 %v528
        %v1279 = vunpack.c.l.b16 %v529
        %v1280 = vunpack.c.l.b16 %v530
        %v1281 = vpack.c.b16 %v1274, %v1273
        %v1282 = vpack.c.b16 %v1276, %v1275
        %v1283 = vpack.c.b16 %v1278, %v1277
        %v1284 = vpack.c.b16 %v1280, %v1279
        %vm1289 = vcmask 523264
        %v1291 = vsel %vm1289, %v1251, 0
        %v1294 = vsel %vm1289, %v1252, 0
        %v1297 = vsel %vm1289, %v1253, 0
        %v1300 = vsel %vm1289, %v1254, 0
        %v1303 = vsel %vm1289, %v1255, 0
        %v1306 = vsel %vm1289, %v1256, 0
        %v1309 = vsel %vm1289, %v1257, 0
        %v1312 = vsel %vm1289, %v1258, 0
        %v1315 = vsel %vm1289, %v1259, 0
        %v1318 = vsel %vm1289, %v1260, 0
        %v1321 = vsel %vm1289, %v1261, 0
        %v1324 = vsel %vm1289, %v1262, 0
        %v1327 = vsel %vm1289, %v1263, 0
        %v1330 = vsel %vm1289, %v1264, 0
        %1332 = vmatpush.bf16.msra.mxu0 0
        %1333 = vmatpush.bf16.msra.mxu0 0
        %1334 = vmatpush.bf16.msra.mxu0 0
        %1335 = vmatpush.bf16.msra.mxu0 0
        %1336 = vmatpush.bf16.msra.mxu0 %v1284
        %1337 = vmatpush.bf16.msra.mxu0 %v1283
        %1338 = vmatpush.bf16.msra.mxu0 %v1282
        %1339 = vmatpush.bf16.msra.mxu0 %v1281
        %1340 = vmatmul.bf16.gmra.mxu0 %v1291
        %v1341 = vpop.f32.mrf.mxu0
        %v1342 = vadd.f32 0.0, %v1341
        %v1343 = vpop.f32.mrf.mxu0
        %v1344 = vadd.f32 0.0, %v1343
        %1345 = vmatmul.bf16.gmra.mxu0 %v1294
        %v1346 = vpop.f32.mrf.mxu0
        %v1347 = vadd.f32 0.0, %v1346
        %v1348 = vpop.f32.mrf.mxu0
        %v1349 = vadd.f32 0.0, %v1348
        %1350 = vmatmul.bf16.gmra.mxu0 %v1297
        %v1351 = vpop.f32.mrf.mxu0
        %v1352 = vadd.f32 0.0, %v1351
        %v1353 = vpop.f32.mrf.mxu0
        %v1354 = vadd.f32 0.0, %v1353
        %1355 = vmatmul.bf16.gmra.mxu0 %v1300
        %v1356 = vpop.f32.mrf.mxu0
        %v1357 = vadd.f32 0.0, %v1356
        %v1358 = vpop.f32.mrf.mxu0
        %v1359 = vadd.f32 0.0, %v1358
        %1360 = vmatmul.bf16.gmra.mxu0 %v1303
        %v1361 = vpop.f32.mrf.mxu0
        %v1362 = vadd.f32 0.0, %v1361
        %v1363 = vpop.f32.mrf.mxu0
        %v1364 = vadd.f32 0.0, %v1363
        %1365 = vmatmul.bf16.gmra.mxu0 %v1306
        %v1366 = vpop.f32.mrf.mxu0
        %v1367 = vadd.f32 0.0, %v1366
        %v1368 = vpop.f32.mrf.mxu0
        %v1369 = vadd.f32 0.0, %v1368
        %1370 = vmatmul.bf16.gmra.mxu0 %v1309
        %v1371 = vpop.f32.mrf.mxu0
        %v1372 = vadd.f32 0.0, %v1371
        %v1373 = vpop.f32.mrf.mxu0
        %v1374 = vadd.f32 0.0, %v1373
        %1375 = vmatmul.bf16.gmra.mxu0 %v1312
        %v1376 = vpop.f32.mrf.mxu0
        %v1377 = vadd.f32 0.0, %v1376
        %v1378 = vpop.f32.mrf.mxu0
        %v1379 = vadd.f32 0.0, %v1378
        %1380 = vmatmul.bf16.gmra.mxu0 %v1315
        %v1381 = vpop.f32.mrf.mxu0
        %v1382 = vadd.f32 0.0, %v1381
        %v1383 = vpop.f32.mrf.mxu0
        %v1384 = vadd.f32 0.0, %v1383
        %1385 = vmatmul.bf16.gmra.mxu0 %v1318
        %v1386 = vpop.f32.mrf.mxu0
        %v1387 = vadd.f32 0.0, %v1386
        %v1388 = vpop.f32.mrf.mxu0
        %v1389 = vadd.f32 0.0, %v1388
        %1390 = vmatmul.bf16.gmra.mxu0 %v1321
        %v1391 = vpop.f32.mrf.mxu0
        %v1392 = vadd.f32 0.0, %v1391
        %v1393 = vpop.f32.mrf.mxu0
        %v1394 = vadd.f32 0.0, %v1393
        %1395 = vmatmul.bf16.gmra.mxu0 %v1324
        %v1396 = vpop.f32.mrf.mxu0
        %v1397 = vadd.f32 0.0, %v1396
        %v1398 = vpop.f32.mrf.mxu0
        %v1399 = vadd.f32 0.0, %v1398
        %1400 = vmatmul.bf16.gmra.mxu0 %v1327
        %v1401 = vpop.f32.mrf.mxu0
        %v1402 = vadd.f32 0.0, %v1401
        %v1403 = vpop.f32.mrf.mxu0
        %v1404 = vadd.f32 0.0, %v1403
        %1405 = vmatmul.bf16.gmra.mxu0 %v1330
        %v1406 = vpop.f32.mrf.mxu0
        %v1407 = vadd.f32 0.0, %v1406
        %v1408 = vpop.f32.mrf.mxu0
        %1409 = vdwg.mxu0
        %v1410 = vmul.f32 %v1143, %v1342
        %v1411 = vmul.f32 %v1144, %v1344
        %v1412 = vmul.f32 %v1145, %v1347
        %v1413 = vmul.f32 %v1146, %v1349
        %v1414 = vmul.f32 %v1147, %v1352
        %v1415 = vmul.f32 %v1148, %v1354
        %v1416 = vmul.f32 %v1149, %v1357
        %v1417 = vmul.f32 %v1150, %v1359
        %v1418 = vmul.f32 %v1151, %v1362
        %v1419 = vmul.f32 %v1152, %v1364
        %v1420 = vmul.f32 %v1153, %v1367
        %v1421 = vmul.f32 %v1154, %v1369
        %v1422 = vmul.f32 %v1155, %v1372
        %v1423 = vmul.f32 %v1156, %v1374
        %v1424 = vmul.f32 %v1157, %v1377
        %v1425 = vmul.f32 %v1158, %v1379
        %v1426 = vmul.f32 %v1159, %v1382
        %v1427 = vmul.f32 %v1160, %v1384
        %v1428 = vmul.f32 %v1161, %v1387
        %v1429 = vmul.f32 %v1162, %v1389
        %v1430 = vmul.f32 %v1163, %v1392
        %v1431 = vmul.f32 %v1164, %v1394
        %v1432 = vmul.f32 %v1165, %v1397
        %v1433 = vmul.f32 %v1166, %v1399
        %v1434 = vmul.f32 %v1167, %v1402
        %v1435 = vmul.f32 %v1168, %v1404
        %v1436 = vmul.f32 %v1169, %v1407
        %v1437 = vadd.f32 %v1410, 0.0
        %v1438 = vadd.f32 %v1411, 0.0
        %v1439 = vadd.f32 %v1412, 0.0
        %v1440 = vadd.f32 %v1413, 0.0
        %v1441 = vadd.f32 %v1414, 0.0
        %v1442 = vadd.f32 %v1415, 0.0
        %v1443 = vadd.f32 %v1416, 0.0
        %v1444 = vadd.f32 %v1417, 0.0
        %v1445 = vadd.f32 %v1418, 0.0
        %v1446 = vadd.f32 %v1419, 0.0
        %v1447 = vadd.f32 %v1420, 0.0
        %v1448 = vadd.f32 %v1421, 0.0
        %v1449 = vadd.f32 %v1422, 0.0
        %v1450 = vadd.f32 %v1423, 0.0
        %v1451 = vadd.f32 %v1424, 0.0
        %v1452 = vadd.f32 %v1425, 0.0
        %v1453 = vadd.f32 %v1426, 0.0
        %v1454 = vadd.f32 %v1427, 0.0
        %v1455 = vadd.f32 %v1428, 0.0
        %v1456 = vadd.f32 %v1429, 0.0
        %v1457 = vadd.f32 %v1430, 0.0
        %v1458 = vadd.f32 %v1431, 0.0
        %v1459 = vadd.f32 %v1432, 0.0
        %v1460 = vadd.f32 %v1433, 0.0
        %v1461 = vadd.f32 %v1434, 0.0
        %v1462 = vadd.f32 %v1435, 0.0
        %v1463 = vadd.f32 %v1436, 0.0
        %s1464 = scalar_lea.vmem %s3, 216
        %v1465 = vld [vmem:[%s1464] sm:$0xff]
        %v1466 = vld [vmem:[%s1464 + $0x8] sm:$0xff]
        %v1467 = vld [vmem:[%s1464 + $0x10] sm:$0xff]
        %v1468 = vld [vmem:[%s1464 + $0x18] sm:$0xff]
        %v1469 = vld [vmem:[%s1464 + $0x20] sm:$0xff]
        %v1470 = vld [vmem:[%s1464 + $0x28] sm:$0xff]
        %v1471 = vld [vmem:[%s1464 + $0x30] sm:$0xff]
        %v1472 = vld [vmem:[%s1464 + $0x38] sm:$0xff]
        %v1473 = vld [vmem:[%s1464 + $0x40] sm:$0xff]
        %v1474 = vld [vmem:[%s1464 + $0x48] sm:$0xff]
        %v1475 = vld [vmem:[%s1464 + $0x50] sm:$0xff]
        %v1476 = vld [vmem:[%s1464 + $0x58] sm:$0xff]
        %v1477 = vld [vmem:[%s1464 + $0x60] sm:$0xff]
        %v1478 = vld [vmem:[%s1464 + $0x68] sm:$0xff]
        %v1479 = vld [vmem:[%s1464 + $0x70] sm:$0xff]
        %v1480 = vld [vmem:[%s1464 + $0x78] sm:$0xff]
        %v1481 = vld [vmem:[%s1464 + $0x80] sm:$0xff]
        %v1482 = vld [vmem:[%s1464 + $0x88] sm:$0xff]
        %v1483 = vld [vmem:[%s1464 + $0x90] sm:$0xff]
        %v1484 = vld [vmem:[%s1464 + $0x98] sm:$0xff]
        %v1485 = vld [vmem:[%s1464 + $0xa0] sm:$0xff]
        %v1486 = vld [vmem:[%s1464 + $0xa8] sm:$0xff]
        %v1487 = vld [vmem:[%s1464 + $0xb0] sm:$0xff]
        %v1488 = vld [vmem:[%s1464 + $0xb8] sm:$0xff]
        %v1489 = vld [vmem:[%s1464 + $0xc0] sm:$0xff]
        %v1490 = vld [vmem:[%s1464 + $0xc8] sm:$0xff]
        %v1491 = vld [vmem:[%s1464 + $0xd0] sm:$0xff]
        %v1493 = vsel %vm558, %v1465, 0
        %v1496 = vsel %vm558, %v1466, 0
        %v1499 = vsel %vm558, %v1467, 0
        %v1502 = vsel %vm558, %v1468, 0
        %v1505 = vsel %vm558, %v1469, 0
        %v1508 = vsel %vm558, %v1470, 0
        %v1511 = vsel %vm558, %v1471, 0
        %v1514 = vsel %vm558, %v1472, 0
        %v1517 = vsel %vm558, %v1473, 0
        %v1520 = vsel %vm558, %v1474, 0
        %v1523 = vsel %vm558, %v1475, 0
        %v1526 = vsel %vm558, %v1476, 0
        %v1529 = vsel %vm558, %v1477, 0
        %v1532 = vsel %vm558, %v1478, 0
        %v1535 = vsel %vm558, %v1479, 0
        %v1538 = vsel %vm558, %v1480, 0
        %v1541 = vsel %vm558, %v1481, 0
        %v1544 = vsel %vm558, %v1482, 0
        %v1547 = vsel %vm558, %v1483, 0
        %v1550 = vsel %vm558, %v1484, 0
        %v1553 = vsel %vm558, %v1485, 0
        %v1556 = vsel %vm558, %v1486, 0
        %v1559 = vsel %vm558, %v1487, 0
        %v1562 = vsel %vm558, %v1488, 0
        %v1565 = vsel %vm558, %v1489, 0
        %v1568 = vsel %vm558, %v1490, 0
        %v1571 = vsel %vm558, %v1491, 0
        %1573 = vmatpush.msra.mxu0 0.0
        %1574 = vmatpush.msra.mxu0 0.0
        %1575 = vmatpush.msra.mxu0 0.0
        %1576 = vmatpush.msra.mxu0 0.0
        %1577 = vmatpush.msra.mxu0 0.0
        %1578 = vmatpush.msra.mxu0 0.0
        %1579 = vmatpush.msra.mxu0 0.0
        %1580 = vmatpush.msra.mxu0 0.0
        %1581 = vmatpush.msra.mxu0 0.0
        %1582 = vmatpush.msra.mxu0 0.0
        %1583 = vmatpush.msra.mxu0 0.0
        %1584 = vmatpush.msra.mxu0 %v522
        %1585 = vmatpush.msra.mxu0 %v521
        %1586 = vmatpush.msra.mxu0 %v520
        %1587 = vmatpush.msra.mxu0 %v519
        %1588 = vmatpush.msra.mxu0 %v518
        %1589 = vmatmul.f32.gmra.mxu0 %v1493
        %v1590 = vpop.f32.mrf.mxu0
        %v1591 = vadd.f32 0.0, %v1590
        %1592 = vmatmul.f32.gmra.mxu0 %v1496
        %v1593 = vpop.f32.mrf.mxu0
        %v1594 = vadd.f32 0.0, %v1593
        %1595 = vmatmul.f32.gmra.mxu0 %v1499
        %v1596 = vpop.f32.mrf.mxu0
        %v1597 = vadd.f32 0.0, %v1596
        %1598 = vmatmul.f32.gmra.mxu0 %v1502
        %v1599 = vpop.f32.mrf.mxu0
        %v1600 = vadd.f32 0.0, %v1599
        %1601 = vmatmul.f32.gmra.mxu0 %v1505
        %v1602 = vpop.f32.mrf.mxu0
        %v1603 = vadd.f32 0.0, %v1602
        %1604 = vmatmul.f32.gmra.mxu0 %v1508
        %v1605 = vpop.f32.mrf.mxu0
        %v1606 = vadd.f32 0.0, %v1605
        %1607 = vmatmul.f32.gmra.mxu0 %v1511
        %v1608 = vpop.f32.mrf.mxu0
        %v1609 = vadd.f32 0.0, %v1608
        %1610 = vmatmul.f32.gmra.mxu0 %v1514
        %v1611 = vpop.f32.mrf.mxu0
        %v1612 = vadd.f32 0.0, %v1611
        %1613 = vmatmul.f32.gmra.mxu0 %v1517
        %v1614 = vpop.f32.mrf.mxu0
        %v1615 = vadd.f32 0.0, %v1614
        %1616 = vmatmul.f32.gmra.mxu0 %v1520
        %v1617 = vpop.f32.mrf.mxu0
        %v1618 = vadd.f32 0.0, %v1617
        %1619 = vmatmul.f32.gmra.mxu0 %v1523
        %v1620 = vpop.f32.mrf.mxu0
        %v1621 = vadd.f32 0.0, %v1620
        %1622 = vmatmul.f32.gmra.mxu0 %v1526
        %v1623 = vpop.f32.mrf.mxu0
        %v1624 = vadd.f32 0.0, %v1623
        %1625 = vmatmul.f32.gmra.mxu0 %v1529
        %v1626 = vpop.f32.mrf.mxu0
        %v1627 = vadd.f32 0.0, %v1626
        %1628 = vmatmul.f32.gmra.mxu0 %v1532
        %v1629 = vpop.f32.mrf.mxu0
        %v1630 = vadd.f32 0.0, %v1629
        %1631 = vmatmul.f32.gmra.mxu0 %v1535
        %v1632 = vpop.f32.mrf.mxu0
        %v1633 = vadd.f32 0.0, %v1632
        %1634 = vmatmul.f32.gmra.mxu0 %v1538
        %v1635 = vpop.f32.mrf.mxu0
        %v1636 = vadd.f32 0.0, %v1635
        %1637 = vmatmul.f32.gmra.mxu0 %v1541
        %v1638 = vpop.f32.mrf.mxu0
        %v1639 = vadd.f32 0.0, %v1638
        %1640 = vmatmul.f32.gmra.mxu0 %v1544
        %v1641 = vpop.f32.mrf.mxu0
        %v1642 = vadd.f32 0.0, %v1641
        %1643 = vmatmul.f32.gmra.mxu0 %v1547
        %v1644 = vpop.f32.mrf.mxu0
        %v1645 = vadd.f32 0.0, %v1644
        %1646 = vmatmul.f32.gmra.mxu0 %v1550
        %v1647 = vpop.f32.mrf.mxu0
        %v1648 = vadd.f32 0.0, %v1647
        %1649 = vmatmul.f32.gmra.mxu0 %v1553
        %v1650 = vpop.f32.mrf.mxu0
        %v1651 = vadd.f32 0.0, %v1650
        %1652 = vmatmul.f32.gmra.mxu0 %v1556
        %v1653 = vpop.f32.mrf.mxu0
        %v1654 = vadd.f32 0.0, %v1653
        %1655 = vmatmul.f32.gmra.mxu0 %v1559
        %v1656 = vpop.f32.mrf.mxu0
        %v1657 = vadd.f32 0.0, %v1656
        %1658 = vmatmul.f32.gmra.mxu0 %v1562
        %v1659 = vpop.f32.mrf.mxu0
        %v1660 = vadd.f32 0.0, %v1659
        %1661 = vmatmul.f32.gmra.mxu0 %v1565
        %v1662 = vpop.f32.mrf.mxu0
        %v1663 = vadd.f32 0.0, %v1662
        %1664 = vmatmul.f32.gmra.mxu0 %v1568
        %v1665 = vpop.f32.mrf.mxu0
        %v1666 = vadd.f32 0.0, %v1665
        %1667 = vmatmul.f32.gmra.mxu0 %v1571
        %v1668 = vpop.f32.mrf.mxu0
        %v1669 = vadd.f32 0.0, %v1668
        %1670 = vdwg.mxu0
        %v1671 = vmax.f32 %v1591, 0.0
        %v1672 = vmax.f32 %v1594, 0.0
        %v1673 = vmax.f32 %v1597, 0.0
        %v1674 = vmax.f32 %v1600, 0.0
        %v1675 = vmax.f32 %v1603, 0.0
        %v1676 = vmax.f32 %v1606, 0.0
        %v1677 = vmax.f32 %v1609, 0.0
        %v1678 = vmax.f32 %v1612, 0.0
        %v1679 = vmax.f32 %v1615, 0.0
        %v1680 = vmax.f32 %v1618, 0.0
        %v1681 = vmax.f32 %v1621, 0.0
        %v1682 = vmax.f32 %v1624, 0.0
        %v1683 = vmax.f32 %v1627, 0.0
        %v1684 = vmax.f32 %v1630, 0.0
        %v1685 = vmax.f32 %v1633, 0.0
        %v1686 = vmax.f32 %v1636, 0.0
        %v1687 = vmax.f32 %v1639, 0.0
        %v1688 = vmax.f32 %v1642, 0.0
        %v1689 = vmax.f32 %v1645, 0.0
        %v1690 = vmax.f32 %v1648, 0.0
        %v1691 = vmax.f32 %v1651, 0.0
        %v1692 = vmax.f32 %v1654, 0.0
        %v1693 = vmax.f32 %v1657, 0.0
        %v1694 = vmax.f32 %v1660, 0.0
        %v1695 = vmax.f32 %v1663, 0.0
        %v1696 = vmax.f32 %v1666, 0.0
        %v1697 = vmax.f32 %v1669, 0.0
        %v1698 = vrsqrt.pop %v1671
        %v1699 = vmul.f32 %v1698, %v1671
        %v1700 = vmul.f32 %v1699, %v1698
        %v1701 = vmul.f32 0.5, %v1700
        %v1702 = vsub.f32 1.5, %v1701
        %v1703 = vmul.f32 %v1698, %v1702
        %v1704 = vmul.f32 %v1671, %v1703
        %vm1705 = vcmp.eq.f32.partialorder %v1671, inf
        %v1706 = vsel %vm1705, %v1671, %v1704
        %vm1707 = vcmp.eq.f32.partialorder %v1671, 0.0
        %v1708 = vand.u32 %v1671, 2147483648
        %v1709 = vsel %vm1707, %v1708, %v1706
        %v1710 = vrsqrt.pop %v1672
        %v1711 = vmul.f32 %v1710, %v1672
        %v1712 = vmul.f32 %v1711, %v1710
        %v1713 = vmul.f32 0.5, %v1712
        %v1714 = vsub.f32 1.5, %v1713
        %v1715 = vmul.f32 %v1710, %v1714
        %v1716 = vmul.f32 %v1672, %v1715
        %vm1717 = vcmp.eq.f32.partialorder %v1672, inf
        %v1718 = vsel %vm1717, %v1672, %v1716
        %vm1719 = vcmp.eq.f32.partialorder %v1672, 0.0
        %v1720 = vand.u32 %v1672, 2147483648
        %v1721 = vsel %vm1719, %v1720, %v1718
        %v1722 = vrsqrt.pop %v1673
        %v1723 = vmul.f32 %v1722, %v1673
        %v1724 = vmul.f32 %v1723, %v1722
        %v1725 = vmul.f32 0.5, %v1724
        %v1726 = vsub.f32 1.5, %v1725
        %v1727 = vmul.f32 %v1722, %v1726
        %v1728 = vmul.f32 %v1673, %v1727
        %vm1729 = vcmp.eq.f32.partialorder %v1673, inf
        %v1730 = vsel %vm1729, %v1673, %v1728
        %vm1731 = vcmp.eq.f32.partialorder %v1673, 0.0
        %v1732 = vand.u32 %v1673, 2147483648
        %v1733 = vsel %vm1731, %v1732, %v1730
        %v1734 = vrsqrt.pop %v1674
        %v1735 = vmul.f32 %v1734, %v1674
        %v1736 = vmul.f32 %v1735, %v1734
        %v1737 = vmul.f32 0.5, %v1736
        %v1738 = vsub.f32 1.5, %v1737
        %v1739 = vmul.f32 %v1734, %v1738
        %v1740 = vmul.f32 %v1674, %v1739
        %vm1741 = vcmp.eq.f32.partialorder %v1674, inf
        %v1742 = vsel %vm1741, %v1674, %v1740
        %vm1743 = vcmp.eq.f32.partialorder %v1674, 0.0
        %v1744 = vand.u32 %v1674, 2147483648
        %v1745 = vsel %vm1743, %v1744, %v1742
        %v1746 = vrsqrt.pop %v1675
        %v1747 = vmul.f32 %v1746, %v1675
        %v1748 = vmul.f32 %v1747, %v1746
        %v1749 = vmul.f32 0.5, %v1748
        %v1750 = vsub.f32 1.5, %v1749
        %v1751 = vmul.f32 %v1746, %v1750
        %v1752 = vmul.f32 %v1675, %v1751
        %vm1753 = vcmp.eq.f32.partialorder %v1675, inf
        %v1754 = vsel %vm1753, %v1675, %v1752
        %vm1755 = vcmp.eq.f32.partialorder %v1675, 0.0
        %v1756 = vand.u32 %v1675, 2147483648
        %v1757 = vsel %vm1755, %v1756, %v1754
        %v1758 = vrsqrt.pop %v1676
        %v1759 = vmul.f32 %v1758, %v1676
        %v1760 = vmul.f32 %v1759, %v1758
        %v1761 = vmul.f32 0.5, %v1760
        %v1762 = vsub.f32 1.5, %v1761
        %v1763 = vmul.f32 %v1758, %v1762
        %v1764 = vmul.f32 %v1676, %v1763
        %vm1765 = vcmp.eq.f32.partialorder %v1676, inf
        %v1766 = vsel %vm1765, %v1676, %v1764
        %vm1767 = vcmp.eq.f32.partialorder %v1676, 0.0
        %v1768 = vand.u32 %v1676, 2147483648
        %v1769 = vsel %vm1767, %v1768, %v1766
        %v1770 = vrsqrt.pop %v1677
        %v1771 = vmul.f32 %v1770, %v1677
        %v1772 = vmul.f32 %v1771, %v1770
        %v1773 = vmul.f32 0.5, %v1772
        %v1774 = vsub.f32 1.5, %v1773
        %v1775 = vmul.f32 %v1770, %v1774
        %v1776 = vmul.f32 %v1677, %v1775
        %vm1777 = vcmp.eq.f32.partialorder %v1677, inf
        %v1778 = vsel %vm1777, %v1677, %v1776
        %vm1779 = vcmp.eq.f32.partialorder %v1677, 0.0
        %v1780 = vand.u32 %v1677, 2147483648
        %v1781 = vsel %vm1779, %v1780, %v1778
        %v1782 = vrsqrt.pop %v1678
        %v1783 = vmul.f32 %v1782, %v1678
        %v1784 = vmul.f32 %v1783, %v1782
        %v1785 = vmul.f32 0.5, %v1784
        %v1786 = vsub.f32 1.5, %v1785
        %v1787 = vmul.f32 %v1782, %v1786
        %v1788 = vmul.f32 %v1678, %v1787
        %vm1789 = vcmp.eq.f32.partialorder %v1678, inf
        %v1790 = vsel %vm1789, %v1678, %v1788
        %vm1791 = vcmp.eq.f32.partialorder %v1678, 0.0
        %v1792 = vand.u32 %v1678, 2147483648
        %v1793 = vsel %vm1791, %v1792, %v1790
        %v1794 = vrsqrt.pop %v1679
        %v1795 = vmul.f32 %v1794, %v1679
        %v1796 = vmul.f32 %v1795, %v1794
        %v1797 = vmul.f32 0.5, %v1796
        %v1798 = vsub.f32 1.5, %v1797
        %v1799 = vmul.f32 %v1794, %v1798
        %v1800 = vmul.f32 %v1679, %v1799
        %vm1801 = vcmp.eq.f32.partialorder %v1679, inf
        %v1802 = vsel %vm1801, %v1679, %v1800
        %vm1803 = vcmp.eq.f32.partialorder %v1679, 0.0
        %v1804 = vand.u32 %v1679, 2147483648
        %v1805 = vsel %vm1803, %v1804, %v1802
        %v1806 = vrsqrt.pop %v1680
        %v1807 = vmul.f32 %v1806, %v1680
        %v1808 = vmul.f32 %v1807, %v1806
        %v1809 = vmul.f32 0.5, %v1808
        %v1810 = vsub.f32 1.5, %v1809
        %v1811 = vmul.f32 %v1806, %v1810
        %v1812 = vmul.f32 %v1680, %v1811
        %vm1813 = vcmp.eq.f32.partialorder %v1680, inf
        %v1814 = vsel %vm1813, %v1680, %v1812
        %vm1815 = vcmp.eq.f32.partialorder %v1680, 0.0
        %v1816 = vand.u32 %v1680, 2147483648
        %v1817 = vsel %vm1815, %v1816, %v1814
        %v1818 = vrsqrt.pop %v1681
        %v1819 = vmul.f32 %v1818, %v1681
        %v1820 = vmul.f32 %v1819, %v1818
        %v1821 = vmul.f32 0.5, %v1820
        %v1822 = vsub.f32 1.5, %v1821
        %v1823 = vmul.f32 %v1818, %v1822
        %v1824 = vmul.f32 %v1681, %v1823
        %vm1825 = vcmp.eq.f32.partialorder %v1681, inf
        %v1826 = vsel %vm1825, %v1681, %v1824
        %vm1827 = vcmp.eq.f32.partialorder %v1681, 0.0
        %v1828 = vand.u32 %v1681, 2147483648
        %v1829 = vsel %vm1827, %v1828, %v1826
        %v1830 = vrsqrt.pop %v1682
        %v1831 = vmul.f32 %v1830, %v1682
        %v1832 = vmul.f32 %v1831, %v1830
        %v1833 = vmul.f32 0.5, %v1832
        %v1834 = vsub.f32 1.5, %v1833
        %v1835 = vmul.f32 %v1830, %v1834
        %v1836 = vmul.f32 %v1682, %v1835
        %vm1837 = vcmp.eq.f32.partialorder %v1682, inf
        %v1838 = vsel %vm1837, %v1682, %v1836
        %vm1839 = vcmp.eq.f32.partialorder %v1682, 0.0
        %v1840 = vand.u32 %v1682, 2147483648
        %v1841 = vsel %vm1839, %v1840, %v1838
        %v1842 = vrsqrt.pop %v1683
        %v1843 = vmul.f32 %v1842, %v1683
        %v1844 = vmul.f32 %v1843, %v1842
        %v1845 = vmul.f32 0.5, %v1844
        %v1846 = vsub.f32 1.5, %v1845
        %v1847 = vmul.f32 %v1842, %v1846
        %v1848 = vmul.f32 %v1683, %v1847
        %vm1849 = vcmp.eq.f32.partialorder %v1683, inf
        %v1850 = vsel %vm1849, %v1683, %v1848
        %vm1851 = vcmp.eq.f32.partialorder %v1683, 0.0
        %v1852 = vand.u32 %v1683, 2147483648
        %v1853 = vsel %vm1851, %v1852, %v1850
        %v1854 = vrsqrt.pop %v1684
        %v1855 = vmul.f32 %v1854, %v1684
        %v1856 = vmul.f32 %v1855, %v1854
        %v1857 = vmul.f32 0.5, %v1856
        %v1858 = vsub.f32 1.5, %v1857
        %v1859 = vmul.f32 %v1854, %v1858
        %v1860 = vmul.f32 %v1684, %v1859
        %vm1861 = vcmp.eq.f32.partialorder %v1684, inf
        %v1862 = vsel %vm1861, %v1684, %v1860
        %vm1863 = vcmp.eq.f32.partialorder %v1684, 0.0
        %v1864 = vand.u32 %v1684, 2147483648
        %v1865 = vsel %vm1863, %v1864, %v1862
        %v1866 = vrsqrt.pop %v1685
        %v1867 = vmul.f32 %v1866, %v1685
        %v1868 = vmul.f32 %v1867, %v1866
        %v1869 = vmul.f32 0.5, %v1868
        %v1870 = vsub.f32 1.5, %v1869
        %v1871 = vmul.f32 %v1866, %v1870
        %v1872 = vmul.f32 %v1685, %v1871
        %vm1873 = vcmp.eq.f32.partialorder %v1685, inf
        %v1874 = vsel %vm1873, %v1685, %v1872
        %vm1875 = vcmp.eq.f32.partialorder %v1685, 0.0
        %v1876 = vand.u32 %v1685, 2147483648
        %v1877 = vsel %vm1875, %v1876, %v1874
        %v1878 = vrsqrt.pop %v1686
        %v1879 = vmul.f32 %v1878, %v1686
        %v1880 = vmul.f32 %v1879, %v1878
        %v1881 = vmul.f32 0.5, %v1880
        %v1882 = vsub.f32 1.5, %v1881
        %v1883 = vmul.f32 %v1878, %v1882
        %v1884 = vmul.f32 %v1686, %v1883
        %vm1885 = vcmp.eq.f32.partialorder %v1686, inf
        %v1886 = vsel %vm1885, %v1686, %v1884
        %vm1887 = vcmp.eq.f32.partialorder %v1686, 0.0
        %v1888 = vand.u32 %v1686, 2147483648
        %v1889 = vsel %vm1887, %v1888, %v1886
        %v1890 = vrsqrt.pop %v1687
        %v1891 = vmul.f32 %v1890, %v1687
        %v1892 = vmul.f32 %v1891, %v1890
        %v1893 = vmul.f32 0.5, %v1892
        %v1894 = vsub.f32 1.5, %v1893
        %v1895 = vmul.f32 %v1890, %v1894
        %v1896 = vmul.f32 %v1687, %v1895
        %vm1897 = vcmp.eq.f32.partialorder %v1687, inf
        %v1898 = vsel %vm1897, %v1687, %v1896
        %vm1899 = vcmp.eq.f32.partialorder %v1687, 0.0
        %v1900 = vand.u32 %v1687, 2147483648
        %v1901 = vsel %vm1899, %v1900, %v1898
        %v1902 = vrsqrt.pop %v1688
        %v1903 = vmul.f32 %v1902, %v1688
        %v1904 = vmul.f32 %v1903, %v1902
        %v1905 = vmul.f32 0.5, %v1904
        %v1906 = vsub.f32 1.5, %v1905
        %v1907 = vmul.f32 %v1902, %v1906
        %v1908 = vmul.f32 %v1688, %v1907
        %vm1909 = vcmp.eq.f32.partialorder %v1688, inf
        %v1910 = vsel %vm1909, %v1688, %v1908
        %vm1911 = vcmp.eq.f32.partialorder %v1688, 0.0
        %v1912 = vand.u32 %v1688, 2147483648
        %v1913 = vsel %vm1911, %v1912, %v1910
        %v1914 = vrsqrt.pop %v1689
        %v1915 = vmul.f32 %v1914, %v1689
        %v1916 = vmul.f32 %v1915, %v1914
        %v1917 = vmul.f32 0.5, %v1916
        %v1918 = vsub.f32 1.5, %v1917
        %v1919 = vmul.f32 %v1914, %v1918
        %v1920 = vmul.f32 %v1689, %v1919
        %vm1921 = vcmp.eq.f32.partialorder %v1689, inf
        %v1922 = vsel %vm1921, %v1689, %v1920
        %vm1923 = vcmp.eq.f32.partialorder %v1689, 0.0
        %v1924 = vand.u32 %v1689, 2147483648
        %v1925 = vsel %vm1923, %v1924, %v1922
        %v1926 = vrsqrt.pop %v1690
        %v1927 = vmul.f32 %v1926, %v1690
        %v1928 = vmul.f32 %v1927, %v1926
        %v1929 = vmul.f32 0.5, %v1928
        %v1930 = vsub.f32 1.5, %v1929
        %v1931 = vmul.f32 %v1926, %v1930
        %v1932 = vmul.f32 %v1690, %v1931
        %vm1933 = vcmp.eq.f32.partialorder %v1690, inf
        %v1934 = vsel %vm1933, %v1690, %v1932
        %vm1935 = vcmp.eq.f32.partialorder %v1690, 0.0
        %v1936 = vand.u32 %v1690, 2147483648
        %v1937 = vsel %vm1935, %v1936, %v1934
        %v1938 = vrsqrt.pop %v1691
        %v1939 = vmul.f32 %v1938, %v1691
        %v1940 = vmul.f32 %v1939, %v1938
        %v1941 = vmul.f32 0.5, %v1940
        %v1942 = vsub.f32 1.5, %v1941
        %v1943 = vmul.f32 %v1938, %v1942
        %v1944 = vmul.f32 %v1691, %v1943
        %vm1945 = vcmp.eq.f32.partialorder %v1691, inf
        %v1946 = vsel %vm1945, %v1691, %v1944
        %vm1947 = vcmp.eq.f32.partialorder %v1691, 0.0
        %v1948 = vand.u32 %v1691, 2147483648
        %v1949 = vsel %vm1947, %v1948, %v1946
        %v1950 = vrsqrt.pop %v1692
        %v1951 = vmul.f32 %v1950, %v1692
        %v1952 = vmul.f32 %v1951, %v1950
        %v1953 = vmul.f32 0.5, %v1952
        %v1954 = vsub.f32 1.5, %v1953
        %v1955 = vmul.f32 %v1950, %v1954
        %v1956 = vmul.f32 %v1692, %v1955
        %vm1957 = vcmp.eq.f32.partialorder %v1692, inf
        %v1958 = vsel %vm1957, %v1692, %v1956
        %vm1959 = vcmp.eq.f32.partialorder %v1692, 0.0
        %v1960 = vand.u32 %v1692, 2147483648
        %v1961 = vsel %vm1959, %v1960, %v1958
        %v1962 = vrsqrt.pop %v1693
        %v1963 = vmul.f32 %v1962, %v1693
        %v1964 = vmul.f32 %v1963, %v1962
        %v1965 = vmul.f32 0.5, %v1964
        %v1966 = vsub.f32 1.5, %v1965
        %v1967 = vmul.f32 %v1962, %v1966
        %v1968 = vmul.f32 %v1693, %v1967
        %vm1969 = vcmp.eq.f32.partialorder %v1693, inf
        %v1970 = vsel %vm1969, %v1693, %v1968
        %vm1971 = vcmp.eq.f32.partialorder %v1693, 0.0
        %v1972 = vand.u32 %v1693, 2147483648
        %v1973 = vsel %vm1971, %v1972, %v1970
        %v1974 = vrsqrt.pop %v1694
        %v1975 = vmul.f32 %v1974, %v1694
        %v1976 = vmul.f32 %v1975, %v1974
        %v1977 = vmul.f32 0.5, %v1976
        %v1978 = vsub.f32 1.5, %v1977
        %v1979 = vmul.f32 %v1974, %v1978
        %v1980 = vmul.f32 %v1694, %v1979
        %vm1981 = vcmp.eq.f32.partialorder %v1694, inf
        %v1982 = vsel %vm1981, %v1694, %v1980
        %vm1983 = vcmp.eq.f32.partialorder %v1694, 0.0
        %v1984 = vand.u32 %v1694, 2147483648
        %v1985 = vsel %vm1983, %v1984, %v1982
        %v1986 = vrsqrt.pop %v1695
        %v1987 = vmul.f32 %v1986, %v1695
        %v1988 = vmul.f32 %v1987, %v1986
        %v1989 = vmul.f32 0.5, %v1988
        %v1990 = vsub.f32 1.5, %v1989
        %v1991 = vmul.f32 %v1986, %v1990
        %v1992 = vmul.f32 %v1695, %v1991
        %vm1993 = vcmp.eq.f32.partialorder %v1695, inf
        %v1994 = vsel %vm1993, %v1695, %v1992
        %vm1995 = vcmp.eq.f32.partialorder %v1695, 0.0
        %v1996 = vand.u32 %v1695, 2147483648
        %v1997 = vsel %vm1995, %v1996, %v1994
        %v1998 = vrsqrt.pop %v1696
        %v1999 = vmul.f32 %v1998, %v1696
        %v2000 = vmul.f32 %v1999, %v1998
        %v2001 = vmul.f32 0.5, %v2000
        %v2002 = vsub.f32 1.5, %v2001
        %v2003 = vmul.f32 %v1998, %v2002
        %v2004 = vmul.f32 %v1696, %v2003
        %vm2005 = vcmp.eq.f32.partialorder %v1696, inf
        %v2006 = vsel %vm2005, %v1696, %v2004
        %vm2007 = vcmp.eq.f32.partialorder %v1696, 0.0
        %v2008 = vand.u32 %v1696, 2147483648
        %v2009 = vsel %vm2007, %v2008, %v2006
        %v2010 = vrsqrt.pop %v1697
        %v2011 = vmul.f32 %v2010, %v1697
        %v2012 = vmul.f32 %v2011, %v2010
        %v2013 = vmul.f32 0.5, %v2012
        %v2014 = vsub.f32 1.5, %v2013
        %v2015 = vmul.f32 %v2010, %v2014
        %v2016 = vmul.f32 %v1697, %v2015
        %vm2017 = vcmp.eq.f32.partialorder %v1697, inf
        %v2018 = vsel %vm2017, %v1697, %v2016
        %vm2019 = vcmp.eq.f32.partialorder %v1697, 0.0
        %v2020 = vand.u32 %v1697, 2147483648
        %v2021 = vsel %vm2019, %v2020, %v2018
        %v2022 = vmul.f32 %v1709, 1.1547005
        %v2023 = vmul.f32 %v1721, 1.1547005
        %v2024 = vmul.f32 %v1733, 1.1547005
        %v2025 = vmul.f32 %v1745, 1.1547005
        %v2026 = vmul.f32 %v1757, 1.1547005
        %v2027 = vmul.f32 %v1769, 1.1547005
        %v2028 = vmul.f32 %v1781, 1.1547005
        %v2029 = vmul.f32 %v1793, 1.1547005
        %v2030 = vmul.f32 %v1805, 1.1547005
        %v2031 = vmul.f32 %v1817, 1.1547005
        %v2032 = vmul.f32 %v1829, 1.1547005
        %v2033 = vmul.f32 %v1841, 1.1547005
        %v2034 = vmul.f32 %v1853, 1.1547005
        %v2035 = vmul.f32 %v1865, 1.1547005
        %v2036 = vmul.f32 %v1877, 1.1547005
        %v2037 = vmul.f32 %v1889, 1.1547005
        %v2038 = vmul.f32 %v1901, 1.1547005
        %v2039 = vmul.f32 %v1913, 1.1547005
        %v2040 = vmul.f32 %v1925, 1.1547005
        %v2041 = vmul.f32 %v1937, 1.1547005
        %v2042 = vmul.f32 %v1949, 1.1547005
        %v2043 = vmul.f32 %v1961, 1.1547005
        %v2044 = vmul.f32 %v1973, 1.1547005
        %v2045 = vmul.f32 %v1985, 1.1547005
        %v2046 = vmul.f32 %v1997, 1.1547005
        %v2047 = vmul.f32 %v2009, 1.1547005
        %v2048 = vmul.f32 %v2021, 1.1547005
        %v2049 = vsub.f32 1.0, %v2022
        %v2050 = vsub.f32 1.0, %v2023
        %v2051 = vsub.f32 1.0, %v2024
        %v2052 = vsub.f32 1.0, %v2025
        %v2053 = vsub.f32 1.0, %v2026
        %v2054 = vsub.f32 1.0, %v2027
        %v2055 = vsub.f32 1.0, %v2028
        %v2056 = vsub.f32 1.0, %v2029
        %v2057 = vsub.f32 1.0, %v2030
        %v2058 = vsub.f32 1.0, %v2031
        %v2059 = vsub.f32 1.0, %v2032
        %v2060 = vsub.f32 1.0, %v2033
        %v2061 = vsub.f32 1.0, %v2034
        %v2062 = vsub.f32 1.0, %v2035
        %v2063 = vsub.f32 1.0, %v2036
        %v2064 = vsub.f32 1.0, %v2037
        %v2065 = vsub.f32 1.0, %v2038
        %v2066 = vsub.f32 1.0, %v2039
        %v2067 = vsub.f32 1.0, %v2040
        %v2068 = vsub.f32 1.0, %v2041
        %v2069 = vsub.f32 1.0, %v2042
        %v2070 = vsub.f32 1.0, %v2043
        %v2071 = vsub.f32 1.0, %v2044
        %v2072 = vsub.f32 1.0, %v2045
        %v2073 = vsub.f32 1.0, %v2046
        %v2074 = vsub.f32 1.0, %v2047
        %v2075 = vsub.f32 1.0, %v2048
        %v2076 = vmax.f32 %v2049, 0.0
        %v2077 = vmax.f32 %v2050, 0.0
        %v2078 = vmax.f32 %v2051, 0.0
        %v2079 = vmax.f32 %v2052, 0.0
        %v2080 = vmax.f32 %v2053, 0.0
        %v2081 = vmax.f32 %v2054, 0.0
        %v2082 = vmax.f32 %v2055, 0.0
        %v2083 = vmax.f32 %v2056, 0.0
        %v2084 = vmax.f32 %v2057, 0.0
        %v2085 = vmax.f32 %v2058, 0.0
        %v2086 = vmax.f32 %v2059, 0.0
        %v2087 = vmax.f32 %v2060, 0.0
        %v2088 = vmax.f32 %v2061, 0.0
        %v2089 = vmax.f32 %v2062, 0.0
        %v2090 = vmax.f32 %v2063, 0.0
        %v2091 = vmax.f32 %v2064, 0.0
        %v2092 = vmax.f32 %v2065, 0.0
        %v2093 = vmax.f32 %v2066, 0.0
        %v2094 = vmax.f32 %v2067, 0.0
        %v2095 = vmax.f32 %v2068, 0.0
        %v2096 = vmax.f32 %v2069, 0.0
        %v2097 = vmax.f32 %v2070, 0.0
        %v2098 = vmax.f32 %v2071, 0.0
        %v2099 = vmax.f32 %v2072, 0.0
        %v2100 = vmax.f32 %v2073, 0.0
        %v2101 = vmax.f32 %v2074, 0.0
        %v2102 = vmax.f32 %v2075, 0.0
        %s2103 = scalar_lea.vmem %s4, 108
        %v2104 = vld [vmem:[%s2103] sm:$0xf]
        %v2105 = vld [vmem:[%s2103 + $0x4] sm:$0xf]
        %v2106 = vld [vmem:[%s2103 + $0x8] sm:$0xf]
        %v2107 = vld [vmem:[%s2103 + $0xc] sm:$0xf]
        %v2108 = vld [vmem:[%s2103 + $0x10] sm:$0xf]
        %v2109 = vld [vmem:[%s2103 + $0x14] sm:$0xf]
        %v2110 = vld [vmem:[%s2103 + $0x18] sm:$0xf]
        %v2111 = vld [vmem:[%s2103 + $0x1c] sm:$0xf]
        %v2112 = vld [vmem:[%s2103 + $0x20] sm:$0xf]
        %v2113 = vld [vmem:[%s2103 + $0x24] sm:$0xf]
        %v2114 = vld [vmem:[%s2103 + $0x28] sm:$0xf]
        %v2115 = vld [vmem:[%s2103 + $0x2c] sm:$0xf]
        %v2116 = vld [vmem:[%s2103 + $0x30] sm:$0xf]
        %v2117 = vld [vmem:[%s2103 + $0x34] sm:$0xf]
        %v2118 = vld [vmem:[%s2103 + $0x38] sm:$0xf]
        %v2119 = vld [vmem:[%s2103 + $0x3c] sm:$0xf]
        %v2120 = vld [vmem:[%s2103 + $0x40] sm:$0xf]
        %v2121 = vld [vmem:[%s2103 + $0x44] sm:$0xf]
        %v2122 = vld [vmem:[%s2103 + $0x48] sm:$0xf]
        %v2123 = vld [vmem:[%s2103 + $0x4c] sm:$0xf]
        %v2124 = vld [vmem:[%s2103 + $0x50] sm:$0xf]
        %v2125 = vld [vmem:[%s2103 + $0x54] sm:$0xf]
        %v2126 = vld [vmem:[%s2103 + $0x58] sm:$0xf]
        %v2127 = vld [vmem:[%s2103 + $0x5c] sm:$0xf]
        %v2128 = vld [vmem:[%s2103 + $0x60] sm:$0xf]
        %v2129 = vld [vmem:[%s2103 + $0x64] sm:$0xf]
        %v2130 = vld [vmem:[%s2103 + $0x68] sm:$0xf]
        %v2158 = vunpack.c.l.b16 %v2104
        %v2159 = vunpack.c.l.b16 %v2105
        %v2160 = vunpack.c.l.b16 %v2106
        %v2161 = vunpack.c.l.b16 %v2107
        %v2162 = vunpack.c.l.b16 %v2108
        %v2163 = vunpack.c.l.b16 %v2109
        %v2164 = vunpack.c.l.b16 %v2110
        %v2165 = vunpack.c.l.b16 %v2111
        %v2166 = vunpack.c.l.b16 %v2112
        %v2167 = vunpack.c.l.b16 %v2113
        %v2168 = vunpack.c.l.b16 %v2114
        %v2169 = vunpack.c.l.b16 %v2115
        %v2170 = vunpack.c.l.b16 %v2116
        %v2171 = vunpack.c.l.b16 %v2117
        %v2172 = vunpack.c.l.b16 %v2118
        %v2173 = vunpack.c.l.b16 %v2119
        %v2174 = vunpack.c.l.b16 %v2120
        %v2175 = vunpack.c.l.b16 %v2121
        %v2176 = vunpack.c.l.b16 %v2122
        %v2177 = vunpack.c.l.b16 %v2123
        %v2178 = vunpack.c.l.b16 %v2124
        %v2179 = vunpack.c.l.b16 %v2125
        %v2180 = vunpack.c.l.b16 %v2126
        %v2181 = vunpack.c.l.b16 %v2127
        %v2182 = vunpack.c.l.b16 %v2128
        %v2183 = vunpack.c.l.b16 %v2129
        %v2184 = vunpack.c.l.b16 %v2130
        %v2185 = vpack.c.b16 %v2159, %v2158
        %v2186 = vpack.c.b16 %v2161, %v2160
        %v2187 = vpack.c.b16 %v2163, %v2162
        %v2188 = vpack.c.b16 %v2165, %v2164
        %v2189 = vpack.c.b16 %v2167, %v2166
        %v2190 = vpack.c.b16 %v2169, %v2168
        %v2191 = vpack.c.b16 %v2171, %v2170
        %v2192 = vpack.c.b16 %v2173, %v2172
        %v2193 = vpack.c.b16 %v2175, %v2174
        %v2194 = vpack.c.b16 %v2177, %v2176
        %v2195 = vpack.c.b16 %v2179, %v2178
        %v2196 = vpack.c.b16 %v2181, %v2180
        %v2197 = vpack.c.b16 %v2183, %v2182
        %v2198 = vpack.c.b16 %v2184, %v2184
        %v2200 = vsel %vm1289, %v2185, 0
        %v2203 = vsel %vm1289, %v2186, 0
        %v2206 = vsel %vm1289, %v2187, 0
        %v2209 = vsel %vm1289, %v2188, 0
        %v2212 = vsel %vm1289, %v2189, 0
        %v2215 = vsel %vm1289, %v2190, 0
        %v2218 = vsel %vm1289, %v2191, 0
        %v2221 = vsel %vm1289, %v2192, 0
        %v2224 = vsel %vm1289, %v2193, 0
        %v2227 = vsel %vm1289, %v2194, 0
        %v2230 = vsel %vm1289, %v2195, 0
        %v2233 = vsel %vm1289, %v2196, 0
        %v2236 = vsel %vm1289, %v2197, 0
        %v2239 = vsel %vm1289, %v2198, 0
        %2241 = vmatpush.bf16.msra.mxu0 0
        %2242 = vmatpush.bf16.msra.mxu0 0
        %2243 = vmatpush.bf16.msra.mxu0 0
        %2244 = vmatpush.bf16.msra.mxu0 0
        %2245 = vmatpush.bf16.msra.mxu0 %v1284
        %2246 = vmatpush.bf16.msra.mxu0 %v1283
        %2247 = vmatpush.bf16.msra.mxu0 %v1282
        %2248 = vmatpush.bf16.msra.mxu0 %v1281
        %2249 = vmatmul.bf16.gmra.mxu0 %v2200
        %v2250 = vpop.f32.mrf.mxu0
        %v2251 = vadd.f32 0.0, %v2250
        %v2252 = vpop.f32.mrf.mxu0
        %v2253 = vadd.f32 0.0, %v2252
        %2254 = vmatmul.bf16.gmra.mxu0 %v2203
        %v2255 = vpop.f32.mrf.mxu0
        %v2256 = vadd.f32 0.0, %v2255
        %v2257 = vpop.f32.mrf.mxu0
        %v2258 = vadd.f32 0.0, %v2257
        %2259 = vmatmul.bf16.gmra.mxu0 %v2206
        %v2260 = vpop.f32.mrf.mxu0
        %v2261 = vadd.f32 0.0, %v2260
        %v2262 = vpop.f32.mrf.mxu0
        %v2263 = vadd.f32 0.0, %v2262
        %2264 = vmatmul.bf16.gmra.mxu0 %v2209
        %v2265 = vpop.f32.mrf.mxu0
        %v2266 = vadd.f32 0.0, %v2265
        %v2267 = vpop.f32.mrf.mxu0
        %v2268 = vadd.f32 0.0, %v2267
        %2269 = vmatmul.bf16.gmra.mxu0 %v2212
        %v2270 = vpop.f32.mrf.mxu0
        %v2271 = vadd.f32 0.0, %v2270
        %v2272 = vpop.f32.mrf.mxu0
        %v2273 = vadd.f32 0.0, %v2272
        %2274 = vmatmul.bf16.gmra.mxu0 %v2215
        %v2275 = vpop.f32.mrf.mxu0
        %v2276 = vadd.f32 0.0, %v2275
        %v2277 = vpop.f32.mrf.mxu0
        %v2278 = vadd.f32 0.0, %v2277
        %2279 = vmatmul.bf16.gmra.mxu0 %v2218
        %v2280 = vpop.f32.mrf.mxu0
        %v2281 = vadd.f32 0.0, %v2280
        %v2282 = vpop.f32.mrf.mxu0
        %v2283 = vadd.f32 0.0, %v2282
        %2284 = vmatmul.bf16.gmra.mxu0 %v2221
        %v2285 = vpop.f32.mrf.mxu0
        %v2286 = vadd.f32 0.0, %v2285
        %v2287 = vpop.f32.mrf.mxu0
        %v2288 = vadd.f32 0.0, %v2287
        %2289 = vmatmul.bf16.gmra.mxu0 %v2224
        %v2290 = vpop.f32.mrf.mxu0
        %v2291 = vadd.f32 0.0, %v2290
        %v2292 = vpop.f32.mrf.mxu0
        %v2293 = vadd.f32 0.0, %v2292
        %2294 = vmatmul.bf16.gmra.mxu0 %v2227
        %v2295 = vpop.f32.mrf.mxu0
        %v2296 = vadd.f32 0.0, %v2295
        %v2297 = vpop.f32.mrf.mxu0
        %v2298 = vadd.f32 0.0, %v2297
        %2299 = vmatmul.bf16.gmra.mxu0 %v2230
        %v2300 = vpop.f32.mrf.mxu0
        %v2301 = vadd.f32 0.0, %v2300
        %v2302 = vpop.f32.mrf.mxu0
        %v2303 = vadd.f32 0.0, %v2302
        %2304 = vmatmul.bf16.gmra.mxu0 %v2233
        %v2305 = vpop.f32.mrf.mxu0
        %v2306 = vadd.f32 0.0, %v2305
        %v2307 = vpop.f32.mrf.mxu0
        %v2308 = vadd.f32 0.0, %v2307
        %2309 = vmatmul.bf16.gmra.mxu0 %v2236
        %v2310 = vpop.f32.mrf.mxu0
        %v2311 = vadd.f32 0.0, %v2310
        %v2312 = vpop.f32.mrf.mxu0
        %v2313 = vadd.f32 0.0, %v2312
        %2314 = vmatmul.bf16.gmra.mxu0 %v2239
        %v2315 = vpop.f32.mrf.mxu0
        %v2316 = vadd.f32 0.0, %v2315
        %v2317 = vpop.f32.mrf.mxu0
        %2318 = vdwg.mxu0
        %v2319 = vmul.f32 %v2076, %v2251
        %v2320 = vmul.f32 %v2077, %v2253
        %v2321 = vmul.f32 %v2078, %v2256
        %v2322 = vmul.f32 %v2079, %v2258
        %v2323 = vmul.f32 %v2080, %v2261
        %v2324 = vmul.f32 %v2081, %v2263
        %v2325 = vmul.f32 %v2082, %v2266
        %v2326 = vmul.f32 %v2083, %v2268
        %v2327 = vmul.f32 %v2084, %v2271
        %v2328 = vmul.f32 %v2085, %v2273
        %v2329 = vmul.f32 %v2086, %v2276
        %v2330 = vmul.f32 %v2087, %v2278
        %v2331 = vmul.f32 %v2088, %v2281
        %v2332 = vmul.f32 %v2089, %v2283
        %v2333 = vmul.f32 %v2090, %v2286
        %v2334 = vmul.f32 %v2091, %v2288
        %v2335 = vmul.f32 %v2092, %v2291
        %v2336 = vmul.f32 %v2093, %v2293
        %v2337 = vmul.f32 %v2094, %v2296
        %v2338 = vmul.f32 %v2095, %v2298
        %v2339 = vmul.f32 %v2096, %v2301
        %v2340 = vmul.f32 %v2097, %v2303
        %v2341 = vmul.f32 %v2098, %v2306
        %v2342 = vmul.f32 %v2099, %v2308
        %v2343 = vmul.f32 %v2100, %v2311
        %v2344 = vmul.f32 %v2101, %v2313
        %v2345 = vmul.f32 %v2102, %v2316
        %v2346 = vadd.f32 %v1437, %v2319
        %v2347 = vadd.f32 %v1438, %v2320
        %v2348 = vadd.f32 %v1439, %v2321
        %v2349 = vadd.f32 %v1440, %v2322
        %v2350 = vadd.f32 %v1441, %v2323
        %v2351 = vadd.f32 %v1442, %v2324
        %v2352 = vadd.f32 %v1443, %v2325
        %v2353 = vadd.f32 %v1444, %v2326
        %v2354 = vadd.f32 %v1445, %v2327
        %v2355 = vadd.f32 %v1446, %v2328
        %v2356 = vadd.f32 %v1447, %v2329
        %v2357 = vadd.f32 %v1448, %v2330
        %v2358 = vadd.f32 %v1449, %v2331
        %v2359 = vadd.f32 %v1450, %v2332
        %v2360 = vadd.f32 %v1451, %v2333
        %v2361 = vadd.f32 %v1452, %v2334
        %v2362 = vadd.f32 %v1453, %v2335
        %v2363 = vadd.f32 %v1454, %v2336
        %v2364 = vadd.f32 %v1455, %v2337
        %v2365 = vadd.f32 %v1456, %v2338
        %v2366 = vadd.f32 %v1457, %v2339
        %v2367 = vadd.f32 %v1458, %v2340
        %v2368 = vadd.f32 %v1459, %v2341
        %v2369 = vadd.f32 %v1460, %v2342
        %v2370 = vadd.f32 %v1461, %v2343
        %v2371 = vadd.f32 %v1462, %v2344
        %v2372 = vadd.f32 %v1463, %v2345
        %s2373 = scalar_lea.vmem %s3, 432
        %v2374 = vld [vmem:[%s2373] sm:$0xff]
        %v2375 = vld [vmem:[%s2373 + $0x8] sm:$0xff]
        %v2376 = vld [vmem:[%s2373 + $0x10] sm:$0xff]
        %v2377 = vld [vmem:[%s2373 + $0x18] sm:$0xff]
        %v2378 = vld [vmem:[%s2373 + $0x20] sm:$0xff]
        %v2379 = vld [vmem:[%s2373 + $0x28] sm:$0xff]
        %v2380 = vld [vmem:[%s2373 + $0x30] sm:$0xff]
        %v2381 = vld [vmem:[%s2373 + $0x38] sm:$0xff]
        %v2382 = vld [vmem:[%s2373 + $0x40] sm:$0xff]
        %v2383 = vld [vmem:[%s2373 + $0x48] sm:$0xff]
        %v2384 = vld [vmem:[%s2373 + $0x50] sm:$0xff]
        %v2385 = vld [vmem:[%s2373 + $0x58] sm:$0xff]
        %v2386 = vld [vmem:[%s2373 + $0x60] sm:$0xff]
        %v2387 = vld [vmem:[%s2373 + $0x68] sm:$0xff]
        %v2388 = vld [vmem:[%s2373 + $0x70] sm:$0xff]
        %v2389 = vld [vmem:[%s2373 + $0x78] sm:$0xff]
        %v2390 = vld [vmem:[%s2373 + $0x80] sm:$0xff]
        %v2391 = vld [vmem:[%s2373 + $0x88] sm:$0xff]
        %v2392 = vld [vmem:[%s2373 + $0x90] sm:$0xff]
        %v2393 = vld [vmem:[%s2373 + $0x98] sm:$0xff]
        %v2394 = vld [vmem:[%s2373 + $0xa0] sm:$0xff]
        %v2395 = vld [vmem:[%s2373 + $0xa8] sm:$0xff]
        %v2396 = vld [vmem:[%s2373 + $0xb0] sm:$0xff]
        %v2397 = vld [vmem:[%s2373 + $0xb8] sm:$0xff]
        %v2398 = vld [vmem:[%s2373 + $0xc0] sm:$0xff]
        %v2399 = vld [vmem:[%s2373 + $0xc8] sm:$0xff]
        %v2400 = vld [vmem:[%s2373 + $0xd0] sm:$0xff]
        %v2402 = vsel %vm558, %v2374, 0
        %v2405 = vsel %vm558, %v2375, 0
        %v2408 = vsel %vm558, %v2376, 0
        %v2411 = vsel %vm558, %v2377, 0
        %v2414 = vsel %vm558, %v2378, 0
        %v2417 = vsel %vm558, %v2379, 0
        %v2420 = vsel %vm558, %v2380, 0
        %v2423 = vsel %vm558, %v2381, 0
        %v2426 = vsel %vm558, %v2382, 0
        %v2429 = vsel %vm558, %v2383, 0
        %v2432 = vsel %vm558, %v2384, 0
        %v2435 = vsel %vm558, %v2385, 0
        %v2438 = vsel %vm558, %v2386, 0
        %v2441 = vsel %vm558, %v2387, 0
        %v2444 = vsel %vm558, %v2388, 0
        %v2447 = vsel %vm558, %v2389, 0
        %v2450 = vsel %vm558, %v2390, 0
        %v2453 = vsel %vm558, %v2391, 0
        %v2456 = vsel %vm558, %v2392, 0
        %v2459 = vsel %vm558, %v2393, 0
        %v2462 = vsel %vm558, %v2394, 0
        %v2465 = vsel %vm558, %v2395, 0
        %v2468 = vsel %vm558, %v2396, 0
        %v2471 = vsel %vm558, %v2397, 0
        %v2474 = vsel %vm558, %v2398, 0
        %v2477 = vsel %vm558, %v2399, 0
        %v2480 = vsel %vm558, %v2400, 0
        %2482 = vmatpush.msra.mxu0 0.0
        %2483 = vmatpush.msra.mxu0 0.0
        %2484 = vmatpush.msra.mxu0 0.0
        %2485 = vmatpush.msra.mxu0 0.0
        %2486 = vmatpush.msra.mxu0 0.0
        %2487 = vmatpush.msra.mxu0 0.0
        %2488 = vmatpush.msra.mxu0 0.0
        %2489 = vmatpush.msra.mxu0 0.0
        %2490 = vmatpush.msra.mxu0 0.0
        %2491 = vmatpush.msra.mxu0 0.0
        %2492 = vmatpush.msra.mxu0 0.0
        %2493 = vmatpush.msra.mxu0 %v522
        %2494 = vmatpush.msra.mxu0 %v521
        %2495 = vmatpush.msra.mxu0 %v520
        %2496 = vmatpush.msra.mxu0 %v519
        %2497 = vmatpush.msra.mxu0 %v518
        %2498 = vmatmul.f32.gmra.mxu0 %v2402
        %v2499 = vpop.f32.mrf.mxu0
        %v2500 = vadd.f32 0.0, %v2499
        %2501 = vmatmul.f32.gmra.mxu0 %v2405
        %v2502 = vpop.f32.mrf.mxu0
        %v2503 = vadd.f32 0.0, %v2502
        %2504 = vmatmul.f32.gmra.mxu0 %v2408
        %v2505 = vpop.f32.mrf.mxu0
        %v2506 = vadd.f32 0.0, %v2505
        %2507 = vmatmul.f32.gmra.mxu0 %v2411
        %v2508 = vpop.f32.mrf.mxu0
        %v2509 = vadd.f32 0.0, %v2508
        %2510 = vmatmul.f32.gmra.mxu0 %v2414
        %v2511 = vpop.f32.mrf.mxu0
        %v2512 = vadd.f32 0.0, %v2511
        %2513 = vmatmul.f32.gmra.mxu0 %v2417
        %v2514 = vpop.f32.mrf.mxu0
        %v2515 = vadd.f32 0.0, %v2514
        %2516 = vmatmul.f32.gmra.mxu0 %v2420
        %v2517 = vpop.f32.mrf.mxu0
        %v2518 = vadd.f32 0.0, %v2517
        %2519 = vmatmul.f32.gmra.mxu0 %v2423
        %v2520 = vpop.f32.mrf.mxu0
        %v2521 = vadd.f32 0.0, %v2520
        %2522 = vmatmul.f32.gmra.mxu0 %v2426
        %v2523 = vpop.f32.mrf.mxu0
        %v2524 = vadd.f32 0.0, %v2523
        %2525 = vmatmul.f32.gmra.mxu0 %v2429
        %v2526 = vpop.f32.mrf.mxu0
        %v2527 = vadd.f32 0.0, %v2526
        %2528 = vmatmul.f32.gmra.mxu0 %v2432
        %v2529 = vpop.f32.mrf.mxu0
        %v2530 = vadd.f32 0.0, %v2529
        %2531 = vmatmul.f32.gmra.mxu0 %v2435
        %v2532 = vpop.f32.mrf.mxu0
        %v2533 = vadd.f32 0.0, %v2532
        %2534 = vmatmul.f32.gmra.mxu0 %v2438
        %v2535 = vpop.f32.mrf.mxu0
        %v2536 = vadd.f32 0.0, %v2535
        %2537 = vmatmul.f32.gmra.mxu0 %v2441
        %v2538 = vpop.f32.mrf.mxu0
        %v2539 = vadd.f32 0.0, %v2538
        %2540 = vmatmul.f32.gmra.mxu0 %v2444
        %v2541 = vpop.f32.mrf.mxu0
        %v2542 = vadd.f32 0.0, %v2541
        %2543 = vmatmul.f32.gmra.mxu0 %v2447
        %v2544 = vpop.f32.mrf.mxu0
        %v2545 = vadd.f32 0.0, %v2544
        %2546 = vmatmul.f32.gmra.mxu0 %v2450
        %v2547 = vpop.f32.mrf.mxu0
        %v2548 = vadd.f32 0.0, %v2547
        %2549 = vmatmul.f32.gmra.mxu0 %v2453
        %v2550 = vpop.f32.mrf.mxu0
        %v2551 = vadd.f32 0.0, %v2550
        %2552 = vmatmul.f32.gmra.mxu0 %v2456
        %v2553 = vpop.f32.mrf.mxu0
        %v2554 = vadd.f32 0.0, %v2553
        %2555 = vmatmul.f32.gmra.mxu0 %v2459
        %v2556 = vpop.f32.mrf.mxu0
        %v2557 = vadd.f32 0.0, %v2556
        %2558 = vmatmul.f32.gmra.mxu0 %v2462
        %v2559 = vpop.f32.mrf.mxu0
        %v2560 = vadd.f32 0.0, %v2559
        %2561 = vmatmul.f32.gmra.mxu0 %v2465
        %v2562 = vpop.f32.mrf.mxu0
        %v2563 = vadd.f32 0.0, %v2562
        %2564 = vmatmul.f32.gmra.mxu0 %v2468
        %v2565 = vpop.f32.mrf.mxu0
        %v2566 = vadd.f32 0.0, %v2565
        %2567 = vmatmul.f32.gmra.mxu0 %v2471
        %v2568 = vpop.f32.mrf.mxu0
        %v2569 = vadd.f32 0.0, %v2568
        %2570 = vmatmul.f32.gmra.mxu0 %v2474
        %v2571 = vpop.f32.mrf.mxu0
        %v2572 = vadd.f32 0.0, %v2571
        %2573 = vmatmul.f32.gmra.mxu0 %v2477
        %v2574 = vpop.f32.mrf.mxu0
        %v2575 = vadd.f32 0.0, %v2574
        %2576 = vmatmul.f32.gmra.mxu0 %v2480
        %v2577 = vpop.f32.mrf.mxu0
        %v2578 = vadd.f32 0.0, %v2577
        %2579 = vdwg.mxu0
        %v2580 = vmax.f32 %v2500, 0.0
        %v2581 = vmax.f32 %v2503, 0.0
        %v2582 = vmax.f32 %v2506, 0.0
        %v2583 = vmax.f32 %v2509, 0.0
        %v2584 = vmax.f32 %v2512, 0.0
        %v2585 = vmax.f32 %v2515, 0.0
        %v2586 = vmax.f32 %v2518, 0.0
        %v2587 = vmax.f32 %v2521, 0.0
        %v2588 = vmax.f32 %v2524, 0.0
        %v2589 = vmax.f32 %v2527, 0.0
        %v2590 = vmax.f32 %v2530, 0.0
        %v2591 = vmax.f32 %v2533, 0.0
        %v2592 = vmax.f32 %v2536, 0.0
        %v2593 = vmax.f32 %v2539, 0.0
        %v2594 = vmax.f32 %v2542, 0.0
        %v2595 = vmax.f32 %v2545, 0.0
        %v2596 = vmax.f32 %v2548, 0.0
        %v2597 = vmax.f32 %v2551, 0.0
        %v2598 = vmax.f32 %v2554, 0.0
        %v2599 = vmax.f32 %v2557, 0.0
        %v2600 = vmax.f32 %v2560, 0.0
        %v2601 = vmax.f32 %v2563, 0.0
        %v2602 = vmax.f32 %v2566, 0.0
        %v2603 = vmax.f32 %v2569, 0.0
        %v2604 = vmax.f32 %v2572, 0.0
        %v2605 = vmax.f32 %v2575, 0.0
        %v2606 = vmax.f32 %v2578, 0.0
        %v2607 = vrsqrt.pop %v2580
        %v2608 = vmul.f32 %v2607, %v2580
        %v2609 = vmul.f32 %v2608, %v2607
        %v2610 = vmul.f32 0.5, %v2609
        %v2611 = vsub.f32 1.5, %v2610
        %v2612 = vmul.f32 %v2607, %v2611
        %v2613 = vmul.f32 %v2580, %v2612
        %vm2614 = vcmp.eq.f32.partialorder %v2580, inf
        %v2615 = vsel %vm2614, %v2580, %v2613
        %vm2616 = vcmp.eq.f32.partialorder %v2580, 0.0
        %v2617 = vand.u32 %v2580, 2147483648
        %v2618 = vsel %vm2616, %v2617, %v2615
        %v2619 = vrsqrt.pop %v2581
        %v2620 = vmul.f32 %v2619, %v2581
        %v2621 = vmul.f32 %v2620, %v2619
        %v2622 = vmul.f32 0.5, %v2621
        %v2623 = vsub.f32 1.5, %v2622
        %v2624 = vmul.f32 %v2619, %v2623
        %v2625 = vmul.f32 %v2581, %v2624
        %vm2626 = vcmp.eq.f32.partialorder %v2581, inf
        %v2627 = vsel %vm2626, %v2581, %v2625
        %vm2628 = vcmp.eq.f32.partialorder %v2581, 0.0
        %v2629 = vand.u32 %v2581, 2147483648
        %v2630 = vsel %vm2628, %v2629, %v2627
        %v2631 = vrsqrt.pop %v2582
        %v2632 = vmul.f32 %v2631, %v2582
        %v2633 = vmul.f32 %v2632, %v2631
        %v2634 = vmul.f32 0.5, %v2633
        %v2635 = vsub.f32 1.5, %v2634
        %v2636 = vmul.f32 %v2631, %v2635
        %v2637 = vmul.f32 %v2582, %v2636
        %vm2638 = vcmp.eq.f32.partialorder %v2582, inf
        %v2639 = vsel %vm2638, %v2582, %v2637
        %vm2640 = vcmp.eq.f32.partialorder %v2582, 0.0
        %v2641 = vand.u32 %v2582, 2147483648
        %v2642 = vsel %vm2640, %v2641, %v2639
        %v2643 = vrsqrt.pop %v2583
        %v2644 = vmul.f32 %v2643, %v2583
        %v2645 = vmul.f32 %v2644, %v2643
        %v2646 = vmul.f32 0.5, %v2645
        %v2647 = vsub.f32 1.5, %v2646
        %v2648 = vmul.f32 %v2643, %v2647
        %v2649 = vmul.f32 %v2583, %v2648
        %vm2650 = vcmp.eq.f32.partialorder %v2583, inf
        %v2651 = vsel %vm2650, %v2583, %v2649
        %vm2652 = vcmp.eq.f32.partialorder %v2583, 0.0
        %v2653 = vand.u32 %v2583, 2147483648
        %v2654 = vsel %vm2652, %v2653, %v2651
        %v2655 = vrsqrt.pop %v2584
        %v2656 = vmul.f32 %v2655, %v2584
        %v2657 = vmul.f32 %v2656, %v2655
        %v2658 = vmul.f32 0.5, %v2657
        %v2659 = vsub.f32 1.5, %v2658
        %v2660 = vmul.f32 %v2655, %v2659
        %v2661 = vmul.f32 %v2584, %v2660
        %vm2662 = vcmp.eq.f32.partialorder %v2584, inf
        %v2663 = vsel %vm2662, %v2584, %v2661
        %vm2664 = vcmp.eq.f32.partialorder %v2584, 0.0
        %v2665 = vand.u32 %v2584, 2147483648
        %v2666 = vsel %vm2664, %v2665, %v2663
        %v2667 = vrsqrt.pop %v2585
        %v2668 = vmul.f32 %v2667, %v2585
        %v2669 = vmul.f32 %v2668, %v2667
        %v2670 = vmul.f32 0.5, %v2669
        %v2671 = vsub.f32 1.5, %v2670
        %v2672 = vmul.f32 %v2667, %v2671
        %v2673 = vmul.f32 %v2585, %v2672
        %vm2674 = vcmp.eq.f32.partialorder %v2585, inf
        %v2675 = vsel %vm2674, %v2585, %v2673
        %vm2676 = vcmp.eq.f32.partialorder %v2585, 0.0
        %v2677 = vand.u32 %v2585, 2147483648
        %v2678 = vsel %vm2676, %v2677, %v2675
        %v2679 = vrsqrt.pop %v2586
        %v2680 = vmul.f32 %v2679, %v2586
        %v2681 = vmul.f32 %v2680, %v2679
        %v2682 = vmul.f32 0.5, %v2681
        %v2683 = vsub.f32 1.5, %v2682
        %v2684 = vmul.f32 %v2679, %v2683
        %v2685 = vmul.f32 %v2586, %v2684
        %vm2686 = vcmp.eq.f32.partialorder %v2586, inf
        %v2687 = vsel %vm2686, %v2586, %v2685
        %vm2688 = vcmp.eq.f32.partialorder %v2586, 0.0
        %v2689 = vand.u32 %v2586, 2147483648
        %v2690 = vsel %vm2688, %v2689, %v2687
        %v2691 = vrsqrt.pop %v2587
        %v2692 = vmul.f32 %v2691, %v2587
        %v2693 = vmul.f32 %v2692, %v2691
        %v2694 = vmul.f32 0.5, %v2693
        %v2695 = vsub.f32 1.5, %v2694
        %v2696 = vmul.f32 %v2691, %v2695
        %v2697 = vmul.f32 %v2587, %v2696
        %vm2698 = vcmp.eq.f32.partialorder %v2587, inf
        %v2699 = vsel %vm2698, %v2587, %v2697
        %vm2700 = vcmp.eq.f32.partialorder %v2587, 0.0
        %v2701 = vand.u32 %v2587, 2147483648
        %v2702 = vsel %vm2700, %v2701, %v2699
        %v2703 = vrsqrt.pop %v2588
        %v2704 = vmul.f32 %v2703, %v2588
        %v2705 = vmul.f32 %v2704, %v2703
        %v2706 = vmul.f32 0.5, %v2705
        %v2707 = vsub.f32 1.5, %v2706
        %v2708 = vmul.f32 %v2703, %v2707
        %v2709 = vmul.f32 %v2588, %v2708
        %vm2710 = vcmp.eq.f32.partialorder %v2588, inf
        %v2711 = vsel %vm2710, %v2588, %v2709
        %vm2712 = vcmp.eq.f32.partialorder %v2588, 0.0
        %v2713 = vand.u32 %v2588, 2147483648
        %v2714 = vsel %vm2712, %v2713, %v2711
        %v2715 = vrsqrt.pop %v2589
        %v2716 = vmul.f32 %v2715, %v2589
        %v2717 = vmul.f32 %v2716, %v2715
        %v2718 = vmul.f32 0.5, %v2717
        %v2719 = vsub.f32 1.5, %v2718
        %v2720 = vmul.f32 %v2715, %v2719
        %v2721 = vmul.f32 %v2589, %v2720
        %vm2722 = vcmp.eq.f32.partialorder %v2589, inf
        %v2723 = vsel %vm2722, %v2589, %v2721
        %vm2724 = vcmp.eq.f32.partialorder %v2589, 0.0
        %v2725 = vand.u32 %v2589, 2147483648
        %v2726 = vsel %vm2724, %v2725, %v2723
        %v2727 = vrsqrt.pop %v2590
        %v2728 = vmul.f32 %v2727, %v2590
        %v2729 = vmul.f32 %v2728, %v2727
        %v2730 = vmul.f32 0.5, %v2729
        %v2731 = vsub.f32 1.5, %v2730
        %v2732 = vmul.f32 %v2727, %v2731
        %v2733 = vmul.f32 %v2590, %v2732
        %vm2734 = vcmp.eq.f32.partialorder %v2590, inf
        %v2735 = vsel %vm2734, %v2590, %v2733
        %vm2736 = vcmp.eq.f32.partialorder %v2590, 0.0
        %v2737 = vand.u32 %v2590, 2147483648
        %v2738 = vsel %vm2736, %v2737, %v2735
        %v2739 = vrsqrt.pop %v2591
        %v2740 = vmul.f32 %v2739, %v2591
        %v2741 = vmul.f32 %v2740, %v2739
        %v2742 = vmul.f32 0.5, %v2741
        %v2743 = vsub.f32 1.5, %v2742
        %v2744 = vmul.f32 %v2739, %v2743
        %v2745 = vmul.f32 %v2591, %v2744
        %vm2746 = vcmp.eq.f32.partialorder %v2591, inf
        %v2747 = vsel %vm2746, %v2591, %v2745
        %vm2748 = vcmp.eq.f32.partialorder %v2591, 0.0
        %v2749 = vand.u32 %v2591, 2147483648
        %v2750 = vsel %vm2748, %v2749, %v2747
        %v2751 = vrsqrt.pop %v2592
        %v2752 = vmul.f32 %v2751, %v2592
        %v2753 = vmul.f32 %v2752, %v2751
        %v2754 = vmul.f32 0.5, %v2753
        %v2755 = vsub.f32 1.5, %v2754
        %v2756 = vmul.f32 %v2751, %v2755
        %v2757 = vmul.f32 %v2592, %v2756
        %vm2758 = vcmp.eq.f32.partialorder %v2592, inf
        %v2759 = vsel %vm2758, %v2592, %v2757
        %vm2760 = vcmp.eq.f32.partialorder %v2592, 0.0
        %v2761 = vand.u32 %v2592, 2147483648
        %v2762 = vsel %vm2760, %v2761, %v2759
        %v2763 = vrsqrt.pop %v2593
        %v2764 = vmul.f32 %v2763, %v2593
        %v2765 = vmul.f32 %v2764, %v2763
        %v2766 = vmul.f32 0.5, %v2765
        %v2767 = vsub.f32 1.5, %v2766
        %v2768 = vmul.f32 %v2763, %v2767
        %v2769 = vmul.f32 %v2593, %v2768
        %vm2770 = vcmp.eq.f32.partialorder %v2593, inf
        %v2771 = vsel %vm2770, %v2593, %v2769
        %vm2772 = vcmp.eq.f32.partialorder %v2593, 0.0
        %v2773 = vand.u32 %v2593, 2147483648
        %v2774 = vsel %vm2772, %v2773, %v2771
        %v2775 = vrsqrt.pop %v2594
        %v2776 = vmul.f32 %v2775, %v2594
        %v2777 = vmul.f32 %v2776, %v2775
        %v2778 = vmul.f32 0.5, %v2777
        %v2779 = vsub.f32 1.5, %v2778
        %v2780 = vmul.f32 %v2775, %v2779
        %v2781 = vmul.f32 %v2594, %v2780
        %vm2782 = vcmp.eq.f32.partialorder %v2594, inf
        %v2783 = vsel %vm2782, %v2594, %v2781
        %vm2784 = vcmp.eq.f32.partialorder %v2594, 0.0
        %v2785 = vand.u32 %v2594, 2147483648
        %v2786 = vsel %vm2784, %v2785, %v2783
        %v2787 = vrsqrt.pop %v2595
        %v2788 = vmul.f32 %v2787, %v2595
        %v2789 = vmul.f32 %v2788, %v2787
        %v2790 = vmul.f32 0.5, %v2789
        %v2791 = vsub.f32 1.5, %v2790
        %v2792 = vmul.f32 %v2787, %v2791
        %v2793 = vmul.f32 %v2595, %v2792
        %vm2794 = vcmp.eq.f32.partialorder %v2595, inf
        %v2795 = vsel %vm2794, %v2595, %v2793
        %vm2796 = vcmp.eq.f32.partialorder %v2595, 0.0
        %v2797 = vand.u32 %v2595, 2147483648
        %v2798 = vsel %vm2796, %v2797, %v2795
        %v2799 = vrsqrt.pop %v2596
        %v2800 = vmul.f32 %v2799, %v2596
        %v2801 = vmul.f32 %v2800, %v2799
        %v2802 = vmul.f32 0.5, %v2801
        %v2803 = vsub.f32 1.5, %v2802
        %v2804 = vmul.f32 %v2799, %v2803
        %v2805 = vmul.f32 %v2596, %v2804
        %vm2806 = vcmp.eq.f32.partialorder %v2596, inf
        %v2807 = vsel %vm2806, %v2596, %v2805
        %vm2808 = vcmp.eq.f32.partialorder %v2596, 0.0
        %v2809 = vand.u32 %v2596, 2147483648
        %v2810 = vsel %vm2808, %v2809, %v2807
        %v2811 = vrsqrt.pop %v2597
        %v2812 = vmul.f32 %v2811, %v2597
        %v2813 = vmul.f32 %v2812, %v2811
        %v2814 = vmul.f32 0.5, %v2813
        %v2815 = vsub.f32 1.5, %v2814
        %v2816 = vmul.f32 %v2811, %v2815
        %v2817 = vmul.f32 %v2597, %v2816
        %vm2818 = vcmp.eq.f32.partialorder %v2597, inf
        %v2819 = vsel %vm2818, %v2597, %v2817
        %vm2820 = vcmp.eq.f32.partialorder %v2597, 0.0
        %v2821 = vand.u32 %v2597, 2147483648
        %v2822 = vsel %vm2820, %v2821, %v2819
        %v2823 = vrsqrt.pop %v2598
        %v2824 = vmul.f32 %v2823, %v2598
        %v2825 = vmul.f32 %v2824, %v2823
        %v2826 = vmul.f32 0.5, %v2825
        %v2827 = vsub.f32 1.5, %v2826
        %v2828 = vmul.f32 %v2823, %v2827
        %v2829 = vmul.f32 %v2598, %v2828
        %vm2830 = vcmp.eq.f32.partialorder %v2598, inf
        %v2831 = vsel %vm2830, %v2598, %v2829
        %vm2832 = vcmp.eq.f32.partialorder %v2598, 0.0
        %v2833 = vand.u32 %v2598, 2147483648
        %v2834 = vsel %vm2832, %v2833, %v2831
        %v2835 = vrsqrt.pop %v2599
        %v2836 = vmul.f32 %v2835, %v2599
        %v2837 = vmul.f32 %v2836, %v2835
        %v2838 = vmul.f32 0.5, %v2837
        %v2839 = vsub.f32 1.5, %v2838
        %v2840 = vmul.f32 %v2835, %v2839
        %v2841 = vmul.f32 %v2599, %v2840
        %vm2842 = vcmp.eq.f32.partialorder %v2599, inf
        %v2843 = vsel %vm2842, %v2599, %v2841
        %vm2844 = vcmp.eq.f32.partialorder %v2599, 0.0
        %v2845 = vand.u32 %v2599, 2147483648
        %v2846 = vsel %vm2844, %v2845, %v2843
        %v2847 = vrsqrt.pop %v2600
        %v2848 = vmul.f32 %v2847, %v2600
        %v2849 = vmul.f32 %v2848, %v2847
        %v2850 = vmul.f32 0.5, %v2849
        %v2851 = vsub.f32 1.5, %v2850
        %v2852 = vmul.f32 %v2847, %v2851
        %v2853 = vmul.f32 %v2600, %v2852
        %vm2854 = vcmp.eq.f32.partialorder %v2600, inf
        %v2855 = vsel %vm2854, %v2600, %v2853
        %vm2856 = vcmp.eq.f32.partialorder %v2600, 0.0
        %v2857 = vand.u32 %v2600, 2147483648
        %v2858 = vsel %vm2856, %v2857, %v2855
        %v2859 = vrsqrt.pop %v2601
        %v2860 = vmul.f32 %v2859, %v2601
        %v2861 = vmul.f32 %v2860, %v2859
        %v2862 = vmul.f32 0.5, %v2861
        %v2863 = vsub.f32 1.5, %v2862
        %v2864 = vmul.f32 %v2859, %v2863
        %v2865 = vmul.f32 %v2601, %v2864
        %vm2866 = vcmp.eq.f32.partialorder %v2601, inf
        %v2867 = vsel %vm2866, %v2601, %v2865
        %vm2868 = vcmp.eq.f32.partialorder %v2601, 0.0
        %v2869 = vand.u32 %v2601, 2147483648
        %v2870 = vsel %vm2868, %v2869, %v2867
        %v2871 = vrsqrt.pop %v2602
        %v2872 = vmul.f32 %v2871, %v2602
        %v2873 = vmul.f32 %v2872, %v2871
        %v2874 = vmul.f32 0.5, %v2873
        %v2875 = vsub.f32 1.5, %v2874
        %v2876 = vmul.f32 %v2871, %v2875
        %v2877 = vmul.f32 %v2602, %v2876
        %vm2878 = vcmp.eq.f32.partialorder %v2602, inf
        %v2879 = vsel %vm2878, %v2602, %v2877
        %vm2880 = vcmp.eq.f32.partialorder %v2602, 0.0
        %v2881 = vand.u32 %v2602, 2147483648
        %v2882 = vsel %vm2880, %v2881, %v2879
        %v2883 = vrsqrt.pop %v2603
        %v2884 = vmul.f32 %v2883, %v2603
        %v2885 = vmul.f32 %v2884, %v2883
        %v2886 = vmul.f32 0.5, %v2885
        %v2887 = vsub.f32 1.5, %v2886
        %v2888 = vmul.f32 %v2883, %v2887
        %v2889 = vmul.f32 %v2603, %v2888
        %vm2890 = vcmp.eq.f32.partialorder %v2603, inf
        %v2891 = vsel %vm2890, %v2603, %v2889
        %vm2892 = vcmp.eq.f32.partialorder %v2603, 0.0
        %v2893 = vand.u32 %v2603, 2147483648
        %v2894 = vsel %vm2892, %v2893, %v2891
        %v2895 = vrsqrt.pop %v2604
        %v2896 = vmul.f32 %v2895, %v2604
        %v2897 = vmul.f32 %v2896, %v2895
        %v2898 = vmul.f32 0.5, %v2897
        %v2899 = vsub.f32 1.5, %v2898
        %v2900 = vmul.f32 %v2895, %v2899
        %v2901 = vmul.f32 %v2604, %v2900
        %vm2902 = vcmp.eq.f32.partialorder %v2604, inf
        %v2903 = vsel %vm2902, %v2604, %v2901
        %vm2904 = vcmp.eq.f32.partialorder %v2604, 0.0
        %v2905 = vand.u32 %v2604, 2147483648
        %v2906 = vsel %vm2904, %v2905, %v2903
        %v2907 = vrsqrt.pop %v2605
        %v2908 = vmul.f32 %v2907, %v2605
        %v2909 = vmul.f32 %v2908, %v2907
        %v2910 = vmul.f32 0.5, %v2909
        %v2911 = vsub.f32 1.5, %v2910
        %v2912 = vmul.f32 %v2907, %v2911
        %v2913 = vmul.f32 %v2605, %v2912
        %vm2914 = vcmp.eq.f32.partialorder %v2605, inf
        %v2915 = vsel %vm2914, %v2605, %v2913
        %vm2916 = vcmp.eq.f32.partialorder %v2605, 0.0
        %v2917 = vand.u32 %v2605, 2147483648
        %v2918 = vsel %vm2916, %v2917, %v2915
        %v2919 = vrsqrt.pop %v2606
        %v2920 = vmul.f32 %v2919, %v2606
        %v2921 = vmul.f32 %v2920, %v2919
        %v2922 = vmul.f32 0.5, %v2921
        %v2923 = vsub.f32 1.5, %v2922
        %v2924 = vmul.f32 %v2919, %v2923
        %v2925 = vmul.f32 %v2606, %v2924
        %vm2926 = vcmp.eq.f32.partialorder %v2606, inf
        %v2927 = vsel %vm2926, %v2606, %v2925
        %vm2928 = vcmp.eq.f32.partialorder %v2606, 0.0
        %v2929 = vand.u32 %v2606, 2147483648
        %v2930 = vsel %vm2928, %v2929, %v2927
        %v2931 = vmul.f32 %v2618, 1.1547005
        %v2932 = vmul.f32 %v2630, 1.1547005
        %v2933 = vmul.f32 %v2642, 1.1547005
        %v2934 = vmul.f32 %v2654, 1.1547005
        %v2935 = vmul.f32 %v2666, 1.1547005
        %v2936 = vmul.f32 %v2678, 1.1547005
        %v2937 = vmul.f32 %v2690, 1.1547005
        %v2938 = vmul.f32 %v2702, 1.1547005
        %v2939 = vmul.f32 %v2714, 1.1547005
        %v2940 = vmul.f32 %v2726, 1.1547005
        %v2941 = vmul.f32 %v2738, 1.1547005
        %v2942 = vmul.f32 %v2750, 1.1547005
        %v2943 = vmul.f32 %v2762, 1.1547005
        %v2944 = vmul.f32 %v2774, 1.1547005
        %v2945 = vmul.f32 %v2786, 1.1547005
        %v2946 = vmul.f32 %v2798, 1.1547005
        %v2947 = vmul.f32 %v2810, 1.1547005
        %v2948 = vmul.f32 %v2822, 1.1547005
        %v2949 = vmul.f32 %v2834, 1.1547005
        %v2950 = vmul.f32 %v2846, 1.1547005
        %v2951 = vmul.f32 %v2858, 1.1547005
        %v2952 = vmul.f32 %v2870, 1.1547005
        %v2953 = vmul.f32 %v2882, 1.1547005
        %v2954 = vmul.f32 %v2894, 1.1547005
        %v2955 = vmul.f32 %v2906, 1.1547005
        %v2956 = vmul.f32 %v2918, 1.1547005
        %v2957 = vmul.f32 %v2930, 1.1547005
        %v2958 = vsub.f32 1.0, %v2931
        %v2959 = vsub.f32 1.0, %v2932
        %v2960 = vsub.f32 1.0, %v2933
        %v2961 = vsub.f32 1.0, %v2934
        %v2962 = vsub.f32 1.0, %v2935
        %v2963 = vsub.f32 1.0, %v2936
        %v2964 = vsub.f32 1.0, %v2937
        %v2965 = vsub.f32 1.0, %v2938
        %v2966 = vsub.f32 1.0, %v2939
        %v2967 = vsub.f32 1.0, %v2940
        %v2968 = vsub.f32 1.0, %v2941
        %v2969 = vsub.f32 1.0, %v2942
        %v2970 = vsub.f32 1.0, %v2943
        %v2971 = vsub.f32 1.0, %v2944
        %v2972 = vsub.f32 1.0, %v2945
        %v2973 = vsub.f32 1.0, %v2946
        %v2974 = vsub.f32 1.0, %v2947
        %v2975 = vsub.f32 1.0, %v2948
        %v2976 = vsub.f32 1.0, %v2949
        %v2977 = vsub.f32 1.0, %v2950
        %v2978 = vsub.f32 1.0, %v2951
        %v2979 = vsub.f32 1.0, %v2952
        %v2980 = vsub.f32 1.0, %v2953
        %v2981 = vsub.f32 1.0, %v2954
        %v2982 = vsub.f32 1.0, %v2955
        %v2983 = vsub.f32 1.0, %v2956
        %v2984 = vsub.f32 1.0, %v2957
        %v2985 = vmax.f32 %v2958, 0.0
        %v2986 = vmax.f32 %v2959, 0.0
        %v2987 = vmax.f32 %v2960, 0.0
        %v2988 = vmax.f32 %v2961, 0.0
        %v2989 = vmax.f32 %v2962, 0.0
        %v2990 = vmax.f32 %v2963, 0.0
        %v2991 = vmax.f32 %v2964, 0.0
        %v2992 = vmax.f32 %v2965, 0.0
        %v2993 = vmax.f32 %v2966, 0.0
        %v2994 = vmax.f32 %v2967, 0.0
        %v2995 = vmax.f32 %v2968, 0.0
        %v2996 = vmax.f32 %v2969, 0.0
        %v2997 = vmax.f32 %v2970, 0.0
        %v2998 = vmax.f32 %v2971, 0.0
        %v2999 = vmax.f32 %v2972, 0.0
        %v3000 = vmax.f32 %v2973, 0.0
        %v3001 = vmax.f32 %v2974, 0.0
        %v3002 = vmax.f32 %v2975, 0.0
        %v3003 = vmax.f32 %v2976, 0.0
        %v3004 = vmax.f32 %v2977, 0.0
        %v3005 = vmax.f32 %v2978, 0.0
        %v3006 = vmax.f32 %v2979, 0.0
        %v3007 = vmax.f32 %v2980, 0.0
        %v3008 = vmax.f32 %v2981, 0.0
        %v3009 = vmax.f32 %v2982, 0.0
        %v3010 = vmax.f32 %v2983, 0.0
        %v3011 = vmax.f32 %v2984, 0.0
        %s3012 = scalar_lea.vmem %s4, 216
        %v3013 = vld [vmem:[%s3012] sm:$0xf]
        %v3014 = vld [vmem:[%s3012 + $0x4] sm:$0xf]
        %v3015 = vld [vmem:[%s3012 + $0x8] sm:$0xf]
        %v3016 = vld [vmem:[%s3012 + $0xc] sm:$0xf]
        %v3017 = vld [vmem:[%s3012 + $0x10] sm:$0xf]
        %v3018 = vld [vmem:[%s3012 + $0x14] sm:$0xf]
        %v3019 = vld [vmem:[%s3012 + $0x18] sm:$0xf]
        %v3020 = vld [vmem:[%s3012 + $0x1c] sm:$0xf]
        %v3021 = vld [vmem:[%s3012 + $0x20] sm:$0xf]
        %v3022 = vld [vmem:[%s3012 + $0x24] sm:$0xf]
        %v3023 = vld [vmem:[%s3012 + $0x28] sm:$0xf]
        %v3024 = vld [vmem:[%s3012 + $0x2c] sm:$0xf]
        %v3025 = vld [vmem:[%s3012 + $0x30] sm:$0xf]
        %v3026 = vld [vmem:[%s3012 + $0x34] sm:$0xf]
        %v3027 = vld [vmem:[%s3012 + $0x38] sm:$0xf]
        %v3028 = vld [vmem:[%s3012 + $0x3c] sm:$0xf]
        %v3029 = vld [vmem:[%s3012 + $0x40] sm:$0xf]
        %v3030 = vld [vmem:[%s3012 + $0x44] sm:$0xf]
        %v3031 = vld [vmem:[%s3012 + $0x48] sm:$0xf]
        %v3032 = vld [vmem:[%s3012 + $0x4c] sm:$0xf]
        %v3033 = vld [vmem:[%s3012 + $0x50] sm:$0xf]
        %v3034 = vld [vmem:[%s3012 + $0x54] sm:$0xf]
        %v3035 = vld [vmem:[%s3012 + $0x58] sm:$0xf]
        %v3036 = vld [vmem:[%s3012 + $0x5c] sm:$0xf]
        %v3037 = vld [vmem:[%s3012 + $0x60] sm:$0xf]
        %v3038 = vld [vmem:[%s3012 + $0x64] sm:$0xf]
        %v3039 = vld [vmem:[%s3012 + $0x68] sm:$0xf]
        %v3067 = vunpack.c.l.b16 %v3013
        %v3068 = vunpack.c.l.b16 %v3014
        %v3069 = vunpack.c.l.b16 %v3015
        %v3070 = vunpack.c.l.b16 %v3016
        %v3071 = vunpack.c.l.b16 %v3017
        %v3072 = vunpack.c.l.b16 %v3018
        %v3073 = vunpack.c.l.b16 %v3019
        %v3074 = vunpack.c.l.b16 %v3020
        %v3075 = vunpack.c.l.b16 %v3021
        %v3076 = vunpack.c.l.b16 %v3022
        %v3077 = vunpack.c.l.b16 %v3023
        %v3078 = vunpack.c.l.b16 %v3024
        %v3079 = vunpack.c.l.b16 %v3025
        %v3080 = vunpack.c.l.b16 %v3026
        %v3081 = vunpack.c.l.b16 %v3027
        %v3082 = vunpack.c.l.b16 %v3028
        %v3083 = vunpack.c.l.b16 %v3029
        %v3084 = vunpack.c.l.b16 %v3030
        %v3085 = vunpack.c.l.b16 %v3031
        %v3086 = vunpack.c.l.b16 %v3032
        %v3087 = vunpack.c.l.b16 %v3033
        %v3088 = vunpack.c.l.b16 %v3034
        %v3089 = vunpack.c.l.b16 %v3035
        %v3090 = vunpack.c.l.b16 %v3036
        %v3091 = vunpack.c.l.b16 %v3037
        %v3092 = vunpack.c.l.b16 %v3038
        %v3093 = vunpack.c.l.b16 %v3039
        %v3094 = vpack.c.b16 %v3068, %v3067
        %v3095 = vpack.c.b16 %v3070, %v3069
        %v3096 = vpack.c.b16 %v3072, %v3071
        %v3097 = vpack.c.b16 %v3074, %v3073
        %v3098 = vpack.c.b16 %v3076, %v3075
        %v3099 = vpack.c.b16 %v3078, %v3077
        %v3100 = vpack.c.b16 %v3080, %v3079
        %v3101 = vpack.c.b16 %v3082, %v3081
        %v3102 = vpack.c.b16 %v3084, %v3083
        %v3103 = vpack.c.b16 %v3086, %v3085
        %v3104 = vpack.c.b16 %v3088, %v3087
        %v3105 = vpack.c.b16 %v3090, %v3089
        %v3106 = vpack.c.b16 %v3092, %v3091
        %v3107 = vpack.c.b16 %v3093, %v3093
        %v3109 = vsel %vm1289, %v3094, 0
        %v3112 = vsel %vm1289, %v3095, 0
        %v3115 = vsel %vm1289, %v3096, 0
        %v3118 = vsel %vm1289, %v3097, 0
        %v3121 = vsel %vm1289, %v3098, 0
        %v3124 = vsel %vm1289, %v3099, 0
        %v3127 = vsel %vm1289, %v3100, 0
        %v3130 = vsel %vm1289, %v3101, 0
        %v3133 = vsel %vm1289, %v3102, 0
        %v3136 = vsel %vm1289, %v3103, 0
        %v3139 = vsel %vm1289, %v3104, 0
        %v3142 = vsel %vm1289, %v3105, 0
        %v3145 = vsel %vm1289, %v3106, 0
        %v3148 = vsel %vm1289, %v3107, 0
        %3150 = vmatpush.bf16.msra.mxu0 0
        %3151 = vmatpush.bf16.msra.mxu0 0
        %3152 = vmatpush.bf16.msra.mxu0 0
        %3153 = vmatpush.bf16.msra.mxu0 0
        %3154 = vmatpush.bf16.msra.mxu0 %v1284
        %3155 = vmatpush.bf16.msra.mxu0 %v1283
        %3156 = vmatpush.bf16.msra.mxu0 %v1282
        %3157 = vmatpush.bf16.msra.mxu0 %v1281
        %3158 = vmatmul.bf16.gmra.mxu0 %v3109
        %v3159 = vpop.f32.mrf.mxu0
        %v3160 = vadd.f32 0.0, %v3159
        %v3161 = vpop.f32.mrf.mxu0
        %v3162 = vadd.f32 0.0, %v3161
        %3163 = vmatmul.bf16.gmra.mxu0 %v3112
        %v3164 = vpop.f32.mrf.mxu0
        %v3165 = vadd.f32 0.0, %v3164
        %v3166 = vpop.f32.mrf.mxu0
        %v3167 = vadd.f32 0.0, %v3166
        %3168 = vmatmul.bf16.gmra.mxu0 %v3115
        %v3169 = vpop.f32.mrf.mxu0
        %v3170 = vadd.f32 0.0, %v3169
        %v3171 = vpop.f32.mrf.mxu0
        %v3172 = vadd.f32 0.0, %v3171
        %3173 = vmatmul.bf16.gmra.mxu0 %v3118
        %v3174 = vpop.f32.mrf.mxu0
        %v3175 = vadd.f32 0.0, %v3174
        %v3176 = vpop.f32.mrf.mxu0
        %v3177 = vadd.f32 0.0, %v3176
        %3178 = vmatmul.bf16.gmra.mxu0 %v3121
        %v3179 = vpop.f32.mrf.mxu0
        %v3180 = vadd.f32 0.0, %v3179
        %v3181 = vpop.f32.mrf.mxu0
        %v3182 = vadd.f32 0.0, %v3181
        %3183 = vmatmul.bf16.gmra.mxu0 %v3124
        %v3184 = vpop.f32.mrf.mxu0
        %v3185 = vadd.f32 0.0, %v3184
        %v3186 = vpop.f32.mrf.mxu0
        %v3187 = vadd.f32 0.0, %v3186
        %3188 = vmatmul.bf16.gmra.mxu0 %v3127
        %v3189 = vpop.f32.mrf.mxu0
        %v3190 = vadd.f32 0.0, %v3189
        %v3191 = vpop.f32.mrf.mxu0
        %v3192 = vadd.f32 0.0, %v3191
        %3193 = vmatmul.bf16.gmra.mxu0 %v3130
        %v3194 = vpop.f32.mrf.mxu0
        %v3195 = vadd.f32 0.0, %v3194
        %v3196 = vpop.f32.mrf.mxu0
        %v3197 = vadd.f32 0.0, %v3196
        %3198 = vmatmul.bf16.gmra.mxu0 %v3133
        %v3199 = vpop.f32.mrf.mxu0
        %v3200 = vadd.f32 0.0, %v3199
        %v3201 = vpop.f32.mrf.mxu0
        %v3202 = vadd.f32 0.0, %v3201
        %3203 = vmatmul.bf16.gmra.mxu0 %v3136
        %v3204 = vpop.f32.mrf.mxu0
        %v3205 = vadd.f32 0.0, %v3204
        %v3206 = vpop.f32.mrf.mxu0
        %v3207 = vadd.f32 0.0, %v3206
        %3208 = vmatmul.bf16.gmra.mxu0 %v3139
        %v3209 = vpop.f32.mrf.mxu0
        %v3210 = vadd.f32 0.0, %v3209
        %v3211 = vpop.f32.mrf.mxu0
        %v3212 = vadd.f32 0.0, %v3211
        %3213 = vmatmul.bf16.gmra.mxu0 %v3142
        %v3214 = vpop.f32.mrf.mxu0
        %v3215 = vadd.f32 0.0, %v3214
        %v3216 = vpop.f32.mrf.mxu0
        %v3217 = vadd.f32 0.0, %v3216
        %3218 = vmatmul.bf16.gmra.mxu0 %v3145
        %v3219 = vpop.f32.mrf.mxu0
        %v3220 = vadd.f32 0.0, %v3219
        %v3221 = vpop.f32.mrf.mxu0
        %v3222 = vadd.f32 0.0, %v3221
        %3223 = vmatmul.bf16.gmra.mxu0 %v3148
        %v3224 = vpop.f32.mrf.mxu0
        %v3225 = vadd.f32 0.0, %v3224
        %v3226 = vpop.f32.mrf.mxu0
        %3227 = vdwg.mxu0
        %v3228 = vmul.f32 %v2985, %v3160
        %v3229 = vmul.f32 %v2986, %v3162
        %v3230 = vmul.f32 %v2987, %v3165
        %v3231 = vmul.f32 %v2988, %v3167
        %v3232 = vmul.f32 %v2989, %v3170
        %v3233 = vmul.f32 %v2990, %v3172
        %v3234 = vmul.f32 %v2991, %v3175
        %v3235 = vmul.f32 %v2992, %v3177
        %v3236 = vmul.f32 %v2993, %v3180
        %v3237 = vmul.f32 %v2994, %v3182
        %v3238 = vmul.f32 %v2995, %v3185
        %v3239 = vmul.f32 %v2996, %v3187
        %v3240 = vmul.f32 %v2997, %v3190
        %v3241 = vmul.f32 %v2998, %v3192
        %v3242 = vmul.f32 %v2999, %v3195
        %v3243 = vmul.f32 %v3000, %v3197
        %v3244 = vmul.f32 %v3001, %v3200
        %v3245 = vmul.f32 %v3002, %v3202
        %v3246 = vmul.f32 %v3003, %v3205
        %v3247 = vmul.f32 %v3004, %v3207
        %v3248 = vmul.f32 %v3005, %v3210
        %v3249 = vmul.f32 %v3006, %v3212
        %v3250 = vmul.f32 %v3007, %v3215
        %v3251 = vmul.f32 %v3008, %v3217
        %v3252 = vmul.f32 %v3009, %v3220
        %v3253 = vmul.f32 %v3010, %v3222
        %v3254 = vmul.f32 %v3011, %v3225
        %v3255 = vadd.f32 %v2346, %v3228
        %v3256 = vadd.f32 %v2347, %v3229
        %v3257 = vadd.f32 %v2348, %v3230
        %v3258 = vadd.f32 %v2349, %v3231
        %v3259 = vadd.f32 %v2350, %v3232
        %v3260 = vadd.f32 %v2351, %v3233
        %v3261 = vadd.f32 %v2352, %v3234
        %v3262 = vadd.f32 %v2353, %v3235
        %v3263 = vadd.f32 %v2354, %v3236
        %v3264 = vadd.f32 %v2355, %v3237
        %v3265 = vadd.f32 %v2356, %v3238
        %v3266 = vadd.f32 %v2357, %v3239
        %v3267 = vadd.f32 %v2358, %v3240
        %v3268 = vadd.f32 %v2359, %v3241
        %v3269 = vadd.f32 %v2360, %v3242
        %v3270 = vadd.f32 %v2361, %v3243
        %v3271 = vadd.f32 %v2362, %v3244
        %v3272 = vadd.f32 %v2363, %v3245
        %v3273 = vadd.f32 %v2364, %v3246
        %v3274 = vadd.f32 %v2365, %v3247
        %v3275 = vadd.f32 %v2366, %v3248
        %v3276 = vadd.f32 %v2367, %v3249
        %v3277 = vadd.f32 %v2368, %v3250
        %v3278 = vadd.f32 %v2369, %v3251
        %v3279 = vadd.f32 %v2370, %v3252
        %v3280 = vadd.f32 %v2371, %v3253
        %v3281 = vadd.f32 %v2372, %v3254
        %s3282 = scalar_lea.vmem %s3, 648
        %v3283 = vld [vmem:[%s3282] sm:$0xff]
        %v3284 = vld [vmem:[%s3282 + $0x8] sm:$0xff]
        %v3285 = vld [vmem:[%s3282 + $0x10] sm:$0xff]
        %v3286 = vld [vmem:[%s3282 + $0x18] sm:$0xff]
        %v3287 = vld [vmem:[%s3282 + $0x20] sm:$0xff]
        %v3288 = vld [vmem:[%s3282 + $0x28] sm:$0xff]
        %v3289 = vld [vmem:[%s3282 + $0x30] sm:$0xff]
        %v3290 = vld [vmem:[%s3282 + $0x38] sm:$0xff]
        %v3291 = vld [vmem:[%s3282 + $0x40] sm:$0xff]
        %v3292 = vld [vmem:[%s3282 + $0x48] sm:$0xff]
        %v3293 = vld [vmem:[%s3282 + $0x50] sm:$0xff]
        %v3294 = vld [vmem:[%s3282 + $0x58] sm:$0xff]
        %v3295 = vld [vmem:[%s3282 + $0x60] sm:$0xff]
        %v3296 = vld [vmem:[%s3282 + $0x68] sm:$0xff]
        %v3297 = vld [vmem:[%s3282 + $0x70] sm:$0xff]
        %v3298 = vld [vmem:[%s3282 + $0x78] sm:$0xff]
        %v3299 = vld [vmem:[%s3282 + $0x80] sm:$0xff]
        %v3300 = vld [vmem:[%s3282 + $0x88] sm:$0xff]
        %v3301 = vld [vmem:[%s3282 + $0x90] sm:$0xff]
        %v3302 = vld [vmem:[%s3282 + $0x98] sm:$0xff]
        %v3303 = vld [vmem:[%s3282 + $0xa0] sm:$0xff]
        %v3304 = vld [vmem:[%s3282 + $0xa8] sm:$0xff]
        %v3305 = vld [vmem:[%s3282 + $0xb0] sm:$0xff]
        %v3306 = vld [vmem:[%s3282 + $0xb8] sm:$0xff]
        %v3307 = vld [vmem:[%s3282 + $0xc0] sm:$0xff]
        %v3308 = vld [vmem:[%s3282 + $0xc8] sm:$0xff]
        %v3309 = vld [vmem:[%s3282 + $0xd0] sm:$0xff]
        %v3311 = vsel %vm558, %v3283, 0
        %v3314 = vsel %vm558, %v3284, 0
        %v3317 = vsel %vm558, %v3285, 0
        %v3320 = vsel %vm558, %v3286, 0
        %v3323 = vsel %vm558, %v3287, 0
        %v3326 = vsel %vm558, %v3288, 0
        %v3329 = vsel %vm558, %v3289, 0
        %v3332 = vsel %vm558, %v3290, 0
        %v3335 = vsel %vm558, %v3291, 0
        %v3338 = vsel %vm558, %v3292, 0
        %v3341 = vsel %vm558, %v3293, 0
        %v3344 = vsel %vm558, %v3294, 0
        %v3347 = vsel %vm558, %v3295, 0
        %v3350 = vsel %vm558, %v3296, 0
        %v3353 = vsel %vm558, %v3297, 0
        %v3356 = vsel %vm558, %v3298, 0
        %v3359 = vsel %vm558, %v3299, 0
        %v3362 = vsel %vm558, %v3300, 0
        %v3365 = vsel %vm558, %v3301, 0
        %v3368 = vsel %vm558, %v3302, 0
        %v3371 = vsel %vm558, %v3303, 0
        %v3374 = vsel %vm558, %v3304, 0
        %v3377 = vsel %vm558, %v3305, 0
        %v3380 = vsel %vm558, %v3306, 0
        %v3383 = vsel %vm558, %v3307, 0
        %v3386 = vsel %vm558, %v3308, 0
        %v3389 = vsel %vm558, %v3309, 0
        %3391 = vmatpush.msra.mxu0 0.0
        %3392 = vmatpush.msra.mxu0 0.0
        %3393 = vmatpush.msra.mxu0 0.0
        %3394 = vmatpush.msra.mxu0 0.0
        %3395 = vmatpush.msra.mxu0 0.0
        %3396 = vmatpush.msra.mxu0 0.0
        %3397 = vmatpush.msra.mxu0 0.0
        %3398 = vmatpush.msra.mxu0 0.0
        %3399 = vmatpush.msra.mxu0 0.0
        %3400 = vmatpush.msra.mxu0 0.0
        %3401 = vmatpush.msra.mxu0 0.0
        %3402 = vmatpush.msra.mxu0 %v522
        %3403 = vmatpush.msra.mxu0 %v521
        %3404 = vmatpush.msra.mxu0 %v520
        %3405 = vmatpush.msra.mxu0 %v519
        %3406 = vmatpush.msra.mxu0 %v518
        %3407 = vmatmul.f32.gmra.mxu0 %v3311
        %v3408 = vpop.f32.mrf.mxu0
        %v3409 = vadd.f32 0.0, %v3408
        %3410 = vmatmul.f32.gmra.mxu0 %v3314
        %v3411 = vpop.f32.mrf.mxu0
        %v3412 = vadd.f32 0.0, %v3411
        %3413 = vmatmul.f32.gmra.mxu0 %v3317
        %v3414 = vpop.f32.mrf.mxu0
        %v3415 = vadd.f32 0.0, %v3414
        %3416 = vmatmul.f32.gmra.mxu0 %v3320
        %v3417 = vpop.f32.mrf.mxu0
        %v3418 = vadd.f32 0.0, %v3417
        %3419 = vmatmul.f32.gmra.mxu0 %v3323
        %v3420 = vpop.f32.mrf.mxu0
        %v3421 = vadd.f32 0.0, %v3420
        %3422 = vmatmul.f32.gmra.mxu0 %v3326
        %v3423 = vpop.f32.mrf.mxu0
        %v3424 = vadd.f32 0.0, %v3423
        %3425 = vmatmul.f32.gmra.mxu0 %v3329
        %v3426 = vpop.f32.mrf.mxu0
        %v3427 = vadd.f32 0.0, %v3426
        %3428 = vmatmul.f32.gmra.mxu0 %v3332
        %v3429 = vpop.f32.mrf.mxu0
        %v3430 = vadd.f32 0.0, %v3429
        %3431 = vmatmul.f32.gmra.mxu0 %v3335
        %v3432 = vpop.f32.mrf.mxu0
        %v3433 = vadd.f32 0.0, %v3432
        %3434 = vmatmul.f32.gmra.mxu0 %v3338
        %v3435 = vpop.f32.mrf.mxu0
        %v3436 = vadd.f32 0.0, %v3435
        %3437 = vmatmul.f32.gmra.mxu0 %v3341
        %v3438 = vpop.f32.mrf.mxu0
        %v3439 = vadd.f32 0.0, %v3438
        %3440 = vmatmul.f32.gmra.mxu0 %v3344
        %v3441 = vpop.f32.mrf.mxu0
        %v3442 = vadd.f32 0.0, %v3441
        %3443 = vmatmul.f32.gmra.mxu0 %v3347
        %v3444 = vpop.f32.mrf.mxu0
        %v3445 = vadd.f32 0.0, %v3444
        %3446 = vmatmul.f32.gmra.mxu0 %v3350
        %v3447 = vpop.f32.mrf.mxu0
        %v3448 = vadd.f32 0.0, %v3447
        %3449 = vmatmul.f32.gmra.mxu0 %v3353
        %v3450 = vpop.f32.mrf.mxu0
        %v3451 = vadd.f32 0.0, %v3450
        %3452 = vmatmul.f32.gmra.mxu0 %v3356
        %v3453 = vpop.f32.mrf.mxu0
        %v3454 = vadd.f32 0.0, %v3453
        %3455 = vmatmul.f32.gmra.mxu0 %v3359
        %v3456 = vpop.f32.mrf.mxu0
        %v3457 = vadd.f32 0.0, %v3456
        %3458 = vmatmul.f32.gmra.mxu0 %v3362
        %v3459 = vpop.f32.mrf.mxu0
        %v3460 = vadd.f32 0.0, %v3459
        %3461 = vmatmul.f32.gmra.mxu0 %v3365
        %v3462 = vpop.f32.mrf.mxu0
        %v3463 = vadd.f32 0.0, %v3462
        %3464 = vmatmul.f32.gmra.mxu0 %v3368
        %v3465 = vpop.f32.mrf.mxu0
        %v3466 = vadd.f32 0.0, %v3465
        %3467 = vmatmul.f32.gmra.mxu0 %v3371
        %v3468 = vpop.f32.mrf.mxu0
        %v3469 = vadd.f32 0.0, %v3468
        %3470 = vmatmul.f32.gmra.mxu0 %v3374
        %v3471 = vpop.f32.mrf.mxu0
        %v3472 = vadd.f32 0.0, %v3471
        %3473 = vmatmul.f32.gmra.mxu0 %v3377
        %v3474 = vpop.f32.mrf.mxu0
        %v3475 = vadd.f32 0.0, %v3474
        %3476 = vmatmul.f32.gmra.mxu0 %v3380
        %v3477 = vpop.f32.mrf.mxu0
        %v3478 = vadd.f32 0.0, %v3477
        %3479 = vmatmul.f32.gmra.mxu0 %v3383
        %v3480 = vpop.f32.mrf.mxu0
        %v3481 = vadd.f32 0.0, %v3480
        %3482 = vmatmul.f32.gmra.mxu0 %v3386
        %v3483 = vpop.f32.mrf.mxu0
        %v3484 = vadd.f32 0.0, %v3483
        %3485 = vmatmul.f32.gmra.mxu0 %v3389
        %v3486 = vpop.f32.mrf.mxu0
        %v3487 = vadd.f32 0.0, %v3486
        %3488 = vdwg.mxu0
        %v3489 = vmax.f32 %v3409, 0.0
        %v3490 = vmax.f32 %v3412, 0.0
        %v3491 = vmax.f32 %v3415, 0.0
        %v3492 = vmax.f32 %v3418, 0.0
        %v3493 = vmax.f32 %v3421, 0.0
        %v3494 = vmax.f32 %v3424, 0.0
        %v3495 = vmax.f32 %v3427, 0.0
        %v3496 = vmax.f32 %v3430, 0.0
        %v3497 = vmax.f32 %v3433, 0.0
        %v3498 = vmax.f32 %v3436, 0.0
        %v3499 = vmax.f32 %v3439, 0.0
        %v3500 = vmax.f32 %v3442, 0.0
        %v3501 = vmax.f32 %v3445, 0.0
        %v3502 = vmax.f32 %v3448, 0.0
        %v3503 = vmax.f32 %v3451, 0.0
        %v3504 = vmax.f32 %v3454, 0.0
        %v3505 = vmax.f32 %v3457, 0.0
        %v3506 = vmax.f32 %v3460, 0.0
        %v3507 = vmax.f32 %v3463, 0.0
        %v3508 = vmax.f32 %v3466, 0.0
        %v3509 = vmax.f32 %v3469, 0.0
        %v3510 = vmax.f32 %v3472, 0.0
        %v3511 = vmax.f32 %v3475, 0.0
        %v3512 = vmax.f32 %v3478, 0.0
        %v3513 = vmax.f32 %v3481, 0.0
        %v3514 = vmax.f32 %v3484, 0.0
        %v3515 = vmax.f32 %v3487, 0.0
        %v3516 = vrsqrt.pop %v3489
        %v3517 = vmul.f32 %v3516, %v3489
        %v3518 = vmul.f32 %v3517, %v3516
        %v3519 = vmul.f32 0.5, %v3518
        %v3520 = vsub.f32 1.5, %v3519
        %v3521 = vmul.f32 %v3516, %v3520
        %v3522 = vmul.f32 %v3489, %v3521
        %vm3523 = vcmp.eq.f32.partialorder %v3489, inf
        %v3524 = vsel %vm3523, %v3489, %v3522
        %vm3525 = vcmp.eq.f32.partialorder %v3489, 0.0
        %v3526 = vand.u32 %v3489, 2147483648
        %v3527 = vsel %vm3525, %v3526, %v3524
        %v3528 = vrsqrt.pop %v3490
        %v3529 = vmul.f32 %v3528, %v3490
        %v3530 = vmul.f32 %v3529, %v3528
        %v3531 = vmul.f32 0.5, %v3530
        %v3532 = vsub.f32 1.5, %v3531
        %v3533 = vmul.f32 %v3528, %v3532
        %v3534 = vmul.f32 %v3490, %v3533
        %vm3535 = vcmp.eq.f32.partialorder %v3490, inf
        %v3536 = vsel %vm3535, %v3490, %v3534
        %vm3537 = vcmp.eq.f32.partialorder %v3490, 0.0
        %v3538 = vand.u32 %v3490, 2147483648
        %v3539 = vsel %vm3537, %v3538, %v3536
        %v3540 = vrsqrt.pop %v3491
        %v3541 = vmul.f32 %v3540, %v3491
        %v3542 = vmul.f32 %v3541, %v3540
        %v3543 = vmul.f32 0.5, %v3542
        %v3544 = vsub.f32 1.5, %v3543
        %v3545 = vmul.f32 %v3540, %v3544
        %v3546 = vmul.f32 %v3491, %v3545
        %vm3547 = vcmp.eq.f32.partialorder %v3491, inf
        %v3548 = vsel %vm3547, %v3491, %v3546
        %vm3549 = vcmp.eq.f32.partialorder %v3491, 0.0
        %v3550 = vand.u32 %v3491, 2147483648
        %v3551 = vsel %vm3549, %v3550, %v3548
        %v3552 = vrsqrt.pop %v3492
        %v3553 = vmul.f32 %v3552, %v3492
        %v3554 = vmul.f32 %v3553, %v3552
        %v3555 = vmul.f32 0.5, %v3554
        %v3556 = vsub.f32 1.5, %v3555
        %v3557 = vmul.f32 %v3552, %v3556
        %v3558 = vmul.f32 %v3492, %v3557
        %vm3559 = vcmp.eq.f32.partialorder %v3492, inf
        %v3560 = vsel %vm3559, %v3492, %v3558
        %vm3561 = vcmp.eq.f32.partialorder %v3492, 0.0
        %v3562 = vand.u32 %v3492, 2147483648
        %v3563 = vsel %vm3561, %v3562, %v3560
        %v3564 = vrsqrt.pop %v3493
        %v3565 = vmul.f32 %v3564, %v3493
        %v3566 = vmul.f32 %v3565, %v3564
        %v3567 = vmul.f32 0.5, %v3566
        %v3568 = vsub.f32 1.5, %v3567
        %v3569 = vmul.f32 %v3564, %v3568
        %v3570 = vmul.f32 %v3493, %v3569
        %vm3571 = vcmp.eq.f32.partialorder %v3493, inf
        %v3572 = vsel %vm3571, %v3493, %v3570
        %vm3573 = vcmp.eq.f32.partialorder %v3493, 0.0
        %v3574 = vand.u32 %v3493, 2147483648
        %v3575 = vsel %vm3573, %v3574, %v3572
        %v3576 = vrsqrt.pop %v3494
        %v3577 = vmul.f32 %v3576, %v3494
        %v3578 = vmul.f32 %v3577, %v3576
        %v3579 = vmul.f32 0.5, %v3578
        %v3580 = vsub.f32 1.5, %v3579
        %v3581 = vmul.f32 %v3576, %v3580
        %v3582 = vmul.f32 %v3494, %v3581
        %vm3583 = vcmp.eq.f32.partialorder %v3494, inf
        %v3584 = vsel %vm3583, %v3494, %v3582
        %vm3585 = vcmp.eq.f32.partialorder %v3494, 0.0
        %v3586 = vand.u32 %v3494, 2147483648
        %v3587 = vsel %vm3585, %v3586, %v3584
        %v3588 = vrsqrt.pop %v3495
        %v3589 = vmul.f32 %v3588, %v3495
        %v3590 = vmul.f32 %v3589, %v3588
        %v3591 = vmul.f32 0.5, %v3590
        %v3592 = vsub.f32 1.5, %v3591
        %v3593 = vmul.f32 %v3588, %v3592
        %v3594 = vmul.f32 %v3495, %v3593
        %vm3595 = vcmp.eq.f32.partialorder %v3495, inf
        %v3596 = vsel %vm3595, %v3495, %v3594
        %vm3597 = vcmp.eq.f32.partialorder %v3495, 0.0
        %v3598 = vand.u32 %v3495, 2147483648
        %v3599 = vsel %vm3597, %v3598, %v3596
        %v3600 = vrsqrt.pop %v3496
        %v3601 = vmul.f32 %v3600, %v3496
        %v3602 = vmul.f32 %v3601, %v3600
        %v3603 = vmul.f32 0.5, %v3602
        %v3604 = vsub.f32 1.5, %v3603
        %v3605 = vmul.f32 %v3600, %v3604
        %v3606 = vmul.f32 %v3496, %v3605
        %vm3607 = vcmp.eq.f32.partialorder %v3496, inf
        %v3608 = vsel %vm3607, %v3496, %v3606
        %vm3609 = vcmp.eq.f32.partialorder %v3496, 0.0
        %v3610 = vand.u32 %v3496, 2147483648
        %v3611 = vsel %vm3609, %v3610, %v3608
        %v3612 = vrsqrt.pop %v3497
        %v3613 = vmul.f32 %v3612, %v3497
        %v3614 = vmul.f32 %v3613, %v3612
        %v3615 = vmul.f32 0.5, %v3614
        %v3616 = vsub.f32 1.5, %v3615
        %v3617 = vmul.f32 %v3612, %v3616
        %v3618 = vmul.f32 %v3497, %v3617
        %vm3619 = vcmp.eq.f32.partialorder %v3497, inf
        %v3620 = vsel %vm3619, %v3497, %v3618
        %vm3621 = vcmp.eq.f32.partialorder %v3497, 0.0
        %v3622 = vand.u32 %v3497, 2147483648
        %v3623 = vsel %vm3621, %v3622, %v3620
        %v3624 = vrsqrt.pop %v3498
        %v3625 = vmul.f32 %v3624, %v3498
        %v3626 = vmul.f32 %v3625, %v3624
        %v3627 = vmul.f32 0.5, %v3626
        %v3628 = vsub.f32 1.5, %v3627
        %v3629 = vmul.f32 %v3624, %v3628
        %v3630 = vmul.f32 %v3498, %v3629
        %vm3631 = vcmp.eq.f32.partialorder %v3498, inf
        %v3632 = vsel %vm3631, %v3498, %v3630
        %vm3633 = vcmp.eq.f32.partialorder %v3498, 0.0
        %v3634 = vand.u32 %v3498, 2147483648
        %v3635 = vsel %vm3633, %v3634, %v3632
        %v3636 = vrsqrt.pop %v3499
        %v3637 = vmul.f32 %v3636, %v3499
        %v3638 = vmul.f32 %v3637, %v3636
        %v3639 = vmul.f32 0.5, %v3638
        %v3640 = vsub.f32 1.5, %v3639
        %v3641 = vmul.f32 %v3636, %v3640
        %v3642 = vmul.f32 %v3499, %v3641
        %vm3643 = vcmp.eq.f32.partialorder %v3499, inf
        %v3644 = vsel %vm3643, %v3499, %v3642
        %vm3645 = vcmp.eq.f32.partialorder %v3499, 0.0
        %v3646 = vand.u32 %v3499, 2147483648
        %v3647 = vsel %vm3645, %v3646, %v3644
        %v3648 = vrsqrt.pop %v3500
        %v3649 = vmul.f32 %v3648, %v3500
        %v3650 = vmul.f32 %v3649, %v3648
        %v3651 = vmul.f32 0.5, %v3650
        %v3652 = vsub.f32 1.5, %v3651
        %v3653 = vmul.f32 %v3648, %v3652
        %v3654 = vmul.f32 %v3500, %v3653
        %vm3655 = vcmp.eq.f32.partialorder %v3500, inf
        %v3656 = vsel %vm3655, %v3500, %v3654
        %vm3657 = vcmp.eq.f32.partialorder %v3500, 0.0
        %v3658 = vand.u32 %v3500, 2147483648
        %v3659 = vsel %vm3657, %v3658, %v3656
        %v3660 = vrsqrt.pop %v3501
        %v3661 = vmul.f32 %v3660, %v3501
        %v3662 = vmul.f32 %v3661, %v3660
        %v3663 = vmul.f32 0.5, %v3662
        %v3664 = vsub.f32 1.5, %v3663
        %v3665 = vmul.f32 %v3660, %v3664
        %v3666 = vmul.f32 %v3501, %v3665
        %vm3667 = vcmp.eq.f32.partialorder %v3501, inf
        %v3668 = vsel %vm3667, %v3501, %v3666
        %vm3669 = vcmp.eq.f32.partialorder %v3501, 0.0
        %v3670 = vand.u32 %v3501, 2147483648
        %v3671 = vsel %vm3669, %v3670, %v3668
        %v3672 = vrsqrt.pop %v3502
        %v3673 = vmul.f32 %v3672, %v3502
        %v3674 = vmul.f32 %v3673, %v3672
        %v3675 = vmul.f32 0.5, %v3674
        %v3676 = vsub.f32 1.5, %v3675
        %v3677 = vmul.f32 %v3672, %v3676
        %v3678 = vmul.f32 %v3502, %v3677
        %vm3679 = vcmp.eq.f32.partialorder %v3502, inf
        %v3680 = vsel %vm3679, %v3502, %v3678
        %vm3681 = vcmp.eq.f32.partialorder %v3502, 0.0
        %v3682 = vand.u32 %v3502, 2147483648
        %v3683 = vsel %vm3681, %v3682, %v3680
        %v3684 = vrsqrt.pop %v3503
        %v3685 = vmul.f32 %v3684, %v3503
        %v3686 = vmul.f32 %v3685, %v3684
        %v3687 = vmul.f32 0.5, %v3686
        %v3688 = vsub.f32 1.5, %v3687
        %v3689 = vmul.f32 %v3684, %v3688
        %v3690 = vmul.f32 %v3503, %v3689
        %vm3691 = vcmp.eq.f32.partialorder %v3503, inf
        %v3692 = vsel %vm3691, %v3503, %v3690
        %vm3693 = vcmp.eq.f32.partialorder %v3503, 0.0
        %v3694 = vand.u32 %v3503, 2147483648
        %v3695 = vsel %vm3693, %v3694, %v3692
        %v3696 = vrsqrt.pop %v3504
        %v3697 = vmul.f32 %v3696, %v3504
        %v3698 = vmul.f32 %v3697, %v3696
        %v3699 = vmul.f32 0.5, %v3698
        %v3700 = vsub.f32 1.5, %v3699
        %v3701 = vmul.f32 %v3696, %v3700
        %v3702 = vmul.f32 %v3504, %v3701
        %vm3703 = vcmp.eq.f32.partialorder %v3504, inf
        %v3704 = vsel %vm3703, %v3504, %v3702
        %vm3705 = vcmp.eq.f32.partialorder %v3504, 0.0
        %v3706 = vand.u32 %v3504, 2147483648
        %v3707 = vsel %vm3705, %v3706, %v3704
        %v3708 = vrsqrt.pop %v3505
        %v3709 = vmul.f32 %v3708, %v3505
        %v3710 = vmul.f32 %v3709, %v3708
        %v3711 = vmul.f32 0.5, %v3710
        %v3712 = vsub.f32 1.5, %v3711
        %v3713 = vmul.f32 %v3708, %v3712
        %v3714 = vmul.f32 %v3505, %v3713
        %vm3715 = vcmp.eq.f32.partialorder %v3505, inf
        %v3716 = vsel %vm3715, %v3505, %v3714
        %vm3717 = vcmp.eq.f32.partialorder %v3505, 0.0
        %v3718 = vand.u32 %v3505, 2147483648
        %v3719 = vsel %vm3717, %v3718, %v3716
        %v3720 = vrsqrt.pop %v3506
        %v3721 = vmul.f32 %v3720, %v3506
        %v3722 = vmul.f32 %v3721, %v3720
        %v3723 = vmul.f32 0.5, %v3722
        %v3724 = vsub.f32 1.5, %v3723
        %v3725 = vmul.f32 %v3720, %v3724
        %v3726 = vmul.f32 %v3506, %v3725
        %vm3727 = vcmp.eq.f32.partialorder %v3506, inf
        %v3728 = vsel %vm3727, %v3506, %v3726
        %vm3729 = vcmp.eq.f32.partialorder %v3506, 0.0
        %v3730 = vand.u32 %v3506, 2147483648
        %v3731 = vsel %vm3729, %v3730, %v3728
        %v3732 = vrsqrt.pop %v3507
        %v3733 = vmul.f32 %v3732, %v3507
        %v3734 = vmul.f32 %v3733, %v3732
        %v3735 = vmul.f32 0.5, %v3734
        %v3736 = vsub.f32 1.5, %v3735
        %v3737 = vmul.f32 %v3732, %v3736
        %v3738 = vmul.f32 %v3507, %v3737
        %vm3739 = vcmp.eq.f32.partialorder %v3507, inf
        %v3740 = vsel %vm3739, %v3507, %v3738
        %vm3741 = vcmp.eq.f32.partialorder %v3507, 0.0
        %v3742 = vand.u32 %v3507, 2147483648
        %v3743 = vsel %vm3741, %v3742, %v3740
        %v3744 = vrsqrt.pop %v3508
        %v3745 = vmul.f32 %v3744, %v3508
        %v3746 = vmul.f32 %v3745, %v3744
        %v3747 = vmul.f32 0.5, %v3746
        %v3748 = vsub.f32 1.5, %v3747
        %v3749 = vmul.f32 %v3744, %v3748
        %v3750 = vmul.f32 %v3508, %v3749
        %vm3751 = vcmp.eq.f32.partialorder %v3508, inf
        %v3752 = vsel %vm3751, %v3508, %v3750
        %vm3753 = vcmp.eq.f32.partialorder %v3508, 0.0
        %v3754 = vand.u32 %v3508, 2147483648
        %v3755 = vsel %vm3753, %v3754, %v3752
        %v3756 = vrsqrt.pop %v3509
        %v3757 = vmul.f32 %v3756, %v3509
        %v3758 = vmul.f32 %v3757, %v3756
        %v3759 = vmul.f32 0.5, %v3758
        %v3760 = vsub.f32 1.5, %v3759
        %v3761 = vmul.f32 %v3756, %v3760
        %v3762 = vmul.f32 %v3509, %v3761
        %vm3763 = vcmp.eq.f32.partialorder %v3509, inf
        %v3764 = vsel %vm3763, %v3509, %v3762
        %vm3765 = vcmp.eq.f32.partialorder %v3509, 0.0
        %v3766 = vand.u32 %v3509, 2147483648
        %v3767 = vsel %vm3765, %v3766, %v3764
        %v3768 = vrsqrt.pop %v3510
        %v3769 = vmul.f32 %v3768, %v3510
        %v3770 = vmul.f32 %v3769, %v3768
        %v3771 = vmul.f32 0.5, %v3770
        %v3772 = vsub.f32 1.5, %v3771
        %v3773 = vmul.f32 %v3768, %v3772
        %v3774 = vmul.f32 %v3510, %v3773
        %vm3775 = vcmp.eq.f32.partialorder %v3510, inf
        %v3776 = vsel %vm3775, %v3510, %v3774
        %vm3777 = vcmp.eq.f32.partialorder %v3510, 0.0
        %v3778 = vand.u32 %v3510, 2147483648
        %v3779 = vsel %vm3777, %v3778, %v3776
        %v3780 = vrsqrt.pop %v3511
        %v3781 = vmul.f32 %v3780, %v3511
        %v3782 = vmul.f32 %v3781, %v3780
        %v3783 = vmul.f32 0.5, %v3782
        %v3784 = vsub.f32 1.5, %v3783
        %v3785 = vmul.f32 %v3780, %v3784
        %v3786 = vmul.f32 %v3511, %v3785
        %vm3787 = vcmp.eq.f32.partialorder %v3511, inf
        %v3788 = vsel %vm3787, %v3511, %v3786
        %vm3789 = vcmp.eq.f32.partialorder %v3511, 0.0
        %v3790 = vand.u32 %v3511, 2147483648
        %v3791 = vsel %vm3789, %v3790, %v3788
        %v3792 = vrsqrt.pop %v3512
        %v3793 = vmul.f32 %v3792, %v3512
        %v3794 = vmul.f32 %v3793, %v3792
        %v3795 = vmul.f32 0.5, %v3794
        %v3796 = vsub.f32 1.5, %v3795
        %v3797 = vmul.f32 %v3792, %v3796
        %v3798 = vmul.f32 %v3512, %v3797
        %vm3799 = vcmp.eq.f32.partialorder %v3512, inf
        %v3800 = vsel %vm3799, %v3512, %v3798
        %vm3801 = vcmp.eq.f32.partialorder %v3512, 0.0
        %v3802 = vand.u32 %v3512, 2147483648
        %v3803 = vsel %vm3801, %v3802, %v3800
        %v3804 = vrsqrt.pop %v3513
        %v3805 = vmul.f32 %v3804, %v3513
        %v3806 = vmul.f32 %v3805, %v3804
        %v3807 = vmul.f32 0.5, %v3806
        %v3808 = vsub.f32 1.5, %v3807
        %v3809 = vmul.f32 %v3804, %v3808
        %v3810 = vmul.f32 %v3513, %v3809
        %vm3811 = vcmp.eq.f32.partialorder %v3513, inf
        %v3812 = vsel %vm3811, %v3513, %v3810
        %vm3813 = vcmp.eq.f32.partialorder %v3513, 0.0
        %v3814 = vand.u32 %v3513, 2147483648
        %v3815 = vsel %vm3813, %v3814, %v3812
        %v3816 = vrsqrt.pop %v3514
        %v3817 = vmul.f32 %v3816, %v3514
        %v3818 = vmul.f32 %v3817, %v3816
        %v3819 = vmul.f32 0.5, %v3818
        %v3820 = vsub.f32 1.5, %v3819
        %v3821 = vmul.f32 %v3816, %v3820
        %v3822 = vmul.f32 %v3514, %v3821
        %vm3823 = vcmp.eq.f32.partialorder %v3514, inf
        %v3824 = vsel %vm3823, %v3514, %v3822
        %vm3825 = vcmp.eq.f32.partialorder %v3514, 0.0
        %v3826 = vand.u32 %v3514, 2147483648
        %v3827 = vsel %vm3825, %v3826, %v3824
        %v3828 = vrsqrt.pop %v3515
        %v3829 = vmul.f32 %v3828, %v3515
        %v3830 = vmul.f32 %v3829, %v3828
        %v3831 = vmul.f32 0.5, %v3830
        %v3832 = vsub.f32 1.5, %v3831
        %v3833 = vmul.f32 %v3828, %v3832
        %v3834 = vmul.f32 %v3515, %v3833
        %vm3835 = vcmp.eq.f32.partialorder %v3515, inf
        %v3836 = vsel %vm3835, %v3515, %v3834
        %vm3837 = vcmp.eq.f32.partialorder %v3515, 0.0
        %v3838 = vand.u32 %v3515, 2147483648
        %v3839 = vsel %vm3837, %v3838, %v3836
        %v3840 = vmul.f32 %v3527, 1.1547005
        %v3841 = vmul.f32 %v3539, 1.1547005
        %v3842 = vmul.f32 %v3551, 1.1547005
        %v3843 = vmul.f32 %v3563, 1.1547005
        %v3844 = vmul.f32 %v3575, 1.1547005
        %v3845 = vmul.f32 %v3587, 1.1547005
        %v3846 = vmul.f32 %v3599, 1.1547005
        %v3847 = vmul.f32 %v3611, 1.1547005
        %v3848 = vmul.f32 %v3623, 1.1547005
        %v3849 = vmul.f32 %v3635, 1.1547005
        %v3850 = vmul.f32 %v3647, 1.1547005
        %v3851 = vmul.f32 %v3659, 1.1547005
        %v3852 = vmul.f32 %v3671, 1.1547005
        %v3853 = vmul.f32 %v3683, 1.1547005
        %v3854 = vmul.f32 %v3695, 1.1547005
        %v3855 = vmul.f32 %v3707, 1.1547005
        %v3856 = vmul.f32 %v3719, 1.1547005
        %v3857 = vmul.f32 %v3731, 1.1547005
        %v3858 = vmul.f32 %v3743, 1.1547005
        %v3859 = vmul.f32 %v3755, 1.1547005
        %v3860 = vmul.f32 %v3767, 1.1547005
        %v3861 = vmul.f32 %v3779, 1.1547005
        %v3862 = vmul.f32 %v3791, 1.1547005
        %v3863 = vmul.f32 %v3803, 1.1547005
        %v3864 = vmul.f32 %v3815, 1.1547005
        %v3865 = vmul.f32 %v3827, 1.1547005
        %v3866 = vmul.f32 %v3839, 1.1547005
        %v3867 = vsub.f32 1.0, %v3840
        %v3868 = vsub.f32 1.0, %v3841
        %v3869 = vsub.f32 1.0, %v3842
        %v3870 = vsub.f32 1.0, %v3843
        %v3871 = vsub.f32 1.0, %v3844
        %v3872 = vsub.f32 1.0, %v3845
        %v3873 = vsub.f32 1.0, %v3846
        %v3874 = vsub.f32 1.0, %v3847
        %v3875 = vsub.f32 1.0, %v3848
        %v3876 = vsub.f32 1.0, %v3849
        %v3877 = vsub.f32 1.0, %v3850
        %v3878 = vsub.f32 1.0, %v3851
        %v3879 = vsub.f32 1.0, %v3852
        %v3880 = vsub.f32 1.0, %v3853
        %v3881 = vsub.f32 1.0, %v3854
        %v3882 = vsub.f32 1.0, %v3855
        %v3883 = vsub.f32 1.0, %v3856
        %v3884 = vsub.f32 1.0, %v3857
        %v3885 = vsub.f32 1.0, %v3858
        %v3886 = vsub.f32 1.0, %v3859
        %v3887 = vsub.f32 1.0, %v3860
        %v3888 = vsub.f32 1.0, %v3861
        %v3889 = vsub.f32 1.0, %v3862
        %v3890 = vsub.f32 1.0, %v3863
        %v3891 = vsub.f32 1.0, %v3864
        %v3892 = vsub.f32 1.0, %v3865
        %v3893 = vsub.f32 1.0, %v3866
        %v3894 = vmax.f32 %v3867, 0.0
        %v3895 = vmax.f32 %v3868, 0.0
        %v3896 = vmax.f32 %v3869, 0.0
        %v3897 = vmax.f32 %v3870, 0.0
        %v3898 = vmax.f32 %v3871, 0.0
        %v3899 = vmax.f32 %v3872, 0.0
        %v3900 = vmax.f32 %v3873, 0.0
        %v3901 = vmax.f32 %v3874, 0.0
        %v3902 = vmax.f32 %v3875, 0.0
        %v3903 = vmax.f32 %v3876, 0.0
        %v3904 = vmax.f32 %v3877, 0.0
        %v3905 = vmax.f32 %v3878, 0.0
        %v3906 = vmax.f32 %v3879, 0.0
        %v3907 = vmax.f32 %v3880, 0.0
        %v3908 = vmax.f32 %v3881, 0.0
        %v3909 = vmax.f32 %v3882, 0.0
        %v3910 = vmax.f32 %v3883, 0.0
        %v3911 = vmax.f32 %v3884, 0.0
        %v3912 = vmax.f32 %v3885, 0.0
        %v3913 = vmax.f32 %v3886, 0.0
        %v3914 = vmax.f32 %v3887, 0.0
        %v3915 = vmax.f32 %v3888, 0.0
        %v3916 = vmax.f32 %v3889, 0.0
        %v3917 = vmax.f32 %v3890, 0.0
        %v3918 = vmax.f32 %v3891, 0.0
        %v3919 = vmax.f32 %v3892, 0.0
        %v3920 = vmax.f32 %v3893, 0.0
        %s3921 = scalar_lea.vmem %s4, 324
        %v3922 = vld [vmem:[%s3921] sm:$0xf]
        %v3923 = vld [vmem:[%s3921 + $0x4] sm:$0xf]
        %v3924 = vld [vmem:[%s3921 + $0x8] sm:$0xf]
        %v3925 = vld [vmem:[%s3921 + $0xc] sm:$0xf]
        %v3926 = vld [vmem:[%s3921 + $0x10] sm:$0xf]
        %v3927 = vld [vmem:[%s3921 + $0x14] sm:$0xf]
        %v3928 = vld [vmem:[%s3921 + $0x18] sm:$0xf]
        %v3929 = vld [vmem:[%s3921 + $0x1c] sm:$0xf]
        %v3930 = vld [vmem:[%s3921 + $0x20] sm:$0xf]
        %v3931 = vld [vmem:[%s3921 + $0x24] sm:$0xf]
        %v3932 = vld [vmem:[%s3921 + $0x28] sm:$0xf]
        %v3933 = vld [vmem:[%s3921 + $0x2c] sm:$0xf]
        %v3934 = vld [vmem:[%s3921 + $0x30] sm:$0xf]
        %v3935 = vld [vmem:[%s3921 + $0x34] sm:$0xf]
        %v3936 = vld [vmem:[%s3921 + $0x38] sm:$0xf]
        %v3937 = vld [vmem:[%s3921 + $0x3c] sm:$0xf]
        %v3938 = vld [vmem:[%s3921 + $0x40] sm:$0xf]
        %v3939 = vld [vmem:[%s3921 + $0x44] sm:$0xf]
        %v3940 = vld [vmem:[%s3921 + $0x48] sm:$0xf]
        %v3941 = vld [vmem:[%s3921 + $0x4c] sm:$0xf]
        %v3942 = vld [vmem:[%s3921 + $0x50] sm:$0xf]
        %v3943 = vld [vmem:[%s3921 + $0x54] sm:$0xf]
        %v3944 = vld [vmem:[%s3921 + $0x58] sm:$0xf]
        %v3945 = vld [vmem:[%s3921 + $0x5c] sm:$0xf]
        %v3946 = vld [vmem:[%s3921 + $0x60] sm:$0xf]
        %v3947 = vld [vmem:[%s3921 + $0x64] sm:$0xf]
        %v3948 = vld [vmem:[%s3921 + $0x68] sm:$0xf]
        %v3976 = vunpack.c.l.b16 %v3922
        %v3977 = vunpack.c.l.b16 %v3923
        %v3978 = vunpack.c.l.b16 %v3924
        %v3979 = vunpack.c.l.b16 %v3925
        %v3980 = vunpack.c.l.b16 %v3926
        %v3981 = vunpack.c.l.b16 %v3927
        %v3982 = vunpack.c.l.b16 %v3928
        %v3983 = vunpack.c.l.b16 %v3929
        %v3984 = vunpack.c.l.b16 %v3930
        %v3985 = vunpack.c.l.b16 %v3931
        %v3986 = vunpack.c.l.b16 %v3932
        %v3987 = vunpack.c.l.b16 %v3933
        %v3988 = vunpack.c.l.b16 %v3934
        %v3989 = vunpack.c.l.b16 %v3935
        %v3990 = vunpack.c.l.b16 %v3936
        %v3991 = vunpack.c.l.b16 %v3937
        %v3992 = vunpack.c.l.b16 %v3938
        %v3993 = vunpack.c.l.b16 %v3939
        %v3994 = vunpack.c.l.b16 %v3940
        %v3995 = vunpack.c.l.b16 %v3941
        %v3996 = vunpack.c.l.b16 %v3942
        %v3997 = vunpack.c.l.b16 %v3943
        %v3998 = vunpack.c.l.b16 %v3944
        %v3999 = vunpack.c.l.b16 %v3945
        %v4000 = vunpack.c.l.b16 %v3946
        %v4001 = vunpack.c.l.b16 %v3947
        %v4002 = vunpack.c.l.b16 %v3948
        %v4003 = vpack.c.b16 %v3977, %v3976
        %v4004 = vpack.c.b16 %v3979, %v3978
        %v4005 = vpack.c.b16 %v3981, %v3980
        %v4006 = vpack.c.b16 %v3983, %v3982
        %v4007 = vpack.c.b16 %v3985, %v3984
        %v4008 = vpack.c.b16 %v3987, %v3986
        %v4009 = vpack.c.b16 %v3989, %v3988
        %v4010 = vpack.c.b16 %v3991, %v3990
        %v4011 = vpack.c.b16 %v3993, %v3992
        %v4012 = vpack.c.b16 %v3995, %v3994
        %v4013 = vpack.c.b16 %v3997, %v3996
        %v4014 = vpack.c.b16 %v3999, %v3998
        %v4015 = vpack.c.b16 %v4001, %v4000
        %v4016 = vpack.c.b16 %v4002, %v4002
        %v4018 = vsel %vm1289, %v4003, 0
        %v4021 = vsel %vm1289, %v4004, 0
        %v4024 = vsel %vm1289, %v4005, 0
        %v4027 = vsel %vm1289, %v4006, 0
        %v4030 = vsel %vm1289, %v4007, 0
        %v4033 = vsel %vm1289, %v4008, 0
        %v4036 = vsel %vm1289, %v4009, 0
        %v4039 = vsel %vm1289, %v4010, 0
        %v4042 = vsel %vm1289, %v4011, 0
        %v4045 = vsel %vm1289, %v4012, 0
        %v4048 = vsel %vm1289, %v4013, 0
        %v4051 = vsel %vm1289, %v4014, 0
        %v4054 = vsel %vm1289, %v4015, 0
        %v4057 = vsel %vm1289, %v4016, 0
        %4059 = vmatpush.bf16.msra.mxu0 0
        %4060 = vmatpush.bf16.msra.mxu0 0
        %4061 = vmatpush.bf16.msra.mxu0 0
        %4062 = vmatpush.bf16.msra.mxu0 0
        %4063 = vmatpush.bf16.msra.mxu0 %v1284
        %4064 = vmatpush.bf16.msra.mxu0 %v1283
        %4065 = vmatpush.bf16.msra.mxu0 %v1282
        %4066 = vmatpush.bf16.msra.mxu0 %v1281
        %4067 = vmatmul.bf16.gmra.mxu0 %v4018
        %v4068 = vpop.f32.mrf.mxu0
        %v4069 = vadd.f32 0.0, %v4068
        %v4070 = vpop.f32.mrf.mxu0
        %v4071 = vadd.f32 0.0, %v4070
        %4072 = vmatmul.bf16.gmra.mxu0 %v4021
        %v4073 = vpop.f32.mrf.mxu0
        %v4074 = vadd.f32 0.0, %v4073
        %v4075 = vpop.f32.mrf.mxu0
        %v4076 = vadd.f32 0.0, %v4075
        %4077 = vmatmul.bf16.gmra.mxu0 %v4024
        %v4078 = vpop.f32.mrf.mxu0
        %v4079 = vadd.f32 0.0, %v4078
        %v4080 = vpop.f32.mrf.mxu0
        %v4081 = vadd.f32 0.0, %v4080
        %4082 = vmatmul.bf16.gmra.mxu0 %v4027
        %v4083 = vpop.f32.mrf.mxu0
        %v4084 = vadd.f32 0.0, %v4083
        %v4085 = vpop.f32.mrf.mxu0
        %v4086 = vadd.f32 0.0, %v4085
        %4087 = vmatmul.bf16.gmra.mxu0 %v4030
        %v4088 = vpop.f32.mrf.mxu0
        %v4089 = vadd.f32 0.0, %v4088
        %v4090 = vpop.f32.mrf.mxu0
        %v4091 = vadd.f32 0.0, %v4090
        %4092 = vmatmul.bf16.gmra.mxu0 %v4033
        %v4093 = vpop.f32.mrf.mxu0
        %v4094 = vadd.f32 0.0, %v4093
        %v4095 = vpop.f32.mrf.mxu0
        %v4096 = vadd.f32 0.0, %v4095
        %4097 = vmatmul.bf16.gmra.mxu0 %v4036
        %v4098 = vpop.f32.mrf.mxu0
        %v4099 = vadd.f32 0.0, %v4098
        %v4100 = vpop.f32.mrf.mxu0
        %v4101 = vadd.f32 0.0, %v4100
        %4102 = vmatmul.bf16.gmra.mxu0 %v4039
        %v4103 = vpop.f32.mrf.mxu0
        %v4104 = vadd.f32 0.0, %v4103
        %v4105 = vpop.f32.mrf.mxu0
        %v4106 = vadd.f32 0.0, %v4105
        %4107 = vmatmul.bf16.gmra.mxu0 %v4042
        %v4108 = vpop.f32.mrf.mxu0
        %v4109 = vadd.f32 0.0, %v4108
        %v4110 = vpop.f32.mrf.mxu0
        %v4111 = vadd.f32 0.0, %v4110
        %4112 = vmatmul.bf16.gmra.mxu0 %v4045
        %v4113 = vpop.f32.mrf.mxu0
        %v4114 = vadd.f32 0.0, %v4113
        %v4115 = vpop.f32.mrf.mxu0
        %v4116 = vadd.f32 0.0, %v4115
        %4117 = vmatmul.bf16.gmra.mxu0 %v4048
        %v4118 = vpop.f32.mrf.mxu0
        %v4119 = vadd.f32 0.0, %v4118
        %v4120 = vpop.f32.mrf.mxu0
        %v4121 = vadd.f32 0.0, %v4120
        %4122 = vmatmul.bf16.gmra.mxu0 %v4051
        %v4123 = vpop.f32.mrf.mxu0
        %v4124 = vadd.f32 0.0, %v4123
        %v4125 = vpop.f32.mrf.mxu0
        %v4126 = vadd.f32 0.0, %v4125
        %4127 = vmatmul.bf16.gmra.mxu0 %v4054
        %v4128 = vpop.f32.mrf.mxu0
        %v4129 = vadd.f32 0.0, %v4128
        %v4130 = vpop.f32.mrf.mxu0
        %v4131 = vadd.f32 0.0, %v4130
        %4132 = vmatmul.bf16.gmra.mxu0 %v4057
        %v4133 = vpop.f32.mrf.mxu0
        %v4134 = vadd.f32 0.0, %v4133
        %v4135 = vpop.f32.mrf.mxu0
        %4136 = vdwg.mxu0
        %v4137 = vmul.f32 %v3894, %v4069
        %v4138 = vmul.f32 %v3895, %v4071
        %v4139 = vmul.f32 %v3896, %v4074
        %v4140 = vmul.f32 %v3897, %v4076
        %v4141 = vmul.f32 %v3898, %v4079
        %v4142 = vmul.f32 %v3899, %v4081
        %v4143 = vmul.f32 %v3900, %v4084
        %v4144 = vmul.f32 %v3901, %v4086
        %v4145 = vmul.f32 %v3902, %v4089
        %v4146 = vmul.f32 %v3903, %v4091
        %v4147 = vmul.f32 %v3904, %v4094
        %v4148 = vmul.f32 %v3905, %v4096
        %v4149 = vmul.f32 %v3906, %v4099
        %v4150 = vmul.f32 %v3907, %v4101
        %v4151 = vmul.f32 %v3908, %v4104
        %v4152 = vmul.f32 %v3909, %v4106
        %v4153 = vmul.f32 %v3910, %v4109
        %v4154 = vmul.f32 %v3911, %v4111
        %v4155 = vmul.f32 %v3912, %v4114
        %v4156 = vmul.f32 %v3913, %v4116
        %v4157 = vmul.f32 %v3914, %v4119
        %v4158 = vmul.f32 %v3915, %v4121
        %v4159 = vmul.f32 %v3916, %v4124
        %v4160 = vmul.f32 %v3917, %v4126
        %v4161 = vmul.f32 %v3918, %v4129
        %v4162 = vmul.f32 %v3919, %v4131
        %v4163 = vmul.f32 %v3920, %v4134
        %v4164 = vadd.f32 %v3255, %v4137
        %v4165 = vadd.f32 %v3256, %v4138
        %v4166 = vadd.f32 %v3257, %v4139
        %v4167 = vadd.f32 %v3258, %v4140
        %v4168 = vadd.f32 %v3259, %v4141
        %v4169 = vadd.f32 %v3260, %v4142
        %v4170 = vadd.f32 %v3261, %v4143
        %v4171 = vadd.f32 %v3262, %v4144
        %v4172 = vadd.f32 %v3263, %v4145
        %v4173 = vadd.f32 %v3264, %v4146
        %v4174 = vadd.f32 %v3265, %v4147
        %v4175 = vadd.f32 %v3266, %v4148
        %v4176 = vadd.f32 %v3267, %v4149
        %v4177 = vadd.f32 %v3268, %v4150
        %v4178 = vadd.f32 %v3269, %v4151
        %v4179 = vadd.f32 %v3270, %v4152
        %v4180 = vadd.f32 %v3271, %v4153
        %v4181 = vadd.f32 %v3272, %v4154
        %v4182 = vadd.f32 %v3273, %v4155
        %v4183 = vadd.f32 %v3274, %v4156
        %v4184 = vadd.f32 %v3275, %v4157
        %v4185 = vadd.f32 %v3276, %v4158
        %v4186 = vadd.f32 %v3277, %v4159
        %v4187 = vadd.f32 %v3278, %v4160
        %v4188 = vadd.f32 %v3279, %v4161
        %v4189 = vadd.f32 %v3280, %v4162
        %v4190 = vadd.f32 %v3281, %v4163
        %s4191 = scalar_lea.vmem %s3, 864
        %v4192 = vld [vmem:[%s4191] sm:$0xff]
        %v4193 = vld [vmem:[%s4191 + $0x8] sm:$0xff]
        %v4194 = vld [vmem:[%s4191 + $0x10] sm:$0xff]
        %v4195 = vld [vmem:[%s4191 + $0x18] sm:$0xff]
        %v4196 = vld [vmem:[%s4191 + $0x20] sm:$0xff]
        %v4197 = vld [vmem:[%s4191 + $0x28] sm:$0xff]
        %v4198 = vld [vmem:[%s4191 + $0x30] sm:$0xff]
        %v4199 = vld [vmem:[%s4191 + $0x38] sm:$0xff]
        %v4200 = vld [vmem:[%s4191 + $0x40] sm:$0xff]
        %v4201 = vld [vmem:[%s4191 + $0x48] sm:$0xff]
        %v4202 = vld [vmem:[%s4191 + $0x50] sm:$0xff]
        %v4203 = vld [vmem:[%s4191 + $0x58] sm:$0xff]
        %v4204 = vld [vmem:[%s4191 + $0x60] sm:$0xff]
        %v4205 = vld [vmem:[%s4191 + $0x68] sm:$0xff]
        %v4206 = vld [vmem:[%s4191 + $0x70] sm:$0xff]
        %v4207 = vld [vmem:[%s4191 + $0x78] sm:$0xff]
        %v4208 = vld [vmem:[%s4191 + $0x80] sm:$0xff]
        %v4209 = vld [vmem:[%s4191 + $0x88] sm:$0xff]
        %v4210 = vld [vmem:[%s4191 + $0x90] sm:$0xff]
        %v4211 = vld [vmem:[%s4191 + $0x98] sm:$0xff]
        %v4212 = vld [vmem:[%s4191 + $0xa0] sm:$0xff]
        %v4213 = vld [vmem:[%s4191 + $0xa8] sm:$0xff]
        %v4214 = vld [vmem:[%s4191 + $0xb0] sm:$0xff]
        %v4215 = vld [vmem:[%s4191 + $0xb8] sm:$0xff]
        %v4216 = vld [vmem:[%s4191 + $0xc0] sm:$0xff]
        %v4217 = vld [vmem:[%s4191 + $0xc8] sm:$0xff]
        %v4218 = vld [vmem:[%s4191 + $0xd0] sm:$0xff]
        %v4220 = vsel %vm558, %v4192, 0
        %v4223 = vsel %vm558, %v4193, 0
        %v4226 = vsel %vm558, %v4194, 0
        %v4229 = vsel %vm558, %v4195, 0
        %v4232 = vsel %vm558, %v4196, 0
        %v4235 = vsel %vm558, %v4197, 0
        %v4238 = vsel %vm558, %v4198, 0
        %v4241 = vsel %vm558, %v4199, 0
        %v4244 = vsel %vm558, %v4200, 0
        %v4247 = vsel %vm558, %v4201, 0
        %v4250 = vsel %vm558, %v4202, 0
        %v4253 = vsel %vm558, %v4203, 0
        %v4256 = vsel %vm558, %v4204, 0
        %v4259 = vsel %vm558, %v4205, 0
        %v4262 = vsel %vm558, %v4206, 0
        %v4265 = vsel %vm558, %v4207, 0
        %v4268 = vsel %vm558, %v4208, 0
        %v4271 = vsel %vm558, %v4209, 0
        %v4274 = vsel %vm558, %v4210, 0
        %v4277 = vsel %vm558, %v4211, 0
        %v4280 = vsel %vm558, %v4212, 0
        %v4283 = vsel %vm558, %v4213, 0
        %v4286 = vsel %vm558, %v4214, 0
        %v4289 = vsel %vm558, %v4215, 0
        %v4292 = vsel %vm558, %v4216, 0
        %v4295 = vsel %vm558, %v4217, 0
        %v4298 = vsel %vm558, %v4218, 0
        %4300 = vmatpush.msra.mxu0 0.0
        %4301 = vmatpush.msra.mxu0 0.0
        %4302 = vmatpush.msra.mxu0 0.0
        %4303 = vmatpush.msra.mxu0 0.0
        %4304 = vmatpush.msra.mxu0 0.0
        %4305 = vmatpush.msra.mxu0 0.0
        %4306 = vmatpush.msra.mxu0 0.0
        %4307 = vmatpush.msra.mxu0 0.0
        %4308 = vmatpush.msra.mxu0 0.0
        %4309 = vmatpush.msra.mxu0 0.0
        %4310 = vmatpush.msra.mxu0 0.0
        %4311 = vmatpush.msra.mxu0 %v522
        %4312 = vmatpush.msra.mxu0 %v521
        %4313 = vmatpush.msra.mxu0 %v520
        %4314 = vmatpush.msra.mxu0 %v519
        %4315 = vmatpush.msra.mxu0 %v518
        %4316 = vmatmul.f32.gmra.mxu0 %v4220
        %v4317 = vpop.f32.mrf.mxu0
        %v4318 = vadd.f32 0.0, %v4317
        %4319 = vmatmul.f32.gmra.mxu0 %v4223
        %v4320 = vpop.f32.mrf.mxu0
        %v4321 = vadd.f32 0.0, %v4320
        %4322 = vmatmul.f32.gmra.mxu0 %v4226
        %v4323 = vpop.f32.mrf.mxu0
        %v4324 = vadd.f32 0.0, %v4323
        %4325 = vmatmul.f32.gmra.mxu0 %v4229
        %v4326 = vpop.f32.mrf.mxu0
        %v4327 = vadd.f32 0.0, %v4326
        %4328 = vmatmul.f32.gmra.mxu0 %v4232
        %v4329 = vpop.f32.mrf.mxu0
        %v4330 = vadd.f32 0.0, %v4329
        %4331 = vmatmul.f32.gmra.mxu0 %v4235
        %v4332 = vpop.f32.mrf.mxu0
        %v4333 = vadd.f32 0.0, %v4332
        %4334 = vmatmul.f32.gmra.mxu0 %v4238
        %v4335 = vpop.f32.mrf.mxu0
        %v4336 = vadd.f32 0.0, %v4335
        %4337 = vmatmul.f32.gmra.mxu0 %v4241
        %v4338 = vpop.f32.mrf.mxu0
        %v4339 = vadd.f32 0.0, %v4338
        %4340 = vmatmul.f32.gmra.mxu0 %v4244
        %v4341 = vpop.f32.mrf.mxu0
        %v4342 = vadd.f32 0.0, %v4341
        %4343 = vmatmul.f32.gmra.mxu0 %v4247
        %v4344 = vpop.f32.mrf.mxu0
        %v4345 = vadd.f32 0.0, %v4344
        %4346 = vmatmul.f32.gmra.mxu0 %v4250
        %v4347 = vpop.f32.mrf.mxu0
        %v4348 = vadd.f32 0.0, %v4347
        %4349 = vmatmul.f32.gmra.mxu0 %v4253
        %v4350 = vpop.f32.mrf.mxu0
        %v4351 = vadd.f32 0.0, %v4350
        %4352 = vmatmul.f32.gmra.mxu0 %v4256
        %v4353 = vpop.f32.mrf.mxu0
        %v4354 = vadd.f32 0.0, %v4353
        %4355 = vmatmul.f32.gmra.mxu0 %v4259
        %v4356 = vpop.f32.mrf.mxu0
        %v4357 = vadd.f32 0.0, %v4356
        %4358 = vmatmul.f32.gmra.mxu0 %v4262
        %v4359 = vpop.f32.mrf.mxu0
        %v4360 = vadd.f32 0.0, %v4359
        %4361 = vmatmul.f32.gmra.mxu0 %v4265
        %v4362 = vpop.f32.mrf.mxu0
        %v4363 = vadd.f32 0.0, %v4362
        %4364 = vmatmul.f32.gmra.mxu0 %v4268
        %v4365 = vpop.f32.mrf.mxu0
        %v4366 = vadd.f32 0.0, %v4365
        %4367 = vmatmul.f32.gmra.mxu0 %v4271
        %v4368 = vpop.f32.mrf.mxu0
        %v4369 = vadd.f32 0.0, %v4368
        %4370 = vmatmul.f32.gmra.mxu0 %v4274
        %v4371 = vpop.f32.mrf.mxu0
        %v4372 = vadd.f32 0.0, %v4371
        %4373 = vmatmul.f32.gmra.mxu0 %v4277
        %v4374 = vpop.f32.mrf.mxu0
        %v4375 = vadd.f32 0.0, %v4374
        %4376 = vmatmul.f32.gmra.mxu0 %v4280
        %v4377 = vpop.f32.mrf.mxu0
        %v4378 = vadd.f32 0.0, %v4377
        %4379 = vmatmul.f32.gmra.mxu0 %v4283
        %v4380 = vpop.f32.mrf.mxu0
        %v4381 = vadd.f32 0.0, %v4380
        %4382 = vmatmul.f32.gmra.mxu0 %v4286
        %v4383 = vpop.f32.mrf.mxu0
        %v4384 = vadd.f32 0.0, %v4383
        %4385 = vmatmul.f32.gmra.mxu0 %v4289
        %v4386 = vpop.f32.mrf.mxu0
        %v4387 = vadd.f32 0.0, %v4386
        %4388 = vmatmul.f32.gmra.mxu0 %v4292
        %v4389 = vpop.f32.mrf.mxu0
        %v4390 = vadd.f32 0.0, %v4389
        %4391 = vmatmul.f32.gmra.mxu0 %v4295
        %v4392 = vpop.f32.mrf.mxu0
        %v4393 = vadd.f32 0.0, %v4392
        %4394 = vmatmul.f32.gmra.mxu0 %v4298
        %v4395 = vpop.f32.mrf.mxu0
        %v4396 = vadd.f32 0.0, %v4395
        %4397 = vdwg.mxu0
        %v4398 = vmax.f32 %v4318, 0.0
        %v4399 = vmax.f32 %v4321, 0.0
        %v4400 = vmax.f32 %v4324, 0.0
        %v4401 = vmax.f32 %v4327, 0.0
        %v4402 = vmax.f32 %v4330, 0.0
        %v4403 = vmax.f32 %v4333, 0.0
        %v4404 = vmax.f32 %v4336, 0.0
        %v4405 = vmax.f32 %v4339, 0.0
        %v4406 = vmax.f32 %v4342, 0.0
        %v4407 = vmax.f32 %v4345, 0.0
        %v4408 = vmax.f32 %v4348, 0.0
        %v4409 = vmax.f32 %v4351, 0.0
        %v4410 = vmax.f32 %v4354, 0.0
        %v4411 = vmax.f32 %v4357, 0.0
        %v4412 = vmax.f32 %v4360, 0.0
        %v4413 = vmax.f32 %v4363, 0.0
        %v4414 = vmax.f32 %v4366, 0.0
        %v4415 = vmax.f32 %v4369, 0.0
        %v4416 = vmax.f32 %v4372, 0.0
        %v4417 = vmax.f32 %v4375, 0.0
        %v4418 = vmax.f32 %v4378, 0.0
        %v4419 = vmax.f32 %v4381, 0.0
        %v4420 = vmax.f32 %v4384, 0.0
        %v4421 = vmax.f32 %v4387, 0.0
        %v4422 = vmax.f32 %v4390, 0.0
        %v4423 = vmax.f32 %v4393, 0.0
        %v4424 = vmax.f32 %v4396, 0.0
        %v4425 = vrsqrt.pop %v4398
        %v4426 = vmul.f32 %v4425, %v4398
        %v4427 = vmul.f32 %v4426, %v4425
        %v4428 = vmul.f32 0.5, %v4427
        %v4429 = vsub.f32 1.5, %v4428
        %v4430 = vmul.f32 %v4425, %v4429
        %v4431 = vmul.f32 %v4398, %v4430
        %vm4432 = vcmp.eq.f32.partialorder %v4398, inf
        %v4433 = vsel %vm4432, %v4398, %v4431
        %vm4434 = vcmp.eq.f32.partialorder %v4398, 0.0
        %v4435 = vand.u32 %v4398, 2147483648
        %v4436 = vsel %vm4434, %v4435, %v4433
        %v4437 = vrsqrt.pop %v4399
        %v4438 = vmul.f32 %v4437, %v4399
        %v4439 = vmul.f32 %v4438, %v4437
        %v4440 = vmul.f32 0.5, %v4439
        %v4441 = vsub.f32 1.5, %v4440
        %v4442 = vmul.f32 %v4437, %v4441
        %v4443 = vmul.f32 %v4399, %v4442
        %vm4444 = vcmp.eq.f32.partialorder %v4399, inf
        %v4445 = vsel %vm4444, %v4399, %v4443
        %vm4446 = vcmp.eq.f32.partialorder %v4399, 0.0
        %v4447 = vand.u32 %v4399, 2147483648
        %v4448 = vsel %vm4446, %v4447, %v4445
        %v4449 = vrsqrt.pop %v4400
        %v4450 = vmul.f32 %v4449, %v4400
        %v4451 = vmul.f32 %v4450, %v4449
        %v4452 = vmul.f32 0.5, %v4451
        %v4453 = vsub.f32 1.5, %v4452
        %v4454 = vmul.f32 %v4449, %v4453
        %v4455 = vmul.f32 %v4400, %v4454
        %vm4456 = vcmp.eq.f32.partialorder %v4400, inf
        %v4457 = vsel %vm4456, %v4400, %v4455
        %vm4458 = vcmp.eq.f32.partialorder %v4400, 0.0
        %v4459 = vand.u32 %v4400, 2147483648
        %v4460 = vsel %vm4458, %v4459, %v4457
        %v4461 = vrsqrt.pop %v4401
        %v4462 = vmul.f32 %v4461, %v4401
        %v4463 = vmul.f32 %v4462, %v4461
        %v4464 = vmul.f32 0.5, %v4463
        %v4465 = vsub.f32 1.5, %v4464
        %v4466 = vmul.f32 %v4461, %v4465
        %v4467 = vmul.f32 %v4401, %v4466
        %vm4468 = vcmp.eq.f32.partialorder %v4401, inf
        %v4469 = vsel %vm4468, %v4401, %v4467
        %vm4470 = vcmp.eq.f32.partialorder %v4401, 0.0
        %v4471 = vand.u32 %v4401, 2147483648
        %v4472 = vsel %vm4470, %v4471, %v4469
        %v4473 = vrsqrt.pop %v4402
        %v4474 = vmul.f32 %v4473, %v4402
        %v4475 = vmul.f32 %v4474, %v4473
        %v4476 = vmul.f32 0.5, %v4475
        %v4477 = vsub.f32 1.5, %v4476
        %v4478 = vmul.f32 %v4473, %v4477
        %v4479 = vmul.f32 %v4402, %v4478
        %vm4480 = vcmp.eq.f32.partialorder %v4402, inf
        %v4481 = vsel %vm4480, %v4402, %v4479
        %vm4482 = vcmp.eq.f32.partialorder %v4402, 0.0
        %v4483 = vand.u32 %v4402, 2147483648
        %v4484 = vsel %vm4482, %v4483, %v4481
        %v4485 = vrsqrt.pop %v4403
        %v4486 = vmul.f32 %v4485, %v4403
        %v4487 = vmul.f32 %v4486, %v4485
        %v4488 = vmul.f32 0.5, %v4487
        %v4489 = vsub.f32 1.5, %v4488
        %v4490 = vmul.f32 %v4485, %v4489
        %v4491 = vmul.f32 %v4403, %v4490
        %vm4492 = vcmp.eq.f32.partialorder %v4403, inf
        %v4493 = vsel %vm4492, %v4403, %v4491
        %vm4494 = vcmp.eq.f32.partialorder %v4403, 0.0
        %v4495 = vand.u32 %v4403, 2147483648
        %v4496 = vsel %vm4494, %v4495, %v4493
        %v4497 = vrsqrt.pop %v4404
        %v4498 = vmul.f32 %v4497, %v4404
        %v4499 = vmul.f32 %v4498, %v4497
        %v4500 = vmul.f32 0.5, %v4499
        %v4501 = vsub.f32 1.5, %v4500
        %v4502 = vmul.f32 %v4497, %v4501
        %v4503 = vmul.f32 %v4404, %v4502
        %vm4504 = vcmp.eq.f32.partialorder %v4404, inf
        %v4505 = vsel %vm4504, %v4404, %v4503
        %vm4506 = vcmp.eq.f32.partialorder %v4404, 0.0
        %v4507 = vand.u32 %v4404, 2147483648
        %v4508 = vsel %vm4506, %v4507, %v4505
        %v4509 = vrsqrt.pop %v4405
        %v4510 = vmul.f32 %v4509, %v4405
        %v4511 = vmul.f32 %v4510, %v4509
        %v4512 = vmul.f32 0.5, %v4511
        %v4513 = vsub.f32 1.5, %v4512
        %v4514 = vmul.f32 %v4509, %v4513
        %v4515 = vmul.f32 %v4405, %v4514
        %vm4516 = vcmp.eq.f32.partialorder %v4405, inf
        %v4517 = vsel %vm4516, %v4405, %v4515
        %vm4518 = vcmp.eq.f32.partialorder %v4405, 0.0
        %v4519 = vand.u32 %v4405, 2147483648
        %v4520 = vsel %vm4518, %v4519, %v4517
        %v4521 = vrsqrt.pop %v4406
        %v4522 = vmul.f32 %v4521, %v4406
        %v4523 = vmul.f32 %v4522, %v4521
        %v4524 = vmul.f32 0.5, %v4523
        %v4525 = vsub.f32 1.5, %v4524
        %v4526 = vmul.f32 %v4521, %v4525
        %v4527 = vmul.f32 %v4406, %v4526
        %vm4528 = vcmp.eq.f32.partialorder %v4406, inf
        %v4529 = vsel %vm4528, %v4406, %v4527
        %vm4530 = vcmp.eq.f32.partialorder %v4406, 0.0
        %v4531 = vand.u32 %v4406, 2147483648
        %v4532 = vsel %vm4530, %v4531, %v4529
        %v4533 = vrsqrt.pop %v4407
        %v4534 = vmul.f32 %v4533, %v4407
        %v4535 = vmul.f32 %v4534, %v4533
        %v4536 = vmul.f32 0.5, %v4535
        %v4537 = vsub.f32 1.5, %v4536
        %v4538 = vmul.f32 %v4533, %v4537
        %v4539 = vmul.f32 %v4407, %v4538
        %vm4540 = vcmp.eq.f32.partialorder %v4407, inf
        %v4541 = vsel %vm4540, %v4407, %v4539
        %vm4542 = vcmp.eq.f32.partialorder %v4407, 0.0
        %v4543 = vand.u32 %v4407, 2147483648
        %v4544 = vsel %vm4542, %v4543, %v4541
        %v4545 = vrsqrt.pop %v4408
        %v4546 = vmul.f32 %v4545, %v4408
        %v4547 = vmul.f32 %v4546, %v4545
        %v4548 = vmul.f32 0.5, %v4547
        %v4549 = vsub.f32 1.5, %v4548
        %v4550 = vmul.f32 %v4545, %v4549
        %v4551 = vmul.f32 %v4408, %v4550
        %vm4552 = vcmp.eq.f32.partialorder %v4408, inf
        %v4553 = vsel %vm4552, %v4408, %v4551
        %vm4554 = vcmp.eq.f32.partialorder %v4408, 0.0
        %v4555 = vand.u32 %v4408, 2147483648
        %v4556 = vsel %vm4554, %v4555, %v4553
        %v4557 = vrsqrt.pop %v4409
        %v4558 = vmul.f32 %v4557, %v4409
        %v4559 = vmul.f32 %v4558, %v4557
        %v4560 = vmul.f32 0.5, %v4559
        %v4561 = vsub.f32 1.5, %v4560
        %v4562 = vmul.f32 %v4557, %v4561
        %v4563 = vmul.f32 %v4409, %v4562
        %vm4564 = vcmp.eq.f32.partialorder %v4409, inf
        %v4565 = vsel %vm4564, %v4409, %v4563
        %vm4566 = vcmp.eq.f32.partialorder %v4409, 0.0
        %v4567 = vand.u32 %v4409, 2147483648
        %v4568 = vsel %vm4566, %v4567, %v4565
        %v4569 = vrsqrt.pop %v4410
        %v4570 = vmul.f32 %v4569, %v4410
        %v4571 = vmul.f32 %v4570, %v4569
        %v4572 = vmul.f32 0.5, %v4571
        %v4573 = vsub.f32 1.5, %v4572
        %v4574 = vmul.f32 %v4569, %v4573
        %v4575 = vmul.f32 %v4410, %v4574
        %vm4576 = vcmp.eq.f32.partialorder %v4410, inf
        %v4577 = vsel %vm4576, %v4410, %v4575
        %vm4578 = vcmp.eq.f32.partialorder %v4410, 0.0
        %v4579 = vand.u32 %v4410, 2147483648
        %v4580 = vsel %vm4578, %v4579, %v4577
        %v4581 = vrsqrt.pop %v4411
        %v4582 = vmul.f32 %v4581, %v4411
        %v4583 = vmul.f32 %v4582, %v4581
        %v4584 = vmul.f32 0.5, %v4583
        %v4585 = vsub.f32 1.5, %v4584
        %v4586 = vmul.f32 %v4581, %v4585
        %v4587 = vmul.f32 %v4411, %v4586
        %vm4588 = vcmp.eq.f32.partialorder %v4411, inf
        %v4589 = vsel %vm4588, %v4411, %v4587
        %vm4590 = vcmp.eq.f32.partialorder %v4411, 0.0
        %v4591 = vand.u32 %v4411, 2147483648
        %v4592 = vsel %vm4590, %v4591, %v4589
        %v4593 = vrsqrt.pop %v4412
        %v4594 = vmul.f32 %v4593, %v4412
        %v4595 = vmul.f32 %v4594, %v4593
        %v4596 = vmul.f32 0.5, %v4595
        %v4597 = vsub.f32 1.5, %v4596
        %v4598 = vmul.f32 %v4593, %v4597
        %v4599 = vmul.f32 %v4412, %v4598
        %vm4600 = vcmp.eq.f32.partialorder %v4412, inf
        %v4601 = vsel %vm4600, %v4412, %v4599
        %vm4602 = vcmp.eq.f32.partialorder %v4412, 0.0
        %v4603 = vand.u32 %v4412, 2147483648
        %v4604 = vsel %vm4602, %v4603, %v4601
        %v4605 = vrsqrt.pop %v4413
        %v4606 = vmul.f32 %v4605, %v4413
        %v4607 = vmul.f32 %v4606, %v4605
        %v4608 = vmul.f32 0.5, %v4607
        %v4609 = vsub.f32 1.5, %v4608
        %v4610 = vmul.f32 %v4605, %v4609
        %v4611 = vmul.f32 %v4413, %v4610
        %vm4612 = vcmp.eq.f32.partialorder %v4413, inf
        %v4613 = vsel %vm4612, %v4413, %v4611
        %vm4614 = vcmp.eq.f32.partialorder %v4413, 0.0
        %v4615 = vand.u32 %v4413, 2147483648
        %v4616 = vsel %vm4614, %v4615, %v4613
        %v4617 = vrsqrt.pop %v4414
        %v4618 = vmul.f32 %v4617, %v4414
        %v4619 = vmul.f32 %v4618, %v4617
        %v4620 = vmul.f32 0.5, %v4619
        %v4621 = vsub.f32 1.5, %v4620
        %v4622 = vmul.f32 %v4617, %v4621
        %v4623 = vmul.f32 %v4414, %v4622
        %vm4624 = vcmp.eq.f32.partialorder %v4414, inf
        %v4625 = vsel %vm4624, %v4414, %v4623
        %vm4626 = vcmp.eq.f32.partialorder %v4414, 0.0
        %v4627 = vand.u32 %v4414, 2147483648
        %v4628 = vsel %vm4626, %v4627, %v4625
        %v4629 = vrsqrt.pop %v4415
        %v4630 = vmul.f32 %v4629, %v4415
        %v4631 = vmul.f32 %v4630, %v4629
        %v4632 = vmul.f32 0.5, %v4631
        %v4633 = vsub.f32 1.5, %v4632
        %v4634 = vmul.f32 %v4629, %v4633
        %v4635 = vmul.f32 %v4415, %v4634
        %vm4636 = vcmp.eq.f32.partialorder %v4415, inf
        %v4637 = vsel %vm4636, %v4415, %v4635
        %vm4638 = vcmp.eq.f32.partialorder %v4415, 0.0
        %v4639 = vand.u32 %v4415, 2147483648
        %v4640 = vsel %vm4638, %v4639, %v4637
        %v4641 = vrsqrt.pop %v4416
        %v4642 = vmul.f32 %v4641, %v4416
        %v4643 = vmul.f32 %v4642, %v4641
        %v4644 = vmul.f32 0.5, %v4643
        %v4645 = vsub.f32 1.5, %v4644
        %v4646 = vmul.f32 %v4641, %v4645
        %v4647 = vmul.f32 %v4416, %v4646
        %vm4648 = vcmp.eq.f32.partialorder %v4416, inf
        %v4649 = vsel %vm4648, %v4416, %v4647
        %vm4650 = vcmp.eq.f32.partialorder %v4416, 0.0
        %v4651 = vand.u32 %v4416, 2147483648
        %v4652 = vsel %vm4650, %v4651, %v4649
        %v4653 = vrsqrt.pop %v4417
        %v4654 = vmul.f32 %v4653, %v4417
        %v4655 = vmul.f32 %v4654, %v4653
        %v4656 = vmul.f32 0.5, %v4655
        %v4657 = vsub.f32 1.5, %v4656
        %v4658 = vmul.f32 %v4653, %v4657
        %v4659 = vmul.f32 %v4417, %v4658
        %vm4660 = vcmp.eq.f32.partialorder %v4417, inf
        %v4661 = vsel %vm4660, %v4417, %v4659
        %vm4662 = vcmp.eq.f32.partialorder %v4417, 0.0
        %v4663 = vand.u32 %v4417, 2147483648
        %v4664 = vsel %vm4662, %v4663, %v4661
        %v4665 = vrsqrt.pop %v4418
        %v4666 = vmul.f32 %v4665, %v4418
        %v4667 = vmul.f32 %v4666, %v4665
        %v4668 = vmul.f32 0.5, %v4667
        %v4669 = vsub.f32 1.5, %v4668
        %v4670 = vmul.f32 %v4665, %v4669
        %v4671 = vmul.f32 %v4418, %v4670
        %vm4672 = vcmp.eq.f32.partialorder %v4418, inf
        %v4673 = vsel %vm4672, %v4418, %v4671
        %vm4674 = vcmp.eq.f32.partialorder %v4418, 0.0
        %v4675 = vand.u32 %v4418, 2147483648
        %v4676 = vsel %vm4674, %v4675, %v4673
        %v4677 = vrsqrt.pop %v4419
        %v4678 = vmul.f32 %v4677, %v4419
        %v4679 = vmul.f32 %v4678, %v4677
        %v4680 = vmul.f32 0.5, %v4679
        %v4681 = vsub.f32 1.5, %v4680
        %v4682 = vmul.f32 %v4677, %v4681
        %v4683 = vmul.f32 %v4419, %v4682
        %vm4684 = vcmp.eq.f32.partialorder %v4419, inf
        %v4685 = vsel %vm4684, %v4419, %v4683
        %vm4686 = vcmp.eq.f32.partialorder %v4419, 0.0
        %v4687 = vand.u32 %v4419, 2147483648
        %v4688 = vsel %vm4686, %v4687, %v4685
        %v4689 = vrsqrt.pop %v4420
        %v4690 = vmul.f32 %v4689, %v4420
        %v4691 = vmul.f32 %v4690, %v4689
        %v4692 = vmul.f32 0.5, %v4691
        %v4693 = vsub.f32 1.5, %v4692
        %v4694 = vmul.f32 %v4689, %v4693
        %v4695 = vmul.f32 %v4420, %v4694
        %vm4696 = vcmp.eq.f32.partialorder %v4420, inf
        %v4697 = vsel %vm4696, %v4420, %v4695
        %vm4698 = vcmp.eq.f32.partialorder %v4420, 0.0
        %v4699 = vand.u32 %v4420, 2147483648
        %v4700 = vsel %vm4698, %v4699, %v4697
        %v4701 = vrsqrt.pop %v4421
        %v4702 = vmul.f32 %v4701, %v4421
        %v4703 = vmul.f32 %v4702, %v4701
        %v4704 = vmul.f32 0.5, %v4703
        %v4705 = vsub.f32 1.5, %v4704
        %v4706 = vmul.f32 %v4701, %v4705
        %v4707 = vmul.f32 %v4421, %v4706
        %vm4708 = vcmp.eq.f32.partialorder %v4421, inf
        %v4709 = vsel %vm4708, %v4421, %v4707
        %vm4710 = vcmp.eq.f32.partialorder %v4421, 0.0
        %v4711 = vand.u32 %v4421, 2147483648
        %v4712 = vsel %vm4710, %v4711, %v4709
        %v4713 = vrsqrt.pop %v4422
        %v4714 = vmul.f32 %v4713, %v4422
        %v4715 = vmul.f32 %v4714, %v4713
        %v4716 = vmul.f32 0.5, %v4715
        %v4717 = vsub.f32 1.5, %v4716
        %v4718 = vmul.f32 %v4713, %v4717
        %v4719 = vmul.f32 %v4422, %v4718
        %vm4720 = vcmp.eq.f32.partialorder %v4422, inf
        %v4721 = vsel %vm4720, %v4422, %v4719
        %vm4722 = vcmp.eq.f32.partialorder %v4422, 0.0
        %v4723 = vand.u32 %v4422, 2147483648
        %v4724 = vsel %vm4722, %v4723, %v4721
        %v4725 = vrsqrt.pop %v4423
        %v4726 = vmul.f32 %v4725, %v4423
        %v4727 = vmul.f32 %v4726, %v4725
        %v4728 = vmul.f32 0.5, %v4727
        %v4729 = vsub.f32 1.5, %v4728
        %v4730 = vmul.f32 %v4725, %v4729
        %v4731 = vmul.f32 %v4423, %v4730
        %vm4732 = vcmp.eq.f32.partialorder %v4423, inf
        %v4733 = vsel %vm4732, %v4423, %v4731
        %vm4734 = vcmp.eq.f32.partialorder %v4423, 0.0
        %v4735 = vand.u32 %v4423, 2147483648
        %v4736 = vsel %vm4734, %v4735, %v4733
        %v4737 = vrsqrt.pop %v4424
        %v4738 = vmul.f32 %v4737, %v4424
        %v4739 = vmul.f32 %v4738, %v4737
        %v4740 = vmul.f32 0.5, %v4739
        %v4741 = vsub.f32 1.5, %v4740
        %v4742 = vmul.f32 %v4737, %v4741
        %v4743 = vmul.f32 %v4424, %v4742
        %vm4744 = vcmp.eq.f32.partialorder %v4424, inf
        %v4745 = vsel %vm4744, %v4424, %v4743
        %vm4746 = vcmp.eq.f32.partialorder %v4424, 0.0
        %v4747 = vand.u32 %v4424, 2147483648
        %v4748 = vsel %vm4746, %v4747, %v4745
        %v4749 = vmul.f32 %v4436, 1.1547005
        %v4750 = vmul.f32 %v4448, 1.1547005
        %v4751 = vmul.f32 %v4460, 1.1547005
        %v4752 = vmul.f32 %v4472, 1.1547005
        %v4753 = vmul.f32 %v4484, 1.1547005
        %v4754 = vmul.f32 %v4496, 1.1547005
        %v4755 = vmul.f32 %v4508, 1.1547005
        %v4756 = vmul.f32 %v4520, 1.1547005
        %v4757 = vmul.f32 %v4532, 1.1547005
        %v4758 = vmul.f32 %v4544, 1.1547005
        %v4759 = vmul.f32 %v4556, 1.1547005
        %v4760 = vmul.f32 %v4568, 1.1547005
        %v4761 = vmul.f32 %v4580, 1.1547005
        %v4762 = vmul.f32 %v4592, 1.1547005
        %v4763 = vmul.f32 %v4604, 1.1547005
        %v4764 = vmul.f32 %v4616, 1.1547005
        %v4765 = vmul.f32 %v4628, 1.1547005
        %v4766 = vmul.f32 %v4640, 1.1547005
        %v4767 = vmul.f32 %v4652, 1.1547005
        %v4768 = vmul.f32 %v4664, 1.1547005
        %v4769 = vmul.f32 %v4676, 1.1547005
        %v4770 = vmul.f32 %v4688, 1.1547005
        %v4771 = vmul.f32 %v4700, 1.1547005
        %v4772 = vmul.f32 %v4712, 1.1547005
        %v4773 = vmul.f32 %v4724, 1.1547005
        %v4774 = vmul.f32 %v4736, 1.1547005
        %v4775 = vmul.f32 %v4748, 1.1547005
        %v4776 = vsub.f32 1.0, %v4749
        %v4777 = vsub.f32 1.0, %v4750
        %v4778 = vsub.f32 1.0, %v4751
        %v4779 = vsub.f32 1.0, %v4752
        %v4780 = vsub.f32 1.0, %v4753
        %v4781 = vsub.f32 1.0, %v4754
        %v4782 = vsub.f32 1.0, %v4755
        %v4783 = vsub.f32 1.0, %v4756
        %v4784 = vsub.f32 1.0, %v4757
        %v4785 = vsub.f32 1.0, %v4758
        %v4786 = vsub.f32 1.0, %v4759
        %v4787 = vsub.f32 1.0, %v4760
        %v4788 = vsub.f32 1.0, %v4761
        %v4789 = vsub.f32 1.0, %v4762
        %v4790 = vsub.f32 1.0, %v4763
        %v4791 = vsub.f32 1.0, %v4764
        %v4792 = vsub.f32 1.0, %v4765
        %v4793 = vsub.f32 1.0, %v4766
        %v4794 = vsub.f32 1.0, %v4767
        %v4795 = vsub.f32 1.0, %v4768
        %v4796 = vsub.f32 1.0, %v4769
        %v4797 = vsub.f32 1.0, %v4770
        %v4798 = vsub.f32 1.0, %v4771
        %v4799 = vsub.f32 1.0, %v4772
        %v4800 = vsub.f32 1.0, %v4773
        %v4801 = vsub.f32 1.0, %v4774
        %v4802 = vsub.f32 1.0, %v4775
        %v4803 = vmax.f32 %v4776, 0.0
        %v4804 = vmax.f32 %v4777, 0.0
        %v4805 = vmax.f32 %v4778, 0.0
        %v4806 = vmax.f32 %v4779, 0.0
        %v4807 = vmax.f32 %v4780, 0.0
        %v4808 = vmax.f32 %v4781, 0.0
        %v4809 = vmax.f32 %v4782, 0.0
        %v4810 = vmax.f32 %v4783, 0.0
        %v4811 = vmax.f32 %v4784, 0.0
        %v4812 = vmax.f32 %v4785, 0.0
        %v4813 = vmax.f32 %v4786, 0.0
        %v4814 = vmax.f32 %v4787, 0.0
        %v4815 = vmax.f32 %v4788, 0.0
        %v4816 = vmax.f32 %v4789, 0.0
        %v4817 = vmax.f32 %v4790, 0.0
        %v4818 = vmax.f32 %v4791, 0.0
        %v4819 = vmax.f32 %v4792, 0.0
        %v4820 = vmax.f32 %v4793, 0.0
        %v4821 = vmax.f32 %v4794, 0.0
        %v4822 = vmax.f32 %v4795, 0.0
        %v4823 = vmax.f32 %v4796, 0.0
        %v4824 = vmax.f32 %v4797, 0.0
        %v4825 = vmax.f32 %v4798, 0.0
        %v4826 = vmax.f32 %v4799, 0.0
        %v4827 = vmax.f32 %v4800, 0.0
        %v4828 = vmax.f32 %v4801, 0.0
        %v4829 = vmax.f32 %v4802, 0.0
        %s4830 = scalar_lea.vmem %s4, 432
        %v4831 = vld [vmem:[%s4830] sm:$0xf]
        %v4832 = vld [vmem:[%s4830 + $0x4] sm:$0xf]
        %v4833 = vld [vmem:[%s4830 + $0x8] sm:$0xf]
        %v4834 = vld [vmem:[%s4830 + $0xc] sm:$0xf]
        %v4835 = vld [vmem:[%s4830 + $0x10] sm:$0xf]
        %v4836 = vld [vmem:[%s4830 + $0x14] sm:$0xf]
        %v4837 = vld [vmem:[%s4830 + $0x18] sm:$0xf]
        %v4838 = vld [vmem:[%s4830 + $0x1c] sm:$0xf]
        %v4839 = vld [vmem:[%s4830 + $0x20] sm:$0xf]
        %v4840 = vld [vmem:[%s4830 + $0x24] sm:$0xf]
        %v4841 = vld [vmem:[%s4830 + $0x28] sm:$0xf]
        %v4842 = vld [vmem:[%s4830 + $0x2c] sm:$0xf]
        %v4843 = vld [vmem:[%s4830 + $0x30] sm:$0xf]
        %v4844 = vld [vmem:[%s4830 + $0x34] sm:$0xf]
        %v4845 = vld [vmem:[%s4830 + $0x38] sm:$0xf]
        %v4846 = vld [vmem:[%s4830 + $0x3c] sm:$0xf]
        %v4847 = vld [vmem:[%s4830 + $0x40] sm:$0xf]
        %v4848 = vld [vmem:[%s4830 + $0x44] sm:$0xf]
        %v4849 = vld [vmem:[%s4830 + $0x48] sm:$0xf]
        %v4850 = vld [vmem:[%s4830 + $0x4c] sm:$0xf]
        %v4851 = vld [vmem:[%s4830 + $0x50] sm:$0xf]
        %v4852 = vld [vmem:[%s4830 + $0x54] sm:$0xf]
        %v4853 = vld [vmem:[%s4830 + $0x58] sm:$0xf]
        %v4854 = vld [vmem:[%s4830 + $0x5c] sm:$0xf]
        %v4855 = vld [vmem:[%s4830 + $0x60] sm:$0xf]
        %v4856 = vld [vmem:[%s4830 + $0x64] sm:$0xf]
        %v4857 = vld [vmem:[%s4830 + $0x68] sm:$0xf]
        %v4885 = vunpack.c.l.b16 %v4831
        %v4886 = vunpack.c.l.b16 %v4832
        %v4887 = vunpack.c.l.b16 %v4833
        %v4888 = vunpack.c.l.b16 %v4834
        %v4889 = vunpack.c.l.b16 %v4835
        %v4890 = vunpack.c.l.b16 %v4836
        %v4891 = vunpack.c.l.b16 %v4837
        %v4892 = vunpack.c.l.b16 %v4838
        %v4893 = vunpack.c.l.b16 %v4839
        %v4894 = vunpack.c.l.b16 %v4840
        %v4895 = vunpack.c.l.b16 %v4841
        %v4896 = vunpack.c.l.b16 %v4842
        %v4897 = vunpack.c.l.b16 %v4843
        %v4898 = vunpack.c.l.b16 %v4844
        %v4899 = vunpack.c.l.b16 %v4845
        %v4900 = vunpack.c.l.b16 %v4846
        %v4901 = vunpack.c.l.b16 %v4847
        %v4902 = vunpack.c.l.b16 %v4848
        %v4903 = vunpack.c.l.b16 %v4849
        %v4904 = vunpack.c.l.b16 %v4850
        %v4905 = vunpack.c.l.b16 %v4851
        %v4906 = vunpack.c.l.b16 %v4852
        %v4907 = vunpack.c.l.b16 %v4853
        %v4908 = vunpack.c.l.b16 %v4854
        %v4909 = vunpack.c.l.b16 %v4855
        %v4910 = vunpack.c.l.b16 %v4856
        %v4911 = vunpack.c.l.b16 %v4857
        %v4912 = vpack.c.b16 %v4886, %v4885
        %v4913 = vpack.c.b16 %v4888, %v4887
        %v4914 = vpack.c.b16 %v4890, %v4889
        %v4915 = vpack.c.b16 %v4892, %v4891
        %v4916 = vpack.c.b16 %v4894, %v4893
        %v4917 = vpack.c.b16 %v4896, %v4895
        %v4918 = vpack.c.b16 %v4898, %v4897
        %v4919 = vpack.c.b16 %v4900, %v4899
        %v4920 = vpack.c.b16 %v4902, %v4901
        %v4921 = vpack.c.b16 %v4904, %v4903
        %v4922 = vpack.c.b16 %v4906, %v4905
        %v4923 = vpack.c.b16 %v4908, %v4907
        %v4924 = vpack.c.b16 %v4910, %v4909
        %v4925 = vpack.c.b16 %v4911, %v4911
        %v4927 = vsel %vm1289, %v4912, 0
        %v4930 = vsel %vm1289, %v4913, 0
        %v4933 = vsel %vm1289, %v4914, 0
        %v4936 = vsel %vm1289, %v4915, 0
        %v4939 = vsel %vm1289, %v4916, 0
        %v4942 = vsel %vm1289, %v4917, 0
        %v4945 = vsel %vm1289, %v4918, 0
        %v4948 = vsel %vm1289, %v4919, 0
        %v4951 = vsel %vm1289, %v4920, 0
        %v4954 = vsel %vm1289, %v4921, 0
        %v4957 = vsel %vm1289, %v4922, 0
        %v4960 = vsel %vm1289, %v4923, 0
        %v4963 = vsel %vm1289, %v4924, 0
        %v4966 = vsel %vm1289, %v4925, 0
        %4968 = vmatpush.bf16.msra.mxu0 0
        %4969 = vmatpush.bf16.msra.mxu0 0
        %4970 = vmatpush.bf16.msra.mxu0 0
        %4971 = vmatpush.bf16.msra.mxu0 0
        %4972 = vmatpush.bf16.msra.mxu0 %v1284
        %4973 = vmatpush.bf16.msra.mxu0 %v1283
        %4974 = vmatpush.bf16.msra.mxu0 %v1282
        %4975 = vmatpush.bf16.msra.mxu0 %v1281
        %4976 = vmatmul.bf16.gmra.mxu0 %v4927
        %v4977 = vpop.f32.mrf.mxu0
        %v4978 = vadd.f32 0.0, %v4977
        %v4979 = vpop.f32.mrf.mxu0
        %v4980 = vadd.f32 0.0, %v4979
        %4981 = vmatmul.bf16.gmra.mxu0 %v4930
        %v4982 = vpop.f32.mrf.mxu0
        %v4983 = vadd.f32 0.0, %v4982
        %v4984 = vpop.f32.mrf.mxu0
        %v4985 = vadd.f32 0.0, %v4984
        %4986 = vmatmul.bf16.gmra.mxu0 %v4933
        %v4987 = vpop.f32.mrf.mxu0
        %v4988 = vadd.f32 0.0, %v4987
        %v4989 = vpop.f32.mrf.mxu0
        %v4990 = vadd.f32 0.0, %v4989
        %4991 = vmatmul.bf16.gmra.mxu0 %v4936
        %v4992 = vpop.f32.mrf.mxu0
        %v4993 = vadd.f32 0.0, %v4992
        %v4994 = vpop.f32.mrf.mxu0
        %v4995 = vadd.f32 0.0, %v4994
        %4996 = vmatmul.bf16.gmra.mxu0 %v4939
        %v4997 = vpop.f32.mrf.mxu0
        %v4998 = vadd.f32 0.0, %v4997
        %v4999 = vpop.f32.mrf.mxu0
        %v5000 = vadd.f32 0.0, %v4999
        %5001 = vmatmul.bf16.gmra.mxu0 %v4942
        %v5002 = vpop.f32.mrf.mxu0
        %v5003 = vadd.f32 0.0, %v5002
        %v5004 = vpop.f32.mrf.mxu0
        %v5005 = vadd.f32 0.0, %v5004
        %5006 = vmatmul.bf16.gmra.mxu0 %v4945
        %v5007 = vpop.f32.mrf.mxu0
        %v5008 = vadd.f32 0.0, %v5007
        %v5009 = vpop.f32.mrf.mxu0
        %v5010 = vadd.f32 0.0, %v5009
        %5011 = vmatmul.bf16.gmra.mxu0 %v4948
        %v5012 = vpop.f32.mrf.mxu0
        %v5013 = vadd.f32 0.0, %v5012
        %v5014 = vpop.f32.mrf.mxu0
        %v5015 = vadd.f32 0.0, %v5014
        %5016 = vmatmul.bf16.gmra.mxu0 %v4951
        %v5017 = vpop.f32.mrf.mxu0
        %v5018 = vadd.f32 0.0, %v5017
        %v5019 = vpop.f32.mrf.mxu0
        %v5020 = vadd.f32 0.0, %v5019
        %5021 = vmatmul.bf16.gmra.mxu0 %v4954
        %v5022 = vpop.f32.mrf.mxu0
        %v5023 = vadd.f32 0.0, %v5022
        %v5024 = vpop.f32.mrf.mxu0
        %v5025 = vadd.f32 0.0, %v5024
        %5026 = vmatmul.bf16.gmra.mxu0 %v4957
        %v5027 = vpop.f32.mrf.mxu0
        %v5028 = vadd.f32 0.0, %v5027
        %v5029 = vpop.f32.mrf.mxu0
        %v5030 = vadd.f32 0.0, %v5029
        %5031 = vmatmul.bf16.gmra.mxu0 %v4960
        %v5032 = vpop.f32.mrf.mxu0
        %v5033 = vadd.f32 0.0, %v5032
        %v5034 = vpop.f32.mrf.mxu0
        %v5035 = vadd.f32 0.0, %v5034
        %5036 = vmatmul.bf16.gmra.mxu0 %v4963
        %v5037 = vpop.f32.mrf.mxu0
        %v5038 = vadd.f32 0.0, %v5037
        %v5039 = vpop.f32.mrf.mxu0
        %v5040 = vadd.f32 0.0, %v5039
        %5041 = vmatmul.bf16.gmra.mxu0 %v4966
        %v5042 = vpop.f32.mrf.mxu0
        %v5043 = vadd.f32 0.0, %v5042
        %v5044 = vpop.f32.mrf.mxu0
        %5045 = vdwg.mxu0
        %v5046 = vmul.f32 %v4803, %v4978
        %v5047 = vmul.f32 %v4804, %v4980
        %v5048 = vmul.f32 %v4805, %v4983
        %v5049 = vmul.f32 %v4806, %v4985
        %v5050 = vmul.f32 %v4807, %v4988
        %v5051 = vmul.f32 %v4808, %v4990
        %v5052 = vmul.f32 %v4809, %v4993
        %v5053 = vmul.f32 %v4810, %v4995
        %v5054 = vmul.f32 %v4811, %v4998
        %v5055 = vmul.f32 %v4812, %v5000
        %v5056 = vmul.f32 %v4813, %v5003
        %v5057 = vmul.f32 %v4814, %v5005
        %v5058 = vmul.f32 %v4815, %v5008
        %v5059 = vmul.f32 %v4816, %v5010
        %v5060 = vmul.f32 %v4817, %v5013
        %v5061 = vmul.f32 %v4818, %v5015
        %v5062 = vmul.f32 %v4819, %v5018
        %v5063 = vmul.f32 %v4820, %v5020
        %v5064 = vmul.f32 %v4821, %v5023
        %v5065 = vmul.f32 %v4822, %v5025
        %v5066 = vmul.f32 %v4823, %v5028
        %v5067 = vmul.f32 %v4824, %v5030
        %v5068 = vmul.f32 %v4825, %v5033
        %v5069 = vmul.f32 %v4826, %v5035
        %v5070 = vmul.f32 %v4827, %v5038
        %v5071 = vmul.f32 %v4828, %v5040
        %v5072 = vmul.f32 %v4829, %v5043
        %v5073 = vadd.f32 %v4164, %v5046
        %v5074 = vadd.f32 %v4165, %v5047
        %v5075 = vadd.f32 %v4166, %v5048
        %v5076 = vadd.f32 %v4167, %v5049
        %v5077 = vadd.f32 %v4168, %v5050
        %v5078 = vadd.f32 %v4169, %v5051
        %v5079 = vadd.f32 %v4170, %v5052
        %v5080 = vadd.f32 %v4171, %v5053
        %v5081 = vadd.f32 %v4172, %v5054
        %v5082 = vadd.f32 %v4173, %v5055
        %v5083 = vadd.f32 %v4174, %v5056
        %v5084 = vadd.f32 %v4175, %v5057
        %v5085 = vadd.f32 %v4176, %v5058
        %v5086 = vadd.f32 %v4177, %v5059
        %v5087 = vadd.f32 %v4178, %v5060
        %v5088 = vadd.f32 %v4179, %v5061
        %v5089 = vadd.f32 %v4180, %v5062
        %v5090 = vadd.f32 %v4181, %v5063
        %v5091 = vadd.f32 %v4182, %v5064
        %v5092 = vadd.f32 %v4183, %v5065
        %v5093 = vadd.f32 %v4184, %v5066
        %v5094 = vadd.f32 %v4185, %v5067
        %v5095 = vadd.f32 %v4186, %v5068
        %v5096 = vadd.f32 %v4187, %v5069
        %v5097 = vadd.f32 %v4188, %v5070
        %v5098 = vadd.f32 %v4189, %v5071
        %v5099 = vadd.f32 %v4190, %v5072
        %s5100 = scalar_lea.vmem %s3, 1080
        %v5101 = vld [vmem:[%s5100] sm:$0xff]
        %v5102 = vld [vmem:[%s5100 + $0x8] sm:$0xff]
        %v5103 = vld [vmem:[%s5100 + $0x10] sm:$0xff]
        %v5104 = vld [vmem:[%s5100 + $0x18] sm:$0xff]
        %v5105 = vld [vmem:[%s5100 + $0x20] sm:$0xff]
        %v5106 = vld [vmem:[%s5100 + $0x28] sm:$0xff]
        %v5107 = vld [vmem:[%s5100 + $0x30] sm:$0xff]
        %v5108 = vld [vmem:[%s5100 + $0x38] sm:$0xff]
        %v5109 = vld [vmem:[%s5100 + $0x40] sm:$0xff]
        %v5110 = vld [vmem:[%s5100 + $0x48] sm:$0xff]
        %v5111 = vld [vmem:[%s5100 + $0x50] sm:$0xff]
        %v5112 = vld [vmem:[%s5100 + $0x58] sm:$0xff]
        %v5113 = vld [vmem:[%s5100 + $0x60] sm:$0xff]
        %v5114 = vld [vmem:[%s5100 + $0x68] sm:$0xff]
        %v5115 = vld [vmem:[%s5100 + $0x70] sm:$0xff]
        %v5116 = vld [vmem:[%s5100 + $0x78] sm:$0xff]
        %v5117 = vld [vmem:[%s5100 + $0x80] sm:$0xff]
        %v5118 = vld [vmem:[%s5100 + $0x88] sm:$0xff]
        %v5119 = vld [vmem:[%s5100 + $0x90] sm:$0xff]
        %v5120 = vld [vmem:[%s5100 + $0x98] sm:$0xff]
        %v5121 = vld [vmem:[%s5100 + $0xa0] sm:$0xff]
        %v5122 = vld [vmem:[%s5100 + $0xa8] sm:$0xff]
        %v5123 = vld [vmem:[%s5100 + $0xb0] sm:$0xff]
        %v5124 = vld [vmem:[%s5100 + $0xb8] sm:$0xff]
        %v5125 = vld [vmem:[%s5100 + $0xc0] sm:$0xff]
        %v5126 = vld [vmem:[%s5100 + $0xc8] sm:$0xff]
        %v5127 = vld [vmem:[%s5100 + $0xd0] sm:$0xff]
        %v5129 = vsel %vm558, %v5101, 0
        %v5132 = vsel %vm558, %v5102, 0
        %v5135 = vsel %vm558, %v5103, 0
        %v5138 = vsel %vm558, %v5104, 0
        %v5141 = vsel %vm558, %v5105, 0
        %v5144 = vsel %vm558, %v5106, 0
        %v5147 = vsel %vm558, %v5107, 0
        %v5150 = vsel %vm558, %v5108, 0
        %v5153 = vsel %vm558, %v5109, 0
        %v5156 = vsel %vm558, %v5110, 0
        %v5159 = vsel %vm558, %v5111, 0
        %v5162 = vsel %vm558, %v5112, 0
        %v5165 = vsel %vm558, %v5113, 0
        %v5168 = vsel %vm558, %v5114, 0
        %v5171 = vsel %vm558, %v5115, 0
        %v5174 = vsel %vm558, %v5116, 0
        %v5177 = vsel %vm558, %v5117, 0
        %v5180 = vsel %vm558, %v5118, 0
        %v5183 = vsel %vm558, %v5119, 0
        %v5186 = vsel %vm558, %v5120, 0
        %v5189 = vsel %vm558, %v5121, 0
        %v5192 = vsel %vm558, %v5122, 0
        %v5195 = vsel %vm558, %v5123, 0
        %v5198 = vsel %vm558, %v5124, 0
        %v5201 = vsel %vm558, %v5125, 0
        %v5204 = vsel %vm558, %v5126, 0
        %v5207 = vsel %vm558, %v5127, 0
        %5209 = vmatpush.msra.mxu0 0.0
        %5210 = vmatpush.msra.mxu0 0.0
        %5211 = vmatpush.msra.mxu0 0.0
        %5212 = vmatpush.msra.mxu0 0.0
        %5213 = vmatpush.msra.mxu0 0.0
        %5214 = vmatpush.msra.mxu0 0.0
        %5215 = vmatpush.msra.mxu0 0.0
        %5216 = vmatpush.msra.mxu0 0.0
        %5217 = vmatpush.msra.mxu0 0.0
        %5218 = vmatpush.msra.mxu0 0.0
        %5219 = vmatpush.msra.mxu0 0.0
        %5220 = vmatpush.msra.mxu0 %v522
        %5221 = vmatpush.msra.mxu0 %v521
        %5222 = vmatpush.msra.mxu0 %v520
        %5223 = vmatpush.msra.mxu0 %v519
        %5224 = vmatpush.msra.mxu0 %v518
        %5225 = vmatmul.f32.gmra.mxu0 %v5129
        %v5226 = vpop.f32.mrf.mxu0
        %v5227 = vadd.f32 0.0, %v5226
        %5228 = vmatmul.f32.gmra.mxu0 %v5132
        %v5229 = vpop.f32.mrf.mxu0
        %v5230 = vadd.f32 0.0, %v5229
        %5231 = vmatmul.f32.gmra.mxu0 %v5135
        %v5232 = vpop.f32.mrf.mxu0
        %v5233 = vadd.f32 0.0, %v5232
        %5234 = vmatmul.f32.gmra.mxu0 %v5138
        %v5235 = vpop.f32.mrf.mxu0
        %v5236 = vadd.f32 0.0, %v5235
        %5237 = vmatmul.f32.gmra.mxu0 %v5141
        %v5238 = vpop.f32.mrf.mxu0
        %v5239 = vadd.f32 0.0, %v5238
        %5240 = vmatmul.f32.gmra.mxu0 %v5144
        %v5241 = vpop.f32.mrf.mxu0
        %v5242 = vadd.f32 0.0, %v5241
        %5243 = vmatmul.f32.gmra.mxu0 %v5147
        %v5244 = vpop.f32.mrf.mxu0
        %v5245 = vadd.f32 0.0, %v5244
        %5246 = vmatmul.f32.gmra.mxu0 %v5150
        %v5247 = vpop.f32.mrf.mxu0
        %v5248 = vadd.f32 0.0, %v5247
        %5249 = vmatmul.f32.gmra.mxu0 %v5153
        %v5250 = vpop.f32.mrf.mxu0
        %v5251 = vadd.f32 0.0, %v5250
        %5252 = vmatmul.f32.gmra.mxu0 %v5156
        %v5253 = vpop.f32.mrf.mxu0
        %v5254 = vadd.f32 0.0, %v5253
        %5255 = vmatmul.f32.gmra.mxu0 %v5159
        %v5256 = vpop.f32.mrf.mxu0
        %v5257 = vadd.f32 0.0, %v5256
        %5258 = vmatmul.f32.gmra.mxu0 %v5162
        %v5259 = vpop.f32.mrf.mxu0
        %v5260 = vadd.f32 0.0, %v5259
        %5261 = vmatmul.f32.gmra.mxu0 %v5165
        %v5262 = vpop.f32.mrf.mxu0
        %v5263 = vadd.f32 0.0, %v5262
        %5264 = vmatmul.f32.gmra.mxu0 %v5168
        %v5265 = vpop.f32.mrf.mxu0
        %v5266 = vadd.f32 0.0, %v5265
        %5267 = vmatmul.f32.gmra.mxu0 %v5171
        %v5268 = vpop.f32.mrf.mxu0
        %v5269 = vadd.f32 0.0, %v5268
        %5270 = vmatmul.f32.gmra.mxu0 %v5174
        %v5271 = vpop.f32.mrf.mxu0
        %v5272 = vadd.f32 0.0, %v5271
        %5273 = vmatmul.f32.gmra.mxu0 %v5177
        %v5274 = vpop.f32.mrf.mxu0
        %v5275 = vadd.f32 0.0, %v5274
        %5276 = vmatmul.f32.gmra.mxu0 %v5180
        %v5277 = vpop.f32.mrf.mxu0
        %v5278 = vadd.f32 0.0, %v5277
        %5279 = vmatmul.f32.gmra.mxu0 %v5183
        %v5280 = vpop.f32.mrf.mxu0
        %v5281 = vadd.f32 0.0, %v5280
        %5282 = vmatmul.f32.gmra.mxu0 %v5186
        %v5283 = vpop.f32.mrf.mxu0
        %v5284 = vadd.f32 0.0, %v5283
        %5285 = vmatmul.f32.gmra.mxu0 %v5189
        %v5286 = vpop.f32.mrf.mxu0
        %v5287 = vadd.f32 0.0, %v5286
        %5288 = vmatmul.f32.gmra.mxu0 %v5192
        %v5289 = vpop.f32.mrf.mxu0
        %v5290 = vadd.f32 0.0, %v5289
        %5291 = vmatmul.f32.gmra.mxu0 %v5195
        %v5292 = vpop.f32.mrf.mxu0
        %v5293 = vadd.f32 0.0, %v5292
        %5294 = vmatmul.f32.gmra.mxu0 %v5198
        %v5295 = vpop.f32.mrf.mxu0
        %v5296 = vadd.f32 0.0, %v5295
        %5297 = vmatmul.f32.gmra.mxu0 %v5201
        %v5298 = vpop.f32.mrf.mxu0
        %v5299 = vadd.f32 0.0, %v5298
        %5300 = vmatmul.f32.gmra.mxu0 %v5204
        %v5301 = vpop.f32.mrf.mxu0
        %v5302 = vadd.f32 0.0, %v5301
        %5303 = vmatmul.f32.gmra.mxu0 %v5207
        %v5304 = vpop.f32.mrf.mxu0
        %v5305 = vadd.f32 0.0, %v5304
        %5306 = vdwg.mxu0
        %v5307 = vmax.f32 %v5227, 0.0
        %v5308 = vmax.f32 %v5230, 0.0
        %v5309 = vmax.f32 %v5233, 0.0
        %v5310 = vmax.f32 %v5236, 0.0
        %v5311 = vmax.f32 %v5239, 0.0
        %v5312 = vmax.f32 %v5242, 0.0
        %v5313 = vmax.f32 %v5245, 0.0
        %v5314 = vmax.f32 %v5248, 0.0
        %v5315 = vmax.f32 %v5251, 0.0
        %v5316 = vmax.f32 %v5254, 0.0
        %v5317 = vmax.f32 %v5257, 0.0
        %v5318 = vmax.f32 %v5260, 0.0
        %v5319 = vmax.f32 %v5263, 0.0
        %v5320 = vmax.f32 %v5266, 0.0
        %v5321 = vmax.f32 %v5269, 0.0
        %v5322 = vmax.f32 %v5272, 0.0
        %v5323 = vmax.f32 %v5275, 0.0
        %v5324 = vmax.f32 %v5278, 0.0
        %v5325 = vmax.f32 %v5281, 0.0
        %v5326 = vmax.f32 %v5284, 0.0
        %v5327 = vmax.f32 %v5287, 0.0
        %v5328 = vmax.f32 %v5290, 0.0
        %v5329 = vmax.f32 %v5293, 0.0
        %v5330 = vmax.f32 %v5296, 0.0
        %v5331 = vmax.f32 %v5299, 0.0
        %v5332 = vmax.f32 %v5302, 0.0
        %v5333 = vmax.f32 %v5305, 0.0
        %v5334 = vrsqrt.pop %v5307
        %v5335 = vmul.f32 %v5334, %v5307
        %v5336 = vmul.f32 %v5335, %v5334
        %v5337 = vmul.f32 0.5, %v5336
        %v5338 = vsub.f32 1.5, %v5337
        %v5339 = vmul.f32 %v5334, %v5338
        %v5340 = vmul.f32 %v5307, %v5339
        %vm5341 = vcmp.eq.f32.partialorder %v5307, inf
        %v5342 = vsel %vm5341, %v5307, %v5340
        %vm5343 = vcmp.eq.f32.partialorder %v5307, 0.0
        %v5344 = vand.u32 %v5307, 2147483648
        %v5345 = vsel %vm5343, %v5344, %v5342
        %v5346 = vrsqrt.pop %v5308
        %v5347 = vmul.f32 %v5346, %v5308
        %v5348 = vmul.f32 %v5347, %v5346
        %v5349 = vmul.f32 0.5, %v5348
        %v5350 = vsub.f32 1.5, %v5349
        %v5351 = vmul.f32 %v5346, %v5350
        %v5352 = vmul.f32 %v5308, %v5351
        %vm5353 = vcmp.eq.f32.partialorder %v5308, inf
        %v5354 = vsel %vm5353, %v5308, %v5352
        %vm5355 = vcmp.eq.f32.partialorder %v5308, 0.0
        %v5356 = vand.u32 %v5308, 2147483648
        %v5357 = vsel %vm5355, %v5356, %v5354
        %v5358 = vrsqrt.pop %v5309
        %v5359 = vmul.f32 %v5358, %v5309
        %v5360 = vmul.f32 %v5359, %v5358
        %v5361 = vmul.f32 0.5, %v5360
        %v5362 = vsub.f32 1.5, %v5361
        %v5363 = vmul.f32 %v5358, %v5362
        %v5364 = vmul.f32 %v5309, %v5363
        %vm5365 = vcmp.eq.f32.partialorder %v5309, inf
        %v5366 = vsel %vm5365, %v5309, %v5364
        %vm5367 = vcmp.eq.f32.partialorder %v5309, 0.0
        %v5368 = vand.u32 %v5309, 2147483648
        %v5369 = vsel %vm5367, %v5368, %v5366
        %v5370 = vrsqrt.pop %v5310
        %v5371 = vmul.f32 %v5370, %v5310
        %v5372 = vmul.f32 %v5371, %v5370
        %v5373 = vmul.f32 0.5, %v5372
        %v5374 = vsub.f32 1.5, %v5373
        %v5375 = vmul.f32 %v5370, %v5374
        %v5376 = vmul.f32 %v5310, %v5375
        %vm5377 = vcmp.eq.f32.partialorder %v5310, inf
        %v5378 = vsel %vm5377, %v5310, %v5376
        %vm5379 = vcmp.eq.f32.partialorder %v5310, 0.0
        %v5380 = vand.u32 %v5310, 2147483648
        %v5381 = vsel %vm5379, %v5380, %v5378
        %v5382 = vrsqrt.pop %v5311
        %v5383 = vmul.f32 %v5382, %v5311
        %v5384 = vmul.f32 %v5383, %v5382
        %v5385 = vmul.f32 0.5, %v5384
        %v5386 = vsub.f32 1.5, %v5385
        %v5387 = vmul.f32 %v5382, %v5386
        %v5388 = vmul.f32 %v5311, %v5387
        %vm5389 = vcmp.eq.f32.partialorder %v5311, inf
        %v5390 = vsel %vm5389, %v5311, %v5388
        %vm5391 = vcmp.eq.f32.partialorder %v5311, 0.0
        %v5392 = vand.u32 %v5311, 2147483648
        %v5393 = vsel %vm5391, %v5392, %v5390
        %v5394 = vrsqrt.pop %v5312
        %v5395 = vmul.f32 %v5394, %v5312
        %v5396 = vmul.f32 %v5395, %v5394
        %v5397 = vmul.f32 0.5, %v5396
        %v5398 = vsub.f32 1.5, %v5397
        %v5399 = vmul.f32 %v5394, %v5398
        %v5400 = vmul.f32 %v5312, %v5399
        %vm5401 = vcmp.eq.f32.partialorder %v5312, inf
        %v5402 = vsel %vm5401, %v5312, %v5400
        %vm5403 = vcmp.eq.f32.partialorder %v5312, 0.0
        %v5404 = vand.u32 %v5312, 2147483648
        %v5405 = vsel %vm5403, %v5404, %v5402
        %v5406 = vrsqrt.pop %v5313
        %v5407 = vmul.f32 %v5406, %v5313
        %v5408 = vmul.f32 %v5407, %v5406
        %v5409 = vmul.f32 0.5, %v5408
        %v5410 = vsub.f32 1.5, %v5409
        %v5411 = vmul.f32 %v5406, %v5410
        %v5412 = vmul.f32 %v5313, %v5411
        %vm5413 = vcmp.eq.f32.partialorder %v5313, inf
        %v5414 = vsel %vm5413, %v5313, %v5412
        %vm5415 = vcmp.eq.f32.partialorder %v5313, 0.0
        %v5416 = vand.u32 %v5313, 2147483648
        %v5417 = vsel %vm5415, %v5416, %v5414
        %v5418 = vrsqrt.pop %v5314
        %v5419 = vmul.f32 %v5418, %v5314
        %v5420 = vmul.f32 %v5419, %v5418
        %v5421 = vmul.f32 0.5, %v5420
        %v5422 = vsub.f32 1.5, %v5421
        %v5423 = vmul.f32 %v5418, %v5422
        %v5424 = vmul.f32 %v5314, %v5423
        %vm5425 = vcmp.eq.f32.partialorder %v5314, inf
        %v5426 = vsel %vm5425, %v5314, %v5424
        %vm5427 = vcmp.eq.f32.partialorder %v5314, 0.0
        %v5428 = vand.u32 %v5314, 2147483648
        %v5429 = vsel %vm5427, %v5428, %v5426
        %v5430 = vrsqrt.pop %v5315
        %v5431 = vmul.f32 %v5430, %v5315
        %v5432 = vmul.f32 %v5431, %v5430
        %v5433 = vmul.f32 0.5, %v5432
        %v5434 = vsub.f32 1.5, %v5433
        %v5435 = vmul.f32 %v5430, %v5434
        %v5436 = vmul.f32 %v5315, %v5435
        %vm5437 = vcmp.eq.f32.partialorder %v5315, inf
        %v5438 = vsel %vm5437, %v5315, %v5436
        %vm5439 = vcmp.eq.f32.partialorder %v5315, 0.0
        %v5440 = vand.u32 %v5315, 2147483648
        %v5441 = vsel %vm5439, %v5440, %v5438
        %v5442 = vrsqrt.pop %v5316
        %v5443 = vmul.f32 %v5442, %v5316
        %v5444 = vmul.f32 %v5443, %v5442
        %v5445 = vmul.f32 0.5, %v5444
        %v5446 = vsub.f32 1.5, %v5445
        %v5447 = vmul.f32 %v5442, %v5446
        %v5448 = vmul.f32 %v5316, %v5447
        %vm5449 = vcmp.eq.f32.partialorder %v5316, inf
        %v5450 = vsel %vm5449, %v5316, %v5448
        %vm5451 = vcmp.eq.f32.partialorder %v5316, 0.0
        %v5452 = vand.u32 %v5316, 2147483648
        %v5453 = vsel %vm5451, %v5452, %v5450
        %v5454 = vrsqrt.pop %v5317
        %v5455 = vmul.f32 %v5454, %v5317
        %v5456 = vmul.f32 %v5455, %v5454
        %v5457 = vmul.f32 0.5, %v5456
        %v5458 = vsub.f32 1.5, %v5457
        %v5459 = vmul.f32 %v5454, %v5458
        %v5460 = vmul.f32 %v5317, %v5459
        %vm5461 = vcmp.eq.f32.partialorder %v5317, inf
        %v5462 = vsel %vm5461, %v5317, %v5460
        %vm5463 = vcmp.eq.f32.partialorder %v5317, 0.0
        %v5464 = vand.u32 %v5317, 2147483648
        %v5465 = vsel %vm5463, %v5464, %v5462
        %v5466 = vrsqrt.pop %v5318
        %v5467 = vmul.f32 %v5466, %v5318
        %v5468 = vmul.f32 %v5467, %v5466
        %v5469 = vmul.f32 0.5, %v5468
        %v5470 = vsub.f32 1.5, %v5469
        %v5471 = vmul.f32 %v5466, %v5470
        %v5472 = vmul.f32 %v5318, %v5471
        %vm5473 = vcmp.eq.f32.partialorder %v5318, inf
        %v5474 = vsel %vm5473, %v5318, %v5472
        %vm5475 = vcmp.eq.f32.partialorder %v5318, 0.0
        %v5476 = vand.u32 %v5318, 2147483648
        %v5477 = vsel %vm5475, %v5476, %v5474
        %v5478 = vrsqrt.pop %v5319
        %v5479 = vmul.f32 %v5478, %v5319
        %v5480 = vmul.f32 %v5479, %v5478
        %v5481 = vmul.f32 0.5, %v5480
        %v5482 = vsub.f32 1.5, %v5481
        %v5483 = vmul.f32 %v5478, %v5482
        %v5484 = vmul.f32 %v5319, %v5483
        %vm5485 = vcmp.eq.f32.partialorder %v5319, inf
        %v5486 = vsel %vm5485, %v5319, %v5484
        %vm5487 = vcmp.eq.f32.partialorder %v5319, 0.0
        %v5488 = vand.u32 %v5319, 2147483648
        %v5489 = vsel %vm5487, %v5488, %v5486
        %v5490 = vrsqrt.pop %v5320
        %v5491 = vmul.f32 %v5490, %v5320
        %v5492 = vmul.f32 %v5491, %v5490
        %v5493 = vmul.f32 0.5, %v5492
        %v5494 = vsub.f32 1.5, %v5493
        %v5495 = vmul.f32 %v5490, %v5494
        %v5496 = vmul.f32 %v5320, %v5495
        %vm5497 = vcmp.eq.f32.partialorder %v5320, inf
        %v5498 = vsel %vm5497, %v5320, %v5496
        %vm5499 = vcmp.eq.f32.partialorder %v5320, 0.0
        %v5500 = vand.u32 %v5320, 2147483648
        %v5501 = vsel %vm5499, %v5500, %v5498
        %v5502 = vrsqrt.pop %v5321
        %v5503 = vmul.f32 %v5502, %v5321
        %v5504 = vmul.f32 %v5503, %v5502
        %v5505 = vmul.f32 0.5, %v5504
        %v5506 = vsub.f32 1.5, %v5505
        %v5507 = vmul.f32 %v5502, %v5506
        %v5508 = vmul.f32 %v5321, %v5507
        %vm5509 = vcmp.eq.f32.partialorder %v5321, inf
        %v5510 = vsel %vm5509, %v5321, %v5508
        %vm5511 = vcmp.eq.f32.partialorder %v5321, 0.0
        %v5512 = vand.u32 %v5321, 2147483648
        %v5513 = vsel %vm5511, %v5512, %v5510
        %v5514 = vrsqrt.pop %v5322
        %v5515 = vmul.f32 %v5514, %v5322
        %v5516 = vmul.f32 %v5515, %v5514
        %v5517 = vmul.f32 0.5, %v5516
        %v5518 = vsub.f32 1.5, %v5517
        %v5519 = vmul.f32 %v5514, %v5518
        %v5520 = vmul.f32 %v5322, %v5519
        %vm5521 = vcmp.eq.f32.partialorder %v5322, inf
        %v5522 = vsel %vm5521, %v5322, %v5520
        %vm5523 = vcmp.eq.f32.partialorder %v5322, 0.0
        %v5524 = vand.u32 %v5322, 2147483648
        %v5525 = vsel %vm5523, %v5524, %v5522
        %v5526 = vrsqrt.pop %v5323
        %v5527 = vmul.f32 %v5526, %v5323
        %v5528 = vmul.f32 %v5527, %v5526
        %v5529 = vmul.f32 0.5, %v5528
        %v5530 = vsub.f32 1.5, %v5529
        %v5531 = vmul.f32 %v5526, %v5530
        %v5532 = vmul.f32 %v5323, %v5531
        %vm5533 = vcmp.eq.f32.partialorder %v5323, inf
        %v5534 = vsel %vm5533, %v5323, %v5532
        %vm5535 = vcmp.eq.f32.partialorder %v5323, 0.0
        %v5536 = vand.u32 %v5323, 2147483648
        %v5537 = vsel %vm5535, %v5536, %v5534
        %v5538 = vrsqrt.pop %v5324
        %v5539 = vmul.f32 %v5538, %v5324
        %v5540 = vmul.f32 %v5539, %v5538
        %v5541 = vmul.f32 0.5, %v5540
        %v5542 = vsub.f32 1.5, %v5541
        %v5543 = vmul.f32 %v5538, %v5542
        %v5544 = vmul.f32 %v5324, %v5543
        %vm5545 = vcmp.eq.f32.partialorder %v5324, inf
        %v5546 = vsel %vm5545, %v5324, %v5544
        %vm5547 = vcmp.eq.f32.partialorder %v5324, 0.0
        %v5548 = vand.u32 %v5324, 2147483648
        %v5549 = vsel %vm5547, %v5548, %v5546
        %v5550 = vrsqrt.pop %v5325
        %v5551 = vmul.f32 %v5550, %v5325
        %v5552 = vmul.f32 %v5551, %v5550
        %v5553 = vmul.f32 0.5, %v5552
        %v5554 = vsub.f32 1.5, %v5553
        %v5555 = vmul.f32 %v5550, %v5554
        %v5556 = vmul.f32 %v5325, %v5555
        %vm5557 = vcmp.eq.f32.partialorder %v5325, inf
        %v5558 = vsel %vm5557, %v5325, %v5556
        %vm5559 = vcmp.eq.f32.partialorder %v5325, 0.0
        %v5560 = vand.u32 %v5325, 2147483648
        %v5561 = vsel %vm5559, %v5560, %v5558
        %v5562 = vrsqrt.pop %v5326
        %v5563 = vmul.f32 %v5562, %v5326
        %v5564 = vmul.f32 %v5563, %v5562
        %v5565 = vmul.f32 0.5, %v5564
        %v5566 = vsub.f32 1.5, %v5565
        %v5567 = vmul.f32 %v5562, %v5566
        %v5568 = vmul.f32 %v5326, %v5567
        %vm5569 = vcmp.eq.f32.partialorder %v5326, inf
        %v5570 = vsel %vm5569, %v5326, %v5568
        %vm5571 = vcmp.eq.f32.partialorder %v5326, 0.0
        %v5572 = vand.u32 %v5326, 2147483648
        %v5573 = vsel %vm5571, %v5572, %v5570
        %v5574 = vrsqrt.pop %v5327
        %v5575 = vmul.f32 %v5574, %v5327
        %v5576 = vmul.f32 %v5575, %v5574
        %v5577 = vmul.f32 0.5, %v5576
        %v5578 = vsub.f32 1.5, %v5577
        %v5579 = vmul.f32 %v5574, %v5578
        %v5580 = vmul.f32 %v5327, %v5579
        %vm5581 = vcmp.eq.f32.partialorder %v5327, inf
        %v5582 = vsel %vm5581, %v5327, %v5580
        %vm5583 = vcmp.eq.f32.partialorder %v5327, 0.0
        %v5584 = vand.u32 %v5327, 2147483648
        %v5585 = vsel %vm5583, %v5584, %v5582
        %v5586 = vrsqrt.pop %v5328
        %v5587 = vmul.f32 %v5586, %v5328
        %v5588 = vmul.f32 %v5587, %v5586
        %v5589 = vmul.f32 0.5, %v5588
        %v5590 = vsub.f32 1.5, %v5589
        %v5591 = vmul.f32 %v5586, %v5590
        %v5592 = vmul.f32 %v5328, %v5591
        %vm5593 = vcmp.eq.f32.partialorder %v5328, inf
        %v5594 = vsel %vm5593, %v5328, %v5592
        %vm5595 = vcmp.eq.f32.partialorder %v5328, 0.0
        %v5596 = vand.u32 %v5328, 2147483648
        %v5597 = vsel %vm5595, %v5596, %v5594
        %v5598 = vrsqrt.pop %v5329
        %v5599 = vmul.f32 %v5598, %v5329
        %v5600 = vmul.f32 %v5599, %v5598
        %v5601 = vmul.f32 0.5, %v5600
        %v5602 = vsub.f32 1.5, %v5601
        %v5603 = vmul.f32 %v5598, %v5602
        %v5604 = vmul.f32 %v5329, %v5603
        %vm5605 = vcmp.eq.f32.partialorder %v5329, inf
        %v5606 = vsel %vm5605, %v5329, %v5604
        %vm5607 = vcmp.eq.f32.partialorder %v5329, 0.0
        %v5608 = vand.u32 %v5329, 2147483648
        %v5609 = vsel %vm5607, %v5608, %v5606
        %v5610 = vrsqrt.pop %v5330
        %v5611 = vmul.f32 %v5610, %v5330
        %v5612 = vmul.f32 %v5611, %v5610
        %v5613 = vmul.f32 0.5, %v5612
        %v5614 = vsub.f32 1.5, %v5613
        %v5615 = vmul.f32 %v5610, %v5614
        %v5616 = vmul.f32 %v5330, %v5615
        %vm5617 = vcmp.eq.f32.partialorder %v5330, inf
        %v5618 = vsel %vm5617, %v5330, %v5616
        %vm5619 = vcmp.eq.f32.partialorder %v5330, 0.0
        %v5620 = vand.u32 %v5330, 2147483648
        %v5621 = vsel %vm5619, %v5620, %v5618
        %v5622 = vrsqrt.pop %v5331
        %v5623 = vmul.f32 %v5622, %v5331
        %v5624 = vmul.f32 %v5623, %v5622
        %v5625 = vmul.f32 0.5, %v5624
        %v5626 = vsub.f32 1.5, %v5625
        %v5627 = vmul.f32 %v5622, %v5626
        %v5628 = vmul.f32 %v5331, %v5627
        %vm5629 = vcmp.eq.f32.partialorder %v5331, inf
        %v5630 = vsel %vm5629, %v5331, %v5628
        %vm5631 = vcmp.eq.f32.partialorder %v5331, 0.0
        %v5632 = vand.u32 %v5331, 2147483648
        %v5633 = vsel %vm5631, %v5632, %v5630
        %v5634 = vrsqrt.pop %v5332
        %v5635 = vmul.f32 %v5634, %v5332
        %v5636 = vmul.f32 %v5635, %v5634
        %v5637 = vmul.f32 0.5, %v5636
        %v5638 = vsub.f32 1.5, %v5637
        %v5639 = vmul.f32 %v5634, %v5638
        %v5640 = vmul.f32 %v5332, %v5639
        %vm5641 = vcmp.eq.f32.partialorder %v5332, inf
        %v5642 = vsel %vm5641, %v5332, %v5640
        %vm5643 = vcmp.eq.f32.partialorder %v5332, 0.0
        %v5644 = vand.u32 %v5332, 2147483648
        %v5645 = vsel %vm5643, %v5644, %v5642
        %v5646 = vrsqrt.pop %v5333
        %v5647 = vmul.f32 %v5646, %v5333
        %v5648 = vmul.f32 %v5647, %v5646
        %v5649 = vmul.f32 0.5, %v5648
        %v5650 = vsub.f32 1.5, %v5649
        %v5651 = vmul.f32 %v5646, %v5650
        %v5652 = vmul.f32 %v5333, %v5651
        %vm5653 = vcmp.eq.f32.partialorder %v5333, inf
        %v5654 = vsel %vm5653, %v5333, %v5652
        %vm5655 = vcmp.eq.f32.partialorder %v5333, 0.0
        %v5656 = vand.u32 %v5333, 2147483648
        %v5657 = vsel %vm5655, %v5656, %v5654
        %v5658 = vmul.f32 %v5345, 1.1547005
        %v5659 = vmul.f32 %v5357, 1.1547005
        %v5660 = vmul.f32 %v5369, 1.1547005
        %v5661 = vmul.f32 %v5381, 1.1547005
        %v5662 = vmul.f32 %v5393, 1.1547005
        %v5663 = vmul.f32 %v5405, 1.1547005
        %v5664 = vmul.f32 %v5417, 1.1547005
        %v5665 = vmul.f32 %v5429, 1.1547005
        %v5666 = vmul.f32 %v5441, 1.1547005
        %v5667 = vmul.f32 %v5453, 1.1547005
        %v5668 = vmul.f32 %v5465, 1.1547005
        %v5669 = vmul.f32 %v5477, 1.1547005
        %v5670 = vmul.f32 %v5489, 1.1547005
        %v5671 = vmul.f32 %v5501, 1.1547005
        %v5672 = vmul.f32 %v5513, 1.1547005
        %v5673 = vmul.f32 %v5525, 1.1547005
        %v5674 = vmul.f32 %v5537, 1.1547005
        %v5675 = vmul.f32 %v5549, 1.1547005
        %v5676 = vmul.f32 %v5561, 1.1547005
        %v5677 = vmul.f32 %v5573, 1.1547005
        %v5678 = vmul.f32 %v5585, 1.1547005
        %v5679 = vmul.f32 %v5597, 1.1547005
        %v5680 = vmul.f32 %v5609, 1.1547005
        %v5681 = vmul.f32 %v5621, 1.1547005
        %v5682 = vmul.f32 %v5633, 1.1547005
        %v5683 = vmul.f32 %v5645, 1.1547005
        %v5684 = vmul.f32 %v5657, 1.1547005
        %v5685 = vsub.f32 1.0, %v5658
        %v5686 = vsub.f32 1.0, %v5659
        %v5687 = vsub.f32 1.0, %v5660
        %v5688 = vsub.f32 1.0, %v5661
        %v5689 = vsub.f32 1.0, %v5662
        %v5690 = vsub.f32 1.0, %v5663
        %v5691 = vsub.f32 1.0, %v5664
        %v5692 = vsub.f32 1.0, %v5665
        %v5693 = vsub.f32 1.0, %v5666
        %v5694 = vsub.f32 1.0, %v5667
        %v5695 = vsub.f32 1.0, %v5668
        %v5696 = vsub.f32 1.0, %v5669
        %v5697 = vsub.f32 1.0, %v5670
        %v5698 = vsub.f32 1.0, %v5671
        %v5699 = vsub.f32 1.0, %v5672
        %v5700 = vsub.f32 1.0, %v5673
        %v5701 = vsub.f32 1.0, %v5674
        %v5702 = vsub.f32 1.0, %v5675
        %v5703 = vsub.f32 1.0, %v5676
        %v5704 = vsub.f32 1.0, %v5677
        %v5705 = vsub.f32 1.0, %v5678
        %v5706 = vsub.f32 1.0, %v5679
        %v5707 = vsub.f32 1.0, %v5680
        %v5708 = vsub.f32 1.0, %v5681
        %v5709 = vsub.f32 1.0, %v5682
        %v5710 = vsub.f32 1.0, %v5683
        %v5711 = vsub.f32 1.0, %v5684
        %v5712 = vmax.f32 %v5685, 0.0
        %v5713 = vmax.f32 %v5686, 0.0
        %v5714 = vmax.f32 %v5687, 0.0
        %v5715 = vmax.f32 %v5688, 0.0
        %v5716 = vmax.f32 %v5689, 0.0
        %v5717 = vmax.f32 %v5690, 0.0
        %v5718 = vmax.f32 %v5691, 0.0
        %v5719 = vmax.f32 %v5692, 0.0
        %v5720 = vmax.f32 %v5693, 0.0
        %v5721 = vmax.f32 %v5694, 0.0
        %v5722 = vmax.f32 %v5695, 0.0
        %v5723 = vmax.f32 %v5696, 0.0
        %v5724 = vmax.f32 %v5697, 0.0
        %v5725 = vmax.f32 %v5698, 0.0
        %v5726 = vmax.f32 %v5699, 0.0
        %v5727 = vmax.f32 %v5700, 0.0
        %v5728 = vmax.f32 %v5701, 0.0
        %v5729 = vmax.f32 %v5702, 0.0
        %v5730 = vmax.f32 %v5703, 0.0
        %v5731 = vmax.f32 %v5704, 0.0
        %v5732 = vmax.f32 %v5705, 0.0
        %v5733 = vmax.f32 %v5706, 0.0
        %v5734 = vmax.f32 %v5707, 0.0
        %v5735 = vmax.f32 %v5708, 0.0
        %v5736 = vmax.f32 %v5709, 0.0
        %v5737 = vmax.f32 %v5710, 0.0
        %v5738 = vmax.f32 %v5711, 0.0
        %s5739 = scalar_lea.vmem %s4, 540
        %v5740 = vld [vmem:[%s5739] sm:$0xf]
        %v5741 = vld [vmem:[%s5739 + $0x4] sm:$0xf]
        %v5742 = vld [vmem:[%s5739 + $0x8] sm:$0xf]
        %v5743 = vld [vmem:[%s5739 + $0xc] sm:$0xf]
        %v5744 = vld [vmem:[%s5739 + $0x10] sm:$0xf]
        %v5745 = vld [vmem:[%s5739 + $0x14] sm:$0xf]
        %v5746 = vld [vmem:[%s5739 + $0x18] sm:$0xf]
        %v5747 = vld [vmem:[%s5739 + $0x1c] sm:$0xf]
        %v5748 = vld [vmem:[%s5739 + $0x20] sm:$0xf]
        %v5749 = vld [vmem:[%s5739 + $0x24] sm:$0xf]
        %v5750 = vld [vmem:[%s5739 + $0x28] sm:$0xf]
        %v5751 = vld [vmem:[%s5739 + $0x2c] sm:$0xf]
        %v5752 = vld [vmem:[%s5739 + $0x30] sm:$0xf]
        %v5753 = vld [vmem:[%s5739 + $0x34] sm:$0xf]
        %v5754 = vld [vmem:[%s5739 + $0x38] sm:$0xf]
        %v5755 = vld [vmem:[%s5739 + $0x3c] sm:$0xf]
        %v5756 = vld [vmem:[%s5739 + $0x40] sm:$0xf]
        %v5757 = vld [vmem:[%s5739 + $0x44] sm:$0xf]
        %v5758 = vld [vmem:[%s5739 + $0x48] sm:$0xf]
        %v5759 = vld [vmem:[%s5739 + $0x4c] sm:$0xf]
        %v5760 = vld [vmem:[%s5739 + $0x50] sm:$0xf]
        %v5761 = vld [vmem:[%s5739 + $0x54] sm:$0xf]
        %v5762 = vld [vmem:[%s5739 + $0x58] sm:$0xf]
        %v5763 = vld [vmem:[%s5739 + $0x5c] sm:$0xf]
        %v5764 = vld [vmem:[%s5739 + $0x60] sm:$0xf]
        %v5765 = vld [vmem:[%s5739 + $0x64] sm:$0xf]
        %v5766 = vld [vmem:[%s5739 + $0x68] sm:$0xf]
        %v5794 = vunpack.c.l.b16 %v5740
        %v5795 = vunpack.c.l.b16 %v5741
        %v5796 = vunpack.c.l.b16 %v5742
        %v5797 = vunpack.c.l.b16 %v5743
        %v5798 = vunpack.c.l.b16 %v5744
        %v5799 = vunpack.c.l.b16 %v5745
        %v5800 = vunpack.c.l.b16 %v5746
        %v5801 = vunpack.c.l.b16 %v5747
        %v5802 = vunpack.c.l.b16 %v5748
        %v5803 = vunpack.c.l.b16 %v5749
        %v5804 = vunpack.c.l.b16 %v5750
        %v5805 = vunpack.c.l.b16 %v5751
        %v5806 = vunpack.c.l.b16 %v5752
        %v5807 = vunpack.c.l.b16 %v5753
        %v5808 = vunpack.c.l.b16 %v5754
        %v5809 = vunpack.c.l.b16 %v5755
        %v5810 = vunpack.c.l.b16 %v5756
        %v5811 = vunpack.c.l.b16 %v5757
        %v5812 = vunpack.c.l.b16 %v5758
        %v5813 = vunpack.c.l.b16 %v5759
        %v5814 = vunpack.c.l.b16 %v5760
        %v5815 = vunpack.c.l.b16 %v5761
        %v5816 = vunpack.c.l.b16 %v5762
        %v5817 = vunpack.c.l.b16 %v5763
        %v5818 = vunpack.c.l.b16 %v5764
        %v5819 = vunpack.c.l.b16 %v5765
        %v5820 = vunpack.c.l.b16 %v5766
        %v5821 = vpack.c.b16 %v5795, %v5794
        %v5822 = vpack.c.b16 %v5797, %v5796
        %v5823 = vpack.c.b16 %v5799, %v5798
        %v5824 = vpack.c.b16 %v5801, %v5800
        %v5825 = vpack.c.b16 %v5803, %v5802
        %v5826 = vpack.c.b16 %v5805, %v5804
        %v5827 = vpack.c.b16 %v5807, %v5806
        %v5828 = vpack.c.b16 %v5809, %v5808
        %v5829 = vpack.c.b16 %v5811, %v5810
        %v5830 = vpack.c.b16 %v5813, %v5812
        %v5831 = vpack.c.b16 %v5815, %v5814
        %v5832 = vpack.c.b16 %v5817, %v5816
        %v5833 = vpack.c.b16 %v5819, %v5818
        %v5834 = vpack.c.b16 %v5820, %v5820
        %v5836 = vsel %vm1289, %v5821, 0
        %v5839 = vsel %vm1289, %v5822, 0
        %v5842 = vsel %vm1289, %v5823, 0
        %v5845 = vsel %vm1289, %v5824, 0
        %v5848 = vsel %vm1289, %v5825, 0
        %v5851 = vsel %vm1289, %v5826, 0
        %v5854 = vsel %vm1289, %v5827, 0
        %v5857 = vsel %vm1289, %v5828, 0
        %v5860 = vsel %vm1289, %v5829, 0
        %v5863 = vsel %vm1289, %v5830, 0
        %v5866 = vsel %vm1289, %v5831, 0
        %v5869 = vsel %vm1289, %v5832, 0
        %v5872 = vsel %vm1289, %v5833, 0
        %v5875 = vsel %vm1289, %v5834, 0
        %5877 = vmatpush.bf16.msra.mxu0 0
        %5878 = vmatpush.bf16.msra.mxu0 0
        %5879 = vmatpush.bf16.msra.mxu0 0
        %5880 = vmatpush.bf16.msra.mxu0 0
        %5881 = vmatpush.bf16.msra.mxu0 %v1284
        %5882 = vmatpush.bf16.msra.mxu0 %v1283
        %5883 = vmatpush.bf16.msra.mxu0 %v1282
        %5884 = vmatpush.bf16.msra.mxu0 %v1281
        %5885 = vmatmul.bf16.gmra.mxu0 %v5836
        %v5886 = vpop.f32.mrf.mxu0
        %v5887 = vadd.f32 0.0, %v5886
        %v5888 = vpop.f32.mrf.mxu0
        %v5889 = vadd.f32 0.0, %v5888
        %5890 = vmatmul.bf16.gmra.mxu0 %v5839
        %v5891 = vpop.f32.mrf.mxu0
        %v5892 = vadd.f32 0.0, %v5891
        %v5893 = vpop.f32.mrf.mxu0
        %v5894 = vadd.f32 0.0, %v5893
        %5895 = vmatmul.bf16.gmra.mxu0 %v5842
        %v5896 = vpop.f32.mrf.mxu0
        %v5897 = vadd.f32 0.0, %v5896
        %v5898 = vpop.f32.mrf.mxu0
        %v5899 = vadd.f32 0.0, %v5898
        %5900 = vmatmul.bf16.gmra.mxu0 %v5845
        %v5901 = vpop.f32.mrf.mxu0
        %v5902 = vadd.f32 0.0, %v5901
        %v5903 = vpop.f32.mrf.mxu0
        %v5904 = vadd.f32 0.0, %v5903
        %5905 = vmatmul.bf16.gmra.mxu0 %v5848
        %v5906 = vpop.f32.mrf.mxu0
        %v5907 = vadd.f32 0.0, %v5906
        %v5908 = vpop.f32.mrf.mxu0
        %v5909 = vadd.f32 0.0, %v5908
        %5910 = vmatmul.bf16.gmra.mxu0 %v5851
        %v5911 = vpop.f32.mrf.mxu0
        %v5912 = vadd.f32 0.0, %v5911
        %v5913 = vpop.f32.mrf.mxu0
        %v5914 = vadd.f32 0.0, %v5913
        %5915 = vmatmul.bf16.gmra.mxu0 %v5854
        %v5916 = vpop.f32.mrf.mxu0
        %v5917 = vadd.f32 0.0, %v5916
        %v5918 = vpop.f32.mrf.mxu0
        %v5919 = vadd.f32 0.0, %v5918
        %5920 = vmatmul.bf16.gmra.mxu0 %v5857
        %v5921 = vpop.f32.mrf.mxu0
        %v5922 = vadd.f32 0.0, %v5921
        %v5923 = vpop.f32.mrf.mxu0
        %v5924 = vadd.f32 0.0, %v5923
        %5925 = vmatmul.bf16.gmra.mxu0 %v5860
        %v5926 = vpop.f32.mrf.mxu0
        %v5927 = vadd.f32 0.0, %v5926
        %v5928 = vpop.f32.mrf.mxu0
        %v5929 = vadd.f32 0.0, %v5928
        %5930 = vmatmul.bf16.gmra.mxu0 %v5863
        %v5931 = vpop.f32.mrf.mxu0
        %v5932 = vadd.f32 0.0, %v5931
        %v5933 = vpop.f32.mrf.mxu0
        %v5934 = vadd.f32 0.0, %v5933
        %5935 = vmatmul.bf16.gmra.mxu0 %v5866
        %v5936 = vpop.f32.mrf.mxu0
        %v5937 = vadd.f32 0.0, %v5936
        %v5938 = vpop.f32.mrf.mxu0
        %v5939 = vadd.f32 0.0, %v5938
        %5940 = vmatmul.bf16.gmra.mxu0 %v5869
        %v5941 = vpop.f32.mrf.mxu0
        %v5942 = vadd.f32 0.0, %v5941
        %v5943 = vpop.f32.mrf.mxu0
        %v5944 = vadd.f32 0.0, %v5943
        %5945 = vmatmul.bf16.gmra.mxu0 %v5872
        %v5946 = vpop.f32.mrf.mxu0
        %v5947 = vadd.f32 0.0, %v5946
        %v5948 = vpop.f32.mrf.mxu0
        %v5949 = vadd.f32 0.0, %v5948
        %5950 = vmatmul.bf16.gmra.mxu0 %v5875
        %v5951 = vpop.f32.mrf.mxu0
        %v5952 = vadd.f32 0.0, %v5951
        %v5953 = vpop.f32.mrf.mxu0
        %5954 = vdwg.mxu0
        %v5955 = vmul.f32 %v5712, %v5887
        %v5956 = vmul.f32 %v5713, %v5889
        %v5957 = vmul.f32 %v5714, %v5892
        %v5958 = vmul.f32 %v5715, %v5894
        %v5959 = vmul.f32 %v5716, %v5897
        %v5960 = vmul.f32 %v5717, %v5899
        %v5961 = vmul.f32 %v5718, %v5902
        %v5962 = vmul.f32 %v5719, %v5904
        %v5963 = vmul.f32 %v5720, %v5907
        %v5964 = vmul.f32 %v5721, %v5909
        %v5965 = vmul.f32 %v5722, %v5912
        %v5966 = vmul.f32 %v5723, %v5914
        %v5967 = vmul.f32 %v5724, %v5917
        %v5968 = vmul.f32 %v5725, %v5919
        %v5969 = vmul.f32 %v5726, %v5922
        %v5970 = vmul.f32 %v5727, %v5924
        %v5971 = vmul.f32 %v5728, %v5927
        %v5972 = vmul.f32 %v5729, %v5929
        %v5973 = vmul.f32 %v5730, %v5932
        %v5974 = vmul.f32 %v5731, %v5934
        %v5975 = vmul.f32 %v5732, %v5937
        %v5976 = vmul.f32 %v5733, %v5939
        %v5977 = vmul.f32 %v5734, %v5942
        %v5978 = vmul.f32 %v5735, %v5944
        %v5979 = vmul.f32 %v5736, %v5947
        %v5980 = vmul.f32 %v5737, %v5949
        %v5981 = vmul.f32 %v5738, %v5952
        %v5982 = vadd.f32 %v5073, %v5955
        %v5983 = vadd.f32 %v5074, %v5956
        %v5984 = vadd.f32 %v5075, %v5957
        %v5985 = vadd.f32 %v5076, %v5958
        %v5986 = vadd.f32 %v5077, %v5959
        %v5987 = vadd.f32 %v5078, %v5960
        %v5988 = vadd.f32 %v5079, %v5961
        %v5989 = vadd.f32 %v5080, %v5962
        %v5990 = vadd.f32 %v5081, %v5963
        %v5991 = vadd.f32 %v5082, %v5964
        %v5992 = vadd.f32 %v5083, %v5965
        %v5993 = vadd.f32 %v5084, %v5966
        %v5994 = vadd.f32 %v5085, %v5967
        %v5995 = vadd.f32 %v5086, %v5968
        %v5996 = vadd.f32 %v5087, %v5969
        %v5997 = vadd.f32 %v5088, %v5970
        %v5998 = vadd.f32 %v5089, %v5971
        %v5999 = vadd.f32 %v5090, %v5972
        %v6000 = vadd.f32 %v5091, %v5973
        %v6001 = vadd.f32 %v5092, %v5974
        %v6002 = vadd.f32 %v5093, %v5975
        %v6003 = vadd.f32 %v5094, %v5976
        %v6004 = vadd.f32 %v5095, %v5977
        %v6005 = vadd.f32 %v5096, %v5978
        %v6006 = vadd.f32 %v5097, %v5979
        %v6007 = vadd.f32 %v5098, %v5980
        %v6008 = vadd.f32 %v5099, %v5981
        %s6009 = scalar_lea.vmem %s3, 1296
        %v6010 = vld [vmem:[%s6009] sm:$0xff]
        %v6011 = vld [vmem:[%s6009 + $0x8] sm:$0xff]
        %v6012 = vld [vmem:[%s6009 + $0x10] sm:$0xff]
        %v6013 = vld [vmem:[%s6009 + $0x18] sm:$0xff]
        %v6014 = vld [vmem:[%s6009 + $0x20] sm:$0xff]
        %v6015 = vld [vmem:[%s6009 + $0x28] sm:$0xff]
        %v6016 = vld [vmem:[%s6009 + $0x30] sm:$0xff]
        %v6017 = vld [vmem:[%s6009 + $0x38] sm:$0xff]
        %v6018 = vld [vmem:[%s6009 + $0x40] sm:$0xff]
        %v6019 = vld [vmem:[%s6009 + $0x48] sm:$0xff]
        %v6020 = vld [vmem:[%s6009 + $0x50] sm:$0xff]
        %v6021 = vld [vmem:[%s6009 + $0x58] sm:$0xff]
        %v6022 = vld [vmem:[%s6009 + $0x60] sm:$0xff]
        %v6023 = vld [vmem:[%s6009 + $0x68] sm:$0xff]
        %v6024 = vld [vmem:[%s6009 + $0x70] sm:$0xff]
        %v6025 = vld [vmem:[%s6009 + $0x78] sm:$0xff]
        %v6026 = vld [vmem:[%s6009 + $0x80] sm:$0xff]
        %v6027 = vld [vmem:[%s6009 + $0x88] sm:$0xff]
        %v6028 = vld [vmem:[%s6009 + $0x90] sm:$0xff]
        %v6029 = vld [vmem:[%s6009 + $0x98] sm:$0xff]
        %v6030 = vld [vmem:[%s6009 + $0xa0] sm:$0xff]
        %v6031 = vld [vmem:[%s6009 + $0xa8] sm:$0xff]
        %v6032 = vld [vmem:[%s6009 + $0xb0] sm:$0xff]
        %v6033 = vld [vmem:[%s6009 + $0xb8] sm:$0xff]
        %v6034 = vld [vmem:[%s6009 + $0xc0] sm:$0xff]
        %v6035 = vld [vmem:[%s6009 + $0xc8] sm:$0xff]
        %v6036 = vld [vmem:[%s6009 + $0xd0] sm:$0xff]
        %v6038 = vsel %vm558, %v6010, 0
        %v6041 = vsel %vm558, %v6011, 0
        %v6044 = vsel %vm558, %v6012, 0
        %v6047 = vsel %vm558, %v6013, 0
        %v6050 = vsel %vm558, %v6014, 0
        %v6053 = vsel %vm558, %v6015, 0
        %v6056 = vsel %vm558, %v6016, 0
        %v6059 = vsel %vm558, %v6017, 0
        %v6062 = vsel %vm558, %v6018, 0
        %v6065 = vsel %vm558, %v6019, 0
        %v6068 = vsel %vm558, %v6020, 0
        %v6071 = vsel %vm558, %v6021, 0
        %v6074 = vsel %vm558, %v6022, 0
        %v6077 = vsel %vm558, %v6023, 0
        %v6080 = vsel %vm558, %v6024, 0
        %v6083 = vsel %vm558, %v6025, 0
        %v6086 = vsel %vm558, %v6026, 0
        %v6089 = vsel %vm558, %v6027, 0
        %v6092 = vsel %vm558, %v6028, 0
        %v6095 = vsel %vm558, %v6029, 0
        %v6098 = vsel %vm558, %v6030, 0
        %v6101 = vsel %vm558, %v6031, 0
        %v6104 = vsel %vm558, %v6032, 0
        %v6107 = vsel %vm558, %v6033, 0
        %v6110 = vsel %vm558, %v6034, 0
        %v6113 = vsel %vm558, %v6035, 0
        %v6116 = vsel %vm558, %v6036, 0
        %6118 = vmatpush.msra.mxu0 0.0
        %6119 = vmatpush.msra.mxu0 0.0
        %6120 = vmatpush.msra.mxu0 0.0
        %6121 = vmatpush.msra.mxu0 0.0
        %6122 = vmatpush.msra.mxu0 0.0
        %6123 = vmatpush.msra.mxu0 0.0
        %6124 = vmatpush.msra.mxu0 0.0
        %6125 = vmatpush.msra.mxu0 0.0
        %6126 = vmatpush.msra.mxu0 0.0
        %6127 = vmatpush.msra.mxu0 0.0
        %6128 = vmatpush.msra.mxu0 0.0
        %6129 = vmatpush.msra.mxu0 %v522
        %6130 = vmatpush.msra.mxu0 %v521
        %6131 = vmatpush.msra.mxu0 %v520
        %6132 = vmatpush.msra.mxu0 %v519
        %6133 = vmatpush.msra.mxu0 %v518
        %6134 = vmatmul.f32.gmra.mxu0 %v6038
        %v6135 = vpop.f32.mrf.mxu0
        %v6136 = vadd.f32 0.0, %v6135
        %6137 = vmatmul.f32.gmra.mxu0 %v6041
        %v6138 = vpop.f32.mrf.mxu0
        %v6139 = vadd.f32 0.0, %v6138
        %6140 = vmatmul.f32.gmra.mxu0 %v6044
        %v6141 = vpop.f32.mrf.mxu0
        %v6142 = vadd.f32 0.0, %v6141
        %6143 = vmatmul.f32.gmra.mxu0 %v6047
        %v6144 = vpop.f32.mrf.mxu0
        %v6145 = vadd.f32 0.0, %v6144
        %6146 = vmatmul.f32.gmra.mxu0 %v6050
        %v6147 = vpop.f32.mrf.mxu0
        %v6148 = vadd.f32 0.0, %v6147
        %6149 = vmatmul.f32.gmra.mxu0 %v6053
        %v6150 = vpop.f32.mrf.mxu0
        %v6151 = vadd.f32 0.0, %v6150
        %6152 = vmatmul.f32.gmra.mxu0 %v6056
        %v6153 = vpop.f32.mrf.mxu0
        %v6154 = vadd.f32 0.0, %v6153
        %6155 = vmatmul.f32.gmra.mxu0 %v6059
        %v6156 = vpop.f32.mrf.mxu0
        %v6157 = vadd.f32 0.0, %v6156
        %6158 = vmatmul.f32.gmra.mxu0 %v6062
        %v6159 = vpop.f32.mrf.mxu0
        %v6160 = vadd.f32 0.0, %v6159
        %6161 = vmatmul.f32.gmra.mxu0 %v6065
        %v6162 = vpop.f32.mrf.mxu0
        %v6163 = vadd.f32 0.0, %v6162
        %6164 = vmatmul.f32.gmra.mxu0 %v6068
        %v6165 = vpop.f32.mrf.mxu0
        %v6166 = vadd.f32 0.0, %v6165
        %6167 = vmatmul.f32.gmra.mxu0 %v6071
        %v6168 = vpop.f32.mrf.mxu0
        %v6169 = vadd.f32 0.0, %v6168
        %6170 = vmatmul.f32.gmra.mxu0 %v6074
        %v6171 = vpop.f32.mrf.mxu0
        %v6172 = vadd.f32 0.0, %v6171
        %6173 = vmatmul.f32.gmra.mxu0 %v6077
        %v6174 = vpop.f32.mrf.mxu0
        %v6175 = vadd.f32 0.0, %v6174
        %6176 = vmatmul.f32.gmra.mxu0 %v6080
        %v6177 = vpop.f32.mrf.mxu0
        %v6178 = vadd.f32 0.0, %v6177
        %6179 = vmatmul.f32.gmra.mxu0 %v6083
        %v6180 = vpop.f32.mrf.mxu0
        %v6181 = vadd.f32 0.0, %v6180
        %6182 = vmatmul.f32.gmra.mxu0 %v6086
        %v6183 = vpop.f32.mrf.mxu0
        %v6184 = vadd.f32 0.0, %v6183
        %6185 = vmatmul.f32.gmra.mxu0 %v6089
        %v6186 = vpop.f32.mrf.mxu0
        %v6187 = vadd.f32 0.0, %v6186
        %6188 = vmatmul.f32.gmra.mxu0 %v6092
        %v6189 = vpop.f32.mrf.mxu0
        %v6190 = vadd.f32 0.0, %v6189
        %6191 = vmatmul.f32.gmra.mxu0 %v6095
        %v6192 = vpop.f32.mrf.mxu0
        %v6193 = vadd.f32 0.0, %v6192
        %6194 = vmatmul.f32.gmra.mxu0 %v6098
        %v6195 = vpop.f32.mrf.mxu0
        %v6196 = vadd.f32 0.0, %v6195
        %6197 = vmatmul.f32.gmra.mxu0 %v6101
        %v6198 = vpop.f32.mrf.mxu0
        %v6199 = vadd.f32 0.0, %v6198
        %6200 = vmatmul.f32.gmra.mxu0 %v6104
        %v6201 = vpop.f32.mrf.mxu0
        %v6202 = vadd.f32 0.0, %v6201
        %6203 = vmatmul.f32.gmra.mxu0 %v6107
        %v6204 = vpop.f32.mrf.mxu0
        %v6205 = vadd.f32 0.0, %v6204
        %6206 = vmatmul.f32.gmra.mxu0 %v6110
        %v6207 = vpop.f32.mrf.mxu0
        %v6208 = vadd.f32 0.0, %v6207
        %6209 = vmatmul.f32.gmra.mxu0 %v6113
        %v6210 = vpop.f32.mrf.mxu0
        %v6211 = vadd.f32 0.0, %v6210
        %6212 = vmatmul.f32.gmra.mxu0 %v6116
        %v6213 = vpop.f32.mrf.mxu0
        %v6214 = vadd.f32 0.0, %v6213
        %6215 = vdwg.mxu0
        %v6216 = vmax.f32 %v6136, 0.0
        %v6217 = vmax.f32 %v6139, 0.0
        %v6218 = vmax.f32 %v6142, 0.0
        %v6219 = vmax.f32 %v6145, 0.0
        %v6220 = vmax.f32 %v6148, 0.0
        %v6221 = vmax.f32 %v6151, 0.0
        %v6222 = vmax.f32 %v6154, 0.0
        %v6223 = vmax.f32 %v6157, 0.0
        %v6224 = vmax.f32 %v6160, 0.0
        %v6225 = vmax.f32 %v6163, 0.0
        %v6226 = vmax.f32 %v6166, 0.0
        %v6227 = vmax.f32 %v6169, 0.0
        %v6228 = vmax.f32 %v6172, 0.0
        %v6229 = vmax.f32 %v6175, 0.0
        %v6230 = vmax.f32 %v6178, 0.0
        %v6231 = vmax.f32 %v6181, 0.0
        %v6232 = vmax.f32 %v6184, 0.0
        %v6233 = vmax.f32 %v6187, 0.0
        %v6234 = vmax.f32 %v6190, 0.0
        %v6235 = vmax.f32 %v6193, 0.0
        %v6236 = vmax.f32 %v6196, 0.0
        %v6237 = vmax.f32 %v6199, 0.0
        %v6238 = vmax.f32 %v6202, 0.0
        %v6239 = vmax.f32 %v6205, 0.0
        %v6240 = vmax.f32 %v6208, 0.0
        %v6241 = vmax.f32 %v6211, 0.0
        %v6242 = vmax.f32 %v6214, 0.0
        %v6243 = vrsqrt.pop %v6216
        %v6244 = vmul.f32 %v6243, %v6216
        %v6245 = vmul.f32 %v6244, %v6243
        %v6246 = vmul.f32 0.5, %v6245
        %v6247 = vsub.f32 1.5, %v6246
        %v6248 = vmul.f32 %v6243, %v6247
        %v6249 = vmul.f32 %v6216, %v6248
        %vm6250 = vcmp.eq.f32.partialorder %v6216, inf
        %v6251 = vsel %vm6250, %v6216, %v6249
        %vm6252 = vcmp.eq.f32.partialorder %v6216, 0.0
        %v6253 = vand.u32 %v6216, 2147483648
        %v6254 = vsel %vm6252, %v6253, %v6251
        %v6255 = vrsqrt.pop %v6217
        %v6256 = vmul.f32 %v6255, %v6217
        %v6257 = vmul.f32 %v6256, %v6255
        %v6258 = vmul.f32 0.5, %v6257
        %v6259 = vsub.f32 1.5, %v6258
        %v6260 = vmul.f32 %v6255, %v6259
        %v6261 = vmul.f32 %v6217, %v6260
        %vm6262 = vcmp.eq.f32.partialorder %v6217, inf
        %v6263 = vsel %vm6262, %v6217, %v6261
        %vm6264 = vcmp.eq.f32.partialorder %v6217, 0.0
        %v6265 = vand.u32 %v6217, 2147483648
        %v6266 = vsel %vm6264, %v6265, %v6263
        %v6267 = vrsqrt.pop %v6218
        %v6268 = vmul.f32 %v6267, %v6218
        %v6269 = vmul.f32 %v6268, %v6267
        %v6270 = vmul.f32 0.5, %v6269
        %v6271 = vsub.f32 1.5, %v6270
        %v6272 = vmul.f32 %v6267, %v6271
        %v6273 = vmul.f32 %v6218, %v6272
        %vm6274 = vcmp.eq.f32.partialorder %v6218, inf
        %v6275 = vsel %vm6274, %v6218, %v6273
        %vm6276 = vcmp.eq.f32.partialorder %v6218, 0.0
        %v6277 = vand.u32 %v6218, 2147483648
        %v6278 = vsel %vm6276, %v6277, %v6275
        %v6279 = vrsqrt.pop %v6219
        %v6280 = vmul.f32 %v6279, %v6219
        %v6281 = vmul.f32 %v6280, %v6279
        %v6282 = vmul.f32 0.5, %v6281
        %v6283 = vsub.f32 1.5, %v6282
        %v6284 = vmul.f32 %v6279, %v6283
        %v6285 = vmul.f32 %v6219, %v6284
        %vm6286 = vcmp.eq.f32.partialorder %v6219, inf
        %v6287 = vsel %vm6286, %v6219, %v6285
        %vm6288 = vcmp.eq.f32.partialorder %v6219, 0.0
        %v6289 = vand.u32 %v6219, 2147483648
        %v6290 = vsel %vm6288, %v6289, %v6287
        %v6291 = vrsqrt.pop %v6220
        %v6292 = vmul.f32 %v6291, %v6220
        %v6293 = vmul.f32 %v6292, %v6291
        %v6294 = vmul.f32 0.5, %v6293
        %v6295 = vsub.f32 1.5, %v6294
        %v6296 = vmul.f32 %v6291, %v6295
        %v6297 = vmul.f32 %v6220, %v6296
        %vm6298 = vcmp.eq.f32.partialorder %v6220, inf
        %v6299 = vsel %vm6298, %v6220, %v6297
        %vm6300 = vcmp.eq.f32.partialorder %v6220, 0.0
        %v6301 = vand.u32 %v6220, 2147483648
        %v6302 = vsel %vm6300, %v6301, %v6299
        %v6303 = vrsqrt.pop %v6221
        %v6304 = vmul.f32 %v6303, %v6221
        %v6305 = vmul.f32 %v6304, %v6303
        %v6306 = vmul.f32 0.5, %v6305
        %v6307 = vsub.f32 1.5, %v6306
        %v6308 = vmul.f32 %v6303, %v6307
        %v6309 = vmul.f32 %v6221, %v6308
        %vm6310 = vcmp.eq.f32.partialorder %v6221, inf
        %v6311 = vsel %vm6310, %v6221, %v6309
        %vm6312 = vcmp.eq.f32.partialorder %v6221, 0.0
        %v6313 = vand.u32 %v6221, 2147483648
        %v6314 = vsel %vm6312, %v6313, %v6311
        %v6315 = vrsqrt.pop %v6222
        %v6316 = vmul.f32 %v6315, %v6222
        %v6317 = vmul.f32 %v6316, %v6315
        %v6318 = vmul.f32 0.5, %v6317
        %v6319 = vsub.f32 1.5, %v6318
        %v6320 = vmul.f32 %v6315, %v6319
        %v6321 = vmul.f32 %v6222, %v6320
        %vm6322 = vcmp.eq.f32.partialorder %v6222, inf
        %v6323 = vsel %vm6322, %v6222, %v6321
        %vm6324 = vcmp.eq.f32.partialorder %v6222, 0.0
        %v6325 = vand.u32 %v6222, 2147483648
        %v6326 = vsel %vm6324, %v6325, %v6323
        %v6327 = vrsqrt.pop %v6223
        %v6328 = vmul.f32 %v6327, %v6223
        %v6329 = vmul.f32 %v6328, %v6327
        %v6330 = vmul.f32 0.5, %v6329
        %v6331 = vsub.f32 1.5, %v6330
        %v6332 = vmul.f32 %v6327, %v6331
        %v6333 = vmul.f32 %v6223, %v6332
        %vm6334 = vcmp.eq.f32.partialorder %v6223, inf
        %v6335 = vsel %vm6334, %v6223, %v6333
        %vm6336 = vcmp.eq.f32.partialorder %v6223, 0.0
        %v6337 = vand.u32 %v6223, 2147483648
        %v6338 = vsel %vm6336, %v6337, %v6335
        %v6339 = vrsqrt.pop %v6224
        %v6340 = vmul.f32 %v6339, %v6224
        %v6341 = vmul.f32 %v6340, %v6339
        %v6342 = vmul.f32 0.5, %v6341
        %v6343 = vsub.f32 1.5, %v6342
        %v6344 = vmul.f32 %v6339, %v6343
        %v6345 = vmul.f32 %v6224, %v6344
        %vm6346 = vcmp.eq.f32.partialorder %v6224, inf
        %v6347 = vsel %vm6346, %v6224, %v6345
        %vm6348 = vcmp.eq.f32.partialorder %v6224, 0.0
        %v6349 = vand.u32 %v6224, 2147483648
        %v6350 = vsel %vm6348, %v6349, %v6347
        %v6351 = vrsqrt.pop %v6225
        %v6352 = vmul.f32 %v6351, %v6225
        %v6353 = vmul.f32 %v6352, %v6351
        %v6354 = vmul.f32 0.5, %v6353
        %v6355 = vsub.f32 1.5, %v6354
        %v6356 = vmul.f32 %v6351, %v6355
        %v6357 = vmul.f32 %v6225, %v6356
        %vm6358 = vcmp.eq.f32.partialorder %v6225, inf
        %v6359 = vsel %vm6358, %v6225, %v6357
        %vm6360 = vcmp.eq.f32.partialorder %v6225, 0.0
        %v6361 = vand.u32 %v6225, 2147483648
        %v6362 = vsel %vm6360, %v6361, %v6359
        %v6363 = vrsqrt.pop %v6226
        %v6364 = vmul.f32 %v6363, %v6226
        %v6365 = vmul.f32 %v6364, %v6363
        %v6366 = vmul.f32 0.5, %v6365
        %v6367 = vsub.f32 1.5, %v6366
        %v6368 = vmul.f32 %v6363, %v6367
        %v6369 = vmul.f32 %v6226, %v6368
        %vm6370 = vcmp.eq.f32.partialorder %v6226, inf
        %v6371 = vsel %vm6370, %v6226, %v6369
        %vm6372 = vcmp.eq.f32.partialorder %v6226, 0.0
        %v6373 = vand.u32 %v6226, 2147483648
        %v6374 = vsel %vm6372, %v6373, %v6371
        %v6375 = vrsqrt.pop %v6227
        %v6376 = vmul.f32 %v6375, %v6227
        %v6377 = vmul.f32 %v6376, %v6375
        %v6378 = vmul.f32 0.5, %v6377
        %v6379 = vsub.f32 1.5, %v6378
        %v6380 = vmul.f32 %v6375, %v6379
        %v6381 = vmul.f32 %v6227, %v6380
        %vm6382 = vcmp.eq.f32.partialorder %v6227, inf
        %v6383 = vsel %vm6382, %v6227, %v6381
        %vm6384 = vcmp.eq.f32.partialorder %v6227, 0.0
        %v6385 = vand.u32 %v6227, 2147483648
        %v6386 = vsel %vm6384, %v6385, %v6383
        %v6387 = vrsqrt.pop %v6228
        %v6388 = vmul.f32 %v6387, %v6228
        %v6389 = vmul.f32 %v6388, %v6387
        %v6390 = vmul.f32 0.5, %v6389
        %v6391 = vsub.f32 1.5, %v6390
        %v6392 = vmul.f32 %v6387, %v6391
        %v6393 = vmul.f32 %v6228, %v6392
        %vm6394 = vcmp.eq.f32.partialorder %v6228, inf
        %v6395 = vsel %vm6394, %v6228, %v6393
        %vm6396 = vcmp.eq.f32.partialorder %v6228, 0.0
        %v6397 = vand.u32 %v6228, 2147483648
        %v6398 = vsel %vm6396, %v6397, %v6395
        %v6399 = vrsqrt.pop %v6229
        %v6400 = vmul.f32 %v6399, %v6229
        %v6401 = vmul.f32 %v6400, %v6399
        %v6402 = vmul.f32 0.5, %v6401
        %v6403 = vsub.f32 1.5, %v6402
        %v6404 = vmul.f32 %v6399, %v6403
        %v6405 = vmul.f32 %v6229, %v6404
        %vm6406 = vcmp.eq.f32.partialorder %v6229, inf
        %v6407 = vsel %vm6406, %v6229, %v6405
        %vm6408 = vcmp.eq.f32.partialorder %v6229, 0.0
        %v6409 = vand.u32 %v6229, 2147483648
        %v6410 = vsel %vm6408, %v6409, %v6407
        %v6411 = vrsqrt.pop %v6230
        %v6412 = vmul.f32 %v6411, %v6230
        %v6413 = vmul.f32 %v6412, %v6411
        %v6414 = vmul.f32 0.5, %v6413
        %v6415 = vsub.f32 1.5, %v6414
        %v6416 = vmul.f32 %v6411, %v6415
        %v6417 = vmul.f32 %v6230, %v6416
        %vm6418 = vcmp.eq.f32.partialorder %v6230, inf
        %v6419 = vsel %vm6418, %v6230, %v6417
        %vm6420 = vcmp.eq.f32.partialorder %v6230, 0.0
        %v6421 = vand.u32 %v6230, 2147483648
        %v6422 = vsel %vm6420, %v6421, %v6419
        %v6423 = vrsqrt.pop %v6231
        %v6424 = vmul.f32 %v6423, %v6231
        %v6425 = vmul.f32 %v6424, %v6423
        %v6426 = vmul.f32 0.5, %v6425
        %v6427 = vsub.f32 1.5, %v6426
        %v6428 = vmul.f32 %v6423, %v6427
        %v6429 = vmul.f32 %v6231, %v6428
        %vm6430 = vcmp.eq.f32.partialorder %v6231, inf
        %v6431 = vsel %vm6430, %v6231, %v6429
        %vm6432 = vcmp.eq.f32.partialorder %v6231, 0.0
        %v6433 = vand.u32 %v6231, 2147483648
        %v6434 = vsel %vm6432, %v6433, %v6431
        %v6435 = vrsqrt.pop %v6232
        %v6436 = vmul.f32 %v6435, %v6232
        %v6437 = vmul.f32 %v6436, %v6435
        %v6438 = vmul.f32 0.5, %v6437
        %v6439 = vsub.f32 1.5, %v6438
        %v6440 = vmul.f32 %v6435, %v6439
        %v6441 = vmul.f32 %v6232, %v6440
        %vm6442 = vcmp.eq.f32.partialorder %v6232, inf
        %v6443 = vsel %vm6442, %v6232, %v6441
        %vm6444 = vcmp.eq.f32.partialorder %v6232, 0.0
        %v6445 = vand.u32 %v6232, 2147483648
        %v6446 = vsel %vm6444, %v6445, %v6443
        %v6447 = vrsqrt.pop %v6233
        %v6448 = vmul.f32 %v6447, %v6233
        %v6449 = vmul.f32 %v6448, %v6447
        %v6450 = vmul.f32 0.5, %v6449
        %v6451 = vsub.f32 1.5, %v6450
        %v6452 = vmul.f32 %v6447, %v6451
        %v6453 = vmul.f32 %v6233, %v6452
        %vm6454 = vcmp.eq.f32.partialorder %v6233, inf
        %v6455 = vsel %vm6454, %v6233, %v6453
        %vm6456 = vcmp.eq.f32.partialorder %v6233, 0.0
        %v6457 = vand.u32 %v6233, 2147483648
        %v6458 = vsel %vm6456, %v6457, %v6455
        %v6459 = vrsqrt.pop %v6234
        %v6460 = vmul.f32 %v6459, %v6234
        %v6461 = vmul.f32 %v6460, %v6459
        %v6462 = vmul.f32 0.5, %v6461
        %v6463 = vsub.f32 1.5, %v6462
        %v6464 = vmul.f32 %v6459, %v6463
        %v6465 = vmul.f32 %v6234, %v6464
        %vm6466 = vcmp.eq.f32.partialorder %v6234, inf
        %v6467 = vsel %vm6466, %v6234, %v6465
        %vm6468 = vcmp.eq.f32.partialorder %v6234, 0.0
        %v6469 = vand.u32 %v6234, 2147483648
        %v6470 = vsel %vm6468, %v6469, %v6467
        %v6471 = vrsqrt.pop %v6235
        %v6472 = vmul.f32 %v6471, %v6235
        %v6473 = vmul.f32 %v6472, %v6471
        %v6474 = vmul.f32 0.5, %v6473
        %v6475 = vsub.f32 1.5, %v6474
        %v6476 = vmul.f32 %v6471, %v6475
        %v6477 = vmul.f32 %v6235, %v6476
        %vm6478 = vcmp.eq.f32.partialorder %v6235, inf
        %v6479 = vsel %vm6478, %v6235, %v6477
        %vm6480 = vcmp.eq.f32.partialorder %v6235, 0.0
        %v6481 = vand.u32 %v6235, 2147483648
        %v6482 = vsel %vm6480, %v6481, %v6479
        %v6483 = vrsqrt.pop %v6236
        %v6484 = vmul.f32 %v6483, %v6236
        %v6485 = vmul.f32 %v6484, %v6483
        %v6486 = vmul.f32 0.5, %v6485
        %v6487 = vsub.f32 1.5, %v6486
        %v6488 = vmul.f32 %v6483, %v6487
        %v6489 = vmul.f32 %v6236, %v6488
        %vm6490 = vcmp.eq.f32.partialorder %v6236, inf
        %v6491 = vsel %vm6490, %v6236, %v6489
        %vm6492 = vcmp.eq.f32.partialorder %v6236, 0.0
        %v6493 = vand.u32 %v6236, 2147483648
        %v6494 = vsel %vm6492, %v6493, %v6491
        %v6495 = vrsqrt.pop %v6237
        %v6496 = vmul.f32 %v6495, %v6237
        %v6497 = vmul.f32 %v6496, %v6495
        %v6498 = vmul.f32 0.5, %v6497
        %v6499 = vsub.f32 1.5, %v6498
        %v6500 = vmul.f32 %v6495, %v6499
        %v6501 = vmul.f32 %v6237, %v6500
        %vm6502 = vcmp.eq.f32.partialorder %v6237, inf
        %v6503 = vsel %vm6502, %v6237, %v6501
        %vm6504 = vcmp.eq.f32.partialorder %v6237, 0.0
        %v6505 = vand.u32 %v6237, 2147483648
        %v6506 = vsel %vm6504, %v6505, %v6503
        %v6507 = vrsqrt.pop %v6238
        %v6508 = vmul.f32 %v6507, %v6238
        %v6509 = vmul.f32 %v6508, %v6507
        %v6510 = vmul.f32 0.5, %v6509
        %v6511 = vsub.f32 1.5, %v6510
        %v6512 = vmul.f32 %v6507, %v6511
        %v6513 = vmul.f32 %v6238, %v6512
        %vm6514 = vcmp.eq.f32.partialorder %v6238, inf
        %v6515 = vsel %vm6514, %v6238, %v6513
        %vm6516 = vcmp.eq.f32.partialorder %v6238, 0.0
        %v6517 = vand.u32 %v6238, 2147483648
        %v6518 = vsel %vm6516, %v6517, %v6515
        %v6519 = vrsqrt.pop %v6239
        %v6520 = vmul.f32 %v6519, %v6239
        %v6521 = vmul.f32 %v6520, %v6519
        %v6522 = vmul.f32 0.5, %v6521
        %v6523 = vsub.f32 1.5, %v6522
        %v6524 = vmul.f32 %v6519, %v6523
        %v6525 = vmul.f32 %v6239, %v6524
        %vm6526 = vcmp.eq.f32.partialorder %v6239, inf
        %v6527 = vsel %vm6526, %v6239, %v6525
        %vm6528 = vcmp.eq.f32.partialorder %v6239, 0.0
        %v6529 = vand.u32 %v6239, 2147483648
        %v6530 = vsel %vm6528, %v6529, %v6527
        %v6531 = vrsqrt.pop %v6240
        %v6532 = vmul.f32 %v6531, %v6240
        %v6533 = vmul.f32 %v6532, %v6531
        %v6534 = vmul.f32 0.5, %v6533
        %v6535 = vsub.f32 1.5, %v6534
        %v6536 = vmul.f32 %v6531, %v6535
        %v6537 = vmul.f32 %v6240, %v6536
        %vm6538 = vcmp.eq.f32.partialorder %v6240, inf
        %v6539 = vsel %vm6538, %v6240, %v6537
        %vm6540 = vcmp.eq.f32.partialorder %v6240, 0.0
        %v6541 = vand.u32 %v6240, 2147483648
        %v6542 = vsel %vm6540, %v6541, %v6539
        %v6543 = vrsqrt.pop %v6241
        %v6544 = vmul.f32 %v6543, %v6241
        %v6545 = vmul.f32 %v6544, %v6543
        %v6546 = vmul.f32 0.5, %v6545
        %v6547 = vsub.f32 1.5, %v6546
        %v6548 = vmul.f32 %v6543, %v6547
        %v6549 = vmul.f32 %v6241, %v6548
        %vm6550 = vcmp.eq.f32.partialorder %v6241, inf
        %v6551 = vsel %vm6550, %v6241, %v6549
        %vm6552 = vcmp.eq.f32.partialorder %v6241, 0.0
        %v6553 = vand.u32 %v6241, 2147483648
        %v6554 = vsel %vm6552, %v6553, %v6551
        %v6555 = vrsqrt.pop %v6242
        %v6556 = vmul.f32 %v6555, %v6242
        %v6557 = vmul.f32 %v6556, %v6555
        %v6558 = vmul.f32 0.5, %v6557
        %v6559 = vsub.f32 1.5, %v6558
        %v6560 = vmul.f32 %v6555, %v6559
        %v6561 = vmul.f32 %v6242, %v6560
        %vm6562 = vcmp.eq.f32.partialorder %v6242, inf
        %v6563 = vsel %vm6562, %v6242, %v6561
        %vm6564 = vcmp.eq.f32.partialorder %v6242, 0.0
        %v6565 = vand.u32 %v6242, 2147483648
        %v6566 = vsel %vm6564, %v6565, %v6563
        %v6567 = vmul.f32 %v6254, 1.1547005
        %v6568 = vmul.f32 %v6266, 1.1547005
        %v6569 = vmul.f32 %v6278, 1.1547005
        %v6570 = vmul.f32 %v6290, 1.1547005
        %v6571 = vmul.f32 %v6302, 1.1547005
        %v6572 = vmul.f32 %v6314, 1.1547005
        %v6573 = vmul.f32 %v6326, 1.1547005
        %v6574 = vmul.f32 %v6338, 1.1547005
        %v6575 = vmul.f32 %v6350, 1.1547005
        %v6576 = vmul.f32 %v6362, 1.1547005
        %v6577 = vmul.f32 %v6374, 1.1547005
        %v6578 = vmul.f32 %v6386, 1.1547005
        %v6579 = vmul.f32 %v6398, 1.1547005
        %v6580 = vmul.f32 %v6410, 1.1547005
        %v6581 = vmul.f32 %v6422, 1.1547005
        %v6582 = vmul.f32 %v6434, 1.1547005
        %v6583 = vmul.f32 %v6446, 1.1547005
        %v6584 = vmul.f32 %v6458, 1.1547005
        %v6585 = vmul.f32 %v6470, 1.1547005
        %v6586 = vmul.f32 %v6482, 1.1547005
        %v6587 = vmul.f32 %v6494, 1.1547005
        %v6588 = vmul.f32 %v6506, 1.1547005
        %v6589 = vmul.f32 %v6518, 1.1547005
        %v6590 = vmul.f32 %v6530, 1.1547005
        %v6591 = vmul.f32 %v6542, 1.1547005
        %v6592 = vmul.f32 %v6554, 1.1547005
        %v6593 = vmul.f32 %v6566, 1.1547005
        %v6594 = vsub.f32 1.0, %v6567
        %v6595 = vsub.f32 1.0, %v6568
        %v6596 = vsub.f32 1.0, %v6569
        %v6597 = vsub.f32 1.0, %v6570
        %v6598 = vsub.f32 1.0, %v6571
        %v6599 = vsub.f32 1.0, %v6572
        %v6600 = vsub.f32 1.0, %v6573
        %v6601 = vsub.f32 1.0, %v6574
        %v6602 = vsub.f32 1.0, %v6575
        %v6603 = vsub.f32 1.0, %v6576
        %v6604 = vsub.f32 1.0, %v6577
        %v6605 = vsub.f32 1.0, %v6578
        %v6606 = vsub.f32 1.0, %v6579
        %v6607 = vsub.f32 1.0, %v6580
        %v6608 = vsub.f32 1.0, %v6581
        %v6609 = vsub.f32 1.0, %v6582
        %v6610 = vsub.f32 1.0, %v6583
        %v6611 = vsub.f32 1.0, %v6584
        %v6612 = vsub.f32 1.0, %v6585
        %v6613 = vsub.f32 1.0, %v6586
        %v6614 = vsub.f32 1.0, %v6587
        %v6615 = vsub.f32 1.0, %v6588
        %v6616 = vsub.f32 1.0, %v6589
        %v6617 = vsub.f32 1.0, %v6590
        %v6618 = vsub.f32 1.0, %v6591
        %v6619 = vsub.f32 1.0, %v6592
        %v6620 = vsub.f32 1.0, %v6593
        %v6621 = vmax.f32 %v6594, 0.0
        %v6622 = vmax.f32 %v6595, 0.0
        %v6623 = vmax.f32 %v6596, 0.0
        %v6624 = vmax.f32 %v6597, 0.0
        %v6625 = vmax.f32 %v6598, 0.0
        %v6626 = vmax.f32 %v6599, 0.0
        %v6627 = vmax.f32 %v6600, 0.0
        %v6628 = vmax.f32 %v6601, 0.0
        %v6629 = vmax.f32 %v6602, 0.0
        %v6630 = vmax.f32 %v6603, 0.0
        %v6631 = vmax.f32 %v6604, 0.0
        %v6632 = vmax.f32 %v6605, 0.0
        %v6633 = vmax.f32 %v6606, 0.0
        %v6634 = vmax.f32 %v6607, 0.0
        %v6635 = vmax.f32 %v6608, 0.0
        %v6636 = vmax.f32 %v6609, 0.0
        %v6637 = vmax.f32 %v6610, 0.0
        %v6638 = vmax.f32 %v6611, 0.0
        %v6639 = vmax.f32 %v6612, 0.0
        %v6640 = vmax.f32 %v6613, 0.0
        %v6641 = vmax.f32 %v6614, 0.0
        %v6642 = vmax.f32 %v6615, 0.0
        %v6643 = vmax.f32 %v6616, 0.0
        %v6644 = vmax.f32 %v6617, 0.0
        %v6645 = vmax.f32 %v6618, 0.0
        %v6646 = vmax.f32 %v6619, 0.0
        %v6647 = vmax.f32 %v6620, 0.0
        %s6648 = scalar_lea.vmem %s4, 648
        %v6649 = vld [vmem:[%s6648] sm:$0xf]
        %v6650 = vld [vmem:[%s6648 + $0x4] sm:$0xf]
        %v6651 = vld [vmem:[%s6648 + $0x8] sm:$0xf]
        %v6652 = vld [vmem:[%s6648 + $0xc] sm:$0xf]
        %v6653 = vld [vmem:[%s6648 + $0x10] sm:$0xf]
        %v6654 = vld [vmem:[%s6648 + $0x14] sm:$0xf]
        %v6655 = vld [vmem:[%s6648 + $0x18] sm:$0xf]
        %v6656 = vld [vmem:[%s6648 + $0x1c] sm:$0xf]
        %v6657 = vld [vmem:[%s6648 + $0x20] sm:$0xf]
        %v6658 = vld [vmem:[%s6648 + $0x24] sm:$0xf]
        %v6659 = vld [vmem:[%s6648 + $0x28] sm:$0xf]
        %v6660 = vld [vmem:[%s6648 + $0x2c] sm:$0xf]
        %v6661 = vld [vmem:[%s6648 + $0x30] sm:$0xf]
        %v6662 = vld [vmem:[%s6648 + $0x34] sm:$0xf]
        %v6663 = vld [vmem:[%s6648 + $0x38] sm:$0xf]
        %v6664 = vld [vmem:[%s6648 + $0x3c] sm:$0xf]
        %v6665 = vld [vmem:[%s6648 + $0x40] sm:$0xf]
        %v6666 = vld [vmem:[%s6648 + $0x44] sm:$0xf]
        %v6667 = vld [vmem:[%s6648 + $0x48] sm:$0xf]
        %v6668 = vld [vmem:[%s6648 + $0x4c] sm:$0xf]
        %v6669 = vld [vmem:[%s6648 + $0x50] sm:$0xf]
        %v6670 = vld [vmem:[%s6648 + $0x54] sm:$0xf]
        %v6671 = vld [vmem:[%s6648 + $0x58] sm:$0xf]
        %v6672 = vld [vmem:[%s6648 + $0x5c] sm:$0xf]
        %v6673 = vld [vmem:[%s6648 + $0x60] sm:$0xf]
        %v6674 = vld [vmem:[%s6648 + $0x64] sm:$0xf]
        %v6675 = vld [vmem:[%s6648 + $0x68] sm:$0xf]
        %v6703 = vunpack.c.l.b16 %v6649
        %v6704 = vunpack.c.l.b16 %v6650
        %v6705 = vunpack.c.l.b16 %v6651
        %v6706 = vunpack.c.l.b16 %v6652
        %v6707 = vunpack.c.l.b16 %v6653
        %v6708 = vunpack.c.l.b16 %v6654
        %v6709 = vunpack.c.l.b16 %v6655
        %v6710 = vunpack.c.l.b16 %v6656
        %v6711 = vunpack.c.l.b16 %v6657
        %v6712 = vunpack.c.l.b16 %v6658
        %v6713 = vunpack.c.l.b16 %v6659
        %v6714 = vunpack.c.l.b16 %v6660
        %v6715 = vunpack.c.l.b16 %v6661
        %v6716 = vunpack.c.l.b16 %v6662
        %v6717 = vunpack.c.l.b16 %v6663
        %v6718 = vunpack.c.l.b16 %v6664
        %v6719 = vunpack.c.l.b16 %v6665
        %v6720 = vunpack.c.l.b16 %v6666
        %v6721 = vunpack.c.l.b16 %v6667
        %v6722 = vunpack.c.l.b16 %v6668
        %v6723 = vunpack.c.l.b16 %v6669
        %v6724 = vunpack.c.l.b16 %v6670
        %v6725 = vunpack.c.l.b16 %v6671
        %v6726 = vunpack.c.l.b16 %v6672
        %v6727 = vunpack.c.l.b16 %v6673
        %v6728 = vunpack.c.l.b16 %v6674
        %v6729 = vunpack.c.l.b16 %v6675
        %v6730 = vpack.c.b16 %v6704, %v6703
        %v6731 = vpack.c.b16 %v6706, %v6705
        %v6732 = vpack.c.b16 %v6708, %v6707
        %v6733 = vpack.c.b16 %v6710, %v6709
        %v6734 = vpack.c.b16 %v6712, %v6711
        %v6735 = vpack.c.b16 %v6714, %v6713
        %v6736 = vpack.c.b16 %v6716, %v6715
        %v6737 = vpack.c.b16 %v6718, %v6717
        %v6738 = vpack.c.b16 %v6720, %v6719
        %v6739 = vpack.c.b16 %v6722, %v6721
        %v6740 = vpack.c.b16 %v6724, %v6723
        %v6741 = vpack.c.b16 %v6726, %v6725
        %v6742 = vpack.c.b16 %v6728, %v6727
        %v6743 = vpack.c.b16 %v6729, %v6729
        %v6745 = vsel %vm1289, %v6730, 0
        %v6748 = vsel %vm1289, %v6731, 0
        %v6751 = vsel %vm1289, %v6732, 0
        %v6754 = vsel %vm1289, %v6733, 0
        %v6757 = vsel %vm1289, %v6734, 0
        %v6760 = vsel %vm1289, %v6735, 0
        %v6763 = vsel %vm1289, %v6736, 0
        %v6766 = vsel %vm1289, %v6737, 0
        %v6769 = vsel %vm1289, %v6738, 0
        %v6772 = vsel %vm1289, %v6739, 0
        %v6775 = vsel %vm1289, %v6740, 0
        %v6778 = vsel %vm1289, %v6741, 0
        %v6781 = vsel %vm1289, %v6742, 0
        %v6784 = vsel %vm1289, %v6743, 0
        %6786 = vmatpush.bf16.msra.mxu0 0
        %6787 = vmatpush.bf16.msra.mxu0 0
        %6788 = vmatpush.bf16.msra.mxu0 0
        %6789 = vmatpush.bf16.msra.mxu0 0
        %6790 = vmatpush.bf16.msra.mxu0 %v1284
        %6791 = vmatpush.bf16.msra.mxu0 %v1283
        %6792 = vmatpush.bf16.msra.mxu0 %v1282
        %6793 = vmatpush.bf16.msra.mxu0 %v1281
        %6794 = vmatmul.bf16.gmra.mxu0 %v6745
        %v6795 = vpop.f32.mrf.mxu0
        %v6796 = vadd.f32 0.0, %v6795
        %v6797 = vpop.f32.mrf.mxu0
        %v6798 = vadd.f32 0.0, %v6797
        %6799 = vmatmul.bf16.gmra.mxu0 %v6748
        %v6800 = vpop.f32.mrf.mxu0
        %v6801 = vadd.f32 0.0, %v6800
        %v6802 = vpop.f32.mrf.mxu0
        %v6803 = vadd.f32 0.0, %v6802
        %6804 = vmatmul.bf16.gmra.mxu0 %v6751
        %v6805 = vpop.f32.mrf.mxu0
        %v6806 = vadd.f32 0.0, %v6805
        %v6807 = vpop.f32.mrf.mxu0
        %v6808 = vadd.f32 0.0, %v6807
        %6809 = vmatmul.bf16.gmra.mxu0 %v6754
        %v6810 = vpop.f32.mrf.mxu0
        %v6811 = vadd.f32 0.0, %v6810
        %v6812 = vpop.f32.mrf.mxu0
        %v6813 = vadd.f32 0.0, %v6812
        %6814 = vmatmul.bf16.gmra.mxu0 %v6757
        %v6815 = vpop.f32.mrf.mxu0
        %v6816 = vadd.f32 0.0, %v6815
        %v6817 = vpop.f32.mrf.mxu0
        %v6818 = vadd.f32 0.0, %v6817
        %6819 = vmatmul.bf16.gmra.mxu0 %v6760
        %v6820 = vpop.f32.mrf.mxu0
        %v6821 = vadd.f32 0.0, %v6820
        %v6822 = vpop.f32.mrf.mxu0
        %v6823 = vadd.f32 0.0, %v6822
        %6824 = vmatmul.bf16.gmra.mxu0 %v6763
        %v6825 = vpop.f32.mrf.mxu0
        %v6826 = vadd.f32 0.0, %v6825
        %v6827 = vpop.f32.mrf.mxu0
        %v6828 = vadd.f32 0.0, %v6827
        %6829 = vmatmul.bf16.gmra.mxu0 %v6766
        %v6830 = vpop.f32.mrf.mxu0
        %v6831 = vadd.f32 0.0, %v6830
        %v6832 = vpop.f32.mrf.mxu0
        %v6833 = vadd.f32 0.0, %v6832
        %6834 = vmatmul.bf16.gmra.mxu0 %v6769
        %v6835 = vpop.f32.mrf.mxu0
        %v6836 = vadd.f32 0.0, %v6835
        %v6837 = vpop.f32.mrf.mxu0
        %v6838 = vadd.f32 0.0, %v6837
        %6839 = vmatmul.bf16.gmra.mxu0 %v6772
        %v6840 = vpop.f32.mrf.mxu0
        %v6841 = vadd.f32 0.0, %v6840
        %v6842 = vpop.f32.mrf.mxu0
        %v6843 = vadd.f32 0.0, %v6842
        %6844 = vmatmul.bf16.gmra.mxu0 %v6775
        %v6845 = vpop.f32.mrf.mxu0
        %v6846 = vadd.f32 0.0, %v6845
        %v6847 = vpop.f32.mrf.mxu0
        %v6848 = vadd.f32 0.0, %v6847
        %6849 = vmatmul.bf16.gmra.mxu0 %v6778
        %v6850 = vpop.f32.mrf.mxu0
        %v6851 = vadd.f32 0.0, %v6850
        %v6852 = vpop.f32.mrf.mxu0
        %v6853 = vadd.f32 0.0, %v6852
        %6854 = vmatmul.bf16.gmra.mxu0 %v6781
        %v6855 = vpop.f32.mrf.mxu0
        %v6856 = vadd.f32 0.0, %v6855
        %v6857 = vpop.f32.mrf.mxu0
        %v6858 = vadd.f32 0.0, %v6857
        %6859 = vmatmul.bf16.gmra.mxu0 %v6784
        %v6860 = vpop.f32.mrf.mxu0
        %v6861 = vadd.f32 0.0, %v6860
        %v6862 = vpop.f32.mrf.mxu0
        %6863 = vdwg.mxu0
        %v6864 = vmul.f32 %v6621, %v6796
        %v6865 = vmul.f32 %v6622, %v6798
        %v6866 = vmul.f32 %v6623, %v6801
        %v6867 = vmul.f32 %v6624, %v6803
        %v6868 = vmul.f32 %v6625, %v6806
        %v6869 = vmul.f32 %v6626, %v6808
        %v6870 = vmul.f32 %v6627, %v6811
        %v6871 = vmul.f32 %v6628, %v6813
        %v6872 = vmul.f32 %v6629, %v6816
        %v6873 = vmul.f32 %v6630, %v6818
        %v6874 = vmul.f32 %v6631, %v6821
        %v6875 = vmul.f32 %v6632, %v6823
        %v6876 = vmul.f32 %v6633, %v6826
        %v6877 = vmul.f32 %v6634, %v6828
        %v6878 = vmul.f32 %v6635, %v6831
        %v6879 = vmul.f32 %v6636, %v6833
        %v6880 = vmul.f32 %v6637, %v6836
        %v6881 = vmul.f32 %v6638, %v6838
        %v6882 = vmul.f32 %v6639, %v6841
        %v6883 = vmul.f32 %v6640, %v6843
        %v6884 = vmul.f32 %v6641, %v6846
        %v6885 = vmul.f32 %v6642, %v6848
        %v6886 = vmul.f32 %v6643, %v6851
        %v6887 = vmul.f32 %v6644, %v6853
        %v6888 = vmul.f32 %v6645, %v6856
        %v6889 = vmul.f32 %v6646, %v6858
        %v6890 = vmul.f32 %v6647, %v6861
        %v6891 = vadd.f32 %v5982, %v6864
        %v6892 = vadd.f32 %v5983, %v6865
        %v6893 = vadd.f32 %v5984, %v6866
        %v6894 = vadd.f32 %v5985, %v6867
        %v6895 = vadd.f32 %v5986, %v6868
        %v6896 = vadd.f32 %v5987, %v6869
        %v6897 = vadd.f32 %v5988, %v6870
        %v6898 = vadd.f32 %v5989, %v6871
        %v6899 = vadd.f32 %v5990, %v6872
        %v6900 = vadd.f32 %v5991, %v6873
        %v6901 = vadd.f32 %v5992, %v6874
        %v6902 = vadd.f32 %v5993, %v6875
        %v6903 = vadd.f32 %v5994, %v6876
        %v6904 = vadd.f32 %v5995, %v6877
        %v6905 = vadd.f32 %v5996, %v6878
        %v6906 = vadd.f32 %v5997, %v6879
        %v6907 = vadd.f32 %v5998, %v6880
        %v6908 = vadd.f32 %v5999, %v6881
        %v6909 = vadd.f32 %v6000, %v6882
        %v6910 = vadd.f32 %v6001, %v6883
        %v6911 = vadd.f32 %v6002, %v6884
        %v6912 = vadd.f32 %v6003, %v6885
        %v6913 = vadd.f32 %v6004, %v6886
        %v6914 = vadd.f32 %v6005, %v6887
        %v6915 = vadd.f32 %v6006, %v6888
        %v6916 = vadd.f32 %v6007, %v6889
        %v6917 = vadd.f32 %v6008, %v6890
        %s6918 = scalar_lea.vmem %s3, 1512
        %v6919 = vld [vmem:[%s6918] sm:$0xff]
        %v6920 = vld [vmem:[%s6918 + $0x8] sm:$0xff]
        %v6921 = vld [vmem:[%s6918 + $0x10] sm:$0xff]
        %v6922 = vld [vmem:[%s6918 + $0x18] sm:$0xff]
        %v6923 = vld [vmem:[%s6918 + $0x20] sm:$0xff]
        %v6924 = vld [vmem:[%s6918 + $0x28] sm:$0xff]
        %v6925 = vld [vmem:[%s6918 + $0x30] sm:$0xff]
        %v6926 = vld [vmem:[%s6918 + $0x38] sm:$0xff]
        %v6927 = vld [vmem:[%s6918 + $0x40] sm:$0xff]
        %v6928 = vld [vmem:[%s6918 + $0x48] sm:$0xff]
        %v6929 = vld [vmem:[%s6918 + $0x50] sm:$0xff]
        %v6930 = vld [vmem:[%s6918 + $0x58] sm:$0xff]
        %v6931 = vld [vmem:[%s6918 + $0x60] sm:$0xff]
        %v6932 = vld [vmem:[%s6918 + $0x68] sm:$0xff]
        %v6933 = vld [vmem:[%s6918 + $0x70] sm:$0xff]
        %v6934 = vld [vmem:[%s6918 + $0x78] sm:$0xff]
        %v6935 = vld [vmem:[%s6918 + $0x80] sm:$0xff]
        %v6936 = vld [vmem:[%s6918 + $0x88] sm:$0xff]
        %v6937 = vld [vmem:[%s6918 + $0x90] sm:$0xff]
        %v6938 = vld [vmem:[%s6918 + $0x98] sm:$0xff]
        %v6939 = vld [vmem:[%s6918 + $0xa0] sm:$0xff]
        %v6940 = vld [vmem:[%s6918 + $0xa8] sm:$0xff]
        %v6941 = vld [vmem:[%s6918 + $0xb0] sm:$0xff]
        %v6942 = vld [vmem:[%s6918 + $0xb8] sm:$0xff]
        %v6943 = vld [vmem:[%s6918 + $0xc0] sm:$0xff]
        %v6944 = vld [vmem:[%s6918 + $0xc8] sm:$0xff]
        %v6945 = vld [vmem:[%s6918 + $0xd0] sm:$0xff]
        %v6947 = vsel %vm558, %v6919, 0
        %v6950 = vsel %vm558, %v6920, 0
        %v6953 = vsel %vm558, %v6921, 0
        %v6956 = vsel %vm558, %v6922, 0
        %v6959 = vsel %vm558, %v6923, 0
        %v6962 = vsel %vm558, %v6924, 0
        %v6965 = vsel %vm558, %v6925, 0
        %v6968 = vsel %vm558, %v6926, 0
        %v6971 = vsel %vm558, %v6927, 0
        %v6974 = vsel %vm558, %v6928, 0
        %v6977 = vsel %vm558, %v6929, 0
        %v6980 = vsel %vm558, %v6930, 0
        %v6983 = vsel %vm558, %v6931, 0
        %v6986 = vsel %vm558, %v6932, 0
        %v6989 = vsel %vm558, %v6933, 0
        %v6992 = vsel %vm558, %v6934, 0
        %v6995 = vsel %vm558, %v6935, 0
        %v6998 = vsel %vm558, %v6936, 0
        %v7001 = vsel %vm558, %v6937, 0
        %v7004 = vsel %vm558, %v6938, 0
        %v7007 = vsel %vm558, %v6939, 0
        %v7010 = vsel %vm558, %v6940, 0
        %v7013 = vsel %vm558, %v6941, 0
        %v7016 = vsel %vm558, %v6942, 0
        %v7019 = vsel %vm558, %v6943, 0
        %v7022 = vsel %vm558, %v6944, 0
        %v7025 = vsel %vm558, %v6945, 0
        %7027 = vmatpush.msra.mxu0 0.0
        %7028 = vmatpush.msra.mxu0 0.0
        %7029 = vmatpush.msra.mxu0 0.0
        %7030 = vmatpush.msra.mxu0 0.0
        %7031 = vmatpush.msra.mxu0 0.0
        %7032 = vmatpush.msra.mxu0 0.0
        %7033 = vmatpush.msra.mxu0 0.0
        %7034 = vmatpush.msra.mxu0 0.0
        %7035 = vmatpush.msra.mxu0 0.0
        %7036 = vmatpush.msra.mxu0 0.0
        %7037 = vmatpush.msra.mxu0 0.0
        %7038 = vmatpush.msra.mxu0 %v522
        %7039 = vmatpush.msra.mxu0 %v521
        %7040 = vmatpush.msra.mxu0 %v520
        %7041 = vmatpush.msra.mxu0 %v519
        %7042 = vmatpush.msra.mxu0 %v518
        %7043 = vmatmul.f32.gmra.mxu0 %v6947
        %v7044 = vpop.f32.mrf.mxu0
        %v7045 = vadd.f32 0.0, %v7044
        %7046 = vmatmul.f32.gmra.mxu0 %v6950
        %v7047 = vpop.f32.mrf.mxu0
        %v7048 = vadd.f32 0.0, %v7047
        %7049 = vmatmul.f32.gmra.mxu0 %v6953
        %v7050 = vpop.f32.mrf.mxu0
        %v7051 = vadd.f32 0.0, %v7050
        %7052 = vmatmul.f32.gmra.mxu0 %v6956
        %v7053 = vpop.f32.mrf.mxu0
        %v7054 = vadd.f32 0.0, %v7053
        %7055 = vmatmul.f32.gmra.mxu0 %v6959
        %v7056 = vpop.f32.mrf.mxu0
        %v7057 = vadd.f32 0.0, %v7056
        %7058 = vmatmul.f32.gmra.mxu0 %v6962
        %v7059 = vpop.f32.mrf.mxu0
        %v7060 = vadd.f32 0.0, %v7059
        %7061 = vmatmul.f32.gmra.mxu0 %v6965
        %v7062 = vpop.f32.mrf.mxu0
        %v7063 = vadd.f32 0.0, %v7062
        %7064 = vmatmul.f32.gmra.mxu0 %v6968
        %v7065 = vpop.f32.mrf.mxu0
        %v7066 = vadd.f32 0.0, %v7065
        %7067 = vmatmul.f32.gmra.mxu0 %v6971
        %v7068 = vpop.f32.mrf.mxu0
        %v7069 = vadd.f32 0.0, %v7068
        %7070 = vmatmul.f32.gmra.mxu0 %v6974
        %v7071 = vpop.f32.mrf.mxu0
        %v7072 = vadd.f32 0.0, %v7071
        %7073 = vmatmul.f32.gmra.mxu0 %v6977
        %v7074 = vpop.f32.mrf.mxu0
        %v7075 = vadd.f32 0.0, %v7074
        %7076 = vmatmul.f32.gmra.mxu0 %v6980
        %v7077 = vpop.f32.mrf.mxu0
        %v7078 = vadd.f32 0.0, %v7077
        %7079 = vmatmul.f32.gmra.mxu0 %v6983
        %v7080 = vpop.f32.mrf.mxu0
        %v7081 = vadd.f32 0.0, %v7080
        %7082 = vmatmul.f32.gmra.mxu0 %v6986
        %v7083 = vpop.f32.mrf.mxu0
        %v7084 = vadd.f32 0.0, %v7083
        %7085 = vmatmul.f32.gmra.mxu0 %v6989
        %v7086 = vpop.f32.mrf.mxu0
        %v7087 = vadd.f32 0.0, %v7086
        %7088 = vmatmul.f32.gmra.mxu0 %v6992
        %v7089 = vpop.f32.mrf.mxu0
        %v7090 = vadd.f32 0.0, %v7089
        %7091 = vmatmul.f32.gmra.mxu0 %v6995
        %v7092 = vpop.f32.mrf.mxu0
        %v7093 = vadd.f32 0.0, %v7092
        %7094 = vmatmul.f32.gmra.mxu0 %v6998
        %v7095 = vpop.f32.mrf.mxu0
        %v7096 = vadd.f32 0.0, %v7095
        %7097 = vmatmul.f32.gmra.mxu0 %v7001
        %v7098 = vpop.f32.mrf.mxu0
        %v7099 = vadd.f32 0.0, %v7098
        %7100 = vmatmul.f32.gmra.mxu0 %v7004
        %v7101 = vpop.f32.mrf.mxu0
        %v7102 = vadd.f32 0.0, %v7101
        %7103 = vmatmul.f32.gmra.mxu0 %v7007
        %v7104 = vpop.f32.mrf.mxu0
        %v7105 = vadd.f32 0.0, %v7104
        %7106 = vmatmul.f32.gmra.mxu0 %v7010
        %v7107 = vpop.f32.mrf.mxu0
        %v7108 = vadd.f32 0.0, %v7107
        %7109 = vmatmul.f32.gmra.mxu0 %v7013
        %v7110 = vpop.f32.mrf.mxu0
        %v7111 = vadd.f32 0.0, %v7110
        %7112 = vmatmul.f32.gmra.mxu0 %v7016
        %v7113 = vpop.f32.mrf.mxu0
        %v7114 = vadd.f32 0.0, %v7113
        %7115 = vmatmul.f32.gmra.mxu0 %v7019
        %v7116 = vpop.f32.mrf.mxu0
        %v7117 = vadd.f32 0.0, %v7116
        %7118 = vmatmul.f32.gmra.mxu0 %v7022
        %v7119 = vpop.f32.mrf.mxu0
        %v7120 = vadd.f32 0.0, %v7119
        %7121 = vmatmul.f32.gmra.mxu0 %v7025
        %v7122 = vpop.f32.mrf.mxu0
        %v7123 = vadd.f32 0.0, %v7122
        %7124 = vdwg.mxu0
        %v7125 = vmax.f32 %v7045, 0.0
        %v7126 = vmax.f32 %v7048, 0.0
        %v7127 = vmax.f32 %v7051, 0.0
        %v7128 = vmax.f32 %v7054, 0.0
        %v7129 = vmax.f32 %v7057, 0.0
        %v7130 = vmax.f32 %v7060, 0.0
        %v7131 = vmax.f32 %v7063, 0.0
        %v7132 = vmax.f32 %v7066, 0.0
        %v7133 = vmax.f32 %v7069, 0.0
        %v7134 = vmax.f32 %v7072, 0.0
        %v7135 = vmax.f32 %v7075, 0.0
        %v7136 = vmax.f32 %v7078, 0.0
        %v7137 = vmax.f32 %v7081, 0.0
        %v7138 = vmax.f32 %v7084, 0.0
        %v7139 = vmax.f32 %v7087, 0.0
        %v7140 = vmax.f32 %v7090, 0.0
        %v7141 = vmax.f32 %v7093, 0.0
        %v7142 = vmax.f32 %v7096, 0.0
        %v7143 = vmax.f32 %v7099, 0.0
        %v7144 = vmax.f32 %v7102, 0.0
        %v7145 = vmax.f32 %v7105, 0.0
        %v7146 = vmax.f32 %v7108, 0.0
        %v7147 = vmax.f32 %v7111, 0.0
        %v7148 = vmax.f32 %v7114, 0.0
        %v7149 = vmax.f32 %v7117, 0.0
        %v7150 = vmax.f32 %v7120, 0.0
        %v7151 = vmax.f32 %v7123, 0.0
        %v7152 = vrsqrt.pop %v7125
        %v7153 = vmul.f32 %v7152, %v7125
        %v7154 = vmul.f32 %v7153, %v7152
        %v7155 = vmul.f32 0.5, %v7154
        %v7156 = vsub.f32 1.5, %v7155
        %v7157 = vmul.f32 %v7152, %v7156
        %v7158 = vmul.f32 %v7125, %v7157
        %vm7159 = vcmp.eq.f32.partialorder %v7125, inf
        %v7160 = vsel %vm7159, %v7125, %v7158
        %vm7161 = vcmp.eq.f32.partialorder %v7125, 0.0
        %v7162 = vand.u32 %v7125, 2147483648
        %v7163 = vsel %vm7161, %v7162, %v7160
        %v7164 = vrsqrt.pop %v7126
        %v7165 = vmul.f32 %v7164, %v7126
        %v7166 = vmul.f32 %v7165, %v7164
        %v7167 = vmul.f32 0.5, %v7166
        %v7168 = vsub.f32 1.5, %v7167
        %v7169 = vmul.f32 %v7164, %v7168
        %v7170 = vmul.f32 %v7126, %v7169
        %vm7171 = vcmp.eq.f32.partialorder %v7126, inf
        %v7172 = vsel %vm7171, %v7126, %v7170
        %vm7173 = vcmp.eq.f32.partialorder %v7126, 0.0
        %v7174 = vand.u32 %v7126, 2147483648
        %v7175 = vsel %vm7173, %v7174, %v7172
        %v7176 = vrsqrt.pop %v7127
        %v7177 = vmul.f32 %v7176, %v7127
        %v7178 = vmul.f32 %v7177, %v7176
        %v7179 = vmul.f32 0.5, %v7178
        %v7180 = vsub.f32 1.5, %v7179
        %v7181 = vmul.f32 %v7176, %v7180
        %v7182 = vmul.f32 %v7127, %v7181
        %vm7183 = vcmp.eq.f32.partialorder %v7127, inf
        %v7184 = vsel %vm7183, %v7127, %v7182
        %vm7185 = vcmp.eq.f32.partialorder %v7127, 0.0
        %v7186 = vand.u32 %v7127, 2147483648
        %v7187 = vsel %vm7185, %v7186, %v7184
        %v7188 = vrsqrt.pop %v7128
        %v7189 = vmul.f32 %v7188, %v7128
        %v7190 = vmul.f32 %v7189, %v7188
        %v7191 = vmul.f32 0.5, %v7190
        %v7192 = vsub.f32 1.5, %v7191
        %v7193 = vmul.f32 %v7188, %v7192
        %v7194 = vmul.f32 %v7128, %v7193
        %vm7195 = vcmp.eq.f32.partialorder %v7128, inf
        %v7196 = vsel %vm7195, %v7128, %v7194
        %vm7197 = vcmp.eq.f32.partialorder %v7128, 0.0
        %v7198 = vand.u32 %v7128, 2147483648
        %v7199 = vsel %vm7197, %v7198, %v7196
        %v7200 = vrsqrt.pop %v7129
        %v7201 = vmul.f32 %v7200, %v7129
        %v7202 = vmul.f32 %v7201, %v7200
        %v7203 = vmul.f32 0.5, %v7202
        %v7204 = vsub.f32 1.5, %v7203
        %v7205 = vmul.f32 %v7200, %v7204
        %v7206 = vmul.f32 %v7129, %v7205
        %vm7207 = vcmp.eq.f32.partialorder %v7129, inf
        %v7208 = vsel %vm7207, %v7129, %v7206
        %vm7209 = vcmp.eq.f32.partialorder %v7129, 0.0
        %v7210 = vand.u32 %v7129, 2147483648
        %v7211 = vsel %vm7209, %v7210, %v7208
        %v7212 = vrsqrt.pop %v7130
        %v7213 = vmul.f32 %v7212, %v7130
        %v7214 = vmul.f32 %v7213, %v7212
        %v7215 = vmul.f32 0.5, %v7214
        %v7216 = vsub.f32 1.5, %v7215
        %v7217 = vmul.f32 %v7212, %v7216
        %v7218 = vmul.f32 %v7130, %v7217
        %vm7219 = vcmp.eq.f32.partialorder %v7130, inf
        %v7220 = vsel %vm7219, %v7130, %v7218
        %vm7221 = vcmp.eq.f32.partialorder %v7130, 0.0
        %v7222 = vand.u32 %v7130, 2147483648
        %v7223 = vsel %vm7221, %v7222, %v7220
        %v7224 = vrsqrt.pop %v7131
        %v7225 = vmul.f32 %v7224, %v7131
        %v7226 = vmul.f32 %v7225, %v7224
        %v7227 = vmul.f32 0.5, %v7226
        %v7228 = vsub.f32 1.5, %v7227
        %v7229 = vmul.f32 %v7224, %v7228
        %v7230 = vmul.f32 %v7131, %v7229
        %vm7231 = vcmp.eq.f32.partialorder %v7131, inf
        %v7232 = vsel %vm7231, %v7131, %v7230
        %vm7233 = vcmp.eq.f32.partialorder %v7131, 0.0
        %v7234 = vand.u32 %v7131, 2147483648
        %v7235 = vsel %vm7233, %v7234, %v7232
        %v7236 = vrsqrt.pop %v7132
        %v7237 = vmul.f32 %v7236, %v7132
        %v7238 = vmul.f32 %v7237, %v7236
        %v7239 = vmul.f32 0.5, %v7238
        %v7240 = vsub.f32 1.5, %v7239
        %v7241 = vmul.f32 %v7236, %v7240
        %v7242 = vmul.f32 %v7132, %v7241
        %vm7243 = vcmp.eq.f32.partialorder %v7132, inf
        %v7244 = vsel %vm7243, %v7132, %v7242
        %vm7245 = vcmp.eq.f32.partialorder %v7132, 0.0
        %v7246 = vand.u32 %v7132, 2147483648
        %v7247 = vsel %vm7245, %v7246, %v7244
        %v7248 = vrsqrt.pop %v7133
        %v7249 = vmul.f32 %v7248, %v7133
        %v7250 = vmul.f32 %v7249, %v7248
        %v7251 = vmul.f32 0.5, %v7250
        %v7252 = vsub.f32 1.5, %v7251
        %v7253 = vmul.f32 %v7248, %v7252
        %v7254 = vmul.f32 %v7133, %v7253
        %vm7255 = vcmp.eq.f32.partialorder %v7133, inf
        %v7256 = vsel %vm7255, %v7133, %v7254
        %vm7257 = vcmp.eq.f32.partialorder %v7133, 0.0
        %v7258 = vand.u32 %v7133, 2147483648
        %v7259 = vsel %vm7257, %v7258, %v7256
        %v7260 = vrsqrt.pop %v7134
        %v7261 = vmul.f32 %v7260, %v7134
        %v7262 = vmul.f32 %v7261, %v7260
        %v7263 = vmul.f32 0.5, %v7262
        %v7264 = vsub.f32 1.5, %v7263
        %v7265 = vmul.f32 %v7260, %v7264
        %v7266 = vmul.f32 %v7134, %v7265
        %vm7267 = vcmp.eq.f32.partialorder %v7134, inf
        %v7268 = vsel %vm7267, %v7134, %v7266
        %vm7269 = vcmp.eq.f32.partialorder %v7134, 0.0
        %v7270 = vand.u32 %v7134, 2147483648
        %v7271 = vsel %vm7269, %v7270, %v7268
        %v7272 = vrsqrt.pop %v7135
        %v7273 = vmul.f32 %v7272, %v7135
        %v7274 = vmul.f32 %v7273, %v7272
        %v7275 = vmul.f32 0.5, %v7274
        %v7276 = vsub.f32 1.5, %v7275
        %v7277 = vmul.f32 %v7272, %v7276
        %v7278 = vmul.f32 %v7135, %v7277
        %vm7279 = vcmp.eq.f32.partialorder %v7135, inf
        %v7280 = vsel %vm7279, %v7135, %v7278
        %vm7281 = vcmp.eq.f32.partialorder %v7135, 0.0
        %v7282 = vand.u32 %v7135, 2147483648
        %v7283 = vsel %vm7281, %v7282, %v7280
        %v7284 = vrsqrt.pop %v7136
        %v7285 = vmul.f32 %v7284, %v7136
        %v7286 = vmul.f32 %v7285, %v7284
        %v7287 = vmul.f32 0.5, %v7286
        %v7288 = vsub.f32 1.5, %v7287
        %v7289 = vmul.f32 %v7284, %v7288
        %v7290 = vmul.f32 %v7136, %v7289
        %vm7291 = vcmp.eq.f32.partialorder %v7136, inf
        %v7292 = vsel %vm7291, %v7136, %v7290
        %vm7293 = vcmp.eq.f32.partialorder %v7136, 0.0
        %v7294 = vand.u32 %v7136, 2147483648
        %v7295 = vsel %vm7293, %v7294, %v7292
        %v7296 = vrsqrt.pop %v7137
        %v7297 = vmul.f32 %v7296, %v7137
        %v7298 = vmul.f32 %v7297, %v7296
        %v7299 = vmul.f32 0.5, %v7298
        %v7300 = vsub.f32 1.5, %v7299
        %v7301 = vmul.f32 %v7296, %v7300
        %v7302 = vmul.f32 %v7137, %v7301
        %vm7303 = vcmp.eq.f32.partialorder %v7137, inf
        %v7304 = vsel %vm7303, %v7137, %v7302
        %vm7305 = vcmp.eq.f32.partialorder %v7137, 0.0
        %v7306 = vand.u32 %v7137, 2147483648
        %v7307 = vsel %vm7305, %v7306, %v7304
        %v7308 = vrsqrt.pop %v7138
        %v7309 = vmul.f32 %v7308, %v7138
        %v7310 = vmul.f32 %v7309, %v7308
        %v7311 = vmul.f32 0.5, %v7310
        %v7312 = vsub.f32 1.5, %v7311
        %v7313 = vmul.f32 %v7308, %v7312
        %v7314 = vmul.f32 %v7138, %v7313
        %vm7315 = vcmp.eq.f32.partialorder %v7138, inf
        %v7316 = vsel %vm7315, %v7138, %v7314
        %vm7317 = vcmp.eq.f32.partialorder %v7138, 0.0
        %v7318 = vand.u32 %v7138, 2147483648
        %v7319 = vsel %vm7317, %v7318, %v7316
        %v7320 = vrsqrt.pop %v7139
        %v7321 = vmul.f32 %v7320, %v7139
        %v7322 = vmul.f32 %v7321, %v7320
        %v7323 = vmul.f32 0.5, %v7322
        %v7324 = vsub.f32 1.5, %v7323
        %v7325 = vmul.f32 %v7320, %v7324
        %v7326 = vmul.f32 %v7139, %v7325
        %vm7327 = vcmp.eq.f32.partialorder %v7139, inf
        %v7328 = vsel %vm7327, %v7139, %v7326
        %vm7329 = vcmp.eq.f32.partialorder %v7139, 0.0
        %v7330 = vand.u32 %v7139, 2147483648
        %v7331 = vsel %vm7329, %v7330, %v7328
        %v7332 = vrsqrt.pop %v7140
        %v7333 = vmul.f32 %v7332, %v7140
        %v7334 = vmul.f32 %v7333, %v7332
        %v7335 = vmul.f32 0.5, %v7334
        %v7336 = vsub.f32 1.5, %v7335
        %v7337 = vmul.f32 %v7332, %v7336
        %v7338 = vmul.f32 %v7140, %v7337
        %vm7339 = vcmp.eq.f32.partialorder %v7140, inf
        %v7340 = vsel %vm7339, %v7140, %v7338
        %vm7341 = vcmp.eq.f32.partialorder %v7140, 0.0
        %v7342 = vand.u32 %v7140, 2147483648
        %v7343 = vsel %vm7341, %v7342, %v7340
        %v7344 = vrsqrt.pop %v7141
        %v7345 = vmul.f32 %v7344, %v7141
        %v7346 = vmul.f32 %v7345, %v7344
        %v7347 = vmul.f32 0.5, %v7346
        %v7348 = vsub.f32 1.5, %v7347
        %v7349 = vmul.f32 %v7344, %v7348
        %v7350 = vmul.f32 %v7141, %v7349
        %vm7351 = vcmp.eq.f32.partialorder %v7141, inf
        %v7352 = vsel %vm7351, %v7141, %v7350
        %vm7353 = vcmp.eq.f32.partialorder %v7141, 0.0
        %v7354 = vand.u32 %v7141, 2147483648
        %v7355 = vsel %vm7353, %v7354, %v7352
        %v7356 = vrsqrt.pop %v7142
        %v7357 = vmul.f32 %v7356, %v7142
        %v7358 = vmul.f32 %v7357, %v7356
        %v7359 = vmul.f32 0.5, %v7358
        %v7360 = vsub.f32 1.5, %v7359
        %v7361 = vmul.f32 %v7356, %v7360
        %v7362 = vmul.f32 %v7142, %v7361
        %vm7363 = vcmp.eq.f32.partialorder %v7142, inf
        %v7364 = vsel %vm7363, %v7142, %v7362
        %vm7365 = vcmp.eq.f32.partialorder %v7142, 0.0
        %v7366 = vand.u32 %v7142, 2147483648
        %v7367 = vsel %vm7365, %v7366, %v7364
        %v7368 = vrsqrt.pop %v7143
        %v7369 = vmul.f32 %v7368, %v7143
        %v7370 = vmul.f32 %v7369, %v7368
        %v7371 = vmul.f32 0.5, %v7370
        %v7372 = vsub.f32 1.5, %v7371
        %v7373 = vmul.f32 %v7368, %v7372
        %v7374 = vmul.f32 %v7143, %v7373
        %vm7375 = vcmp.eq.f32.partialorder %v7143, inf
        %v7376 = vsel %vm7375, %v7143, %v7374
        %vm7377 = vcmp.eq.f32.partialorder %v7143, 0.0
        %v7378 = vand.u32 %v7143, 2147483648
        %v7379 = vsel %vm7377, %v7378, %v7376
        %v7380 = vrsqrt.pop %v7144
        %v7381 = vmul.f32 %v7380, %v7144
        %v7382 = vmul.f32 %v7381, %v7380
        %v7383 = vmul.f32 0.5, %v7382
        %v7384 = vsub.f32 1.5, %v7383
        %v7385 = vmul.f32 %v7380, %v7384
        %v7386 = vmul.f32 %v7144, %v7385
        %vm7387 = vcmp.eq.f32.partialorder %v7144, inf
        %v7388 = vsel %vm7387, %v7144, %v7386
        %vm7389 = vcmp.eq.f32.partialorder %v7144, 0.0
        %v7390 = vand.u32 %v7144, 2147483648
        %v7391 = vsel %vm7389, %v7390, %v7388
        %v7392 = vrsqrt.pop %v7145
        %v7393 = vmul.f32 %v7392, %v7145
        %v7394 = vmul.f32 %v7393, %v7392
        %v7395 = vmul.f32 0.5, %v7394
        %v7396 = vsub.f32 1.5, %v7395
        %v7397 = vmul.f32 %v7392, %v7396
        %v7398 = vmul.f32 %v7145, %v7397
        %vm7399 = vcmp.eq.f32.partialorder %v7145, inf
        %v7400 = vsel %vm7399, %v7145, %v7398
        %vm7401 = vcmp.eq.f32.partialorder %v7145, 0.0
        %v7402 = vand.u32 %v7145, 2147483648
        %v7403 = vsel %vm7401, %v7402, %v7400
        %v7404 = vrsqrt.pop %v7146
        %v7405 = vmul.f32 %v7404, %v7146
        %v7406 = vmul.f32 %v7405, %v7404
        %v7407 = vmul.f32 0.5, %v7406
        %v7408 = vsub.f32 1.5, %v7407
        %v7409 = vmul.f32 %v7404, %v7408
        %v7410 = vmul.f32 %v7146, %v7409
        %vm7411 = vcmp.eq.f32.partialorder %v7146, inf
        %v7412 = vsel %vm7411, %v7146, %v7410
        %vm7413 = vcmp.eq.f32.partialorder %v7146, 0.0
        %v7414 = vand.u32 %v7146, 2147483648
        %v7415 = vsel %vm7413, %v7414, %v7412
        %v7416 = vrsqrt.pop %v7147
        %v7417 = vmul.f32 %v7416, %v7147
        %v7418 = vmul.f32 %v7417, %v7416
        %v7419 = vmul.f32 0.5, %v7418
        %v7420 = vsub.f32 1.5, %v7419
        %v7421 = vmul.f32 %v7416, %v7420
        %v7422 = vmul.f32 %v7147, %v7421
        %vm7423 = vcmp.eq.f32.partialorder %v7147, inf
        %v7424 = vsel %vm7423, %v7147, %v7422
        %vm7425 = vcmp.eq.f32.partialorder %v7147, 0.0
        %v7426 = vand.u32 %v7147, 2147483648
        %v7427 = vsel %vm7425, %v7426, %v7424
        %v7428 = vrsqrt.pop %v7148
        %v7429 = vmul.f32 %v7428, %v7148
        %v7430 = vmul.f32 %v7429, %v7428
        %v7431 = vmul.f32 0.5, %v7430
        %v7432 = vsub.f32 1.5, %v7431
        %v7433 = vmul.f32 %v7428, %v7432
        %v7434 = vmul.f32 %v7148, %v7433
        %vm7435 = vcmp.eq.f32.partialorder %v7148, inf
        %v7436 = vsel %vm7435, %v7148, %v7434
        %vm7437 = vcmp.eq.f32.partialorder %v7148, 0.0
        %v7438 = vand.u32 %v7148, 2147483648
        %v7439 = vsel %vm7437, %v7438, %v7436
        %v7440 = vrsqrt.pop %v7149
        %v7441 = vmul.f32 %v7440, %v7149
        %v7442 = vmul.f32 %v7441, %v7440
        %v7443 = vmul.f32 0.5, %v7442
        %v7444 = vsub.f32 1.5, %v7443
        %v7445 = vmul.f32 %v7440, %v7444
        %v7446 = vmul.f32 %v7149, %v7445
        %vm7447 = vcmp.eq.f32.partialorder %v7149, inf
        %v7448 = vsel %vm7447, %v7149, %v7446
        %vm7449 = vcmp.eq.f32.partialorder %v7149, 0.0
        %v7450 = vand.u32 %v7149, 2147483648
        %v7451 = vsel %vm7449, %v7450, %v7448
        %v7452 = vrsqrt.pop %v7150
        %v7453 = vmul.f32 %v7452, %v7150
        %v7454 = vmul.f32 %v7453, %v7452
        %v7455 = vmul.f32 0.5, %v7454
        %v7456 = vsub.f32 1.5, %v7455
        %v7457 = vmul.f32 %v7452, %v7456
        %v7458 = vmul.f32 %v7150, %v7457
        %vm7459 = vcmp.eq.f32.partialorder %v7150, inf
        %v7460 = vsel %vm7459, %v7150, %v7458
        %vm7461 = vcmp.eq.f32.partialorder %v7150, 0.0
        %v7462 = vand.u32 %v7150, 2147483648
        %v7463 = vsel %vm7461, %v7462, %v7460
        %v7464 = vrsqrt.pop %v7151
        %v7465 = vmul.f32 %v7464, %v7151
        %v7466 = vmul.f32 %v7465, %v7464
        %v7467 = vmul.f32 0.5, %v7466
        %v7468 = vsub.f32 1.5, %v7467
        %v7469 = vmul.f32 %v7464, %v7468
        %v7470 = vmul.f32 %v7151, %v7469
        %vm7471 = vcmp.eq.f32.partialorder %v7151, inf
        %v7472 = vsel %vm7471, %v7151, %v7470
        %vm7473 = vcmp.eq.f32.partialorder %v7151, 0.0
        %v7474 = vand.u32 %v7151, 2147483648
        %v7475 = vsel %vm7473, %v7474, %v7472
        %v7476 = vmul.f32 %v7163, 1.1547005
        %v7477 = vmul.f32 %v7175, 1.1547005
        %v7478 = vmul.f32 %v7187, 1.1547005
        %v7479 = vmul.f32 %v7199, 1.1547005
        %v7480 = vmul.f32 %v7211, 1.1547005
        %v7481 = vmul.f32 %v7223, 1.1547005
        %v7482 = vmul.f32 %v7235, 1.1547005
        %v7483 = vmul.f32 %v7247, 1.1547005
        %v7484 = vmul.f32 %v7259, 1.1547005
        %v7485 = vmul.f32 %v7271, 1.1547005
        %v7486 = vmul.f32 %v7283, 1.1547005
        %v7487 = vmul.f32 %v7295, 1.1547005
        %v7488 = vmul.f32 %v7307, 1.1547005
        %v7489 = vmul.f32 %v7319, 1.1547005
        %v7490 = vmul.f32 %v7331, 1.1547005
        %v7491 = vmul.f32 %v7343, 1.1547005
        %v7492 = vmul.f32 %v7355, 1.1547005
        %v7493 = vmul.f32 %v7367, 1.1547005
        %v7494 = vmul.f32 %v7379, 1.1547005
        %v7495 = vmul.f32 %v7391, 1.1547005
        %v7496 = vmul.f32 %v7403, 1.1547005
        %v7497 = vmul.f32 %v7415, 1.1547005
        %v7498 = vmul.f32 %v7427, 1.1547005
        %v7499 = vmul.f32 %v7439, 1.1547005
        %v7500 = vmul.f32 %v7451, 1.1547005
        %v7501 = vmul.f32 %v7463, 1.1547005
        %v7502 = vmul.f32 %v7475, 1.1547005
        %v7503 = vsub.f32 1.0, %v7476
        %v7504 = vsub.f32 1.0, %v7477
        %v7505 = vsub.f32 1.0, %v7478
        %v7506 = vsub.f32 1.0, %v7479
        %v7507 = vsub.f32 1.0, %v7480
        %v7508 = vsub.f32 1.0, %v7481
        %v7509 = vsub.f32 1.0, %v7482
        %v7510 = vsub.f32 1.0, %v7483
        %v7511 = vsub.f32 1.0, %v7484
        %v7512 = vsub.f32 1.0, %v7485
        %v7513 = vsub.f32 1.0, %v7486
        %v7514 = vsub.f32 1.0, %v7487
        %v7515 = vsub.f32 1.0, %v7488
        %v7516 = vsub.f32 1.0, %v7489
        %v7517 = vsub.f32 1.0, %v7490
        %v7518 = vsub.f32 1.0, %v7491
        %v7519 = vsub.f32 1.0, %v7492
        %v7520 = vsub.f32 1.0, %v7493
        %v7521 = vsub.f32 1.0, %v7494
        %v7522 = vsub.f32 1.0, %v7495
        %v7523 = vsub.f32 1.0, %v7496
        %v7524 = vsub.f32 1.0, %v7497
        %v7525 = vsub.f32 1.0, %v7498
        %v7526 = vsub.f32 1.0, %v7499
        %v7527 = vsub.f32 1.0, %v7500
        %v7528 = vsub.f32 1.0, %v7501
        %v7529 = vsub.f32 1.0, %v7502
        %v7530 = vmax.f32 %v7503, 0.0
        %v7531 = vmax.f32 %v7504, 0.0
        %v7532 = vmax.f32 %v7505, 0.0
        %v7533 = vmax.f32 %v7506, 0.0
        %v7534 = vmax.f32 %v7507, 0.0
        %v7535 = vmax.f32 %v7508, 0.0
        %v7536 = vmax.f32 %v7509, 0.0
        %v7537 = vmax.f32 %v7510, 0.0
        %v7538 = vmax.f32 %v7511, 0.0
        %v7539 = vmax.f32 %v7512, 0.0
        %v7540 = vmax.f32 %v7513, 0.0
        %v7541 = vmax.f32 %v7514, 0.0
        %v7542 = vmax.f32 %v7515, 0.0
        %v7543 = vmax.f32 %v7516, 0.0
        %v7544 = vmax.f32 %v7517, 0.0
        %v7545 = vmax.f32 %v7518, 0.0
        %v7546 = vmax.f32 %v7519, 0.0
        %v7547 = vmax.f32 %v7520, 0.0
        %v7548 = vmax.f32 %v7521, 0.0
        %v7549 = vmax.f32 %v7522, 0.0
        %v7550 = vmax.f32 %v7523, 0.0
        %v7551 = vmax.f32 %v7524, 0.0
        %v7552 = vmax.f32 %v7525, 0.0
        %v7553 = vmax.f32 %v7526, 0.0
        %v7554 = vmax.f32 %v7527, 0.0
        %v7555 = vmax.f32 %v7528, 0.0
        %v7556 = vmax.f32 %v7529, 0.0
        %s7557 = scalar_lea.vmem %s4, 756
        %v7558 = vld [vmem:[%s7557] sm:$0xf]
        %v7559 = vld [vmem:[%s7557 + $0x4] sm:$0xf]
        %v7560 = vld [vmem:[%s7557 + $0x8] sm:$0xf]
        %v7561 = vld [vmem:[%s7557 + $0xc] sm:$0xf]
        %v7562 = vld [vmem:[%s7557 + $0x10] sm:$0xf]
        %v7563 = vld [vmem:[%s7557 + $0x14] sm:$0xf]
        %v7564 = vld [vmem:[%s7557 + $0x18] sm:$0xf]
        %v7565 = vld [vmem:[%s7557 + $0x1c] sm:$0xf]
        %v7566 = vld [vmem:[%s7557 + $0x20] sm:$0xf]
        %v7567 = vld [vmem:[%s7557 + $0x24] sm:$0xf]
        %v7568 = vld [vmem:[%s7557 + $0x28] sm:$0xf]
        %v7569 = vld [vmem:[%s7557 + $0x2c] sm:$0xf]
        %v7570 = vld [vmem:[%s7557 + $0x30] sm:$0xf]
        %v7571 = vld [vmem:[%s7557 + $0x34] sm:$0xf]
        %v7572 = vld [vmem:[%s7557 + $0x38] sm:$0xf]
        %v7573 = vld [vmem:[%s7557 + $0x3c] sm:$0xf]
        %v7574 = vld [vmem:[%s7557 + $0x40] sm:$0xf]
        %v7575 = vld [vmem:[%s7557 + $0x44] sm:$0xf]
        %v7576 = vld [vmem:[%s7557 + $0x48] sm:$0xf]
        %v7577 = vld [vmem:[%s7557 + $0x4c] sm:$0xf]
        %v7578 = vld [vmem:[%s7557 + $0x50] sm:$0xf]
        %v7579 = vld [vmem:[%s7557 + $0x54] sm:$0xf]
        %v7580 = vld [vmem:[%s7557 + $0x58] sm:$0xf]
        %v7581 = vld [vmem:[%s7557 + $0x5c] sm:$0xf]
        %v7582 = vld [vmem:[%s7557 + $0x60] sm:$0xf]
        %v7583 = vld [vmem:[%s7557 + $0x64] sm:$0xf]
        %v7584 = vld [vmem:[%s7557 + $0x68] sm:$0xf]
        %v7612 = vunpack.c.l.b16 %v7558
        %v7613 = vunpack.c.l.b16 %v7559
        %v7614 = vunpack.c.l.b16 %v7560
        %v7615 = vunpack.c.l.b16 %v7561
        %v7616 = vunpack.c.l.b16 %v7562
        %v7617 = vunpack.c.l.b16 %v7563
        %v7618 = vunpack.c.l.b16 %v7564
        %v7619 = vunpack.c.l.b16 %v7565
        %v7620 = vunpack.c.l.b16 %v7566
        %v7621 = vunpack.c.l.b16 %v7567
        %v7622 = vunpack.c.l.b16 %v7568
        %v7623 = vunpack.c.l.b16 %v7569
        %v7624 = vunpack.c.l.b16 %v7570
        %v7625 = vunpack.c.l.b16 %v7571
        %v7626 = vunpack.c.l.b16 %v7572
        %v7627 = vunpack.c.l.b16 %v7573
        %v7628 = vunpack.c.l.b16 %v7574
        %v7629 = vunpack.c.l.b16 %v7575
        %v7630 = vunpack.c.l.b16 %v7576
        %v7631 = vunpack.c.l.b16 %v7577
        %v7632 = vunpack.c.l.b16 %v7578
        %v7633 = vunpack.c.l.b16 %v7579
        %v7634 = vunpack.c.l.b16 %v7580
        %v7635 = vunpack.c.l.b16 %v7581
        %v7636 = vunpack.c.l.b16 %v7582
        %v7637 = vunpack.c.l.b16 %v7583
        %v7638 = vunpack.c.l.b16 %v7584
        %v7639 = vpack.c.b16 %v7613, %v7612
        %v7640 = vpack.c.b16 %v7615, %v7614
        %v7641 = vpack.c.b16 %v7617, %v7616
        %v7642 = vpack.c.b16 %v7619, %v7618
        %v7643 = vpack.c.b16 %v7621, %v7620
        %v7644 = vpack.c.b16 %v7623, %v7622
        %v7645 = vpack.c.b16 %v7625, %v7624
        %v7646 = vpack.c.b16 %v7627, %v7626
        %v7647 = vpack.c.b16 %v7629, %v7628
        %v7648 = vpack.c.b16 %v7631, %v7630
        %v7649 = vpack.c.b16 %v7633, %v7632
        %v7650 = vpack.c.b16 %v7635, %v7634
        %v7651 = vpack.c.b16 %v7637, %v7636
        %v7652 = vpack.c.b16 %v7638, %v7638
        %v7654 = vsel %vm1289, %v7639, 0
        %v7657 = vsel %vm1289, %v7640, 0
        %v7660 = vsel %vm1289, %v7641, 0
        %v7663 = vsel %vm1289, %v7642, 0
        %v7666 = vsel %vm1289, %v7643, 0
        %v7669 = vsel %vm1289, %v7644, 0
        %v7672 = vsel %vm1289, %v7645, 0
        %v7675 = vsel %vm1289, %v7646, 0
        %v7678 = vsel %vm1289, %v7647, 0
        %v7681 = vsel %vm1289, %v7648, 0
        %v7684 = vsel %vm1289, %v7649, 0
        %v7687 = vsel %vm1289, %v7650, 0
        %v7690 = vsel %vm1289, %v7651, 0
        %v7693 = vsel %vm1289, %v7652, 0
        %7695 = vmatpush.bf16.msra.mxu0 0
        %7696 = vmatpush.bf16.msra.mxu0 0
        %7697 = vmatpush.bf16.msra.mxu0 0
        %7698 = vmatpush.bf16.msra.mxu0 0
        %7699 = vmatpush.bf16.msra.mxu0 %v1284
        %7700 = vmatpush.bf16.msra.mxu0 %v1283
        %7701 = vmatpush.bf16.msra.mxu0 %v1282
        %7702 = vmatpush.bf16.msra.mxu0 %v1281
        %7703 = vmatmul.bf16.gmra.mxu0 %v7654
        %v7704 = vpop.f32.mrf.mxu0
        %v7705 = vadd.f32 0.0, %v7704
        %v7706 = vpop.f32.mrf.mxu0
        %v7707 = vadd.f32 0.0, %v7706
        %7708 = vmatmul.bf16.gmra.mxu0 %v7657
        %v7709 = vpop.f32.mrf.mxu0
        %v7710 = vadd.f32 0.0, %v7709
        %v7711 = vpop.f32.mrf.mxu0
        %v7712 = vadd.f32 0.0, %v7711
        %7713 = vmatmul.bf16.gmra.mxu0 %v7660
        %v7714 = vpop.f32.mrf.mxu0
        %v7715 = vadd.f32 0.0, %v7714
        %v7716 = vpop.f32.mrf.mxu0
        %v7717 = vadd.f32 0.0, %v7716
        %7718 = vmatmul.bf16.gmra.mxu0 %v7663
        %v7719 = vpop.f32.mrf.mxu0
        %v7720 = vadd.f32 0.0, %v7719
        %v7721 = vpop.f32.mrf.mxu0
        %v7722 = vadd.f32 0.0, %v7721
        %7723 = vmatmul.bf16.gmra.mxu0 %v7666
        %v7724 = vpop.f32.mrf.mxu0
        %v7725 = vadd.f32 0.0, %v7724
        %v7726 = vpop.f32.mrf.mxu0
        %v7727 = vadd.f32 0.0, %v7726
        %7728 = vmatmul.bf16.gmra.mxu0 %v7669
        %v7729 = vpop.f32.mrf.mxu0
        %v7730 = vadd.f32 0.0, %v7729
        %v7731 = vpop.f32.mrf.mxu0
        %v7732 = vadd.f32 0.0, %v7731
        %7733 = vmatmul.bf16.gmra.mxu0 %v7672
        %v7734 = vpop.f32.mrf.mxu0
        %v7735 = vadd.f32 0.0, %v7734
        %v7736 = vpop.f32.mrf.mxu0
        %v7737 = vadd.f32 0.0, %v7736
        %7738 = vmatmul.bf16.gmra.mxu0 %v7675
        %v7739 = vpop.f32.mrf.mxu0
        %v7740 = vadd.f32 0.0, %v7739
        %v7741 = vpop.f32.mrf.mxu0
        %v7742 = vadd.f32 0.0, %v7741
        %7743 = vmatmul.bf16.gmra.mxu0 %v7678
        %v7744 = vpop.f32.mrf.mxu0
        %v7745 = vadd.f32 0.0, %v7744
        %v7746 = vpop.f32.mrf.mxu0
        %v7747 = vadd.f32 0.0, %v7746
        %7748 = vmatmul.bf16.gmra.mxu0 %v7681
        %v7749 = vpop.f32.mrf.mxu0
        %v7750 = vadd.f32 0.0, %v7749
        %v7751 = vpop.f32.mrf.mxu0
        %v7752 = vadd.f32 0.0, %v7751
        %7753 = vmatmul.bf16.gmra.mxu0 %v7684
        %v7754 = vpop.f32.mrf.mxu0
        %v7755 = vadd.f32 0.0, %v7754
        %v7756 = vpop.f32.mrf.mxu0
        %v7757 = vadd.f32 0.0, %v7756
        %7758 = vmatmul.bf16.gmra.mxu0 %v7687
        %v7759 = vpop.f32.mrf.mxu0
        %v7760 = vadd.f32 0.0, %v7759
        %v7761 = vpop.f32.mrf.mxu0
        %v7762 = vadd.f32 0.0, %v7761
        %7763 = vmatmul.bf16.gmra.mxu0 %v7690
        %v7764 = vpop.f32.mrf.mxu0
        %v7765 = vadd.f32 0.0, %v7764
        %v7766 = vpop.f32.mrf.mxu0
        %v7767 = vadd.f32 0.0, %v7766
        %7768 = vmatmul.bf16.gmra.mxu0 %v7693
        %v7769 = vpop.f32.mrf.mxu0
        %v7770 = vadd.f32 0.0, %v7769
        %v7771 = vpop.f32.mrf.mxu0
        %7772 = vdwg.mxu0
        %v7773 = vmul.f32 %v7530, %v7705
        %v7774 = vmul.f32 %v7531, %v7707
        %v7775 = vmul.f32 %v7532, %v7710
        %v7776 = vmul.f32 %v7533, %v7712
        %v7777 = vmul.f32 %v7534, %v7715
        %v7778 = vmul.f32 %v7535, %v7717
        %v7779 = vmul.f32 %v7536, %v7720
        %v7780 = vmul.f32 %v7537, %v7722
        %v7781 = vmul.f32 %v7538, %v7725
        %v7782 = vmul.f32 %v7539, %v7727
        %v7783 = vmul.f32 %v7540, %v7730
        %v7784 = vmul.f32 %v7541, %v7732
        %v7785 = vmul.f32 %v7542, %v7735
        %v7786 = vmul.f32 %v7543, %v7737
        %v7787 = vmul.f32 %v7544, %v7740
        %v7788 = vmul.f32 %v7545, %v7742
        %v7789 = vmul.f32 %v7546, %v7745
        %v7790 = vmul.f32 %v7547, %v7747
        %v7791 = vmul.f32 %v7548, %v7750
        %v7792 = vmul.f32 %v7549, %v7752
        %v7793 = vmul.f32 %v7550, %v7755
        %v7794 = vmul.f32 %v7551, %v7757
        %v7795 = vmul.f32 %v7552, %v7760
        %v7796 = vmul.f32 %v7553, %v7762
        %v7797 = vmul.f32 %v7554, %v7765
        %v7798 = vmul.f32 %v7555, %v7767
        %v7799 = vmul.f32 %v7556, %v7770
        %v7800 = vadd.f32 %v6891, %v7773
        %v7801 = vadd.f32 %v6892, %v7774
        %v7802 = vadd.f32 %v6893, %v7775
        %v7803 = vadd.f32 %v6894, %v7776
        %v7804 = vadd.f32 %v6895, %v7777
        %v7805 = vadd.f32 %v6896, %v7778
        %v7806 = vadd.f32 %v6897, %v7779
        %v7807 = vadd.f32 %v6898, %v7780
        %v7808 = vadd.f32 %v6899, %v7781
        %v7809 = vadd.f32 %v6900, %v7782
        %v7810 = vadd.f32 %v6901, %v7783
        %v7811 = vadd.f32 %v6902, %v7784
        %v7812 = vadd.f32 %v6903, %v7785
        %v7813 = vadd.f32 %v6904, %v7786
        %v7814 = vadd.f32 %v6905, %v7787
        %v7815 = vadd.f32 %v6906, %v7788
        %v7816 = vadd.f32 %v6907, %v7789
        %v7817 = vadd.f32 %v6908, %v7790
        %v7818 = vadd.f32 %v6909, %v7791
        %v7819 = vadd.f32 %v6910, %v7792
        %v7820 = vadd.f32 %v6911, %v7793
        %v7821 = vadd.f32 %v6912, %v7794
        %v7822 = vadd.f32 %v6913, %v7795
        %v7823 = vadd.f32 %v6914, %v7796
        %v7824 = vadd.f32 %v6915, %v7797
        %v7825 = vadd.f32 %v6916, %v7798
        %v7826 = vadd.f32 %v6917, %v7799
        %v7827 = vld [vmem:[%s5] sm:$0xff]
        %v7828 = vld [vmem:[%s5 + $0x8] sm:$0xff]
        %vm7829 = vcmask 719872
        %v7831 = vsel %vm7829, %v7828, 0
        %7833 = vmatpush.msra.mxu0 %v7815
        %7834 = vmatpush.msra.mxu0 %v7814
        %7835 = vmatpush.msra.mxu0 %v7813
        %7836 = vmatpush.msra.mxu0 %v7812
        %7837 = vmatpush.msra.mxu0 %v7811
        %7838 = vmatpush.msra.mxu0 %v7810
        %7839 = vmatpush.msra.mxu0 %v7809
        %7840 = vmatpush.msra.mxu0 %v7808
        %7841 = vmatpush.msra.mxu0 %v7807
        %7842 = vmatpush.msra.mxu0 %v7806
        %7843 = vmatpush.msra.mxu0 %v7805
        %7844 = vmatpush.msra.mxu0 %v7804
        %7845 = vmatpush.msra.mxu0 %v7803
        %7846 = vmatpush.msra.mxu0 %v7802
        %7847 = vmatpush.msra.mxu0 %v7801
        %7848 = vmatpush.msra.mxu0 %v7800
        %7849 = vmatmul.f32.gmra.mxu0 %v7827
        %v7850 = vpop.f32.mrf.mxu0
        %v7851 = vadd.f32 0.0, %v7850
        %7852 = vdwg.mxu0
        %7853 = vmatpush.msra.mxu0 0.0
        %7854 = vmatpush.msra.mxu0 0.0
        %7855 = vmatpush.msra.mxu0 0.0
        %7856 = vmatpush.msra.mxu0 0.0
        %7857 = vmatpush.msra.mxu0 0.0
        %7858 = vmatpush.msra.mxu0 %v7826
        %7859 = vmatpush.msra.mxu0 %v7825
        %7860 = vmatpush.msra.mxu0 %v7824
        %7861 = vmatpush.msra.mxu0 %v7823
        %7862 = vmatpush.msra.mxu0 %v7822
        %7863 = vmatpush.msra.mxu0 %v7821
        %7864 = vmatpush.msra.mxu0 %v7820
        %7865 = vmatpush.msra.mxu0 %v7819
        %7866 = vmatpush.msra.mxu0 %v7818
        %7867 = vmatpush.msra.mxu0 %v7817
        %7868 = vmatpush.msra.mxu0 %v7816
        %7869 = vmatmul.f32.gmra.mxu0 %v7831
        %v7870 = vpop.f32.mrf.mxu0
        %v7871 = vadd.f32 %v7851, %v7870
        %7872 = vdwg.mxu0
        %v7873 = vrot.slane %v7871, 4
        %v7874 = vadd.f32 %v7871, %v7873
        %v7875 = vrot.slane %v7874, 2
        %v7876 = vadd.f32 %v7874, %v7875
        %v7877 = vrot.slane %v7876, 1
        %v7878 = vadd.f32 %v7876, %v7877
        %v7879 = vrcp.pop 8.0
        %v7880 = vmul.f32 8.0, %v7879
        %v7881 = vsub.f32 1.0, %v7880
        %v7882 = vmul.f32 %v7879, %v7881
        %v7883 = vadd.f32 %v7879, %v7882
        %vm7884 = vweird.f32 %v7879
        %v7885 = vsel %vm7884, %v7879, %v7883
        %v7886 = vmul.f32 %v7878, %v7885
        %v7887 = vsub.f32 %v7871, %v7886
        %v7888 = vmul.f32 %v7887, %v7887
        %v7889 = vrot.slane %v7888, 4
        %v7890 = vadd.f32 %v7888, %v7889
        %v7891 = vrot.slane %v7890, 2
        %v7892 = vadd.f32 %v7890, %v7891
        %v7893 = vrot.slane %v7892, 1
        %v7894 = vadd.f32 %v7892, %v7893
        %v7895 = vmul.f32 %v7894, %v7885
        %v7896 = vadd.f32 %v7895, 1e-05
        %v7897 = vrsqrt.pop %v7896
        %v7898 = vmul.f32 %v7897, %v7896
        %v7899 = vmul.f32 %v7898, %v7897
        %v7900 = vmul.f32 0.5, %v7899
        %v7901 = vsub.f32 1.5, %v7900
        %v7902 = vmul.f32 %v7897, %v7901
        %vm7903 = vweird.f32 %v7896
        %vm7904 = vweird.f32 %v7897
        %vm7905 = vmor %vm7903, %vm7904
        %v7906 = vsel %vm7905, %v7897, %v7902
        %v7907 = vmul.f32 %v7887, %v7906
        %v7908 = vld [vmem:[%s6] sm:$0xff]
        %7910 = vset.pattern.permute.xlu0 0
        %7911 = vperm.xlu0 %7910, %v7908
        %v7912 = vpop.permute.xlu0 %7911
        %v7914 = vmul.f32 %v7907, %v7912
        %v7915 = vld [vmem:[%s7] sm:$0xff]
        %7917 = vset.pattern.permute.xlu0 0
        %7918 = vperm.xlu0 %7917, %v7915
        %v7919 = vpop.permute.xlu0 %7918
        %v7921 = vadd.f32 %v7914, %v7919
        %vm7922 = vcmp.ge.f32.partialorder %v7921, 0.0
        %v7923 = vmul.f32 %v7921, 0.01
        %v7924 = vsel %vm7922, %v7921, %v7923
        %v7925 = vld [vmem:[%s516] sm:$0xff]
        %v7926 = vld [vmem:[%s8] sm:$0xff]
        %v7927 = vld [vmem:[%s8 + $0x8] sm:$0xff]
        %v7928 = vld [vmem:[%s9] sm:$0xff]
        %v7929 = vld [vmem:[%s9 + $0x8] sm:$0xff]
        %7931 = vset.pattern.permute.xlu0 0
        %7932 = vperm.xlu0 %7931, %v7928
        %v7933 = vpop.permute.xlu0 %7932
        %7936 = vset.pattern.permute.xlu0 0
        %7937 = vperm.xlu0 %7936, %v7929
        %v7938 = vpop.permute.xlu0 %7937
        %vm7940 = vcmask 130048
        %v7942 = vsel %vm7940, %v7926, 0
        %v7945 = vsel %vm7940, %v7927, 0
        %7947 = vmatpush.msra.mxu0 0.0
        %7948 = vmatpush.msra.mxu0 0.0
        %7949 = vmatpush.msra.mxu0 0.0
        %7950 = vmatpush.msra.mxu0 0.0
        %7951 = vmatpush.msra.mxu0 0.0
        %7952 = vmatpush.msra.mxu0 0.0
        %7953 = vmatpush.msra.mxu0 0.0
        %7954 = vmatpush.msra.mxu0 0.0
        %7955 = vmatpush.msra.mxu0 0.0
        %7956 = vmatpush.msra.mxu0 0.0
        %7957 = vmatpush.msra.mxu0 0.0
        %7958 = vmatpush.msra.mxu0 0.0
        %7959 = vmatpush.msra.mxu0 0.0
        %7960 = vmatpush.msra.mxu0 0.0
        %7961 = vmatpush.msra.mxu0 %v7925
        %7962 = vmatpush.msra.mxu0 %v7924
        %7963 = vmatmul.f32.gmra.mxu0 %v7942
        %v7964 = vpop.f32.mrf.mxu0
        %v7965 = vadd.f32 %v7933, %v7964
        %7966 = vmatmul.f32.gmra.mxu0 %v7945
        %v7967 = vpop.f32.mrf.mxu0
        %v7968 = vadd.f32 %v7938, %v7967
        %7969 = vdwg.mxu0
        %7970 = vst [vmem:[%s512] sm:$0xff] %v7965
        %7971 = vst [vmem:[%s512 + $0x8] sm:$0xff] %v7968
        %s7972 = sand.u32 %s257, 1
        %s7973 = scalar_lea.sflag [#allocation5], %s7972
        %s7974 = sand.u32 %s257, 1
        %s7975 = smul.addr %s7974, 16
        %s7976 = scalar_lea.vmem [#allocation4], %s7975
        // Predicated region
        $region140: #{resnet_kpconv_forward.1} parent=130 // pred_check
          %p7977 = pneg %p267
        $region141: #{resnet_kpconv_forward.1} parent=130 // pred_check_branch
          %7979 = sbr.rel (%p7977) target = $region143
        $region142: #{resnet_kpconv_forward.1} parent=130 // pred_region
          %7981 = vsyncadd %s7973, 0
          %s7982 = smul.addr %s24, 8
          %s7983 = scalar_lea.hbm %s10, %s7982
          %s7984 = sshll.u32 %s7976, 4
          %s7985 = int_to_ptr.vmem [resolvable:$true] %s7984
          %s7986 = sshll.u32 %s7983, 4
          %s7987 = int_to_ptr.hbm [resolvable:$true] %s7986
          %7992 = dma.vmem_to_hbm [thread:$0]  %s7985, 256, %s7987, %s7973, 128, 512, 8
        $region143: #{resnet_kpconv_forward.1} parent=130 // pred_fallthru
          _
      $region131: #{resnet_kpconv_forward.1} parent=5 // pred_fallthru
        _
      %p7993 = scmp.le.s32.totalorder 2, %s19
      // Predicated region
      $region144: #{resnet_kpconv_forward.1} parent=5 // pred_check
        %p7994 = pneg %p7993
      $region145: #{resnet_kpconv_forward.1} parent=5 // pred_check_branch
        %7996 = sbr.rel (%p7994) target = $region147
      $region146: #{resnet_kpconv_forward.1} parent=5 // pred_region
        %s7997 = ssub.s32 %s19, 2
        // Predicated region
        $region148: #{resnet_kpconv_forward.1} parent=146 // pred_check
          %p7998 = pneg %p273
        $region149: #{resnet_kpconv_forward.1} parent=146 // pred_check_branch
          %8000 = sbr.rel (%p7998) target = $region151
        $region150: #{resnet_kpconv_forward.1} parent=146 // pred_region
          %s8001 = sand.u32 %s258, 1
          %s8002 = scalar_lea.sflag [#allocation5], %s8001
          %s8003 = sand.u32 %s258, 1
          %s8004 = smul.addr %s8003, 16
          %s8005 = scalar_lea.vmem [#allocation4], %s8004
          %8007 = dma.done %s8002, 256
        $region151: #{resnet_kpconv_forward.1} parent=146 // pred_fallthru
          _
      $region147: #{resnet_kpconv_forward.1} parent=5 // pred_fallthru
        _
    $region6: #{resnet_kpconv_forward.1} parent=1 // loop_footer
      %s23 = sadd.s32 1, %s19
    $region7: #{resnet_kpconv_forward.1} parent=1 // loop_footer_branch
      %18 = sbr.rel target = $region3
    $region8: #{resnet_kpconv_forward.1} parent=1 // loop_exit
      _
    %8008 = vsyncpa [#allocation5], 1
    %s8009 = scalar_lea.sflag [#allocation5], 1
    %8010 = vsyncpa %s8009, 1

</llo_original>
